<compile_context>
chip_gen: v6e
topology: v6e:2x2x1
jax: 0.10.0
libtpu: 0.0.40
codegen_flags: <defaults>
</compile_context>

<pallas_src>
import functools

import jax
import jax.numpy as jnp
from jax.experimental import pallas as pl
from jax.experimental.pallas import tpu as pltpu

LANE = 128


def _round_up(x, m):
    return (x + m - 1) // m * m


def _pick_tile(padded, candidates):
    for c in candidates:
        if padded % c == 0:
            return c
    return padded


# ----------------------------- Pallas kernels ------------------------------

def _conv_matmul_kernel(*refs, slope, has_residual, pn_channels):
    """Tiled matmul with f32 accumulator; epilogue on the last K step applies
    bias [+ residual] + LeakyReLU [+ PixelNorm over the lane dim]."""
    if has_residual:
        x_ref, w_ref, b_ref, r_ref, o_ref, acc_ref = refs
    else:
        x_ref, w_ref, b_ref, o_ref, acc_ref = refs
        r_ref = None

    k = pl.program_id(2)

    @pl.when(k == 0)
    def _():
        acc_ref[...] = jnp.zeros_like(acc_ref)

    acc_ref[...] += jnp.dot(x_ref[...], w_ref[...],
                            preferred_element_type=jnp.float32)

    @pl.when(k == pl.num_programs(2) - 1)
    def _():
        acc = acc_ref[...] + b_ref[...]
        if r_ref is not None:
            acc = acc + r_ref[...].astype(jnp.float32)
        acc = jnp.where(acc >= 0.0, acc, slope * acc)
        if pn_channels is not None:
            # Padded output channels are exactly zero, so summing over the
            # whole (lane-padded) tile equals summing over the real channels.
            ms = jnp.sum(acc * acc, axis=-1, keepdims=True) * (1.0 / pn_channels)
            acc = acc * jax.lax.rsqrt(ms + 1e-6)
        o_ref[...] = acc.astype(o_ref.dtype)


def _pixelnorm_kernel(x_ref, o_ref, *, n_valid):
    x = x_ref[...].astype(jnp.float32)
    ms = jnp.sum(x * x, axis=-1, keepdims=True) * (1.0 / n_valid)
    o_ref[...] = (x * jax.lax.rsqrt(ms + 1e-6)).astype(o_ref.dtype)


# ----------------------------- kernel wrappers ------------------------------

def fused_conv_matmul(patches, w_mat, bias, residual=None, slope=0.1,
                      pn_channels=None, out_dtype=jnp.float32):
    """leaky_relu(patches @ w_mat + bias [+ residual]) [-> pixelnorm], tiled."""
    M, K = patches.shape
    K_pad, O_pad = w_mat.shape

    tm = min(256, _round_up(M, 8))
    M_pad = _round_up(M, tm)
    to = _pick_tile(O_pad, (256, 128))
    tk = _pick_tile(K_pad, (512, 256, 128))

    x = jnp.pad(patches, ((0, M_pad - M), (0, K_pad - K)))
    args = [x, w_mat, bias]
    in_specs = [
        pl.BlockSpec((tm, tk), lambda i, j, k: (i, k)),
        pl.BlockSpec((tk, to), lambda i, j, k: (k, j)),
        pl.BlockSpec((1, to), lambda i, j, k: (0, j)),
    ]
    if residual is not None:
        r = jnp.pad(residual, ((0, M_pad - residual.shape[0]),
                               (0, O_pad - residual.shape[1])))
        args.append(r)
        in_specs.append(pl.BlockSpec((tm, to), lambda i, j, k: (i, j)))

    grid = (M_pad // tm, O_pad // to, K_pad // tk)
    kernel = functools.partial(_conv_matmul_kernel, slope=slope,
                               has_residual=residual is not None,
                               pn_channels=pn_channels)

    flops = 2 * M_pad * K_pad * O_pad
    bytes_accessed = int(sum(int(a.size) * a.dtype.itemsize for a in args)
                         + M_pad * O_pad * jnp.dtype(out_dtype).itemsize)

    out = pl.pallas_call(
        kernel,
        out_shape=jax.ShapeDtypeStruct((M_pad, O_pad), out_dtype),
        grid_spec=pltpu.PrefetchScalarGridSpec(
            num_scalar_prefetch=0,
            grid=grid,
            in_specs=in_specs,
            out_specs=pl.BlockSpec((tm, to), lambda i, j, k: (i, j)),
            scratch_shapes=[pltpu.VMEM((tm, to), jnp.float32)]),
        compiler_params=pltpu.CompilerParams(
            dimension_semantics=("parallel", "parallel", "arbitrary"),
            vmem_limit_bytes=32 * 1024 * 1024),
        cost_estimate=pl.CostEstimate(flops=flops, transcendentals=0,
                                      bytes_accessed=bytes_accessed),
    )(*args)
    return out  # (M_pad, O_pad); caller slices back to (M, O)


def pixel_norm(flat):
    """Fallback standalone PixelNorm (only used when the fused epilogue's
    preconditions do not hold)."""
    N, D = flat.shape
    N_pad = _round_up(N, 8)
    D_pad = _round_up(D, LANE)
    xp = jnp.pad(flat.astype(jnp.float32), ((0, N_pad - N), (0, D_pad - D)))
    out = pl.pallas_call(
        functools.partial(_pixelnorm_kernel, n_valid=D),
        out_shape=jax.ShapeDtypeStruct((N_pad, D_pad), jnp.float32),
        in_specs=[pl.BlockSpec(memory_space=pltpu.MemorySpace.VMEM)],
        out_specs=pl.BlockSpec(memory_space=pltpu.MemorySpace.VMEM),
    )(xp)
    return out[:N, :D]


# ------------------------------ glue (JAX) ---------------------------------

def im2col(x_nhwc, kh, kw, stride, pad):
    N, H, W, C = x_nhwc.shape
    xp = jnp.pad(x_nhwc, ((0, 0), (pad, pad), (pad, pad), (0, 0)))
    Hp, Wp = H + 2 * pad, W + 2 * pad
    out_h = (Hp - kh) // stride + 1
    out_w = (Wp - kw) // stride + 1
    cols = []
    for i in range(kh):
        for j in range(kw):
            cols.append(
                xp[:, i:i + stride * out_h:stride, j:j + stride * out_w:stride, :]
            )
    cols = jnp.concatenate(cols, axis=-1)  # (N, out_h, out_w, kh*kw*C)
    return cols.reshape(N * out_h * out_w, kh * kw * C), out_h, out_w


def conv_lrelu(x_nhwc, cw, m, stride, pad, slope,
               residual_nhwc=None, pn_channels=None, out_dtype=None):
    O, C, kh, kw = m
    if out_dtype is None:
        out_dtype = x_nhwc.dtype
    N = x_nhwc.shape[0]
    patches, oh, ow = im2col(x_nhwc, kh, kw, stride, pad)
    M = N * oh * ow
    res = None
    if residual_nhwc is not None:
        res = residual_nhwc.reshape(M, O)
    y = fused_conv_matmul(patches, cw['w'], cw['b'], residual=res, slope=slope,
                          pn_channels=pn_channels, out_dtype=out_dtype)
    return y[:M, :O].reshape(N, oh, ow, O)


def res_block(x_nhwc, cwA, mA, cwB, mB, pn_channels=None, out_dtype=None):
    h = conv_lrelu(x_nhwc, cwA, mA, 1, 1, 0.2)
    # second conv fused with residual add + LeakyReLU(0.2) [+ PixelNorm]
    return conv_lrelu(h, cwB, mB, 1, 1, 0.2, residual_nhwc=x_nhwc,
                      pn_channels=pn_channels, out_dtype=out_dtype)


def encoder_forward(x_nchw, params, *, meta, compute_dtype=jnp.bfloat16):
    x = jnp.transpose(x_nchw, (0, 2, 3, 1)).astype(compute_dtype)  # NCHW->NHWC
    x = conv_lrelu(x, params['c1'], meta['c1'], 2, 2, 0.1)
    x = res_block(x, params['r1A'], meta['r1A'], params['r1B'], meta['r1B'])
    x = conv_lrelu(x, params['c2'], meta['c2'], 2, 2, 0.1)
    x = conv_lrelu(x, params['c3'], meta['c3'], 2, 2, 0.1)
    x = conv_lrelu(x, params['c4'], meta['c4'], 2, 2, 0.1)
    x = conv_lrelu(x, params['c5'], meta['c5'], 2, 2, 0.1)

    N, H, W, _ = x.shape
    O = meta['r2B'][0]
    O_pad = params['r2B']['w'].shape[1]
    if H == 1 and W == 1 and O_pad <= 256:
        # Fuse nn.Flatten + PixelNorm into the final conv epilogue (the whole
        # per-sample feature row is already resident in one output tile, and
        # NCHW flatten == channel order for a 1x1 spatial map).
        y = res_block(x, params['r2A'], meta['r2A'], params['r2B'], meta['r2B'],
                      pn_channels=O, out_dtype=jnp.float32)
        return y.reshape(N, O)
    # Generic fallback: flatten in NCHW order, standalone PixelNorm kernel.
    y = res_block(x, params['r2A'], meta['r2A'], params['r2B'], meta['r2B'])
    flat = jnp.transpose(y, (0, 3, 1, 2)).reshape(N, -1)
    return pixel_norm(flat)


# --------------------------- parameter handling -----------------------------

def init_params(key, e_ch):
    def conv_init(k, o, c, ks):
        k1, k2 = jax.random.split(k)
        fan_in = c * ks * ks
        w = jax.random.normal(k1, (o, c, ks, ks), jnp.float32) / jnp.sqrt(fan_in)
        b = 0.01 * jax.random.normal(k2, (o,), jnp.float32)
        return w, b

    keys = jax.random.split(key, 9)
    p = {}
    p['w1'], p['b1'] = conv_init(keys[0], e_ch, 3, 5)
    p['r1wA'], p['r1bA'] = conv_init(keys[1], e_ch, e_ch, 3)
    p['r1wB'], p['r1bB'] = conv_init(keys[2], e_ch, e_ch, 3)
    p['w2'], p['b2'] = conv_init(keys[3], 2 * e_ch, e_ch, 5)
    p['w3'], p['b3'] = conv_init(keys[4], 4 * e_ch, 2 * e_ch, 5)
    p['w4'], p['b4'] = conv_init(keys[5], 8 * e_ch, 4 * e_ch, 5)
    p['w5'], p['b5'] = conv_init(keys[6], 8 * e_ch, 8 * e_ch, 5)
    p['r2wA'], p['r2bA'] = conv_init(keys[7], 8 * e_ch, 8 * e_ch, 3)
    p['r2wB'], p['r2bB'] = conv_init(keys[8], 8 * e_ch, 8 * e_ch, 3)
    return p


def prepare_params(p, compute_dtype):
    """One-time weight transform: (O,C,kh,kw) -> (K_pad, O_pad) matmul layout,
    lane-padded and cast to the compute dtype; bias -> (1, O_pad) f32 row.
    Done once outside the per-forward path."""
    arrays, meta = {}, {}

    def prep(name, w, b):
        O, C, kh, kw = (int(d) for d in w.shape)
        K = kh * kw * C
        K_pad = _round_up(K, LANE)
        O_pad = _round_up(O, LANE)
        wm = jnp.transpose(w, (2, 3, 1, 0)).reshape(K, O)
        wm = jnp.pad(wm, ((0, K_pad - K), (0, O_pad - O))).astype(compute_dtype)
        bp = jnp.pad(b, (0, O_pad - O)).reshape(1, O_pad).astype(jnp.float32)
        arrays[name] = {'w': wm, 'b': bp}
        meta[name] = (O, C, kh, kw)

    prep('c1', p['w1'], p['b1'])
    prep('r1A', p['r1wA'], p['r1bA'])
    prep('r1B', p['r1wB'], p['r1bB'])
    prep('c2', p['w2'], p['b2'])
    prep('c3', p['w3'], p['b3'])
    prep('c4', p['w4'], p['b4'])
    prep('c5', p['w5'], p['b5'])
    prep('r2A', p['r2wA'], p['r2bA'])
    prep('r2B', p['r2wB'], p['r2bB'])
    return arrays, meta


# ------------------------- pure-JAX reference check -------------------------

def _ref_conv(x, w, b, stride, pad):
    y = jax.lax.conv_general_dilated(
        x, w, (stride, stride), [(pad, pad), (pad, pad)],
        dimension_numbers=('NCHW', 'OIHW', 'NCHW'))
    return y + b.reshape(1, -1, 1, 1)


def _leaky(x, s):
    return jnp.where(x >= 0, x, s * x)


def ref_forward(x, p):
    h = _leaky(_ref_conv(x, p['w1'], p['b1'], 2, 2), 0.1)
    r = _leaky(_ref_conv(h, p['r1wA'], p['r1bA'], 1, 1), 0.2)
    r = _ref_conv(r, p['r1wB'], p['r1bB'], 1, 1)
    h = _leaky(h + r, 0.2)
    h = _leaky(_ref_conv(h, p['w2'], p['b2'], 2, 2), 0.1)
    h = _leaky(_ref_conv(h, p['w3'], p['b3'], 2, 2), 0.1)
    h = _leaky(_ref_conv(h, p['w4'], p['b4'], 2, 2), 0.1)
    h = _leaky(_ref_conv(h, p['w5'], p['b5'], 2, 2), 0.1)
    r = _leaky(_ref_conv(h, p['r2wA'], p['r2bA'], 1, 1), 0.2)
    r = _ref_conv(r, p['r2wB'], p['r2bB'], 1, 1)
    h = _leaky(h + r, 0.2)
    f = h.reshape(h.shape[0], -1)
    return f * jax.lax.rsqrt(jnp.mean(f * f, axis=-1, keepdims=True) + 1e-6)


# ---------------------------------- main ------------------------------------

if __name__ == "__main__":
    e_ch = 4
    batch = 2
    spatial = 32  # 5 stride-2 convs: 32 -> 16 -> 8 -> 4 -> 2 -> 1

    key = jax.random.PRNGKey(0)
    kx, kp = jax.random.split(key)
    x = jax.random.normal(kx, (batch, 3, spatial, spatial), jnp.float32)
    params = init_params(kp, e_ch)

    ref = jax.block_until_ready(ref_forward(x, params))

    # --- primary path: bf16 operands, f32 MXU accumulation -----------------
    arrays_bf16, meta_bf16 = prepare_params(params, jnp.bfloat16)
    fwd_bf16 = jax.jit(functools.partial(encoder_forward, meta=meta_bf16,
                                         compute_dtype=jnp.bfloat16))
    out_bf16 = jax.block_until_ready(fwd_bf16(x, arrays_bf16))
    assert out_bf16.shape == (batch, 8 * e_ch), out_bf16.shape
    err_bf16 = float(jnp.max(jnp.abs(out_bf16 - ref)))
    assert err_bf16 < 0.25, err_bf16  # loose: bf16 operand quantization

    # --- f32 path through the same kernels: tight numerical check ----------
    arrays_f32, meta_f32 = prepare_params(params, jnp.float32)
    fwd_f32 = jax.jit(functools.partial(encoder_forward, meta=meta_f32,
                                        compute_dtype=jnp.float32))
    out_f32 = jax.block_until_ready(fwd_f32(x, arrays_f32))
    assert out_f32.shape == (batch, 8 * e_ch), out_f32.shape
    assert jnp.allclose(out_f32, ref, atol=1e-4, rtol=1e-4), \
        float(jnp.max(jnp.abs(out_f32 - ref)))

    print("KERNEL_OK")
</pallas_src>

<mosaic_0001>
module attributes {stable_mosaic.version = 11 : i64} {
  func.func @_conv_matmul_kernel(%arg0: i32, %arg1: i32, %arg2: i32, %arg3: memref<256x128xbf16, #tpu.memory_space<vmem>>, %arg4: memref<128x128xbf16, #tpu.memory_space<vmem>>, %arg5: memref<1x128xf32, #tpu.memory_space<vmem>>, %arg6: memref<256x128xbf16, #tpu.memory_space<vmem>>, %arg7: memref<256x128xf32, #tpu.memory_space<vmem>>) attributes {dimension_semantics = [#tpu.dimension_semantics<parallel>, #tpu.dimension_semantics<parallel>, #tpu.dimension_semantics<arbitrary>], iteration_bounds = array<i64: 2, 1, 1>, scalar_prefetch = 0 : i64, scratch_operands = 1 : i64, tpu.core_type = #tpu.core_type<tc>, window_params = [{transform_indices = @transform_0, window_bounds = array<i64: 256, 128>}, {transform_indices = @transform_1, window_bounds = array<i64: 128, 128>}, {transform_indices = @transform_2, window_bounds = array<i64: 1, 128>}, {transform_indices = @transform_3, window_bounds = array<i64: 256, 128>}]} {
    %c0_i32 = arith.constant 0 : i32
    %0 = arith.cmpi eq, %arg2, %c0_i32 : i32
    %1 = arith.extui %0 : i1 to i32
    %c0_i32_0 = arith.constant 0 : i32
    %2 = arith.cmpi ne, %1, %c0_i32_0 : i32
    scf.if %2 {
      %cst_10 = arith.constant 0.000000e+00 : f32
      %12 = vector.broadcast %cst_10 : f32 to vector<256x128xf32>
      %c0_11 = arith.constant 0 : index
      %c0_12 = arith.constant 0 : index
      %13 = vector.load %arg7[%c0_11, %c0_12] : memref<256x128xf32, #tpu.memory_space<vmem>>, vector<256x128xf32>
      tpu.vector_store %arg7[%c0_11, %c0_12], %12 {strides = array<i32>} : memref<256x128xf32, #tpu.memory_space<vmem>>, vector<256x128xf32>,
    } else {
    }
    %c0 = arith.constant 0 : index
    %c0_1 = arith.constant 0 : index
    %3 = vector.load %arg7[%c0, %c0_1] : memref<256x128xf32, #tpu.memory_space<vmem>>, vector<256x128xf32>
    %c0_2 = arith.constant 0 : index
    %c0_3 = arith.constant 0 : index
    %4 = vector.load %arg3[%c0_2, %c0_3] : memref<256x128xbf16, #tpu.memory_space<vmem>>, vector<256x128xbf16>
    %c0_4 = arith.constant 0 : index
    %c0_5 = arith.constant 0 : index
    %5 = vector.load %arg4[%c0_4, %c0_5] : memref<128x128xbf16, #tpu.memory_space<vmem>>, vector<128x128xbf16>
    %cst = arith.constant dense<0.000000e+00> : vector<256x128xf32>
    %6 = tpu.matmul %4, %5, %cst {dimension_numbers = #tpu.dot_dimension_numbers<[1], [0], [0], [1], [0, 0, 1, 1], [], []>} : vector<256x128xbf16>, vector<128x128xbf16>, vector<256x128xf32> -> vector<256x128xf32>
    %7 = arith.addf %3, %6 : vector<256x128xf32>
    %c0_6 = arith.constant 0 : index
    %c0_7 = arith.constant 0 : index
    %8 = vector.load %arg7[%c0_6, %c0_7] : memref<256x128xf32, #tpu.memory_space<vmem>>, vector<256x128xf32>
    tpu.vector_store %arg7[%c0_6, %c0_7], %7 {strides = array<i32>} : memref<256x128xf32, #tpu.memory_space<vmem>>, vector<256x128xf32>,
    %c0_i32_8 = arith.constant 0 : i32
    %9 = arith.cmpi eq, %arg2, %c0_i32_8 : i32
    %10 = arith.extui %9 : i1 to i32
    %c0_i32_9 = arith.constant 0 : i32
    %11 = arith.cmpi ne, %10, %c0_i32_9 : i32
    scf.if %11 {
      %c0_10 = arith.constant 0 : index
      %c0_11 = arith.constant 0 : index
      %12 = vector.load %arg7[%c0_10, %c0_11] : memref<256x128xf32, #tpu.memory_space<vmem>>, vector<256x128xf32>
      %c0_12 = arith.constant 0 : index
      %c0_13 = arith.constant 0 : index
      %13 = vector.load %arg5[%c0_12, %c0_13] : memref<1x128xf32, #tpu.memory_space<vmem>>, vector<1x128xf32>
      %14 = vector.broadcast %13 : vector<1x128xf32> to vector<256x128xf32>
      %15 = arith.addf %12, %14 : vector<256x128xf32>
      %cst_14 = arith.constant 0.000000e+00 : f32
      %16 = vector.broadcast %cst_14 : f32 to vector<256x128xf32>
      %17 = arith.cmpf oge, %15, %16 : vector<256x128xf32>
      %cst_15 = arith.constant 1.000000e-01 : f32
      %18 = vector.broadcast %cst_15 : f32 to vector<256x128xf32>
      %19 = arith.mulf %18, %15 : vector<256x128xf32>
      %20 = arith.select %17, %15, %19 : vector<256x128xi1>, vector<256x128xf32>
      %21 = arith.truncf %20 : vector<256x128xf32> to vector<256x128xbf16>
      %c0_16 = arith.constant 0 : index
      %c0_17 = arith.constant 0 : index
      %22 = vector.load %arg6[%c0_16, %c0_17] : memref<256x128xbf16, #tpu.memory_space<vmem>>, vector<256x128xbf16>
      tpu.vector_store %arg6[%c0_16, %c0_17], %21 {strides = array<i32>} : memref<256x128xbf16, #tpu.memory_space<vmem>>, vector<256x128xbf16>,
    } else {
    }
    return
  }
  func.func @transform_0(%arg0: i32, %arg1: i32, %arg2: i32) -> (i32, i32) {
    %c0_i32 = arith.constant 0 : i32
    return %arg0, %arg2 : i32, i32
  }
  func.func @transform_1(%arg0: i32, %arg1: i32, %arg2: i32) -> (i32, i32) {
    %c0_i32 = arith.constant 0 : i32
    return %arg2, %arg1 : i32, i32
  }
  func.func @transform_2(%arg0: i32, %arg1: i32, %arg2: i32) -> (i32, i32) {
    %c0_i32 = arith.constant 0 : i32
    %c0_i32_0 = arith.constant 0 : i32
    return %c0_i32, %arg1 : i32, i32
  }
  func.func @transform_3(%arg0: i32, %arg1: i32, %arg2: i32) -> (i32, i32) {
    %c0_i32 = arith.constant 0 : i32
    return %arg0, %arg1 : i32, i32
  }
}

module attributes {stable_mosaic.version = 11 : i64} {
  func.func @_conv_matmul_kernel(%arg0: i32, %arg1: i32, %arg2: i32, %arg3: memref<256x128xbf16, #tpu.memory_space<vmem>>, %arg4: memref<128x128xbf16, #tpu.memory_space<vmem>>, %arg5: memref<1x128xf32, #tpu.memory_space<vmem>>, %arg6: memref<256x128xbf16, #tpu.memory_space<vmem>>, %arg7: memref<256x128xf32, #tpu.memory_space<vmem>>) attributes {dimension_semantics = [#tpu.dimension_semantics<parallel>, #tpu.dimension_semantics<parallel>, #tpu.dimension_semantics<arbitrary>], iteration_bounds = array<i64: 2, 1, 1>, scalar_prefetch = 0 : i64, scratch_operands = 1 : i64, tpu.core_type = #tpu.core_type<tc>, window_params = [{transform_indices = @transform_0, window_bounds = array<i64: 256, 128>}, {transform_indices = @transform_1, window_bounds = array<i64: 128, 128>}, {transform_indices = @transform_2, window_bounds = array<i64: 1, 128>}, {transform_indices = @transform_3, window_bounds = array<i64: 256, 128>}]} {
    %c0_i32 = arith.constant 0 : i32
    %0 = arith.cmpi eq, %arg2, %c0_i32 : i32
    %1 = arith.extui %0 : i1 to i32
    %c0_i32_0 = arith.constant 0 : i32
    %2 = arith.cmpi ne, %1, %c0_i32_0 : i32
    scf.if %2 {
      %cst_10 = arith.constant 0.000000e+00 : f32
      %12 = vector.broadcast %cst_10 : f32 to vector<256x128xf32>
      %c0_11 = arith.constant 0 : index
      %c0_12 = arith.constant 0 : index
      %13 = vector.load %arg7[%c0_11, %c0_12] : memref<256x128xf32, #tpu.memory_space<vmem>>, vector<256x128xf32>
      tpu.vector_store %arg7[%c0_11, %c0_12], %12 {strides = array<i32>} : memref<256x128xf32, #tpu.memory_space<vmem>>, vector<256x128xf32>,
    } else {
    }
    %c0 = arith.constant 0 : index
    %c0_1 = arith.constant 0 : index
    %3 = vector.load %arg7[%c0, %c0_1] : memref<256x128xf32, #tpu.memory_space<vmem>>, vector<256x128xf32>
    %c0_2 = arith.constant 0 : index
    %c0_3 = arith.constant 0 : index
    %4 = vector.load %arg3[%c0_2, %c0_3] : memref<256x128xbf16, #tpu.memory_space<vmem>>, vector<256x128xbf16>
    %c0_4 = arith.constant 0 : index
    %c0_5 = arith.constant 0 : index
    %5 = vector.load %arg4[%c0_4, %c0_5] : memref<128x128xbf16, #tpu.memory_space<vmem>>, vector<128x128xbf16>
    %cst = arith.constant dense<0.000000e+00> : vector<256x128xf32>
    %6 = tpu.matmul %4, %5, %cst {dimension_numbers = #tpu.dot_dimension_numbers<[1], [0], [0], [1], [0, 0, 1, 1], [], []>} : vector<256x128xbf16>, vector<128x128xbf16>, vector<256x128xf32> -> vector<256x128xf32>
    %7 = arith.addf %3, %6 : vector<256x128xf32>
    %c0_6 = arith.constant 0 : index
    %c0_7 = arith.constant 0 : index
    %8 = vector.load %arg7[%c0_6, %c0_7] : memref<256x128xf32, #tpu.memory_space<vmem>>, vector<256x128xf32>
    tpu.vector_store %arg7[%c0_6, %c0_7], %7 {strides = array<i32>} : memref<256x128xf32, #tpu.memory_space<vmem>>, vector<256x128xf32>,
    %c0_i32_8 = arith.constant 0 : i32
    %9 = arith.cmpi eq, %arg2, %c0_i32_8 : i32
    %10 = arith.extui %9 : i1 to i32
    %c0_i32_9 = arith.constant 0 : i32
    %11 = arith.cmpi ne, %10, %c0_i32_9 : i32
    scf.if %11 {
      %c0_10 = arith.constant 0 : index
      %c0_11 = arith.constant 0 : index
      %12 = vector.load %arg7[%c0_10, %c0_11] : memref<256x128xf32, #tpu.memory_space<vmem>>, vector<256x128xf32>
      %c0_12 = arith.constant 0 : index
      %c0_13 = arith.constant 0 : index
      %13 = vector.load %arg5[%c0_12, %c0_13] : memref<1x128xf32, #tpu.memory_space<vmem>>, vector<1x128xf32>
      %14 = vector.broadcast %13 : vector<1x128xf32> to vector<256x128xf32>
      %15 = arith.addf %12, %14 : vector<256x128xf32>
      %cst_14 = arith.constant 0.000000e+00 : f32
      %16 = vector.broadcast %cst_14 : f32 to vector<256x128xf32>
      %17 = arith.cmpf oge, %15, %16 : vector<256x128xf32>
      %cst_15 = arith.constant 2.000000e-01 : f32
      %18 = vector.broadcast %cst_15 : f32 to vector<256x128xf32>
      %19 = arith.mulf %18, %15 : vector<256x128xf32>
      %20 = arith.select %17, %15, %19 : vector<256x128xi1>, vector<256x128xf32>
      %21 = arith.truncf %20 : vector<256x128xf32> to vector<256x128xbf16>
      %c0_16 = arith.constant 0 : index
      %c0_17 = arith.constant 0 : index
      %22 = vector.load %arg6[%c0_16, %c0_17] : memref<256x128xbf16, #tpu.memory_space<vmem>>, vector<256x128xbf16>
      tpu.vector_store %arg6[%c0_16, %c0_17], %21 {strides = array<i32>} : memref<256x128xbf16, #tpu.memory_space<vmem>>, vector<256x128xbf16>,
    } else {
    }
    return
  }
  func.func @transform_0(%arg0: i32, %arg1: i32, %arg2: i32) -> (i32, i32) {
    %c0_i32 = arith.constant 0 : i32
    return %arg0, %arg2 : i32, i32
  }
  func.func @transform_1(%arg0: i32, %arg1: i32, %arg2: i32) -> (i32, i32) {
    %c0_i32 = arith.constant 0 : i32
    return %arg2, %arg1 : i32, i32
  }
  func.func @transform_2(%arg0: i32, %arg1: i32, %arg2: i32) -> (i32, i32) {
    %c0_i32 = arith.constant 0 : i32
    %c0_i32_0 = arith.constant 0 : i32
    return %c0_i32, %arg1 : i32, i32
  }
  func.func @transform_3(%arg0: i32, %arg1: i32, %arg2: i32) -> (i32, i32) {
    %c0_i32 = arith.constant 0 : i32
    return %arg0, %arg1 : i32, i32
  }
}

module attributes {stable_mosaic.version = 11 : i64} {
  func.func @_conv_matmul_kernel(%arg0: i32, %arg1: i32, %arg2: i32, %arg3: memref<256x128xbf16, #tpu.memory_space<vmem>>, %arg4: memref<128x128xbf16, #tpu.memory_space<vmem>>, %arg5: memref<1x128xf32, #tpu.memory_space<vmem>>, %arg6: memref<256x128xbf16, #tpu.memory_space<vmem>>, %arg7: memref<256x128xbf16, #tpu.memory_space<vmem>>, %arg8: memref<256x128xf32, #tpu.memory_space<vmem>>) attributes {dimension_semantics = [#tpu.dimension_semantics<parallel>, #tpu.dimension_semantics<parallel>, #tpu.dimension_semantics<arbitrary>], iteration_bounds = array<i64: 2, 1, 1>, scalar_prefetch = 0 : i64, scratch_operands = 1 : i64, tpu.core_type = #tpu.core_type<tc>, window_params = [{transform_indices = @transform_0, window_bounds = array<i64: 256, 128>}, {transform_indices = @transform_1, window_bounds = array<i64: 128, 128>}, {transform_indices = @transform_2, window_bounds = array<i64: 1, 128>}, {transform_indices = @transform_3, window_bounds = array<i64: 256, 128>}, {transform_indices = @transform_4, window_bounds = array<i64: 256, 128>}]} {
    %c0_i32 = arith.constant 0 : i32
    %0 = arith.cmpi eq, %arg2, %c0_i32 : i32
    %1 = arith.extui %0 : i1 to i32
    %c0_i32_0 = arith.constant 0 : i32
    %2 = arith.cmpi ne, %1, %c0_i32_0 : i32
    scf.if %2 {
      %cst_10 = arith.constant 0.000000e+00 : f32
      %12 = vector.broadcast %cst_10 : f32 to vector<256x128xf32>
      %c0_11 = arith.constant 0 : index
      %c0_12 = arith.constant 0 : index
      %13 = vector.load %arg8[%c0_11, %c0_12] : memref<256x128xf32, #tpu.memory_space<vmem>>, vector<256x128xf32>
      tpu.vector_store %arg8[%c0_11, %c0_12], %12 {strides = array<i32>} : memref<256x128xf32, #tpu.memory_space<vmem>>, vector<256x128xf32>,
    } else {
    }
    %c0 = arith.constant 0 : index
    %c0_1 = arith.constant 0 : index
    %3 = vector.load %arg8[%c0, %c0_1] : memref<256x128xf32, #tpu.memory_space<vmem>>, vector<256x128xf32>
    %c0_2 = arith.constant 0 : index
    %c0_3 = arith.constant 0 : index
    %4 = vector.load %arg3[%c0_2, %c0_3] : memref<256x128xbf16, #tpu.memory_space<vmem>>, vector<256x128xbf16>
    %c0_4 = arith.constant 0 : index
    %c0_5 = arith.constant 0 : index
    %5 = vector.load %arg4[%c0_4, %c0_5] : memref<128x128xbf16, #tpu.memory_space<vmem>>, vector<128x128xbf16>
    %cst = arith.constant dense<0.000000e+00> : vector<256x128xf32>
    %6 = tpu.matmul %4, %5, %cst {dimension_numbers = #tpu.dot_dimension_numbers<[1], [0], [0], [1], [0, 0, 1, 1], [], []>} : vector<256x128xbf16>, vector<128x128xbf16>, vector<256x128xf32> -> vector<256x128xf32>
    %7 = arith.addf %3, %6 : vector<256x128xf32>
    %c0_6 = arith.constant 0 : index
    %c0_7 = arith.constant 0 : index
    %8 = vector.load %arg8[%c0_6, %c0_7] : memref<256x128xf32, #tpu.memory_space<vmem>>, vector<256x128xf32>
    tpu.vector_store %arg8[%c0_6, %c0_7], %7 {strides = array<i32>} : memref<256x128xf32, #tpu.memory_space<vmem>>, vector<256x128xf32>,
    %c0_i32_8 = arith.constant 0 : i32
    %9 = arith.cmpi eq, %arg2, %c0_i32_8 : i32
    %10 = arith.extui %9 : i1 to i32
    %c0_i32_9 = arith.constant 0 : i32
    %11 = arith.cmpi ne, %10, %c0_i32_9 : i32
    scf.if %11 {
      %c0_10 = arith.constant 0 : index
      %c0_11 = arith.constant 0 : index
      %12 = vector.load %arg8[%c0_10, %c0_11] : memref<256x128xf32, #tpu.memory_space<vmem>>, vector<256x128xf32>
      %c0_12 = arith.constant 0 : index
      %c0_13 = arith.constant 0 : index
      %13 = vector.load %arg5[%c0_12, %c0_13] : memref<1x128xf32, #tpu.memory_space<vmem>>, vector<1x128xf32>
      %14 = vector.broadcast %13 : vector<1x128xf32> to vector<256x128xf32>
      %15 = arith.addf %12, %14 : vector<256x128xf32>
      %c0_14 = arith.constant 0 : index
      %c0_15 = arith.constant 0 : index
      %16 = vector.load %arg6[%c0_14, %c0_15] : memref<256x128xbf16, #tpu.memory_space<vmem>>, vector<256x128xbf16>
      %17 = arith.extf %16 : vector<256x128xbf16> to vector<256x128xf32>
      %18 = arith.addf %15, %17 : vector<256x128xf32>
      %cst_16 = arith.constant 0.000000e+00 : f32
      %19 = vector.broadcast %cst_16 : f32 to vector<256x128xf32>
      %20 = arith.cmpf oge, %18, %19 : vector<256x128xf32>
      %cst_17 = arith.constant 2.000000e-01 : f32
      %21 = vector.broadcast %cst_17 : f32 to vector<256x128xf32>
      %22 = arith.mulf %21, %18 : vector<256x128xf32>
      %23 = arith.select %20, %18, %22 : vector<256x128xi1>, vector<256x128xf32>
      %24 = arith.truncf %23 : vector<256x128xf32> to vector<256x128xbf16>
      %c0_18 = arith.constant 0 : index
      %c0_19 = arith.constant 0 : index
      %25 = vector.load %arg7[%c0_18, %c0_19] : memref<256x128xbf16, #tpu.memory_space<vmem>>, vector<256x128xbf16>
      tpu.vector_store %arg7[%c0_18, %c0_19], %24 {strides = array<i32>} : memref<256x128xbf16, #tpu.memory_space<vmem>>, vector<256x128xbf16>,
    } else {
    }
    return
  }
  func.func @transform_0(%arg0: i32, %arg1: i32, %arg2: i32) -> (i32, i32) {
    %c0_i32 = arith.constant 0 : i32
    return %arg0, %arg2 : i32, i32
  }
  func.func @transform_1(%arg0: i32, %arg1: i32, %arg2: i32) -> (i32, i32) {
    %c0_i32 = arith.constant 0 : i32
    return %arg2, %arg1 : i32, i32
  }
  func.func @transform_2(%arg0: i32, %arg1: i32, %arg2: i32) -> (i32, i32) {
    %c0_i32 = arith.constant 0 : i32
    %c0_i32_0 = arith.constant 0 : i32
    return %c0_i32, %arg1 : i32, i32
  }
  func.func @transform_3(%arg0: i32, %arg1: i32, %arg2: i32) -> (i32, i32) {
    %c0_i32 = arith.constant 0 : i32
    return %arg0, %arg1 : i32, i32
  }
  func.func @transform_4(%arg0: i32, %arg1: i32, %arg2: i32) -> (i32, i32) {
    %c0_i32 = arith.constant 0 : i32
    return %arg0, %arg1 : i32, i32
  }
}

module attributes {stable_mosaic.version = 11 : i64} {
  func.func @_conv_matmul_kernel(%arg0: i32, %arg1: i32, %arg2: i32, %arg3: memref<128x128xbf16, #tpu.memory_space<vmem>>, %arg4: memref<128x128xbf16, #tpu.memory_space<vmem>>, %arg5: memref<1x128xf32, #tpu.memory_space<vmem>>, %arg6: memref<128x128xbf16, #tpu.memory_space<vmem>>, %arg7: memref<128x128xf32, #tpu.memory_space<vmem>>) attributes {dimension_semantics = [#tpu.dimension_semantics<parallel>, #tpu.dimension_semantics<parallel>, #tpu.dimension_semantics<arbitrary>], iteration_bounds = array<i64: 1, 1, 1>, scalar_prefetch = 0 : i64, scratch_operands = 1 : i64, tpu.core_type = #tpu.core_type<tc>, window_params = [{transform_indices = @transform_0, window_bounds = array<i64: 128, 128>}, {transform_indices = @transform_1, window_bounds = array<i64: 128, 128>}, {transform_indices = @transform_2, window_bounds = array<i64: 1, 128>}, {transform_indices = @transform_3, window_bounds = array<i64: 128, 128>}]} {
    %c0_i32 = arith.constant 0 : i32
    %0 = arith.cmpi eq, %arg2, %c0_i32 : i32
    %1 = arith.extui %0 : i1 to i32
    %c0_i32_0 = arith.constant 0 : i32
    %2 = arith.cmpi ne, %1, %c0_i32_0 : i32
    scf.if %2 {
      %cst_10 = arith.constant 0.000000e+00 : f32
      %12 = vector.broadcast %cst_10 : f32 to vector<128x128xf32>
      %c0_11 = arith.constant 0 : index
      %c0_12 = arith.constant 0 : index
      %13 = vector.load %arg7[%c0_11, %c0_12] : memref<128x128xf32, #tpu.memory_space<vmem>>, vector<128x128xf32>
      tpu.vector_store %arg7[%c0_11, %c0_12], %12 {strides = array<i32>} : memref<128x128xf32, #tpu.memory_space<vmem>>, vector<128x128xf32>,
    } else {
    }
    %c0 = arith.constant 0 : index
    %c0_1 = arith.constant 0 : index
    %3 = vector.load %arg7[%c0, %c0_1] : memref<128x128xf32, #tpu.memory_space<vmem>>, vector<128x128xf32>
    %c0_2 = arith.constant 0 : index
    %c0_3 = arith.constant 0 : index
    %4 = vector.load %arg3[%c0_2, %c0_3] : memref<128x128xbf16, #tpu.memory_space<vmem>>, vector<128x128xbf16>
    %c0_4 = arith.constant 0 : index
    %c0_5 = arith.constant 0 : index
    %5 = vector.load %arg4[%c0_4, %c0_5] : memref<128x128xbf16, #tpu.memory_space<vmem>>, vector<128x128xbf16>
    %cst = arith.constant dense<0.000000e+00> : vector<128x128xf32>
    %6 = tpu.matmul %4, %5, %cst {dimension_numbers = #tpu.dot_dimension_numbers<[1], [0], [0], [1], [0, 0, 1, 1], [], []>} : vector<128x128xbf16>, vector<128x128xbf16>, vector<128x128xf32> -> vector<128x128xf32>
    %7 = arith.addf %3, %6 : vector<128x128xf32>
    %c0_6 = arith.constant 0 : index
    %c0_7 = arith.constant 0 : index
    %8 = vector.load %arg7[%c0_6, %c0_7] : memref<128x128xf32, #tpu.memory_space<vmem>>, vector<128x128xf32>
    tpu.vector_store %arg7[%c0_6, %c0_7], %7 {strides = array<i32>} : memref<128x128xf32, #tpu.memory_space<vmem>>, vector<128x128xf32>,
    %c0_i32_8 = arith.constant 0 : i32
    %9 = arith.cmpi eq, %arg2, %c0_i32_8 : i32
    %10 = arith.extui %9 : i1 to i32
    %c0_i32_9 = arith.constant 0 : i32
    %11 = arith.cmpi ne, %10, %c0_i32_9 : i32
    scf.if %11 {
      %c0_10 = arith.constant 0 : index
      %c0_11 = arith.constant 0 : index
      %12 = vector.load %arg7[%c0_10, %c0_11] : memref<128x128xf32, #tpu.memory_space<vmem>>, vector<128x128xf32>
      %c0_12 = arith.constant 0 : index
      %c0_13 = arith.constant 0 : index
      %13 = vector.load %arg5[%c0_12, %c0_13] : memref<1x128xf32, #tpu.memory_space<vmem>>, vector<1x128xf32>
      %14 = vector.broadcast %13 : vector<1x128xf32> to vector<128x128xf32>
      %15 = arith.addf %12, %14 : vector<128x128xf32>
      %cst_14 = arith.constant 0.000000e+00 : f32
      %16 = vector.broadcast %cst_14 : f32 to vector<128x128xf32>
      %17 = arith.cmpf oge, %15, %16 : vector<128x128xf32>
      %cst_15 = arith.constant 1.000000e-01 : f32
      %18 = vector.broadcast %cst_15 : f32 to vector<128x128xf32>
      %19 = arith.mulf %18, %15 : vector<128x128xf32>
      %20 = arith.select %17, %15, %19 : vector<128x128xi1>, vector<128x128xf32>
      %21 = arith.truncf %20 : vector<128x128xf32> to vector<128x128xbf16>
      %c0_16 = arith.constant 0 : index
      %c0_17 = arith.constant 0 : index
      %22 = vector.load %arg6[%c0_16, %c0_17] : memref<128x128xbf16, #tpu.memory_space<vmem>>, vector<128x128xbf16>
      tpu.vector_store %arg6[%c0_16, %c0_17], %21 {strides = array<i32>} : memref<128x128xbf16, #tpu.memory_space<vmem>>, vector<128x128xbf16>,
    } else {
    }
    return
  }
  func.func @transform_0(%arg0: i32, %arg1: i32, %arg2: i32) -> (i32, i32) {
    %c0_i32 = arith.constant 0 : i32
    return %arg0, %arg2 : i32, i32
  }
  func.func @transform_1(%arg0: i32, %arg1: i32, %arg2: i32) -> (i32, i32) {
    %c0_i32 = arith.constant 0 : i32
    return %arg2, %arg1 : i32, i32
  }
  func.func @transform_2(%arg0: i32, %arg1: i32, %arg2: i32) -> (i32, i32) {
    %c0_i32 = arith.constant 0 : i32
    %c0_i32_0 = arith.constant 0 : i32
    return %c0_i32, %arg1 : i32, i32
  }
  func.func @transform_3(%arg0: i32, %arg1: i32, %arg2: i32) -> (i32, i32) {
    %c0_i32 = arith.constant 0 : i32
    return %arg0, %arg1 : i32, i32
  }
}

module attributes {stable_mosaic.version = 11 : i64} {
  func.func @_conv_matmul_kernel(%arg0: i32, %arg1: i32, %arg2: i32, %arg3: memref<32x256xbf16, #tpu.memory_space<vmem>>, %arg4: memref<256x128xbf16, #tpu.memory_space<vmem>>, %arg5: memref<1x128xf32, #tpu.memory_space<vmem>>, %arg6: memref<32x128xbf16, #tpu.memory_space<vmem>>, %arg7: memref<32x128xf32, #tpu.memory_space<vmem>>) attributes {dimension_semantics = [#tpu.dimension_semantics<parallel>, #tpu.dimension_semantics<parallel>, #tpu.dimension_semantics<arbitrary>], iteration_bounds = array<i64: 1, 1, 1>, scalar_prefetch = 0 : i64, scratch_operands = 1 : i64, tpu.core_type = #tpu.core_type<tc>, window_params = [{transform_indices = @transform_0, window_bounds = array<i64: 32, 256>}, {transform_indices = @transform_1, window_bounds = array<i64: 256, 128>}, {transform_indices = @transform_2, window_bounds = array<i64: 1, 128>}, {transform_indices = @transform_3, window_bounds = array<i64: 32, 128>}]} {
    %c0_i32 = arith.constant 0 : i32
    %0 = arith.cmpi eq, %arg2, %c0_i32 : i32
    %1 = arith.extui %0 : i1 to i32
    %c0_i32_0 = arith.constant 0 : i32
    %2 = arith.cmpi ne, %1, %c0_i32_0 : i32
    scf.if %2 {
      %cst_10 = arith.constant 0.000000e+00 : f32
      %12 = vector.broadcast %cst_10 : f32 to vector<32x128xf32>
      %c0_11 = arith.constant 0 : index
      %c0_12 = arith.constant 0 : index
      %13 = vector.load %arg7[%c0_11, %c0_12] : memref<32x128xf32, #tpu.memory_space<vmem>>, vector<32x128xf32>
      tpu.vector_store %arg7[%c0_11, %c0_12], %12 {strides = array<i32>} : memref<32x128xf32, #tpu.memory_space<vmem>>, vector<32x128xf32>,
    } else {
    }
    %c0 = arith.constant 0 : index
    %c0_1 = arith.constant 0 : index
    %3 = vector.load %arg7[%c0, %c0_1] : memref<32x128xf32, #tpu.memory_space<vmem>>, vector<32x128xf32>
    %c0_2 = arith.constant 0 : index
    %c0_3 = arith.constant 0 : index
    %4 = vector.load %arg3[%c0_2, %c0_3] : memref<32x256xbf16, #tpu.memory_space<vmem>>, vector<32x256xbf16>
    %c0_4 = arith.constant 0 : index
    %c0_5 = arith.constant 0 : index
    %5 = vector.load %arg4[%c0_4, %c0_5] : memref<256x128xbf16, #tpu.memory_space<vmem>>, vector<256x128xbf16>
    %cst = arith.constant dense<0.000000e+00> : vector<32x128xf32>
    %6 = tpu.matmul %4, %5, %cst {dimension_numbers = #tpu.dot_dimension_numbers<[1], [0], [0], [1], [0, 0, 1, 1], [], []>} : vector<32x256xbf16>, vector<256x128xbf16>, vector<32x128xf32> -> vector<32x128xf32>
    %7 = arith.addf %3, %6 : vector<32x128xf32>
    %c0_6 = arith.constant 0 : index
    %c0_7 = arith.constant 0 : index
    %8 = vector.load %arg7[%c0_6, %c0_7] : memref<32x128xf32, #tpu.memory_space<vmem>>, vector<32x128xf32>
    tpu.vector_store %arg7[%c0_6, %c0_7], %7 {strides = array<i32>} : memref<32x128xf32, #tpu.memory_space<vmem>>, vector<32x128xf32>,
    %c0_i32_8 = arith.constant 0 : i32
    %9 = arith.cmpi eq, %arg2, %c0_i32_8 : i32
    %10 = arith.extui %9 : i1 to i32
    %c0_i32_9 = arith.constant 0 : i32
    %11 = arith.cmpi ne, %10, %c0_i32_9 : i32
    scf.if %11 {
      %c0_10 = arith.constant 0 : index
      %c0_11 = arith.constant 0 : index
      %12 = vector.load %arg7[%c0_10, %c0_11] : memref<32x128xf32, #tpu.memory_space<vmem>>, vector<32x128xf32>
      %c0_12 = arith.constant 0 : index
      %c0_13 = arith.constant 0 : index
      %13 = vector.load %arg5[%c0_12, %c0_13] : memref<1x128xf32, #tpu.memory_space<vmem>>, vector<1x128xf32>
      %14 = vector.broadcast %13 : vector<1x128xf32> to vector<32x128xf32>
      %15 = arith.addf %12, %14 : vector<32x128xf32>
      %cst_14 = arith.constant 0.000000e+00 : f32
      %16 = vector.broadcast %cst_14 : f32 to vector<32x128xf32>
      %17 = arith.cmpf oge, %15, %16 : vector<32x128xf32>
      %cst_15 = arith.constant 1.000000e-01 : f32
      %18 = vector.broadcast %cst_15 : f32 to vector<32x128xf32>
      %19 = arith.mulf %18, %15 : vector<32x128xf32>
      %20 = arith.select %17, %15, %19 : vector<32x128xi1>, vector<32x128xf32>
      %21 = arith.truncf %20 : vector<32x128xf32> to vector<32x128xbf16>
      %c0_16 = arith.constant 0 : index
      %c0_17 = arith.constant 0 : index
      %22 = vector.load %arg6[%c0_16, %c0_17] : memref<32x128xbf16, #tpu.memory_space<vmem>>, vector<32x128xbf16>
      tpu.vector_store %arg6[%c0_16, %c0_17], %21 {strides = array<i32>} : memref<32x128xbf16, #tpu.memory_space<vmem>>, vector<32x128xbf16>,
    } else {
    }
    return
  }
  func.func @transform_0(%arg0: i32, %arg1: i32, %arg2: i32) -> (i32, i32) {
    %c0_i32 = arith.constant 0 : i32
    return %arg0, %arg2 : i32, i32
  }
  func.func @transform_1(%arg0: i32, %arg1: i32, %arg2: i32) -> (i32, i32) {
    %c0_i32 = arith.constant 0 : i32
    return %arg2, %arg1 : i32, i32
  }
  func.func @transform_2(%arg0: i32, %arg1: i32, %arg2: i32) -> (i32, i32) {
    %c0_i32 = arith.constant 0 : i32
    %c0_i32_0 = arith.constant 0 : i32
    return %c0_i32, %arg1 : i32, i32
  }
  func.func @transform_3(%arg0: i32, %arg1: i32, %arg2: i32) -> (i32, i32) {
    %c0_i32 = arith.constant 0 : i32
    return %arg0, %arg1 : i32, i32
  }
}

module attributes {stable_mosaic.version = 11 : i64} {
  func.func @_conv_matmul_kernel(%arg0: i32, %arg1: i32, %arg2: i32, %arg3: memref<8x128xbf16, #tpu.memory_space<vmem>>, %arg4: memref<128x128xbf16, #tpu.memory_space<vmem>>, %arg5: memref<1x128xf32, #tpu.memory_space<vmem>>, %arg6: memref<8x128xbf16, #tpu.memory_space<vmem>>, %arg7: memref<8x128xf32, #tpu.memory_space<vmem>>) attributes {dimension_semantics = [#tpu.dimension_semantics<parallel>, #tpu.dimension_semantics<parallel>, #tpu.dimension_semantics<arbitrary>], iteration_bounds = array<i64: 1, 1, 7>, scalar_prefetch = 0 : i64, scratch_operands = 1 : i64, tpu.core_type = #tpu.core_type<tc>, window_params = [{transform_indices = @transform_0, window_bounds = array<i64: 8, 128>}, {transform_indices = @transform_1, window_bounds = array<i64: 128, 128>}, {transform_indices = @transform_2, window_bounds = array<i64: 1, 128>}, {transform_indices = @transform_3, window_bounds = array<i64: 8, 128>}]} {
    %c0_i32 = arith.constant 0 : i32
    %0 = arith.cmpi eq, %arg2, %c0_i32 : i32
    %1 = arith.extui %0 : i1 to i32
    %c0_i32_0 = arith.constant 0 : i32
    %2 = arith.cmpi ne, %1, %c0_i32_0 : i32
    scf.if %2 {
      %cst_9 = arith.constant 0.000000e+00 : f32
      %12 = vector.broadcast %cst_9 : f32 to vector<8x128xf32>
      %c0_10 = arith.constant 0 : index
      %c0_11 = arith.constant 0 : index
      %13 = vector.load %arg7[%c0_10, %c0_11] : memref<8x128xf32, #tpu.memory_space<vmem>>, vector<8x128xf32>
      tpu.vector_store %arg7[%c0_10, %c0_11], %12 {strides = array<i32>} : memref<8x128xf32, #tpu.memory_space<vmem>>, vector<8x128xf32>,
    } else {
    }
    %c0 = arith.constant 0 : index
    %c0_1 = arith.constant 0 : index
    %3 = vector.load %arg7[%c0, %c0_1] : memref<8x128xf32, #tpu.memory_space<vmem>>, vector<8x128xf32>
    %c0_2 = arith.constant 0 : index
    %c0_3 = arith.constant 0 : index
    %4 = vector.load %arg3[%c0_2, %c0_3] : memref<8x128xbf16, #tpu.memory_space<vmem>>, vector<8x128xbf16>
    %c0_4 = arith.constant 0 : index
    %c0_5 = arith.constant 0 : index
    %5 = vector.load %arg4[%c0_4, %c0_5] : memref<128x128xbf16, #tpu.memory_space<vmem>>, vector<128x128xbf16>
    %cst = arith.constant dense<0.000000e+00> : vector<8x128xf32>
    %6 = tpu.matmul %4, %5, %cst {dimension_numbers = #tpu.dot_dimension_numbers<[1], [0], [0], [1], [0, 0, 1, 1], [], []>} : vector<8x128xbf16>, vector<128x128xbf16>, vector<8x128xf32> -> vector<8x128xf32>
    %7 = arith.addf %3, %6 : vector<8x128xf32>
    %c0_6 = arith.constant 0 : index
    %c0_7 = arith.constant 0 : index
    %8 = vector.load %arg7[%c0_6, %c0_7] : memref<8x128xf32, #tpu.memory_space<vmem>>, vector<8x128xf32>
    tpu.vector_store %arg7[%c0_6, %c0_7], %7 {strides = array<i32>} : memref<8x128xf32, #tpu.memory_space<vmem>>, vector<8x128xf32>,
    %c6_i32 = arith.constant 6 : i32
    %9 = arith.cmpi eq, %arg2, %c6_i32 : i32
    %10 = arith.extui %9 : i1 to i32
    %c0_i32_8 = arith.constant 0 : i32
    %11 = arith.cmpi ne, %10, %c0_i32_8 : i32
    scf.if %11 {
      %c0_9 = arith.constant 0 : index
      %c0_10 = arith.constant 0 : index
      %12 = vector.load %arg7[%c0_9, %c0_10] : memref<8x128xf32, #tpu.memory_space<vmem>>, vector<8x128xf32>
      %c0_11 = arith.constant 0 : index
      %c0_12 = arith.constant 0 : index
      %13 = vector.load %arg5[%c0_11, %c0_12] : memref<1x128xf32, #tpu.memory_space<vmem>>, vector<1x128xf32>
      %14 = vector.broadcast %13 : vector<1x128xf32> to vector<8x128xf32>
      %15 = arith.addf %12, %14 : vector<8x128xf32>
      %cst_13 = arith.constant 0.000000e+00 : f32
      %16 = vector.broadcast %cst_13 : f32 to vector<8x128xf32>
      %17 = arith.cmpf oge, %15, %16 : vector<8x128xf32>
      %cst_14 = arith.constant 1.000000e-01 : f32
      %18 = vector.broadcast %cst_14 : f32 to vector<8x128xf32>
      %19 = arith.mulf %18, %15 : vector<8x128xf32>
      %20 = arith.select %17, %15, %19 : vector<8x128xi1>, vector<8x128xf32>
      %21 = arith.truncf %20 : vector<8x128xf32> to vector<8x128xbf16>
      %c0_15 = arith.constant 0 : index
      %c0_16 = arith.constant 0 : index
      %22 = vector.load %arg6[%c0_15, %c0_16] : memref<8x128xbf16, #tpu.memory_space<vmem>>, vector<8x128xbf16>
      tpu.vector_store %arg6[%c0_15, %c0_16], %21 {strides = array<i32>} : memref<8x128xbf16, #tpu.memory_space<vmem>>, vector<8x128xbf16>,
    } else {
    }
    return
  }
  func.func @transform_0(%arg0: i32, %arg1: i32, %arg2: i32) -> (i32, i32) {
    %c0_i32 = arith.constant 0 : i32
    return %arg0, %arg2 : i32, i32
  }
  func.func @transform_1(%arg0: i32, %arg1: i32, %arg2: i32) -> (i32, i32) {
    %c0_i32 = arith.constant 0 : i32
    return %arg2, %arg1 : i32, i32
  }
  func.func @transform_2(%arg0: i32, %arg1: i32, %arg2: i32) -> (i32, i32) {
    %c0_i32 = arith.constant 0 : i32
    %c0_i32_0 = arith.constant 0 : i32
    return %c0_i32, %arg1 : i32, i32
  }
  func.func @transform_3(%arg0: i32, %arg1: i32, %arg2: i32) -> (i32, i32) {
    %c0_i32 = arith.constant 0 : i32
    return %arg0, %arg1 : i32, i32
  }
}

module attributes {stable_mosaic.version = 11 : i64} {
  func.func @_conv_matmul_kernel(%arg0: i32, %arg1: i32, %arg2: i32, %arg3: memref<8x512xbf16, #tpu.memory_space<vmem>>, %arg4: memref<512x128xbf16, #tpu.memory_space<vmem>>, %arg5: memref<1x128xf32, #tpu.memory_space<vmem>>, %arg6: memref<8x128xbf16, #tpu.memory_space<vmem>>, %arg7: memref<8x128xf32, #tpu.memory_space<vmem>>) attributes {dimension_semantics = [#tpu.dimension_semantics<parallel>, #tpu.dimension_semantics<parallel>, #tpu.dimension_semantics<arbitrary>], iteration_bounds = array<i64: 1, 1, 1>, scalar_prefetch = 0 : i64, scratch_operands = 1 : i64, tpu.core_type = #tpu.core_type<tc>, window_params = [{transform_indices = @transform_0, window_bounds = array<i64: 8, 512>}, {transform_indices = @transform_1, window_bounds = array<i64: 512, 128>}, {transform_indices = @transform_2, window_bounds = array<i64: 1, 128>}, {transform_indices = @transform_3, window_bounds = array<i64: 8, 128>}]} {
    %c0_i32 = arith.constant 0 : i32
    %0 = arith.cmpi eq, %arg2, %c0_i32 : i32
    %1 = arith.extui %0 : i1 to i32
    %c0_i32_0 = arith.constant 0 : i32
    %2 = arith.cmpi ne, %1, %c0_i32_0 : i32
    scf.if %2 {
      %cst_10 = arith.constant 0.000000e+00 : f32
      %12 = vector.broadcast %cst_10 : f32 to vector<8x128xf32>
      %c0_11 = arith.constant 0 : index
      %c0_12 = arith.constant 0 : index
      %13 = vector.load %arg7[%c0_11, %c0_12] : memref<8x128xf32, #tpu.memory_space<vmem>>, vector<8x128xf32>
      tpu.vector_store %arg7[%c0_11, %c0_12], %12 {strides = array<i32>} : memref<8x128xf32, #tpu.memory_space<vmem>>, vector<8x128xf32>,
    } else {
    }
    %c0 = arith.constant 0 : index
    %c0_1 = arith.constant 0 : index
    %3 = vector.load %arg7[%c0, %c0_1] : memref<8x128xf32, #tpu.memory_space<vmem>>, vector<8x128xf32>
    %c0_2 = arith.constant 0 : index
    %c0_3 = arith.constant 0 : index
    %4 = vector.load %arg3[%c0_2, %c0_3] : memref<8x512xbf16, #tpu.memory_space<vmem>>, vector<8x512xbf16>
    %c0_4 = arith.constant 0 : index
    %c0_5 = arith.constant 0 : index
    %5 = vector.load %arg4[%c0_4, %c0_5] : memref<512x128xbf16, #tpu.memory_space<vmem>>, vector<512x128xbf16>
    %cst = arith.constant dense<0.000000e+00> : vector<8x128xf32>
    %6 = tpu.matmul %4, %5, %cst {dimension_numbers = #tpu.dot_dimension_numbers<[1], [0], [0], [1], [0, 0, 1, 1], [], []>} : vector<8x512xbf16>, vector<512x128xbf16>, vector<8x128xf32> -> vector<8x128xf32>
    %7 = arith.addf %3, %6 : vector<8x128xf32>
    %c0_6 = arith.constant 0 : index
    %c0_7 = arith.constant 0 : index
    %8 = vector.load %arg7[%c0_6, %c0_7] : memref<8x128xf32, #tpu.memory_space<vmem>>, vector<8x128xf32>
    tpu.vector_store %arg7[%c0_6, %c0_7], %7 {strides = array<i32>} : memref<8x128xf32, #tpu.memory_space<vmem>>, vector<8x128xf32>,
    %c0_i32_8 = arith.constant 0 : i32
    %9 = arith.cmpi eq, %arg2, %c0_i32_8 : i32
    %10 = arith.extui %9 : i1 to i32
    %c0_i32_9 = arith.constant 0 : i32
    %11 = arith.cmpi ne, %10, %c0_i32_9 : i32
    scf.if %11 {
      %c0_10 = arith.constant 0 : index
      %c0_11 = arith.constant 0 : index
      %12 = vector.load %arg7[%c0_10, %c0_11] : memref<8x128xf32, #tpu.memory_space<vmem>>, vector<8x128xf32>
      %c0_12 = arith.constant 0 : index
      %c0_13 = arith.constant 0 : index
      %13 = vector.load %arg5[%c0_12, %c0_13] : memref<1x128xf32, #tpu.memory_space<vmem>>, vector<1x128xf32>
      %14 = vector.broadcast %13 : vector<1x128xf32> to vector<8x128xf32>
      %15 = arith.addf %12, %14 : vector<8x128xf32>
      %cst_14 = arith.constant 0.000000e+00 : f32
      %16 = vector.broadcast %cst_14 : f32 to vector<8x128xf32>
      %17 = arith.cmpf oge, %15, %16 : vector<8x128xf32>
      %cst_15 = arith.constant 1.000000e-01 : f32
      %18 = vector.broadcast %cst_15 : f32 to vector<8x128xf32>
      %19 = arith.mulf %18, %15 : vector<8x128xf32>
      %20 = arith.select %17, %15, %19 : vector<8x128xi1>, vector<8x128xf32>
      %21 = arith.truncf %20 : vector<8x128xf32> to vector<8x128xbf16>
      %c0_16 = arith.constant 0 : index
      %c0_17 = arith.constant 0 : index
      %22 = vector.load %arg6[%c0_16, %c0_17] : memref<8x128xbf16, #tpu.memory_space<vmem>>, vector<8x128xbf16>
      tpu.vector_store %arg6[%c0_16, %c0_17], %21 {strides = array<i32>} : memref<8x128xbf16, #tpu.memory_space<vmem>>, vector<8x128xbf16>,
    } else {
    }
    return
  }
  func.func @transform_0(%arg0: i32, %arg1: i32, %arg2: i32) -> (i32, i32) {
    %c0_i32 = arith.constant 0 : i32
    return %arg0, %arg2 : i32, i32
  }
  func.func @transform_1(%arg0: i32, %arg1: i32, %arg2: i32) -> (i32, i32) {
    %c0_i32 = arith.constant 0 : i32
    return %arg2, %arg1 : i32, i32
  }
  func.func @transform_2(%arg0: i32, %arg1: i32, %arg2: i32) -> (i32, i32) {
    %c0_i32 = arith.constant 0 : i32
    %c0_i32_0 = arith.constant 0 : i32
    return %c0_i32, %arg1 : i32, i32
  }
  func.func @transform_3(%arg0: i32, %arg1: i32, %arg2: i32) -> (i32, i32) {
    %c0_i32 = arith.constant 0 : i32
    return %arg0, %arg1 : i32, i32
  }
}

module attributes {stable_mosaic.version = 11 : i64} {
  func.func @_conv_matmul_kernel(%arg0: i32, %arg1: i32, %arg2: i32, %arg3: memref<8x128xbf16, #tpu.memory_space<vmem>>, %arg4: memref<128x128xbf16, #tpu.memory_space<vmem>>, %arg5: memref<1x128xf32, #tpu.memory_space<vmem>>, %arg6: memref<8x128xbf16, #tpu.memory_space<vmem>>, %arg7: memref<8x128xf32, #tpu.memory_space<vmem>>) attributes {dimension_semantics = [#tpu.dimension_semantics<parallel>, #tpu.dimension_semantics<parallel>, #tpu.dimension_semantics<arbitrary>], iteration_bounds = array<i64: 1, 1, 3>, scalar_prefetch = 0 : i64, scratch_operands = 1 : i64, tpu.core_type = #tpu.core_type<tc>, window_params = [{transform_indices = @transform_0, window_bounds = array<i64: 8, 128>}, {transform_indices = @transform_1, window_bounds = array<i64: 128, 128>}, {transform_indices = @transform_2, window_bounds = array<i64: 1, 128>}, {transform_indices = @transform_3, window_bounds = array<i64: 8, 128>}]} {
    %c0_i32 = arith.constant 0 : i32
    %0 = arith.cmpi eq, %arg2, %c0_i32 : i32
    %1 = arith.extui %0 : i1 to i32
    %c0_i32_0 = arith.constant 0 : i32
    %2 = arith.cmpi ne, %1, %c0_i32_0 : i32
    scf.if %2 {
      %cst_9 = arith.constant 0.000000e+00 : f32
      %12 = vector.broadcast %cst_9 : f32 to vector<8x128xf32>
      %c0_10 = arith.constant 0 : index
      %c0_11 = arith.constant 0 : index
      %13 = vector.load %arg7[%c0_10, %c0_11] : memref<8x128xf32, #tpu.memory_space<vmem>>, vector<8x128xf32>
      tpu.vector_store %arg7[%c0_10, %c0_11], %12 {strides = array<i32>} : memref<8x128xf32, #tpu.memory_space<vmem>>, vector<8x128xf32>,
    } else {
    }
    %c0 = arith.constant 0 : index
    %c0_1 = arith.constant 0 : index
    %3 = vector.load %arg7[%c0, %c0_1] : memref<8x128xf32, #tpu.memory_space<vmem>>, vector<8x128xf32>
    %c0_2 = arith.constant 0 : index
    %c0_3 = arith.constant 0 : index
    %4 = vector.load %arg3[%c0_2, %c0_3] : memref<8x128xbf16, #tpu.memory_space<vmem>>, vector<8x128xbf16>
    %c0_4 = arith.constant 0 : index
    %c0_5 = arith.constant 0 : index
    %5 = vector.load %arg4[%c0_4, %c0_5] : memref<128x128xbf16, #tpu.memory_space<vmem>>, vector<128x128xbf16>
    %cst = arith.constant dense<0.000000e+00> : vector<8x128xf32>
    %6 = tpu.matmul %4, %5, %cst {dimension_numbers = #tpu.dot_dimension_numbers<[1], [0], [0], [1], [0, 0, 1, 1], [], []>} : vector<8x128xbf16>, vector<128x128xbf16>, vector<8x128xf32> -> vector<8x128xf32>
    %7 = arith.addf %3, %6 : vector<8x128xf32>
    %c0_6 = arith.constant 0 : index
    %c0_7 = arith.constant 0 : index
    %8 = vector.load %arg7[%c0_6, %c0_7] : memref<8x128xf32, #tpu.memory_space<vmem>>, vector<8x128xf32>
    tpu.vector_store %arg7[%c0_6, %c0_7], %7 {strides = array<i32>} : memref<8x128xf32, #tpu.memory_space<vmem>>, vector<8x128xf32>,
    %c2_i32 = arith.constant 2 : i32
    %9 = arith.cmpi eq, %arg2, %c2_i32 : i32
    %10 = arith.extui %9 : i1 to i32
    %c0_i32_8 = arith.constant 0 : i32
    %11 = arith.cmpi ne, %10, %c0_i32_8 : i32
    scf.if %11 {
      %c0_9 = arith.constant 0 : index
      %c0_10 = arith.constant 0 : index
      %12 = vector.load %arg7[%c0_9, %c0_10] : memref<8x128xf32, #tpu.memory_space<vmem>>, vector<8x128xf32>
      %c0_11 = arith.constant 0 : index
      %c0_12 = arith.constant 0 : index
      %13 = vector.load %arg5[%c0_11, %c0_12] : memref<1x128xf32, #tpu.memory_space<vmem>>, vector<1x128xf32>
      %14 = vector.broadcast %13 : vector<1x128xf32> to vector<8x128xf32>
      %15 = arith.addf %12, %14 : vector<8x128xf32>
      %cst_13 = arith.constant 0.000000e+00 : f32
      %16 = vector.broadcast %cst_13 : f32 to vector<8x128xf32>
      %17 = arith.cmpf oge, %15, %16 : vector<8x128xf32>
      %cst_14 = arith.constant 2.000000e-01 : f32
      %18 = vector.broadcast %cst_14 : f32 to vector<8x128xf32>
      %19 = arith.mulf %18, %15 : vector<8x128xf32>
      %20 = arith.select %17, %15, %19 : vector<8x128xi1>, vector<8x128xf32>
      %21 = arith.truncf %20 : vector<8x128xf32> to vector<8x128xbf16>
      %c0_15 = arith.constant 0 : index
      %c0_16 = arith.constant 0 : index
      %22 = vector.load %arg6[%c0_15, %c0_16] : memref<8x128xbf16, #tpu.memory_space<vmem>>, vector<8x128xbf16>
      tpu.vector_store %arg6[%c0_15, %c0_16], %21 {strides = array<i32>} : memref<8x128xbf16, #tpu.memory_space<vmem>>, vector<8x128xbf16>,
    } else {
    }
    return
  }
  func.func @transform_0(%arg0: i32, %arg1: i32, %arg2: i32) -> (i32, i32) {
    %c0_i32 = arith.constant 0 : i32
    return %arg0, %arg2 : i32, i32
  }
  func.func @transform_1(%arg0: i32, %arg1: i32, %arg2: i32) -> (i32, i32) {
    %c0_i32 = arith.constant 0 : i32
    return %arg2, %arg1 : i32, i32
  }
  func.func @transform_2(%arg0: i32, %arg1: i32, %arg2: i32) -> (i32, i32) {
    %c0_i32 = arith.constant 0 : i32
    %c0_i32_0 = arith.constant 0 : i32
    return %c0_i32, %arg1 : i32, i32
  }
  func.func @transform_3(%arg0: i32, %arg1: i32, %arg2: i32) -> (i32, i32) {
    %c0_i32 = arith.constant 0 : i32
    return %arg0, %arg1 : i32, i32
  }
}

module attributes {stable_mosaic.version = 11 : i64} {
  func.func @_conv_matmul_kernel(%arg0: i32, %arg1: i32, %arg2: i32, %arg3: memref<8x128xbf16, #tpu.memory_space<vmem>>, %arg4: memref<128x128xbf16, #tpu.memory_space<vmem>>, %arg5: memref<1x128xf32, #tpu.memory_space<vmem>>, %arg6: memref<8x128xbf16, #tpu.memory_space<vmem>>, %arg7: memref<8x128xf32, #tpu.memory_space<vmem>>, %arg8: memref<8x128xf32, #tpu.memory_space<vmem>>) attributes {dimension_semantics = [#tpu.dimension_semantics<parallel>, #tpu.dimension_semantics<parallel>, #tpu.dimension_semantics<arbitrary>], iteration_bounds = array<i64: 1, 1, 3>, scalar_prefetch = 0 : i64, scratch_operands = 1 : i64, tpu.core_type = #tpu.core_type<tc>, window_params = [{transform_indices = @transform_0, window_bounds = array<i64: 8, 128>}, {transform_indices = @transform_1, window_bounds = array<i64: 128, 128>}, {transform_indices = @transform_2, window_bounds = array<i64: 1, 128>}, {transform_indices = @transform_3, window_bounds = array<i64: 8, 128>}, {transform_indices = @transform_4, window_bounds = array<i64: 8, 128>}]} {
    %c0_i32 = arith.constant 0 : i32
    %0 = arith.cmpi eq, %arg2, %c0_i32 : i32
    %1 = arith.extui %0 : i1 to i32
    %c0_i32_0 = arith.constant 0 : i32
    %2 = arith.cmpi ne, %1, %c0_i32_0 : i32
    scf.if %2 {
      %cst_9 = arith.constant 0.000000e+00 : f32
      %12 = vector.broadcast %cst_9 : f32 to vector<8x128xf32>
      %c0_10 = arith.constant 0 : index
      %c0_11 = arith.constant 0 : index
      %13 = vector.load %arg8[%c0_10, %c0_11] : memref<8x128xf32, #tpu.memory_space<vmem>>, vector<8x128xf32>
      tpu.vector_store %arg8[%c0_10, %c0_11], %12 {strides = array<i32>} : memref<8x128xf32, #tpu.memory_space<vmem>>, vector<8x128xf32>,
    } else {
    }
    %c0 = arith.constant 0 : index
    %c0_1 = arith.constant 0 : index
    %3 = vector.load %arg8[%c0, %c0_1] : memref<8x128xf32, #tpu.memory_space<vmem>>, vector<8x128xf32>
    %c0_2 = arith.constant 0 : index
    %c0_3 = arith.constant 0 : index
    %4 = vector.load %arg3[%c0_2, %c0_3] : memref<8x128xbf16, #tpu.memory_space<vmem>>, vector<8x128xbf16>
    %c0_4 = arith.constant 0 : index
    %c0_5 = arith.constant 0 : index
    %5 = vector.load %arg4[%c0_4, %c0_5] : memref<128x128xbf16, #tpu.memory_space<vmem>>, vector<128x128xbf16>
    %cst = arith.constant dense<0.000000e+00> : vector<8x128xf32>
    %6 = tpu.matmul %4, %5, %cst {dimension_numbers = #tpu.dot_dimension_numbers<[1], [0], [0], [1], [0, 0, 1, 1], [], []>} : vector<8x128xbf16>, vector<128x128xbf16>, vector<8x128xf32> -> vector<8x128xf32>
    %7 = arith.addf %3, %6 : vector<8x128xf32>
    %c0_6 = arith.constant 0 : index
    %c0_7 = arith.constant 0 : index
    %8 = vector.load %arg8[%c0_6, %c0_7] : memref<8x128xf32, #tpu.memory_space<vmem>>, vector<8x128xf32>
    tpu.vector_store %arg8[%c0_6, %c0_7], %7 {strides = array<i32>} : memref<8x128xf32, #tpu.memory_space<vmem>>, vector<8x128xf32>,
    %c2_i32 = arith.constant 2 : i32
    %9 = arith.cmpi eq, %arg2, %c2_i32 : i32
    %10 = arith.extui %9 : i1 to i32
    %c0_i32_8 = arith.constant 0 : i32
    %11 = arith.cmpi ne, %10, %c0_i32_8 : i32
    scf.if %11 {
      %c0_9 = arith.constant 0 : index
      %c0_10 = arith.constant 0 : index
      %12 = vector.load %arg8[%c0_9, %c0_10] : memref<8x128xf32, #tpu.memory_space<vmem>>, vector<8x128xf32>
      %c0_11 = arith.constant 0 : index
      %c0_12 = arith.constant 0 : index
      %13 = vector.load %arg5[%c0_11, %c0_12] : memref<1x128xf32, #tpu.memory_space<vmem>>, vector<1x128xf32>
      %14 = vector.broadcast %13 : vector<1x128xf32> to vector<8x128xf32>
      %15 = arith.addf %12, %14 : vector<8x128xf32>
      %c0_13 = arith.constant 0 : index
      %c0_14 = arith.constant 0 : index
      %16 = vector.load %arg6[%c0_13, %c0_14] : memref<8x128xbf16, #tpu.memory_space<vmem>>, vector<8x128xbf16>
      %17 = arith.extf %16 : vector<8x128xbf16> to vector<8x128xf32>
      %18 = arith.addf %15, %17 : vector<8x128xf32>
      %cst_15 = arith.constant 0.000000e+00 : f32
      %19 = vector.broadcast %cst_15 : f32 to vector<8x128xf32>
      %20 = arith.cmpf oge, %18, %19 : vector<8x128xf32>
      %cst_16 = arith.constant 2.000000e-01 : f32
      %21 = vector.broadcast %cst_16 : f32 to vector<8x128xf32>
      %22 = arith.mulf %21, %18 : vector<8x128xf32>
      %23 = arith.select %20, %18, %22 : vector<8x128xi1>, vector<8x128xf32>
      %24 = arith.mulf %23, %23 : vector<8x128xf32>
      %cst_17 = arith.constant dense<0.000000e+00> : vector<8xf32>
      %25 = vector.multi_reduction <add>, %24, %cst_17 [1] : vector<8x128xf32> to vector<8xf32>
      %26 = vector.shape_cast %25 : vector<8xf32> to vector<8x1xf32>
      %cst_18 = arith.constant 3.125000e-02 : f32
      %27 = vector.broadcast %cst_18 : f32 to vector<8x1xf32>
      %28 = arith.mulf %26, %27 : vector<8x1xf32>
      %cst_19 = arith.constant 9.99999997E-7 : f32
      %29 = vector.broadcast %cst_19 : f32 to vector<8x1xf32>
      %30 = arith.addf %28, %29 : vector<8x1xf32>
      %31 = math.rsqrt %30 : vector<8x1xf32>
      %32 = vector.broadcast %31 : vector<8x1xf32> to vector<8x128xf32>
      %33 = arith.mulf %23, %32 : vector<8x128xf32>
      %c0_20 = arith.constant 0 : index
      %c0_21 = arith.constant 0 : index
      %34 = vector.load %arg7[%c0_20, %c0_21] : memref<8x128xf32, #tpu.memory_space<vmem>>, vector<8x128xf32>
      tpu.vector_store %arg7[%c0_20, %c0_21], %33 {strides = array<i32>} : memref<8x128xf32, #tpu.memory_space<vmem>>, vector<8x128xf32>,
    } else {
    }
    return
  }
  func.func @transform_0(%arg0: i32, %arg1: i32, %arg2: i32) -> (i32, i32) {
    %c0_i32 = arith.constant 0 : i32
    return %arg0, %arg2 : i32, i32
  }
  func.func @transform_1(%arg0: i32, %arg1: i32, %arg2: i32) -> (i32, i32) {
    %c0_i32 = arith.constant 0 : i32
    return %arg2, %arg1 : i32, i32
  }
  func.func @transform_2(%arg0: i32, %arg1: i32, %arg2: i32) -> (i32, i32) {
    %c0_i32 = arith.constant 0 : i32
    %c0_i32_0 = arith.constant 0 : i32
    return %c0_i32, %arg1 : i32, i32
  }
  func.func @transform_3(%arg0: i32, %arg1: i32, %arg2: i32) -> (i32, i32) {
    %c0_i32 = arith.constant 0 : i32
    return %arg0, %arg1 : i32, i32
  }
  func.func @transform_4(%arg0: i32, %arg1: i32, %arg2: i32) -> (i32, i32) {
    %c0_i32 = arith.constant 0 : i32
    return %arg0, %arg1 : i32, i32
  }
}

</mosaic_0001>

<llo_original>
// kernel: encoder_forward.9
$region0: #{encoder_forward.9}
  #allocation0 [shape = 'u32[]', space=smem, size = 0x4, offset = 0x4, fixed_abs, tag = 'smem constant byte address 0x4 - core index']
  #allocation1 [shape = 'u32[144,128]{1,0:T(1,128)}', space=vmem, size = 0x12000, scoped, tag = 'internal scratch']
  #allocation2 [shape = 'f32[256,128]{1,0:T(8,128)}', space=vmem, size = 0x20000, scoped, tag = 'scratch operand']
  %s0 = inlined_call_operand.vmem [shape: bf16[512,128], index: 0, kind: input, shape index: {}]
  %s1 = inlined_call_operand.vmem [shape: bf16[128,128], index: 1, kind: input, shape index: {}]
  %s2 = inlined_call_operand.vmem [shape: f32[1,128], index: 2, kind: input, shape index: {}]
  %s3 = inlined_call_operand.vmem [shape: bf16[512,128], index: 3, kind: output, shape index: {}]
  %s4 = sld [smem:[#allocation0]]
  $region53: #{encoder_forward.9} parent=0
    _
  %s6 = ssub.s32 1, %s4
  %s7 = scalar_select 0, %s6, %s4
  loop: start=0, step=1, limit=4
  $region2: #{encoder_forward.9} parent=0 // loop_pre_header
    _
  $region3: #{encoder_forward.9} parent=0 // loop_header
    %s9 = sphi 0, %s13
    %p10 = scmp.ge.s32.totalorder %s9, 4
    %s16 = sphi 0, %s35
    %s17 = sphi 0, %s31
    %s18 = sphi 0, %s27
    %s19 = sphi 0, %s16
    %s20 = sphi 0, %s17
    %s21 = sphi 0, %s18
    %s22 = sphi 0, %s19
    %s23 = sphi 0, %s20
    %s24 = sphi 0, %s21
    %s40 = sphi 0, %s42
    %s43 = sphi 0, %s40
    %s44 = sphi 0, %s43
    %s60 = sphi 0, %s44
    %s68 = sphi 0, %s70
    %s71 = sphi 0, %s68
    %s72 = sphi 0, %s71
    %s88 = sphi 0, %s72
    %s94 = sphi 0, %s96
    %s97 = sphi 0, %s94
    %s98 = sphi 0, %s97
    %s114 = sphi 0, %s98
    %s122 = sphi 0, %s124
    %s125 = sphi 0, %s122
    %s126 = sphi 0, %s125
    %s142 = sphi 0, %s126
  $region4: #{encoder_forward.9} parent=0 // loop_header_branch
    %12 = sbr.rel (%p10) target = $region8
  $region5: #{encoder_forward.9} parent=0 // loop_body
    %s14 = ssub.s32 %s9, 1
    %s15 = ssub.s32 %s9, 2
    %s25 = sadd.s32 1, %s18
    %p26 = scmp.ge.s32.totalorder %s25, 1
    %s27 = scalar_select %p26, 0, %s25
    %s28 = sadd.s32 1, %s17
    %s29 = scalar_select %p26, %s28, %s17
    %p30 = scmp.ge.s32.totalorder %s29, 1
    %s31 = scalar_select %p30, 0, %s29
    %s32 = sadd.s32 1, %s16
    %s33 = scalar_select %p30, %s32, %s16
    %p34 = scmp.ge.s32.totalorder %s33, 2
    %s35 = scalar_select %p34, 0, %s33
    %s36 = ssub.s32 %s16, %s35
    %s37 = ssub.s32 %s18, %s27
    %s38 = sor.u32 %s36, %s37
    %p39 = scmp.eq.s32.totalorder %s38, 0
    %s41 = sadd.s32 %s40, 1
    %s42 = scalar_select %p39, %s40, %s41
    %p45 = pneg %p39
    %p46 = scmp.eq.s32.totalorder %s9, 1
    %p47 = por %p45, %p46
    %p48 = scmp.ne.s32.totalorder %s40, %s43
    %p49 = scmp.eq.s32.totalorder %s9, 0
    %p50 = por %p48, %p49
    %p51 = scmp.ne.s32.totalorder %s40, %s43
    %p52 = scmp.eq.s32.totalorder %s14, 1
    %p53 = por %p51, %p52
    %p54 = scmp.ne.s32.totalorder %s43, %s44
    %p55 = scmp.eq.s32.totalorder %s14, 0
    %p56 = por %p54, %p55
    %p57 = scmp.ne.s32.totalorder %s43, %s44
    %p58 = scmp.eq.s32.totalorder %s15, 1
    %p59 = por %p57, %p58
    %p61 = scmp.ne.s32.totalorder %s44, %s60
    %p62 = scmp.eq.s32.totalorder %s15, 0
    %p63 = por %p61, %p62
    %s64 = ssub.s32 %s18, %s27
    %s65 = ssub.s32 %s17, %s31
    %s66 = sor.u32 %s64, %s65
    %p67 = scmp.eq.s32.totalorder %s66, 0
    %s69 = sadd.s32 %s68, 1
    %s70 = scalar_select %p67, %s68, %s69
    %p73 = pneg %p67
    %p74 = scmp.eq.s32.totalorder %s9, 1
    %p75 = por %p73, %p74
    %p76 = scmp.ne.s32.totalorder %s68, %s71
    %p77 = scmp.eq.s32.totalorder %s9, 0
    %p78 = por %p76, %p77
    %p79 = scmp.ne.s32.totalorder %s68, %s71
    %p80 = scmp.eq.s32.totalorder %s14, 1
    %p81 = por %p79, %p80
    %p82 = scmp.ne.s32.totalorder %s71, %s72
    %p83 = scmp.eq.s32.totalorder %s14, 0
    %p84 = por %p82, %p83
    %p85 = scmp.ne.s32.totalorder %s71, %s72
    %p86 = scmp.eq.s32.totalorder %s15, 1
    %p87 = por %p85, %p86
    %p89 = scmp.ne.s32.totalorder %s72, %s88
    %p90 = scmp.eq.s32.totalorder %s15, 0
    %p91 = por %p89, %p90
    %s92 = ssub.s32 %s17, %s31
    %p93 = scmp.eq.s32.totalorder %s92, 0
    %s95 = sadd.s32 %s94, 1
    %s96 = scalar_select %p93, %s94, %s95
    %p99 = pneg %p93
    %p100 = scmp.eq.s32.totalorder %s9, 1
    %p101 = por %p99, %p100
    %p102 = scmp.ne.s32.totalorder %s94, %s97
    %p103 = scmp.eq.s32.totalorder %s9, 0
    %p104 = por %p102, %p103
    %p105 = scmp.ne.s32.totalorder %s94, %s97
    %p106 = scmp.eq.s32.totalorder %s14, 1
    %p107 = por %p105, %p106
    %p108 = scmp.ne.s32.totalorder %s97, %s98
    %p109 = scmp.eq.s32.totalorder %s14, 0
    %p110 = por %p108, %p109
    %p111 = scmp.ne.s32.totalorder %s97, %s98
    %p112 = scmp.eq.s32.totalorder %s15, 1
    %p113 = por %p111, %p112
    %p115 = scmp.ne.s32.totalorder %s98, %s114
    %p116 = scmp.eq.s32.totalorder %s15, 0
    %p117 = por %p115, %p116
    %s118 = ssub.s32 %s16, %s35
    %s119 = ssub.s32 %s17, %s31
    %s120 = sor.u32 %s118, %s119
    %p121 = scmp.eq.s32.totalorder %s120, 0
    %s123 = sadd.s32 %s122, 1
    %s124 = scalar_select %p121, %s122, %s123
    %p127 = pneg %p121
    %p128 = scmp.eq.s32.totalorder %s9, 1
    %p129 = por %p127, %p128
    %p130 = scmp.ne.s32.totalorder %s122, %s125
    %p131 = scmp.eq.s32.totalorder %s9, 0
    %p132 = por %p130, %p131
    %p133 = scmp.ne.s32.totalorder %s122, %s125
    %p134 = scmp.eq.s32.totalorder %s14, 1
    %p135 = por %p133, %p134
    %p136 = scmp.ne.s32.totalorder %s125, %s126
    %p137 = scmp.eq.s32.totalorder %s14, 0
    %p138 = por %p136, %p137
    %p139 = scmp.ne.s32.totalorder %s125, %s126
    %p140 = scmp.eq.s32.totalorder %s15, 1
    %p141 = por %p139, %p140
    %p143 = scmp.ne.s32.totalorder %s126, %s142
    %p144 = scmp.eq.s32.totalorder %s15, 0
    %p145 = por %p143, %p144
    %p146 = scmp.le.s32.totalorder 1, %s9
    %p147 = scmp.lt.s32.totalorder %s9, 3
    %p148 = pnand %p146, %p147
    %p149 = pneg %p148
    // Predicated region
    $region9: #{encoder_forward.9} parent=5 // pred_check
      _
    $region10: #{encoder_forward.9} parent=5 // pred_check_branch
      %151 = sbr.rel (%p148) target = $region12
    $region11: #{encoder_forward.9} parent=5 // pred_region
      %s152 = ssub.s32 %s9, 1
      // Predicated region
      $region13: #{encoder_forward.9} parent=11 // pred_check
        %p153 = pneg %p84
      $region14: #{encoder_forward.9} parent=11 // pred_check_branch
        %155 = sbr.rel (%p153) target = $region16
      $region15: #{encoder_forward.9} parent=11 // pred_region
        %s156 = smul.u32 16, %s21
        %p157 = scmp.lt.s32.totalorder %s156, 15
        %s158 = scalar_select %p157, %s156, 15
        %p159 = scmp.lt.s32.totalorder %s20, 0
        %s160 = scalar_select %p159, %s20, 0
        %s161 = sadd.s32 %s160, %s158
        %s162 = smul.addr %s161, 4
        %s163 = scalar_lea.vmem %s1, %s162
        %s164 = smul.u32 16, %s21
      $region16: #{encoder_forward.9} parent=11 // pred_fallthru
        _
      // Predicated region
      $region17: #{encoder_forward.9} parent=11 // pred_check
        %p165 = pneg %p110
      $region18: #{encoder_forward.9} parent=11 // pred_check_branch
        %167 = sbr.rel (%p165) target = $region20
      $region19: #{encoder_forward.9} parent=11 // pred_region
        %p168 = scmp.lt.s32.totalorder %s20, 0
        %s169 = scalar_select %p168, %s20, 0
        %s170 = scalar_lea.vmem %s2, %s169
      $region20: #{encoder_forward.9} parent=11 // pred_fallthru
        _
    $region12: #{encoder_forward.9} parent=5 // pred_fallthru
      _
    %p171 = scmp.lt.s32.totalorder %s9, 2
    // Predicated region
    $region21: #{encoder_forward.9} parent=5 // pred_check
      %p172 = pneg %p171
    $region22: #{encoder_forward.9} parent=5 // pred_check_branch
      %174 = sbr.rel (%p172) target = $region24
    $region23: #{encoder_forward.9} parent=5 // pred_region
      // Predicated region
      $region25: #{encoder_forward.9} parent=23 // pred_check
        %p175 = pneg %p50
      $region26: #{encoder_forward.9} parent=23 // pred_check_branch
        %177 = sbr.rel (%p175) target = $region28
      $region27: #{encoder_forward.9} parent=23 // pred_region
        %s178 = smul.u32 32, %s16
        %p179 = scmp.lt.s32.totalorder %s178, 63
        %s180 = scalar_select %p179, %s178, 63
        %p181 = scmp.lt.s32.totalorder %s18, 0
        %s182 = scalar_select %p181, %s18, 0
        %s183 = sadd.s32 %s182, %s180
        %s184 = smul.addr %s183, 4
        %s185 = scalar_lea.vmem %s0, %s184
        %s186 = smul.u32 32, %s16
      $region28: #{encoder_forward.9} parent=23 // pred_fallthru
        _
    $region24: #{encoder_forward.9} parent=5 // pred_fallthru
      _
    %p187 = scmp.le.s32.totalorder 1, %s9
    %p188 = scmp.lt.s32.totalorder %s9, 3
    %p189 = pnand %p187, %p188
    %p190 = pneg %p189
    // Predicated region
    $region29: #{encoder_forward.9} parent=5 // pred_check
      _
    $region30: #{encoder_forward.9} parent=5 // pred_check_branch
      %192 = sbr.rel (%p189) target = $region32
    $region31: #{encoder_forward.9} parent=5 // pred_region
      %s193 = ssub.s32 %s9, 1
      %s194 = smul.u32 32, %s19
      %p195 = scmp.lt.s32.totalorder %s194, 63
      %s196 = scalar_select %p195, %s194, 63
      %p197 = scmp.lt.s32.totalorder %s21, 0
      %s198 = scalar_select %p197, %s21, 0
      %s199 = sadd.s32 %s198, %s196
      %s200 = smul.addr %s199, 4
      %s201 = scalar_lea.vmem %s0, %s200
      %p202 = pneg %p56
      %p203 = pneg %p53
      %s204 = smul.u32 16, %s21
      %p205 = scmp.lt.s32.totalorder %s204, 15
      %s206 = scalar_select %p205, %s204, 15
      %p207 = scmp.lt.s32.totalorder %s20, 0
      %s208 = scalar_select %p207, %s20, 0
      %s209 = sadd.s32 %s208, %s206
      %s210 = smul.addr %s209, 4
      %s211 = scalar_lea.vmem %s1, %s210
      %p212 = pneg %p84
      %p213 = pneg %p81
      %p214 = scmp.lt.s32.totalorder %s20, 0
      %s215 = scalar_select %p214, %s20, 0
      %s216 = scalar_lea.vmem %s2, %s215
      %p217 = pneg %p110
      %p218 = pneg %p107
      %p219 = pneg %p138
      %p220 = pneg %p135
      %s221 = smul.u32 32, %s19
      %p222 = scmp.lt.s32.totalorder %s221, 63
      %s223 = scalar_select %p222, %s221, 63
      %p224 = scmp.lt.s32.totalorder %s20, 0
      %s225 = scalar_select %p224, %s20, 0
      %s226 = sadd.s32 %s225, %s223
      %s227 = smul.addr %s226, 4
      %s228 = scalar_lea.vmem %s3, %s227
      %s229 = smul.u32 32, %s19
      %p230 = scmp.lt.s32.totalorder %s229, 63
      %s231 = scalar_select %p230, %s229, 63
      %p232 = scmp.lt.s32.totalorder %s21, 0
      %s233 = scalar_select %p232, %s21, 0
      %s234 = sadd.s32 %s233, %s231
      %s235 = smul.addr %s234, 4
      %s236 = scalar_lea.vmem %s0, %s235
      %s237 = smul.u32 32, %s19
      %s238 = smul.u32 16, %s21
      %p239 = scmp.lt.s32.totalorder %s238, 15
      %s240 = scalar_select %p239, %s238, 15
      %p241 = scmp.lt.s32.totalorder %s20, 0
      %s242 = scalar_select %p241, %s20, 0
      %s243 = sadd.s32 %s242, %s240
      %s244 = smul.addr %s243, 4
      %s245 = scalar_lea.vmem %s1, %s244
      %s246 = smul.u32 16, %s21
      %p247 = scmp.lt.s32.totalorder %s20, 0
      %s248 = scalar_select %p247, %s20, 0
      %s249 = scalar_lea.vmem %s2, %s248
      %s250 = smul.u32 32, %s19
      %p251 = scmp.lt.s32.totalorder %s250, 63
      %s252 = scalar_select %p251, %s250, 63
      %p253 = scmp.lt.s32.totalorder %s20, 0
      %s254 = scalar_select %p253, %s20, 0
      %s255 = sadd.s32 %s254, %s252
      %s256 = smul.addr %s255, 4
      %s257 = scalar_lea.vmem %s3, %s256
      %s258 = smul.u32 32, %s19
      %p260 = scmp.eq.s32.totalorder %s21, 0
      // Predicated region
      $region33: #{encoder_forward.9} parent=31 // pred_check
        %p261 = pneg %p260
      $region34: #{encoder_forward.9} parent=31 // pred_check_branch
        %263 = sbr.rel (%p261) target = $region36
      $region35: #{encoder_forward.9} parent=31 // pred_region
        %264 = vst [vmem:[#allocation2] sm:$0xff] 0.0
        %265 = vst [vmem:[#allocation2 + $0x8] sm:$0xff] 0.0
        %266 = vst [vmem:[#allocation2 + $0x10] sm:$0xff] 0.0
        %267 = vst [vmem:[#allocation2 + $0x18] sm:$0xff] 0.0
        %268 = vst [vmem:[#allocation2 + $0x20] sm:$0xff] 0.0
        %269 = vst [vmem:[#allocation2 + $0x28] sm:$0xff] 0.0
        %270 = vst [vmem:[#allocation2 + $0x30] sm:$0xff] 0.0
        %271 = vst [vmem:[#allocation2 + $0x38] sm:$0xff] 0.0
        %272 = vst [vmem:[#allocation2 + $0x40] sm:$0xff] 0.0
        %273 = vst [vmem:[#allocation2 + $0x48] sm:$0xff] 0.0
        %274 = vst [vmem:[#allocation2 + $0x50] sm:$0xff] 0.0
        %275 = vst [vmem:[#allocation2 + $0x58] sm:$0xff] 0.0
        %276 = vst [vmem:[#allocation2 + $0x60] sm:$0xff] 0.0
        %277 = vst [vmem:[#allocation2 + $0x68] sm:$0xff] 0.0
        %278 = vst [vmem:[#allocation2 + $0x70] sm:$0xff] 0.0
        %279 = vst [vmem:[#allocation2 + $0x78] sm:$0xff] 0.0
        %280 = vst [vmem:[#allocation2 + $0x80] sm:$0xff] 0.0
        %281 = vst [vmem:[#allocation2 + $0x88] sm:$0xff] 0.0
        %282 = vst [vmem:[#allocation2 + $0x90] sm:$0xff] 0.0
        %283 = vst [vmem:[#allocation2 + $0x98] sm:$0xff] 0.0
        %284 = vst [vmem:[#allocation2 + $0xa0] sm:$0xff] 0.0
        %285 = vst [vmem:[#allocation2 + $0xa8] sm:$0xff] 0.0
        %286 = vst [vmem:[#allocation2 + $0xb0] sm:$0xff] 0.0
        %287 = vst [vmem:[#allocation2 + $0xb8] sm:$0xff] 0.0
        %288 = vst [vmem:[#allocation2 + $0xc0] sm:$0xff] 0.0
        %289 = vst [vmem:[#allocation2 + $0xc8] sm:$0xff] 0.0
        %290 = vst [vmem:[#allocation2 + $0xd0] sm:$0xff] 0.0
        %291 = vst [vmem:[#allocation2 + $0xd8] sm:$0xff] 0.0
        %292 = vst [vmem:[#allocation2 + $0xe0] sm:$0xff] 0.0
        %293 = vst [vmem:[#allocation2 + $0xe8] sm:$0xff] 0.0
        %294 = vst [vmem:[#allocation2 + $0xf0] sm:$0xff] 0.0
        %295 = vst [vmem:[#allocation2 + $0xf8] sm:$0xff] 0.0
      $region36: #{encoder_forward.9} parent=31 // pred_fallthru
        _
      %v296 = vld [vmem:[#allocation2] sm:$0xff]
      %v297 = vld [vmem:[#allocation2 + $0x8] sm:$0xff]
      %v298 = vld [vmem:[#allocation2 + $0x10] sm:$0xff]
      %v299 = vld [vmem:[#allocation2 + $0x18] sm:$0xff]
      %v300 = vld [vmem:[#allocation2 + $0x20] sm:$0xff]
      %v301 = vld [vmem:[#allocation2 + $0x28] sm:$0xff]
      %v302 = vld [vmem:[#allocation2 + $0x30] sm:$0xff]
      %v303 = vld [vmem:[#allocation2 + $0x38] sm:$0xff]
      %v304 = vld [vmem:[#allocation2 + $0x40] sm:$0xff]
      %v305 = vld [vmem:[#allocation2 + $0x48] sm:$0xff]
      %v306 = vld [vmem:[#allocation2 + $0x50] sm:$0xff]
      %v307 = vld [vmem:[#allocation2 + $0x58] sm:$0xff]
      %v308 = vld [vmem:[#allocation2 + $0x60] sm:$0xff]
      %v309 = vld [vmem:[#allocation2 + $0x68] sm:$0xff]
      %v310 = vld [vmem:[#allocation2 + $0x70] sm:$0xff]
      %v311 = vld [vmem:[#allocation2 + $0x78] sm:$0xff]
      %v312 = vld [vmem:[#allocation2 + $0x80] sm:$0xff]
      %v313 = vld [vmem:[#allocation2 + $0x88] sm:$0xff]
      %v314 = vld [vmem:[#allocation2 + $0x90] sm:$0xff]
      %v315 = vld [vmem:[#allocation2 + $0x98] sm:$0xff]
      %v316 = vld [vmem:[#allocation2 + $0xa0] sm:$0xff]
      %v317 = vld [vmem:[#allocation2 + $0xa8] sm:$0xff]
      %v318 = vld [vmem:[#allocation2 + $0xb0] sm:$0xff]
      %v319 = vld [vmem:[#allocation2 + $0xb8] sm:$0xff]
      %v320 = vld [vmem:[#allocation2 + $0xc0] sm:$0xff]
      %v321 = vld [vmem:[#allocation2 + $0xc8] sm:$0xff]
      %v322 = vld [vmem:[#allocation2 + $0xd0] sm:$0xff]
      %v323 = vld [vmem:[#allocation2 + $0xd8] sm:$0xff]
      %v324 = vld [vmem:[#allocation2 + $0xe0] sm:$0xff]
      %v325 = vld [vmem:[#allocation2 + $0xe8] sm:$0xff]
      %v326 = vld [vmem:[#allocation2 + $0xf0] sm:$0xff]
      %v327 = vld [vmem:[#allocation2 + $0xf8] sm:$0xff]
      %v328 = vld [vmem:[%s236] sm:$0xf]
      %v329 = vld [vmem:[%s236 + $0x4] sm:$0xf]
      %v330 = vld [vmem:[%s236 + $0x8] sm:$0xf]
      %v331 = vld [vmem:[%s236 + $0xc] sm:$0xf]
      %v332 = vld [vmem:[%s236 + $0x10] sm:$0xf]
      %v333 = vld [vmem:[%s236 + $0x14] sm:$0xf]
      %v334 = vld [vmem:[%s236 + $0x18] sm:$0xf]
      %v335 = vld [vmem:[%s236 + $0x1c] sm:$0xf]
      %v336 = vld [vmem:[%s236 + $0x20] sm:$0xf]
      %v337 = vld [vmem:[%s236 + $0x24] sm:$0xf]
      %v338 = vld [vmem:[%s236 + $0x28] sm:$0xf]
      %v339 = vld [vmem:[%s236 + $0x2c] sm:$0xf]
      %v340 = vld [vmem:[%s236 + $0x30] sm:$0xf]
      %v341 = vld [vmem:[%s236 + $0x34] sm:$0xf]
      %v342 = vld [vmem:[%s236 + $0x38] sm:$0xf]
      %v343 = vld [vmem:[%s236 + $0x3c] sm:$0xf]
      %v344 = vld [vmem:[%s236 + $0x40] sm:$0xf]
      %v345 = vld [vmem:[%s236 + $0x44] sm:$0xf]
      %v346 = vld [vmem:[%s236 + $0x48] sm:$0xf]
      %v347 = vld [vmem:[%s236 + $0x4c] sm:$0xf]
      %v348 = vld [vmem:[%s236 + $0x50] sm:$0xf]
      %v349 = vld [vmem:[%s236 + $0x54] sm:$0xf]
      %v350 = vld [vmem:[%s236 + $0x58] sm:$0xf]
      %v351 = vld [vmem:[%s236 + $0x5c] sm:$0xf]
      %v352 = vld [vmem:[%s236 + $0x60] sm:$0xf]
      %v353 = vld [vmem:[%s236 + $0x64] sm:$0xf]
      %v354 = vld [vmem:[%s236 + $0x68] sm:$0xf]
      %v355 = vld [vmem:[%s236 + $0x6c] sm:$0xf]
      %v356 = vld [vmem:[%s236 + $0x70] sm:$0xf]
      %v357 = vld [vmem:[%s236 + $0x74] sm:$0xf]
      %v358 = vld [vmem:[%s236 + $0x78] sm:$0xf]
      %v359 = vld [vmem:[%s236 + $0x7c] sm:$0xf]
      %v360 = vld [vmem:[%s245] sm:$0xf]
      %v361 = vld [vmem:[%s245 + $0x4] sm:$0xf]
      %v362 = vld [vmem:[%s245 + $0x8] sm:$0xf]
      %v363 = vld [vmem:[%s245 + $0xc] sm:$0xf]
      %v364 = vld [vmem:[%s245 + $0x10] sm:$0xf]
      %v365 = vld [vmem:[%s245 + $0x14] sm:$0xf]
      %v366 = vld [vmem:[%s245 + $0x18] sm:$0xf]
      %v367 = vld [vmem:[%s245 + $0x1c] sm:$0xf]
      %v368 = vld [vmem:[%s245 + $0x20] sm:$0xf]
      %v369 = vld [vmem:[%s245 + $0x24] sm:$0xf]
      %v370 = vld [vmem:[%s245 + $0x28] sm:$0xf]
      %v371 = vld [vmem:[%s245 + $0x2c] sm:$0xf]
      %v372 = vld [vmem:[%s245 + $0x30] sm:$0xf]
      %v373 = vld [vmem:[%s245 + $0x34] sm:$0xf]
      %v374 = vld [vmem:[%s245 + $0x38] sm:$0xf]
      %v375 = vld [vmem:[%s245 + $0x3c] sm:$0xf]
      %v408 = vunpack.c.l.b16 %v328
      %v409 = vunpack.c.l.b16 %v329
      %v410 = vunpack.c.l.b16 %v330
      %v411 = vunpack.c.l.b16 %v331
      %v412 = vunpack.c.l.b16 %v332
      %v413 = vunpack.c.l.b16 %v333
      %v414 = vunpack.c.l.b16 %v334
      %v415 = vunpack.c.l.b16 %v335
      %v416 = vunpack.c.l.b16 %v336
      %v417 = vunpack.c.l.b16 %v337
      %v418 = vunpack.c.l.b16 %v338
      %v419 = vunpack.c.l.b16 %v339
      %v420 = vunpack.c.l.b16 %v340
      %v421 = vunpack.c.l.b16 %v341
      %v422 = vunpack.c.l.b16 %v342
      %v423 = vunpack.c.l.b16 %v343
      %v424 = vunpack.c.l.b16 %v344
      %v425 = vunpack.c.l.b16 %v345
      %v426 = vunpack.c.l.b16 %v346
      %v427 = vunpack.c.l.b16 %v347
      %v428 = vunpack.c.l.b16 %v348
      %v429 = vunpack.c.l.b16 %v349
      %v430 = vunpack.c.l.b16 %v350
      %v431 = vunpack.c.l.b16 %v351
      %v432 = vunpack.c.l.b16 %v352
      %v433 = vunpack.c.l.b16 %v353
      %v434 = vunpack.c.l.b16 %v354
      %v435 = vunpack.c.l.b16 %v355
      %v436 = vunpack.c.l.b16 %v356
      %v437 = vunpack.c.l.b16 %v357
      %v438 = vunpack.c.l.b16 %v358
      %v439 = vunpack.c.l.b16 %v359
      %v440 = vpack.c.b16 %v409, %v408
      %v441 = vpack.c.b16 %v411, %v410
      %v442 = vpack.c.b16 %v413, %v412
      %v443 = vpack.c.b16 %v415, %v414
      %v444 = vpack.c.b16 %v417, %v416
      %v445 = vpack.c.b16 %v419, %v418
      %v446 = vpack.c.b16 %v421, %v420
      %v447 = vpack.c.b16 %v423, %v422
      %v448 = vpack.c.b16 %v425, %v424
      %v449 = vpack.c.b16 %v427, %v426
      %v450 = vpack.c.b16 %v429, %v428
      %v451 = vpack.c.b16 %v431, %v430
      %v452 = vpack.c.b16 %v433, %v432
      %v453 = vpack.c.b16 %v435, %v434
      %v454 = vpack.c.b16 %v437, %v436
      %v455 = vpack.c.b16 %v439, %v438
      %v488 = vunpack.c.l.b16 %v360
      %v489 = vunpack.c.l.b16 %v361
      %v490 = vunpack.c.l.b16 %v362
      %v491 = vunpack.c.l.b16 %v363
      %v492 = vunpack.c.l.b16 %v364
      %v493 = vunpack.c.l.b16 %v365
      %v494 = vunpack.c.l.b16 %v366
      %v495 = vunpack.c.l.b16 %v367
      %v496 = vunpack.c.l.b16 %v368
      %v497 = vunpack.c.l.b16 %v369
      %v498 = vunpack.c.l.b16 %v370
      %v499 = vunpack.c.l.b16 %v371
      %v500 = vunpack.c.l.b16 %v372
      %v501 = vunpack.c.l.b16 %v373
      %v502 = vunpack.c.l.b16 %v374
      %v503 = vunpack.c.l.b16 %v375
      %v504 = vpack.c.b16 %v489, %v488
      %v505 = vpack.c.b16 %v491, %v490
      %v506 = vpack.c.b16 %v493, %v492
      %v507 = vpack.c.b16 %v495, %v494
      %v508 = vpack.c.b16 %v497, %v496
      %v509 = vpack.c.b16 %v499, %v498
      %v510 = vpack.c.b16 %v501, %v500
      %v511 = vpack.c.b16 %v503, %v502
      %520 = vmatprep.subr.bf16.mxu0 0
      %521 = vmatpush1.bf16.msra.mxu0 %v511
      %522 = vmatprep.subr.bf16.mxu0 0
      %523 = vmatpush1.bf16.msra.mxu0 %v510
      %524 = vmatprep.subr.bf16.mxu0 0
      %525 = vmatpush1.bf16.msra.mxu0 %v509
      %526 = vmatprep.subr.bf16.mxu0 0
      %527 = vmatpush1.bf16.msra.mxu0 %v508
      %528 = vmatprep.subr.bf16.mxu0 0
      %529 = vmatpush1.bf16.msra.mxu0 %v507
      %530 = vmatprep.subr.bf16.mxu0 0
      %531 = vmatpush1.bf16.msra.mxu0 %v506
      %532 = vmatprep.subr.bf16.mxu0 0
      %533 = vmatpush1.bf16.msra.mxu0 %v505
      %534 = vmatprep.subr.bf16.mxu0 0
      %535 = vmatpush1.bf16.msra.mxu0 %v504
      %536 = vmatprep.subr.bf16.mxu0 0
      %537 = vmatpush2.bf16.msra.mxu0 0
      %538 = vmatprep.subr.bf16.mxu0 0
      %539 = vmatpush2.bf16.msra.mxu0 0
      %540 = vmatprep.subr.bf16.mxu0 0
      %541 = vmatpush2.bf16.msra.mxu0 0
      %542 = vmatprep.subr.bf16.mxu0 0
      %543 = vmatpush2.bf16.msra.mxu0 0
      %544 = vmatprep.subr.bf16.mxu0 0
      %545 = vmatpush2.bf16.msra.mxu0 0
      %546 = vmatprep.subr.bf16.mxu0 0
      %547 = vmatpush2.bf16.msra.mxu0 0
      %548 = vmatprep.subr.bf16.mxu0 0
      %549 = vmatpush2.bf16.msra.mxu0 0
      %550 = vmatprep.subr.bf16.mxu0 0
      %551 = vmatpush2.bf16.msra.mxu0 0
      %552 = vmatprep.mubr.bf16.mxu0 0
      %553 = vmatmul.mubr.bf16.gmra.mxu0 %v440
      %v554 = vpop.f32.mrf.mxu0
      %v555 = vadd.f32 0.0, %v554
      %v556 = vpop.f32.mrf.mxu0
      %v557 = vpop.f32.mrf.mxu0
      %v558 = vadd.f32 0.0, %v557
      %v559 = vpop.f32.mrf.mxu0
      %560 = vmatprep.mubr.bf16.mxu0 0
      %561 = vmatmul.mubr.bf16.gmra.mxu0 %v441
      %v562 = vpop.f32.mrf.mxu0
      %v563 = vadd.f32 0.0, %v562
      %v564 = vpop.f32.mrf.mxu0
      %v565 = vpop.f32.mrf.mxu0
      %v566 = vadd.f32 0.0, %v565
      %v567 = vpop.f32.mrf.mxu0
      %568 = vmatprep.mubr.bf16.mxu0 0
      %569 = vmatmul.mubr.bf16.gmra.mxu0 %v442
      %v570 = vpop.f32.mrf.mxu0
      %v571 = vadd.f32 0.0, %v570
      %v572 = vpop.f32.mrf.mxu0
      %v573 = vpop.f32.mrf.mxu0
      %v574 = vadd.f32 0.0, %v573
      %v575 = vpop.f32.mrf.mxu0
      %576 = vmatprep.mubr.bf16.mxu0 0
      %577 = vmatmul.mubr.bf16.gmra.mxu0 %v443
      %v578 = vpop.f32.mrf.mxu0
      %v579 = vadd.f32 0.0, %v578
      %v580 = vpop.f32.mrf.mxu0
      %v581 = vpop.f32.mrf.mxu0
      %v582 = vadd.f32 0.0, %v581
      %v583 = vpop.f32.mrf.mxu0
      %584 = vmatprep.mubr.bf16.mxu0 0
      %585 = vmatmul.mubr.bf16.gmra.mxu0 %v444
      %v586 = vpop.f32.mrf.mxu0
      %v587 = vadd.f32 0.0, %v586
      %v588 = vpop.f32.mrf.mxu0
      %v589 = vpop.f32.mrf.mxu0
      %v590 = vadd.f32 0.0, %v589
      %v591 = vpop.f32.mrf.mxu0
      %592 = vmatprep.mubr.bf16.mxu0 0
      %593 = vmatmul.mubr.bf16.gmra.mxu0 %v445
      %v594 = vpop.f32.mrf.mxu0
      %v595 = vadd.f32 0.0, %v594
      %v596 = vpop.f32.mrf.mxu0
      %v597 = vpop.f32.mrf.mxu0
      %v598 = vadd.f32 0.0, %v597
      %v599 = vpop.f32.mrf.mxu0
      %600 = vmatprep.mubr.bf16.mxu0 0
      %601 = vmatmul.mubr.bf16.gmra.mxu0 %v446
      %v602 = vpop.f32.mrf.mxu0
      %v603 = vadd.f32 0.0, %v602
      %v604 = vpop.f32.mrf.mxu0
      %v605 = vpop.f32.mrf.mxu0
      %v606 = vadd.f32 0.0, %v605
      %v607 = vpop.f32.mrf.mxu0
      %608 = vmatprep.mubr.bf16.mxu0 0
      %609 = vmatmul.mubr.bf16.gmra.mxu0 %v447
      %v610 = vpop.f32.mrf.mxu0
      %v611 = vadd.f32 0.0, %v610
      %v612 = vpop.f32.mrf.mxu0
      %v613 = vpop.f32.mrf.mxu0
      %v614 = vadd.f32 0.0, %v613
      %v615 = vpop.f32.mrf.mxu0
      %616 = vmatprep.mubr.bf16.mxu0 0
      %617 = vmatmul.mubr.bf16.gmra.mxu0 %v448
      %v618 = vpop.f32.mrf.mxu0
      %v619 = vadd.f32 0.0, %v618
      %v620 = vpop.f32.mrf.mxu0
      %v621 = vpop.f32.mrf.mxu0
      %v622 = vadd.f32 0.0, %v621
      %v623 = vpop.f32.mrf.mxu0
      %624 = vmatprep.mubr.bf16.mxu0 0
      %625 = vmatmul.mubr.bf16.gmra.mxu0 %v449
      %v626 = vpop.f32.mrf.mxu0
      %v627 = vadd.f32 0.0, %v626
      %v628 = vpop.f32.mrf.mxu0
      %v629 = vpop.f32.mrf.mxu0
      %v630 = vadd.f32 0.0, %v629
      %v631 = vpop.f32.mrf.mxu0
      %632 = vmatprep.mubr.bf16.mxu0 0
      %633 = vmatmul.mubr.bf16.gmra.mxu0 %v450
      %v634 = vpop.f32.mrf.mxu0
      %v635 = vadd.f32 0.0, %v634
      %v636 = vpop.f32.mrf.mxu0
      %v637 = vpop.f32.mrf.mxu0
      %v638 = vadd.f32 0.0, %v637
      %v639 = vpop.f32.mrf.mxu0
      %640 = vmatprep.mubr.bf16.mxu0 0
      %641 = vmatmul.mubr.bf16.gmra.mxu0 %v451
      %v642 = vpop.f32.mrf.mxu0
      %v643 = vadd.f32 0.0, %v642
      %v644 = vpop.f32.mrf.mxu0
      %v645 = vpop.f32.mrf.mxu0
      %v646 = vadd.f32 0.0, %v645
      %v647 = vpop.f32.mrf.mxu0
      %648 = vmatprep.mubr.bf16.mxu0 0
      %649 = vmatmul.mubr.bf16.gmra.mxu0 %v452
      %v650 = vpop.f32.mrf.mxu0
      %v651 = vadd.f32 0.0, %v650
      %v652 = vpop.f32.mrf.mxu0
      %v653 = vpop.f32.mrf.mxu0
      %v654 = vadd.f32 0.0, %v653
      %v655 = vpop.f32.mrf.mxu0
      %656 = vmatprep.mubr.bf16.mxu0 0
      %657 = vmatmul.mubr.bf16.gmra.mxu0 %v453
      %v658 = vpop.f32.mrf.mxu0
      %v659 = vadd.f32 0.0, %v658
      %v660 = vpop.f32.mrf.mxu0
      %v661 = vpop.f32.mrf.mxu0
      %v662 = vadd.f32 0.0, %v661
      %v663 = vpop.f32.mrf.mxu0
      %664 = vmatprep.mubr.bf16.mxu0 0
      %665 = vmatmul.mubr.bf16.gmra.mxu0 %v454
      %v666 = vpop.f32.mrf.mxu0
      %v667 = vadd.f32 0.0, %v666
      %v668 = vpop.f32.mrf.mxu0
      %v669 = vpop.f32.mrf.mxu0
      %v670 = vadd.f32 0.0, %v669
      %v671 = vpop.f32.mrf.mxu0
      %672 = vmatprep.mubr.bf16.mxu0 0
      %673 = vmatmul.mubr.bf16.gmra.mxu0 %v455
      %v674 = vpop.f32.mrf.mxu0
      %v675 = vadd.f32 0.0, %v674
      %v676 = vpop.f32.mrf.mxu0
      %v677 = vpop.f32.mrf.mxu0
      %v678 = vadd.f32 0.0, %v677
      %v679 = vpop.f32.mrf.mxu0
      %680 = vdwg.mxu0
      %v681 = vadd.f32 %v296, %v555
      %v682 = vadd.f32 %v297, %v558
      %v683 = vadd.f32 %v298, %v563
      %v684 = vadd.f32 %v299, %v566
      %v685 = vadd.f32 %v300, %v571
      %v686 = vadd.f32 %v301, %v574
      %v687 = vadd.f32 %v302, %v579
      %v688 = vadd.f32 %v303, %v582
      %v689 = vadd.f32 %v304, %v587
      %v690 = vadd.f32 %v305, %v590
      %v691 = vadd.f32 %v306, %v595
      %v692 = vadd.f32 %v307, %v598
      %v693 = vadd.f32 %v308, %v603
      %v694 = vadd.f32 %v309, %v606
      %v695 = vadd.f32 %v310, %v611
      %v696 = vadd.f32 %v311, %v614
      %v697 = vadd.f32 %v312, %v619
      %v698 = vadd.f32 %v313, %v622
      %v699 = vadd.f32 %v314, %v627
      %v700 = vadd.f32 %v315, %v630
      %v701 = vadd.f32 %v316, %v635
      %v702 = vadd.f32 %v317, %v638
      %v703 = vadd.f32 %v318, %v643
      %v704 = vadd.f32 %v319, %v646
      %v705 = vadd.f32 %v320, %v651
      %v706 = vadd.f32 %v321, %v654
      %v707 = vadd.f32 %v322, %v659
      %v708 = vadd.f32 %v323, %v662
      %v709 = vadd.f32 %v324, %v667
      %v710 = vadd.f32 %v325, %v670
      %v711 = vadd.f32 %v326, %v675
      %v712 = vadd.f32 %v327, %v678
      %713 = vst [vmem:[#allocation2] sm:$0xff] %v681
      %714 = vst [vmem:[#allocation2 + $0x8] sm:$0xff] %v682
      %715 = vst [vmem:[#allocation2 + $0x10] sm:$0xff] %v683
      %716 = vst [vmem:[#allocation2 + $0x18] sm:$0xff] %v684
      %717 = vst [vmem:[#allocation2 + $0x20] sm:$0xff] %v685
      %718 = vst [vmem:[#allocation2 + $0x28] sm:$0xff] %v686
      %719 = vst [vmem:[#allocation2 + $0x30] sm:$0xff] %v687
      %720 = vst [vmem:[#allocation2 + $0x38] sm:$0xff] %v688
      %721 = vst [vmem:[#allocation2 + $0x40] sm:$0xff] %v689
      %722 = vst [vmem:[#allocation2 + $0x48] sm:$0xff] %v690
      %723 = vst [vmem:[#allocation2 + $0x50] sm:$0xff] %v691
      %724 = vst [vmem:[#allocation2 + $0x58] sm:$0xff] %v692
      %725 = vst [vmem:[#allocation2 + $0x60] sm:$0xff] %v693
      %726 = vst [vmem:[#allocation2 + $0x68] sm:$0xff] %v694
      %727 = vst [vmem:[#allocation2 + $0x70] sm:$0xff] %v695
      %728 = vst [vmem:[#allocation2 + $0x78] sm:$0xff] %v696
      %729 = vst [vmem:[#allocation2 + $0x80] sm:$0xff] %v697
      %730 = vst [vmem:[#allocation2 + $0x88] sm:$0xff] %v698
      %731 = vst [vmem:[#allocation2 + $0x90] sm:$0xff] %v699
      %732 = vst [vmem:[#allocation2 + $0x98] sm:$0xff] %v700
      %733 = vst [vmem:[#allocation2 + $0xa0] sm:$0xff] %v701
      %734 = vst [vmem:[#allocation2 + $0xa8] sm:$0xff] %v702
      %735 = vst [vmem:[#allocation2 + $0xb0] sm:$0xff] %v703
      %736 = vst [vmem:[#allocation2 + $0xb8] sm:$0xff] %v704
      %737 = vst [vmem:[#allocation2 + $0xc0] sm:$0xff] %v705
      %738 = vst [vmem:[#allocation2 + $0xc8] sm:$0xff] %v706
      %739 = vst [vmem:[#allocation2 + $0xd0] sm:$0xff] %v707
      %740 = vst [vmem:[#allocation2 + $0xd8] sm:$0xff] %v708
      %741 = vst [vmem:[#allocation2 + $0xe0] sm:$0xff] %v709
      %742 = vst [vmem:[#allocation2 + $0xe8] sm:$0xff] %v710
      %743 = vst [vmem:[#allocation2 + $0xf0] sm:$0xff] %v711
      %744 = vst [vmem:[#allocation2 + $0xf8] sm:$0xff] %v712
      // Predicated region
      $region37: #{encoder_forward.9} parent=31 // pred_check
        %p745 = pneg %p260
      $region38: #{encoder_forward.9} parent=31 // pred_check_branch
        %747 = sbr.rel (%p745) target = $region40
      $region39: #{encoder_forward.9} parent=31 // pred_region
        %v748 = vld [vmem:[#allocation2] sm:$0xff]
        %v749 = vld [vmem:[#allocation2 + $0x8] sm:$0xff]
        %v750 = vld [vmem:[#allocation2 + $0x10] sm:$0xff]
        %v751 = vld [vmem:[#allocation2 + $0x18] sm:$0xff]
        %v752 = vld [vmem:[#allocation2 + $0x20] sm:$0xff]
        %v753 = vld [vmem:[#allocation2 + $0x28] sm:$0xff]
        %v754 = vld [vmem:[#allocation2 + $0x30] sm:$0xff]
        %v755 = vld [vmem:[#allocation2 + $0x38] sm:$0xff]
        %v756 = vld [vmem:[#allocation2 + $0x40] sm:$0xff]
        %v757 = vld [vmem:[#allocation2 + $0x48] sm:$0xff]
        %v758 = vld [vmem:[#allocation2 + $0x50] sm:$0xff]
        %v759 = vld [vmem:[#allocation2 + $0x58] sm:$0xff]
        %v760 = vld [vmem:[#allocation2 + $0x60] sm:$0xff]
        %v761 = vld [vmem:[#allocation2 + $0x68] sm:$0xff]
        %v762 = vld [vmem:[#allocation2 + $0x70] sm:$0xff]
        %v763 = vld [vmem:[#allocation2 + $0x78] sm:$0xff]
        %v764 = vld [vmem:[#allocation2 + $0x80] sm:$0xff]
        %v765 = vld [vmem:[#allocation2 + $0x88] sm:$0xff]
        %v766 = vld [vmem:[#allocation2 + $0x90] sm:$0xff]
        %v767 = vld [vmem:[#allocation2 + $0x98] sm:$0xff]
        %v768 = vld [vmem:[#allocation2 + $0xa0] sm:$0xff]
        %v769 = vld [vmem:[#allocation2 + $0xa8] sm:$0xff]
        %v770 = vld [vmem:[#allocation2 + $0xb0] sm:$0xff]
        %v771 = vld [vmem:[#allocation2 + $0xb8] sm:$0xff]
        %v772 = vld [vmem:[#allocation2 + $0xc0] sm:$0xff]
        %v773 = vld [vmem:[#allocation2 + $0xc8] sm:$0xff]
        %v774 = vld [vmem:[#allocation2 + $0xd0] sm:$0xff]
        %v775 = vld [vmem:[#allocation2 + $0xd8] sm:$0xff]
        %v776 = vld [vmem:[#allocation2 + $0xe0] sm:$0xff]
        %v777 = vld [vmem:[#allocation2 + $0xe8] sm:$0xff]
        %v778 = vld [vmem:[#allocation2 + $0xf0] sm:$0xff]
        %v779 = vld [vmem:[#allocation2 + $0xf8] sm:$0xff]
        %v780 = vld [vmem:[%s249] sm:$0x1]
        %v782 = vlaneseq
        %v783 = vshrl.u32 %v782, 7
        %v784 = vsub.s32 0, %v783
        %v785 = vrot.slane %v780, %v784
        %v787 = vadd.f32 %v748, %v785
        %v788 = vadd.f32 %v749, %v785
        %v789 = vadd.f32 %v750, %v785
        %v790 = vadd.f32 %v751, %v785
        %v791 = vadd.f32 %v752, %v785
        %v792 = vadd.f32 %v753, %v785
        %v793 = vadd.f32 %v754, %v785
        %v794 = vadd.f32 %v755, %v785
        %v795 = vadd.f32 %v756, %v785
        %v796 = vadd.f32 %v757, %v785
        %v797 = vadd.f32 %v758, %v785
        %v798 = vadd.f32 %v759, %v785
        %v799 = vadd.f32 %v760, %v785
        %v800 = vadd.f32 %v761, %v785
        %v801 = vadd.f32 %v762, %v785
        %v802 = vadd.f32 %v763, %v785
        %v803 = vadd.f32 %v764, %v785
        %v804 = vadd.f32 %v765, %v785
        %v805 = vadd.f32 %v766, %v785
        %v806 = vadd.f32 %v767, %v785
        %v807 = vadd.f32 %v768, %v785
        %v808 = vadd.f32 %v769, %v785
        %v809 = vadd.f32 %v770, %v785
        %v810 = vadd.f32 %v771, %v785
        %v811 = vadd.f32 %v772, %v785
        %v812 = vadd.f32 %v773, %v785
        %v813 = vadd.f32 %v774, %v785
        %v814 = vadd.f32 %v775, %v785
        %v815 = vadd.f32 %v776, %v785
        %v816 = vadd.f32 %v777, %v785
        %v817 = vadd.f32 %v778, %v785
        %v818 = vadd.f32 %v779, %v785
        %vm819 = vcmp.ge.f32.partialorder %v787, 0.0
        %vm820 = vcmp.ge.f32.partialorder %v788, 0.0
        %vm821 = vcmp.ge.f32.partialorder %v789, 0.0
        %vm822 = vcmp.ge.f32.partialorder %v790, 0.0
        %vm823 = vcmp.ge.f32.partialorder %v791, 0.0
        %vm824 = vcmp.ge.f32.partialorder %v792, 0.0
        %vm825 = vcmp.ge.f32.partialorder %v793, 0.0
        %vm826 = vcmp.ge.f32.partialorder %v794, 0.0
        %vm827 = vcmp.ge.f32.partialorder %v795, 0.0
        %vm828 = vcmp.ge.f32.partialorder %v796, 0.0
        %vm829 = vcmp.ge.f32.partialorder %v797, 0.0
        %vm830 = vcmp.ge.f32.partialorder %v798, 0.0
        %vm831 = vcmp.ge.f32.partialorder %v799, 0.0
        %vm832 = vcmp.ge.f32.partialorder %v800, 0.0
        %vm833 = vcmp.ge.f32.partialorder %v801, 0.0
        %vm834 = vcmp.ge.f32.partialorder %v802, 0.0
        %vm835 = vcmp.ge.f32.partialorder %v803, 0.0
        %vm836 = vcmp.ge.f32.partialorder %v804, 0.0
        %vm837 = vcmp.ge.f32.partialorder %v805, 0.0
        %vm838 = vcmp.ge.f32.partialorder %v806, 0.0
        %vm839 = vcmp.ge.f32.partialorder %v807, 0.0
        %vm840 = vcmp.ge.f32.partialorder %v808, 0.0
        %vm841 = vcmp.ge.f32.partialorder %v809, 0.0
        %vm842 = vcmp.ge.f32.partialorder %v810, 0.0
        %vm843 = vcmp.ge.f32.partialorder %v811, 0.0
        %vm844 = vcmp.ge.f32.partialorder %v812, 0.0
        %vm845 = vcmp.ge.f32.partialorder %v813, 0.0
        %vm846 = vcmp.ge.f32.partialorder %v814, 0.0
        %vm847 = vcmp.ge.f32.partialorder %v815, 0.0
        %vm848 = vcmp.ge.f32.partialorder %v816, 0.0
        %vm849 = vcmp.ge.f32.partialorder %v817, 0.0
        %vm850 = vcmp.ge.f32.partialorder %v818, 0.0
        %v851 = vmul.f32 %v787, 0.1
        %v852 = vmul.f32 %v788, 0.1
        %v853 = vmul.f32 %v789, 0.1
        %v854 = vmul.f32 %v790, 0.1
        %v855 = vmul.f32 %v791, 0.1
        %v856 = vmul.f32 %v792, 0.1
        %v857 = vmul.f32 %v793, 0.1
        %v858 = vmul.f32 %v794, 0.1
        %v859 = vmul.f32 %v795, 0.1
        %v860 = vmul.f32 %v796, 0.1
        %v861 = vmul.f32 %v797, 0.1
        %v862 = vmul.f32 %v798, 0.1
        %v863 = vmul.f32 %v799, 0.1
        %v864 = vmul.f32 %v800, 0.1
        %v865 = vmul.f32 %v801, 0.1
        %v866 = vmul.f32 %v802, 0.1
        %v867 = vmul.f32 %v803, 0.1
        %v868 = vmul.f32 %v804, 0.1
        %v869 = vmul.f32 %v805, 0.1
        %v870 = vmul.f32 %v806, 0.1
        %v871 = vmul.f32 %v807, 0.1
        %v872 = vmul.f32 %v808, 0.1
        %v873 = vmul.f32 %v809, 0.1
        %v874 = vmul.f32 %v810, 0.1
        %v875 = vmul.f32 %v811, 0.1
        %v876 = vmul.f32 %v812, 0.1
        %v877 = vmul.f32 %v813, 0.1
        %v878 = vmul.f32 %v814, 0.1
        %v879 = vmul.f32 %v815, 0.1
        %v880 = vmul.f32 %v816, 0.1
        %v881 = vmul.f32 %v817, 0.1
        %v882 = vmul.f32 %v818, 0.1
        %v883 = vsel %vm819, %v787, %v851
        %v884 = vsel %vm820, %v788, %v852
        %v885 = vsel %vm821, %v789, %v853
        %v886 = vsel %vm822, %v790, %v854
        %v887 = vsel %vm823, %v791, %v855
        %v888 = vsel %vm824, %v792, %v856
        %v889 = vsel %vm825, %v793, %v857
        %v890 = vsel %vm826, %v794, %v858
        %v891 = vsel %vm827, %v795, %v859
        %v892 = vsel %vm828, %v796, %v860
        %v893 = vsel %vm829, %v797, %v861
        %v894 = vsel %vm830, %v798, %v862
        %v895 = vsel %vm831, %v799, %v863
        %v896 = vsel %vm832, %v800, %v864
        %v897 = vsel %vm833, %v801, %v865
        %v898 = vsel %vm834, %v802, %v866
        %v899 = vsel %vm835, %v803, %v867
        %v900 = vsel %vm836, %v804, %v868
        %v901 = vsel %vm837, %v805, %v869
        %v902 = vsel %vm838, %v806, %v870
        %v903 = vsel %vm839, %v807, %v871
        %v904 = vsel %vm840, %v808, %v872
        %v905 = vsel %vm841, %v809, %v873
        %v906 = vsel %vm842, %v810, %v874
        %v907 = vsel %vm843, %v811, %v875
        %v908 = vsel %vm844, %v812, %v876
        %v909 = vsel %vm845, %v813, %v877
        %v910 = vsel %vm846, %v814, %v878
        %v911 = vsel %vm847, %v815, %v879
        %v912 = vsel %vm848, %v816, %v880
        %v913 = vsel %vm849, %v817, %v881
        %v914 = vsel %vm850, %v818, %v882
        %v915 = vpack.c.bf16 %v884, %v883
        %v916 = vpack.c.bf16 %v886, %v885
        %v917 = vpack.c.bf16 %v888, %v887
        %v918 = vpack.c.bf16 %v890, %v889
        %v919 = vpack.c.bf16 %v892, %v891
        %v920 = vpack.c.bf16 %v894, %v893
        %v921 = vpack.c.bf16 %v896, %v895
        %v922 = vpack.c.bf16 %v898, %v897
        %v923 = vpack.c.bf16 %v900, %v899
        %v924 = vpack.c.bf16 %v902, %v901
        %v925 = vpack.c.bf16 %v904, %v903
        %v926 = vpack.c.bf16 %v906, %v905
        %v927 = vpack.c.bf16 %v908, %v907
        %v928 = vpack.c.bf16 %v910, %v909
        %v929 = vpack.c.bf16 %v912, %v911
        %v930 = vpack.c.bf16 %v914, %v913
        %v947 = vunpack.c.l.b16 %v915
        %v948 = vunpack.c.h.b16 %v915
        %v949 = vunpack.c.l.b16 %v916
        %v950 = vunpack.c.h.b16 %v916
        %v951 = vunpack.c.l.b16 %v917
        %v952 = vunpack.c.h.b16 %v917
        %v953 = vunpack.c.l.b16 %v918
        %v954 = vunpack.c.h.b16 %v918
        %v955 = vunpack.c.l.b16 %v919
        %v956 = vunpack.c.h.b16 %v919
        %v957 = vunpack.c.l.b16 %v920
        %v958 = vunpack.c.h.b16 %v920
        %v959 = vunpack.c.l.b16 %v921
        %v960 = vunpack.c.h.b16 %v921
        %v961 = vunpack.c.l.b16 %v922
        %v962 = vunpack.c.h.b16 %v922
        %v963 = vunpack.c.l.b16 %v923
        %v964 = vunpack.c.h.b16 %v923
        %v965 = vunpack.c.l.b16 %v924
        %v966 = vunpack.c.h.b16 %v924
        %v967 = vunpack.c.l.b16 %v925
        %v968 = vunpack.c.h.b16 %v925
        %v969 = vunpack.c.l.b16 %v926
        %v970 = vunpack.c.h.b16 %v926
        %v971 = vunpack.c.l.b16 %v927
        %v972 = vunpack.c.h.b16 %v927
        %v973 = vunpack.c.l.b16 %v928
        %v974 = vunpack.c.h.b16 %v928
        %v975 = vunpack.c.l.b16 %v929
        %v976 = vunpack.c.h.b16 %v929
        %v977 = vunpack.c.l.b16 %v930
        %v978 = vunpack.c.h.b16 %v930
        %v979 = vpack.c.b16 %v947, %v947
        %v980 = vpack.c.b16 %v948, %v948
        %v981 = vpack.c.b16 %v949, %v949
        %v982 = vpack.c.b16 %v950, %v950
        %v983 = vpack.c.b16 %v951, %v951
        %v984 = vpack.c.b16 %v952, %v952
        %v985 = vpack.c.b16 %v953, %v953
        %v986 = vpack.c.b16 %v954, %v954
        %v987 = vpack.c.b16 %v955, %v955
        %v988 = vpack.c.b16 %v956, %v956
        %v989 = vpack.c.b16 %v957, %v957
        %v990 = vpack.c.b16 %v958, %v958
        %v991 = vpack.c.b16 %v959, %v959
        %v992 = vpack.c.b16 %v960, %v960
        %v993 = vpack.c.b16 %v961, %v961
        %v994 = vpack.c.b16 %v962, %v962
        %v995 = vpack.c.b16 %v963, %v963
        %v996 = vpack.c.b16 %v964, %v964
        %v997 = vpack.c.b16 %v965, %v965
        %v998 = vpack.c.b16 %v966, %v966
        %v999 = vpack.c.b16 %v967, %v967
        %v1000 = vpack.c.b16 %v968, %v968
        %v1001 = vpack.c.b16 %v969, %v969
        %v1002 = vpack.c.b16 %v970, %v970
        %v1003 = vpack.c.b16 %v971, %v971
        %v1004 = vpack.c.b16 %v972, %v972
        %v1005 = vpack.c.b16 %v973, %v973
        %v1006 = vpack.c.b16 %v974, %v974
        %v1007 = vpack.c.b16 %v975, %v975
        %v1008 = vpack.c.b16 %v976, %v976
        %v1009 = vpack.c.b16 %v977, %v977
        %v1010 = vpack.c.b16 %v978, %v978
        %1043 = vst [vmem:[%s257] sm:$0xf] %v979
        %1044 = vst [vmem:[%s257 + $0x4] sm:$0xf] %v980
        %1045 = vst [vmem:[%s257 + $0x8] sm:$0xf] %v981
        %1046 = vst [vmem:[%s257 + $0xc] sm:$0xf] %v982
        %1047 = vst [vmem:[%s257 + $0x10] sm:$0xf] %v983
        %1048 = vst [vmem:[%s257 + $0x14] sm:$0xf] %v984
        %1049 = vst [vmem:[%s257 + $0x18] sm:$0xf] %v985
        %1050 = vst [vmem:[%s257 + $0x1c] sm:$0xf] %v986
        %1051 = vst [vmem:[%s257 + $0x20] sm:$0xf] %v987
        %1052 = vst [vmem:[%s257 + $0x24] sm:$0xf] %v988
        %1053 = vst [vmem:[%s257 + $0x28] sm:$0xf] %v989
        %1054 = vst [vmem:[%s257 + $0x2c] sm:$0xf] %v990
        %1055 = vst [vmem:[%s257 + $0x30] sm:$0xf] %v991
        %1056 = vst [vmem:[%s257 + $0x34] sm:$0xf] %v992
        %1057 = vst [vmem:[%s257 + $0x38] sm:$0xf] %v993
        %1058 = vst [vmem:[%s257 + $0x3c] sm:$0xf] %v994
        %1059 = vst [vmem:[%s257 + $0x40] sm:$0xf] %v995
        %1060 = vst [vmem:[%s257 + $0x44] sm:$0xf] %v996
        %1061 = vst [vmem:[%s257 + $0x48] sm:$0xf] %v997
        %1062 = vst [vmem:[%s257 + $0x4c] sm:$0xf] %v998
        %1063 = vst [vmem:[%s257 + $0x50] sm:$0xf] %v999
        %1064 = vst [vmem:[%s257 + $0x54] sm:$0xf] %v1000
        %1065 = vst [vmem:[%s257 + $0x58] sm:$0xf] %v1001
        %1066 = vst [vmem:[%s257 + $0x5c] sm:$0xf] %v1002
        %1067 = vst [vmem:[%s257 + $0x60] sm:$0xf] %v1003
        %1068 = vst [vmem:[%s257 + $0x64] sm:$0xf] %v1004
        %1069 = vst [vmem:[%s257 + $0x68] sm:$0xf] %v1005
        %1070 = vst [vmem:[%s257 + $0x6c] sm:$0xf] %v1006
        %1071 = vst [vmem:[%s257 + $0x70] sm:$0xf] %v1007
        %1072 = vst [vmem:[%s257 + $0x74] sm:$0xf] %v1008
        %1073 = vst [vmem:[%s257 + $0x78] sm:$0xf] %v1009
        %1074 = vst [vmem:[%s257 + $0x7c] sm:$0xf] %v1010
      $region40: #{encoder_forward.9} parent=31 // pred_fallthru
        _
      %s1075 = smul.u32 32, %s19
      %p1076 = scmp.lt.s32.totalorder %s1075, 63
      %s1077 = scalar_select %p1076, %s1075, 63
      %p1078 = scmp.lt.s32.totalorder %s20, 0
      %s1079 = scalar_select %p1078, %s20, 0
      %s1080 = sadd.s32 %s1079, %s1077
      %s1081 = smul.addr %s1080, 4
      %s1082 = scalar_lea.vmem %s3, %s1081
      // Predicated region
      $region41: #{encoder_forward.9} parent=31 // pred_check
        %p1083 = pneg %p135
      $region42: #{encoder_forward.9} parent=31 // pred_check_branch
        %1085 = sbr.rel (%p1083) target = $region44
      $region43: #{encoder_forward.9} parent=31 // pred_region
        %s1086 = smul.u32 32, %s19
      $region44: #{encoder_forward.9} parent=31 // pred_fallthru
        _
    $region32: #{encoder_forward.9} parent=5 // pred_fallthru
      _
    %p1087 = scmp.le.s32.totalorder 2, %s9
    // Predicated region
    $region45: #{encoder_forward.9} parent=5 // pred_check
      %p1088 = pneg %p1087
    $region46: #{encoder_forward.9} parent=5 // pred_check_branch
      %1090 = sbr.rel (%p1088) target = $region48
    $region47: #{encoder_forward.9} parent=5 // pred_region
      %s1091 = ssub.s32 %s9, 2
      // Predicated region
      $region49: #{encoder_forward.9} parent=47 // pred_check
        %p1092 = pneg %p141
      $region50: #{encoder_forward.9} parent=47 // pred_check_branch
        %1094 = sbr.rel (%p1092) target = $region52
      $region51: #{encoder_forward.9} parent=47 // pred_region
        %s1095 = smul.u32 32, %s22
        %p1096 = scmp.lt.s32.totalorder %s1095, 63
        %s1097 = scalar_select %p1096, %s1095, 63
        %p1098 = scmp.lt.s32.totalorder %s23, 0
        %s1099 = scalar_select %p1098, %s23, 0
        %s1100 = sadd.s32 %s1099, %s1097
        %s1101 = smul.addr %s1100, 4
        %s1102 = scalar_lea.vmem %s3, %s1101
      $region52: #{encoder_forward.9} parent=47 // pred_fallthru
        _
    $region48: #{encoder_forward.9} parent=5 // pred_fallthru
      _
  $region6: #{encoder_forward.9} parent=0 // loop_footer
    %s13 = sadd.s32 1, %s9
  $region7: #{encoder_forward.9} parent=0 // loop_footer_branch
    %8 = sbr.rel target = $region3
  $region8: #{encoder_forward.9} parent=0 // loop_exit
    _

// kernel: encoder_forward.10
$region0: #{encoder_forward.10}
  #allocation0 [shape = 'u32[]', space=smem, size = 0x4, offset = 0x4, fixed_abs, tag = 'smem constant byte address 0x4 - core index']
  #allocation1 [shape = 'u32[144,128]{1,0:T(1,128)}', space=vmem, size = 0x12000, scoped, tag = 'internal scratch']
  #allocation2 [shape = 'f32[256,128]{1,0:T(8,128)}', space=vmem, size = 0x20000, scoped, tag = 'scratch operand']
  %s0 = inlined_call_operand.vmem [shape: bf16[512,128], index: 0, kind: input, shape index: {}]
  %s1 = inlined_call_operand.vmem [shape: bf16[128,128], index: 1, kind: input, shape index: {}]
  %s2 = inlined_call_operand.vmem [shape: f32[1,128], index: 2, kind: input, shape index: {}]
  %s3 = inlined_call_operand.vmem [shape: bf16[512,128], index: 3, kind: output, shape index: {}]
  %s4 = sld [smem:[#allocation0]]
  $region53: #{encoder_forward.10} parent=0
    _
  %s6 = ssub.s32 1, %s4
  %s7 = scalar_select 0, %s6, %s4
  loop: start=0, step=1, limit=4
  $region2: #{encoder_forward.10} parent=0 // loop_pre_header
    _
  $region3: #{encoder_forward.10} parent=0 // loop_header
    %s9 = sphi 0, %s13
    %p10 = scmp.ge.s32.totalorder %s9, 4
    %s16 = sphi 0, %s35
    %s17 = sphi 0, %s31
    %s18 = sphi 0, %s27
    %s19 = sphi 0, %s16
    %s20 = sphi 0, %s17
    %s21 = sphi 0, %s18
    %s22 = sphi 0, %s19
    %s23 = sphi 0, %s20
    %s24 = sphi 0, %s21
    %s40 = sphi 0, %s42
    %s43 = sphi 0, %s40
    %s44 = sphi 0, %s43
    %s60 = sphi 0, %s44
    %s68 = sphi 0, %s70
    %s71 = sphi 0, %s68
    %s72 = sphi 0, %s71
    %s88 = sphi 0, %s72
    %s94 = sphi 0, %s96
    %s97 = sphi 0, %s94
    %s98 = sphi 0, %s97
    %s114 = sphi 0, %s98
    %s122 = sphi 0, %s124
    %s125 = sphi 0, %s122
    %s126 = sphi 0, %s125
    %s142 = sphi 0, %s126
  $region4: #{encoder_forward.10} parent=0 // loop_header_branch
    %12 = sbr.rel (%p10) target = $region8
  $region5: #{encoder_forward.10} parent=0 // loop_body
    %s14 = ssub.s32 %s9, 1
    %s15 = ssub.s32 %s9, 2
    %s25 = sadd.s32 1, %s18
    %p26 = scmp.ge.s32.totalorder %s25, 1
    %s27 = scalar_select %p26, 0, %s25
    %s28 = sadd.s32 1, %s17
    %s29 = scalar_select %p26, %s28, %s17
    %p30 = scmp.ge.s32.totalorder %s29, 1
    %s31 = scalar_select %p30, 0, %s29
    %s32 = sadd.s32 1, %s16
    %s33 = scalar_select %p30, %s32, %s16
    %p34 = scmp.ge.s32.totalorder %s33, 2
    %s35 = scalar_select %p34, 0, %s33
    %s36 = ssub.s32 %s16, %s35
    %s37 = ssub.s32 %s18, %s27
    %s38 = sor.u32 %s36, %s37
    %p39 = scmp.eq.s32.totalorder %s38, 0
    %s41 = sadd.s32 %s40, 1
    %s42 = scalar_select %p39, %s40, %s41
    %p45 = pneg %p39
    %p46 = scmp.eq.s32.totalorder %s9, 1
    %p47 = por %p45, %p46
    %p48 = scmp.ne.s32.totalorder %s40, %s43
    %p49 = scmp.eq.s32.totalorder %s9, 0
    %p50 = por %p48, %p49
    %p51 = scmp.ne.s32.totalorder %s40, %s43
    %p52 = scmp.eq.s32.totalorder %s14, 1
    %p53 = por %p51, %p52
    %p54 = scmp.ne.s32.totalorder %s43, %s44
    %p55 = scmp.eq.s32.totalorder %s14, 0
    %p56 = por %p54, %p55
    %p57 = scmp.ne.s32.totalorder %s43, %s44
    %p58 = scmp.eq.s32.totalorder %s15, 1
    %p59 = por %p57, %p58
    %p61 = scmp.ne.s32.totalorder %s44, %s60
    %p62 = scmp.eq.s32.totalorder %s15, 0
    %p63 = por %p61, %p62
    %s64 = ssub.s32 %s18, %s27
    %s65 = ssub.s32 %s17, %s31
    %s66 = sor.u32 %s64, %s65
    %p67 = scmp.eq.s32.totalorder %s66, 0
    %s69 = sadd.s32 %s68, 1
    %s70 = scalar_select %p67, %s68, %s69
    %p73 = pneg %p67
    %p74 = scmp.eq.s32.totalorder %s9, 1
    %p75 = por %p73, %p74
    %p76 = scmp.ne.s32.totalorder %s68, %s71
    %p77 = scmp.eq.s32.totalorder %s9, 0
    %p78 = por %p76, %p77
    %p79 = scmp.ne.s32.totalorder %s68, %s71
    %p80 = scmp.eq.s32.totalorder %s14, 1
    %p81 = por %p79, %p80
    %p82 = scmp.ne.s32.totalorder %s71, %s72
    %p83 = scmp.eq.s32.totalorder %s14, 0
    %p84 = por %p82, %p83
    %p85 = scmp.ne.s32.totalorder %s71, %s72
    %p86 = scmp.eq.s32.totalorder %s15, 1
    %p87 = por %p85, %p86
    %p89 = scmp.ne.s32.totalorder %s72, %s88
    %p90 = scmp.eq.s32.totalorder %s15, 0
    %p91 = por %p89, %p90
    %s92 = ssub.s32 %s17, %s31
    %p93 = scmp.eq.s32.totalorder %s92, 0
    %s95 = sadd.s32 %s94, 1
    %s96 = scalar_select %p93, %s94, %s95
    %p99 = pneg %p93
    %p100 = scmp.eq.s32.totalorder %s9, 1
    %p101 = por %p99, %p100
    %p102 = scmp.ne.s32.totalorder %s94, %s97
    %p103 = scmp.eq.s32.totalorder %s9, 0
    %p104 = por %p102, %p103
    %p105 = scmp.ne.s32.totalorder %s94, %s97
    %p106 = scmp.eq.s32.totalorder %s14, 1
    %p107 = por %p105, %p106
    %p108 = scmp.ne.s32.totalorder %s97, %s98
    %p109 = scmp.eq.s32.totalorder %s14, 0
    %p110 = por %p108, %p109
    %p111 = scmp.ne.s32.totalorder %s97, %s98
    %p112 = scmp.eq.s32.totalorder %s15, 1
    %p113 = por %p111, %p112
    %p115 = scmp.ne.s32.totalorder %s98, %s114
    %p116 = scmp.eq.s32.totalorder %s15, 0
    %p117 = por %p115, %p116
    %s118 = ssub.s32 %s16, %s35
    %s119 = ssub.s32 %s17, %s31
    %s120 = sor.u32 %s118, %s119
    %p121 = scmp.eq.s32.totalorder %s120, 0
    %s123 = sadd.s32 %s122, 1
    %s124 = scalar_select %p121, %s122, %s123
    %p127 = pneg %p121
    %p128 = scmp.eq.s32.totalorder %s9, 1
    %p129 = por %p127, %p128
    %p130 = scmp.ne.s32.totalorder %s122, %s125
    %p131 = scmp.eq.s32.totalorder %s9, 0
    %p132 = por %p130, %p131
    %p133 = scmp.ne.s32.totalorder %s122, %s125
    %p134 = scmp.eq.s32.totalorder %s14, 1
    %p135 = por %p133, %p134
    %p136 = scmp.ne.s32.totalorder %s125, %s126
    %p137 = scmp.eq.s32.totalorder %s14, 0
    %p138 = por %p136, %p137
    %p139 = scmp.ne.s32.totalorder %s125, %s126
    %p140 = scmp.eq.s32.totalorder %s15, 1
    %p141 = por %p139, %p140
    %p143 = scmp.ne.s32.totalorder %s126, %s142
    %p144 = scmp.eq.s32.totalorder %s15, 0
    %p145 = por %p143, %p144
    %p146 = scmp.le.s32.totalorder 1, %s9
    %p147 = scmp.lt.s32.totalorder %s9, 3
    %p148 = pnand %p146, %p147
    %p149 = pneg %p148
    // Predicated region
    $region9: #{encoder_forward.10} parent=5 // pred_check
      _
    $region10: #{encoder_forward.10} parent=5 // pred_check_branch
      %151 = sbr.rel (%p148) target = $region12
    $region11: #{encoder_forward.10} parent=5 // pred_region
      %s152 = ssub.s32 %s9, 1
      // Predicated region
      $region13: #{encoder_forward.10} parent=11 // pred_check
        %p153 = pneg %p84
      $region14: #{encoder_forward.10} parent=11 // pred_check_branch
        %155 = sbr.rel (%p153) target = $region16
      $region15: #{encoder_forward.10} parent=11 // pred_region
        %s156 = smul.u32 16, %s21
        %p157 = scmp.lt.s32.totalorder %s156, 15
        %s158 = scalar_select %p157, %s156, 15
        %p159 = scmp.lt.s32.totalorder %s20, 0
        %s160 = scalar_select %p159, %s20, 0
        %s161 = sadd.s32 %s160, %s158
        %s162 = smul.addr %s161, 4
        %s163 = scalar_lea.vmem %s1, %s162
        %s164 = smul.u32 16, %s21
      $region16: #{encoder_forward.10} parent=11 // pred_fallthru
        _
      // Predicated region
      $region17: #{encoder_forward.10} parent=11 // pred_check
        %p165 = pneg %p110
      $region18: #{encoder_forward.10} parent=11 // pred_check_branch
        %167 = sbr.rel (%p165) target = $region20
      $region19: #{encoder_forward.10} parent=11 // pred_region
        %p168 = scmp.lt.s32.totalorder %s20, 0
        %s169 = scalar_select %p168, %s20, 0
        %s170 = scalar_lea.vmem %s2, %s169
      $region20: #{encoder_forward.10} parent=11 // pred_fallthru
        _
    $region12: #{encoder_forward.10} parent=5 // pred_fallthru
      _
    %p171 = scmp.lt.s32.totalorder %s9, 2
    // Predicated region
    $region21: #{encoder_forward.10} parent=5 // pred_check
      %p172 = pneg %p171
    $region22: #{encoder_forward.10} parent=5 // pred_check_branch
      %174 = sbr.rel (%p172) target = $region24
    $region23: #{encoder_forward.10} parent=5 // pred_region
      // Predicated region
      $region25: #{encoder_forward.10} parent=23 // pred_check
        %p175 = pneg %p50
      $region26: #{encoder_forward.10} parent=23 // pred_check_branch
        %177 = sbr.rel (%p175) target = $region28
      $region27: #{encoder_forward.10} parent=23 // pred_region
        %s178 = smul.u32 32, %s16
        %p179 = scmp.lt.s32.totalorder %s178, 63
        %s180 = scalar_select %p179, %s178, 63
        %p181 = scmp.lt.s32.totalorder %s18, 0
        %s182 = scalar_select %p181, %s18, 0
        %s183 = sadd.s32 %s182, %s180
        %s184 = smul.addr %s183, 4
        %s185 = scalar_lea.vmem %s0, %s184
        %s186 = smul.u32 32, %s16
      $region28: #{encoder_forward.10} parent=23 // pred_fallthru
        _
    $region24: #{encoder_forward.10} parent=5 // pred_fallthru
      _
    %p187 = scmp.le.s32.totalorder 1, %s9
    %p188 = scmp.lt.s32.totalorder %s9, 3
    %p189 = pnand %p187, %p188
    %p190 = pneg %p189
    // Predicated region
    $region29: #{encoder_forward.10} parent=5 // pred_check
      _
    $region30: #{encoder_forward.10} parent=5 // pred_check_branch
      %192 = sbr.rel (%p189) target = $region32
    $region31: #{encoder_forward.10} parent=5 // pred_region
      %s193 = ssub.s32 %s9, 1
      %s194 = smul.u32 32, %s19
      %p195 = scmp.lt.s32.totalorder %s194, 63
      %s196 = scalar_select %p195, %s194, 63
      %p197 = scmp.lt.s32.totalorder %s21, 0
      %s198 = scalar_select %p197, %s21, 0
      %s199 = sadd.s32 %s198, %s196
      %s200 = smul.addr %s199, 4
      %s201 = scalar_lea.vmem %s0, %s200
      %p202 = pneg %p56
      %p203 = pneg %p53
      %s204 = smul.u32 16, %s21
      %p205 = scmp.lt.s32.totalorder %s204, 15
      %s206 = scalar_select %p205, %s204, 15
      %p207 = scmp.lt.s32.totalorder %s20, 0
      %s208 = scalar_select %p207, %s20, 0
      %s209 = sadd.s32 %s208, %s206
      %s210 = smul.addr %s209, 4
      %s211 = scalar_lea.vmem %s1, %s210
      %p212 = pneg %p84
      %p213 = pneg %p81
      %p214 = scmp.lt.s32.totalorder %s20, 0
      %s215 = scalar_select %p214, %s20, 0
      %s216 = scalar_lea.vmem %s2, %s215
      %p217 = pneg %p110
      %p218 = pneg %p107
      %p219 = pneg %p138
      %p220 = pneg %p135
      %s221 = smul.u32 32, %s19
      %p222 = scmp.lt.s32.totalorder %s221, 63
      %s223 = scalar_select %p222, %s221, 63
      %p224 = scmp.lt.s32.totalorder %s20, 0
      %s225 = scalar_select %p224, %s20, 0
      %s226 = sadd.s32 %s225, %s223
      %s227 = smul.addr %s226, 4
      %s228 = scalar_lea.vmem %s3, %s227
      %s229 = smul.u32 32, %s19
      %p230 = scmp.lt.s32.totalorder %s229, 63
      %s231 = scalar_select %p230, %s229, 63
      %p232 = scmp.lt.s32.totalorder %s21, 0
      %s233 = scalar_select %p232, %s21, 0
      %s234 = sadd.s32 %s233, %s231
      %s235 = smul.addr %s234, 4
      %s236 = scalar_lea.vmem %s0, %s235
      %s237 = smul.u32 32, %s19
      %s238 = smul.u32 16, %s21
      %p239 = scmp.lt.s32.totalorder %s238, 15
      %s240 = scalar_select %p239, %s238, 15
      %p241 = scmp.lt.s32.totalorder %s20, 0
      %s242 = scalar_select %p241, %s20, 0
      %s243 = sadd.s32 %s242, %s240
      %s244 = smul.addr %s243, 4
      %s245 = scalar_lea.vmem %s1, %s244
      %s246 = smul.u32 16, %s21
      %p247 = scmp.lt.s32.totalorder %s20, 0
      %s248 = scalar_select %p247, %s20, 0
      %s249 = scalar_lea.vmem %s2, %s248
      %s250 = smul.u32 32, %s19
      %p251 = scmp.lt.s32.totalorder %s250, 63
      %s252 = scalar_select %p251, %s250, 63
      %p253 = scmp.lt.s32.totalorder %s20, 0
      %s254 = scalar_select %p253, %s20, 0
      %s255 = sadd.s32 %s254, %s252
      %s256 = smul.addr %s255, 4
      %s257 = scalar_lea.vmem %s3, %s256
      %s258 = smul.u32 32, %s19
      %p260 = scmp.eq.s32.totalorder %s21, 0
      // Predicated region
      $region33: #{encoder_forward.10} parent=31 // pred_check
        %p261 = pneg %p260
      $region34: #{encoder_forward.10} parent=31 // pred_check_branch
        %263 = sbr.rel (%p261) target = $region36
      $region35: #{encoder_forward.10} parent=31 // pred_region
        %264 = vst [vmem:[#allocation2] sm:$0xff] 0.0
        %265 = vst [vmem:[#allocation2 + $0x8] sm:$0xff] 0.0
        %266 = vst [vmem:[#allocation2 + $0x10] sm:$0xff] 0.0
        %267 = vst [vmem:[#allocation2 + $0x18] sm:$0xff] 0.0
        %268 = vst [vmem:[#allocation2 + $0x20] sm:$0xff] 0.0
        %269 = vst [vmem:[#allocation2 + $0x28] sm:$0xff] 0.0
        %270 = vst [vmem:[#allocation2 + $0x30] sm:$0xff] 0.0
        %271 = vst [vmem:[#allocation2 + $0x38] sm:$0xff] 0.0
        %272 = vst [vmem:[#allocation2 + $0x40] sm:$0xff] 0.0
        %273 = vst [vmem:[#allocation2 + $0x48] sm:$0xff] 0.0
        %274 = vst [vmem:[#allocation2 + $0x50] sm:$0xff] 0.0
        %275 = vst [vmem:[#allocation2 + $0x58] sm:$0xff] 0.0
        %276 = vst [vmem:[#allocation2 + $0x60] sm:$0xff] 0.0
        %277 = vst [vmem:[#allocation2 + $0x68] sm:$0xff] 0.0
        %278 = vst [vmem:[#allocation2 + $0x70] sm:$0xff] 0.0
        %279 = vst [vmem:[#allocation2 + $0x78] sm:$0xff] 0.0
        %280 = vst [vmem:[#allocation2 + $0x80] sm:$0xff] 0.0
        %281 = vst [vmem:[#allocation2 + $0x88] sm:$0xff] 0.0
        %282 = vst [vmem:[#allocation2 + $0x90] sm:$0xff] 0.0
        %283 = vst [vmem:[#allocation2 + $0x98] sm:$0xff] 0.0
        %284 = vst [vmem:[#allocation2 + $0xa0] sm:$0xff] 0.0
        %285 = vst [vmem:[#allocation2 + $0xa8] sm:$0xff] 0.0
        %286 = vst [vmem:[#allocation2 + $0xb0] sm:$0xff] 0.0
        %287 = vst [vmem:[#allocation2 + $0xb8] sm:$0xff] 0.0
        %288 = vst [vmem:[#allocation2 + $0xc0] sm:$0xff] 0.0
        %289 = vst [vmem:[#allocation2 + $0xc8] sm:$0xff] 0.0
        %290 = vst [vmem:[#allocation2 + $0xd0] sm:$0xff] 0.0
        %291 = vst [vmem:[#allocation2 + $0xd8] sm:$0xff] 0.0
        %292 = vst [vmem:[#allocation2 + $0xe0] sm:$0xff] 0.0
        %293 = vst [vmem:[#allocation2 + $0xe8] sm:$0xff] 0.0
        %294 = vst [vmem:[#allocation2 + $0xf0] sm:$0xff] 0.0
        %295 = vst [vmem:[#allocation2 + $0xf8] sm:$0xff] 0.0
      $region36: #{encoder_forward.10} parent=31 // pred_fallthru
        _
      %v296 = vld [vmem:[#allocation2] sm:$0xff]
      %v297 = vld [vmem:[#allocation2 + $0x8] sm:$0xff]
      %v298 = vld [vmem:[#allocation2 + $0x10] sm:$0xff]
      %v299 = vld [vmem:[#allocation2 + $0x18] sm:$0xff]
      %v300 = vld [vmem:[#allocation2 + $0x20] sm:$0xff]
      %v301 = vld [vmem:[#allocation2 + $0x28] sm:$0xff]
      %v302 = vld [vmem:[#allocation2 + $0x30] sm:$0xff]
      %v303 = vld [vmem:[#allocation2 + $0x38] sm:$0xff]
      %v304 = vld [vmem:[#allocation2 + $0x40] sm:$0xff]
      %v305 = vld [vmem:[#allocation2 + $0x48] sm:$0xff]
      %v306 = vld [vmem:[#allocation2 + $0x50] sm:$0xff]
      %v307 = vld [vmem:[#allocation2 + $0x58] sm:$0xff]
      %v308 = vld [vmem:[#allocation2 + $0x60] sm:$0xff]
      %v309 = vld [vmem:[#allocation2 + $0x68] sm:$0xff]
      %v310 = vld [vmem:[#allocation2 + $0x70] sm:$0xff]
      %v311 = vld [vmem:[#allocation2 + $0x78] sm:$0xff]
      %v312 = vld [vmem:[#allocation2 + $0x80] sm:$0xff]
      %v313 = vld [vmem:[#allocation2 + $0x88] sm:$0xff]
      %v314 = vld [vmem:[#allocation2 + $0x90] sm:$0xff]
      %v315 = vld [vmem:[#allocation2 + $0x98] sm:$0xff]
      %v316 = vld [vmem:[#allocation2 + $0xa0] sm:$0xff]
      %v317 = vld [vmem:[#allocation2 + $0xa8] sm:$0xff]
      %v318 = vld [vmem:[#allocation2 + $0xb0] sm:$0xff]
      %v319 = vld [vmem:[#allocation2 + $0xb8] sm:$0xff]
      %v320 = vld [vmem:[#allocation2 + $0xc0] sm:$0xff]
      %v321 = vld [vmem:[#allocation2 + $0xc8] sm:$0xff]
      %v322 = vld [vmem:[#allocation2 + $0xd0] sm:$0xff]
      %v323 = vld [vmem:[#allocation2 + $0xd8] sm:$0xff]
      %v324 = vld [vmem:[#allocation2 + $0xe0] sm:$0xff]
      %v325 = vld [vmem:[#allocation2 + $0xe8] sm:$0xff]
      %v326 = vld [vmem:[#allocation2 + $0xf0] sm:$0xff]
      %v327 = vld [vmem:[#allocation2 + $0xf8] sm:$0xff]
      %v328 = vld [vmem:[%s236] sm:$0xf]
      %v329 = vld [vmem:[%s236 + $0x4] sm:$0xf]
      %v330 = vld [vmem:[%s236 + $0x8] sm:$0xf]
      %v331 = vld [vmem:[%s236 + $0xc] sm:$0xf]
      %v332 = vld [vmem:[%s236 + $0x10] sm:$0xf]
      %v333 = vld [vmem:[%s236 + $0x14] sm:$0xf]
      %v334 = vld [vmem:[%s236 + $0x18] sm:$0xf]
      %v335 = vld [vmem:[%s236 + $0x1c] sm:$0xf]
      %v336 = vld [vmem:[%s236 + $0x20] sm:$0xf]
      %v337 = vld [vmem:[%s236 + $0x24] sm:$0xf]
      %v338 = vld [vmem:[%s236 + $0x28] sm:$0xf]
      %v339 = vld [vmem:[%s236 + $0x2c] sm:$0xf]
      %v340 = vld [vmem:[%s236 + $0x30] sm:$0xf]
      %v341 = vld [vmem:[%s236 + $0x34] sm:$0xf]
      %v342 = vld [vmem:[%s236 + $0x38] sm:$0xf]
      %v343 = vld [vmem:[%s236 + $0x3c] sm:$0xf]
      %v344 = vld [vmem:[%s236 + $0x40] sm:$0xf]
      %v345 = vld [vmem:[%s236 + $0x44] sm:$0xf]
      %v346 = vld [vmem:[%s236 + $0x48] sm:$0xf]
      %v347 = vld [vmem:[%s236 + $0x4c] sm:$0xf]
      %v348 = vld [vmem:[%s236 + $0x50] sm:$0xf]
      %v349 = vld [vmem:[%s236 + $0x54] sm:$0xf]
      %v350 = vld [vmem:[%s236 + $0x58] sm:$0xf]
      %v351 = vld [vmem:[%s236 + $0x5c] sm:$0xf]
      %v352 = vld [vmem:[%s236 + $0x60] sm:$0xf]
      %v353 = vld [vmem:[%s236 + $0x64] sm:$0xf]
      %v354 = vld [vmem:[%s236 + $0x68] sm:$0xf]
      %v355 = vld [vmem:[%s236 + $0x6c] sm:$0xf]
      %v356 = vld [vmem:[%s236 + $0x70] sm:$0xf]
      %v357 = vld [vmem:[%s236 + $0x74] sm:$0xf]
      %v358 = vld [vmem:[%s236 + $0x78] sm:$0xf]
      %v359 = vld [vmem:[%s236 + $0x7c] sm:$0xf]
      %v360 = vld [vmem:[%s245] sm:$0xf]
      %v361 = vld [vmem:[%s245 + $0x4] sm:$0xf]
      %v362 = vld [vmem:[%s245 + $0x8] sm:$0xf]
      %v363 = vld [vmem:[%s245 + $0xc] sm:$0xf]
      %v364 = vld [vmem:[%s245 + $0x10] sm:$0xf]
      %v365 = vld [vmem:[%s245 + $0x14] sm:$0xf]
      %v366 = vld [vmem:[%s245 + $0x18] sm:$0xf]
      %v367 = vld [vmem:[%s245 + $0x1c] sm:$0xf]
      %v368 = vld [vmem:[%s245 + $0x20] sm:$0xf]
      %v369 = vld [vmem:[%s245 + $0x24] sm:$0xf]
      %v370 = vld [vmem:[%s245 + $0x28] sm:$0xf]
      %v371 = vld [vmem:[%s245 + $0x2c] sm:$0xf]
      %v372 = vld [vmem:[%s245 + $0x30] sm:$0xf]
      %v373 = vld [vmem:[%s245 + $0x34] sm:$0xf]
      %v374 = vld [vmem:[%s245 + $0x38] sm:$0xf]
      %v375 = vld [vmem:[%s245 + $0x3c] sm:$0xf]
      %v408 = vunpack.c.l.b16 %v328
      %v409 = vunpack.c.l.b16 %v329
      %v410 = vunpack.c.l.b16 %v330
      %v411 = vunpack.c.l.b16 %v331
      %v412 = vunpack.c.l.b16 %v332
      %v413 = vunpack.c.l.b16 %v333
      %v414 = vunpack.c.l.b16 %v334
      %v415 = vunpack.c.l.b16 %v335
      %v416 = vunpack.c.l.b16 %v336
      %v417 = vunpack.c.l.b16 %v337
      %v418 = vunpack.c.l.b16 %v338
      %v419 = vunpack.c.l.b16 %v339
      %v420 = vunpack.c.l.b16 %v340
      %v421 = vunpack.c.l.b16 %v341
      %v422 = vunpack.c.l.b16 %v342
      %v423 = vunpack.c.l.b16 %v343
      %v424 = vunpack.c.l.b16 %v344
      %v425 = vunpack.c.l.b16 %v345
      %v426 = vunpack.c.l.b16 %v346
      %v427 = vunpack.c.l.b16 %v347
      %v428 = vunpack.c.l.b16 %v348
      %v429 = vunpack.c.l.b16 %v349
      %v430 = vunpack.c.l.b16 %v350
      %v431 = vunpack.c.l.b16 %v351
      %v432 = vunpack.c.l.b16 %v352
      %v433 = vunpack.c.l.b16 %v353
      %v434 = vunpack.c.l.b16 %v354
      %v435 = vunpack.c.l.b16 %v355
      %v436 = vunpack.c.l.b16 %v356
      %v437 = vunpack.c.l.b16 %v357
      %v438 = vunpack.c.l.b16 %v358
      %v439 = vunpack.c.l.b16 %v359
      %v440 = vpack.c.b16 %v409, %v408
      %v441 = vpack.c.b16 %v411, %v410
      %v442 = vpack.c.b16 %v413, %v412
      %v443 = vpack.c.b16 %v415, %v414
      %v444 = vpack.c.b16 %v417, %v416
      %v445 = vpack.c.b16 %v419, %v418
      %v446 = vpack.c.b16 %v421, %v420
      %v447 = vpack.c.b16 %v423, %v422
      %v448 = vpack.c.b16 %v425, %v424
      %v449 = vpack.c.b16 %v427, %v426
      %v450 = vpack.c.b16 %v429, %v428
      %v451 = vpack.c.b16 %v431, %v430
      %v452 = vpack.c.b16 %v433, %v432
      %v453 = vpack.c.b16 %v435, %v434
      %v454 = vpack.c.b16 %v437, %v436
      %v455 = vpack.c.b16 %v439, %v438
      %v488 = vunpack.c.l.b16 %v360
      %v489 = vunpack.c.l.b16 %v361
      %v490 = vunpack.c.l.b16 %v362
      %v491 = vunpack.c.l.b16 %v363
      %v492 = vunpack.c.l.b16 %v364
      %v493 = vunpack.c.l.b16 %v365
      %v494 = vunpack.c.l.b16 %v366
      %v495 = vunpack.c.l.b16 %v367
      %v496 = vunpack.c.l.b16 %v368
      %v497 = vunpack.c.l.b16 %v369
      %v498 = vunpack.c.l.b16 %v370
      %v499 = vunpack.c.l.b16 %v371
      %v500 = vunpack.c.l.b16 %v372
      %v501 = vunpack.c.l.b16 %v373
      %v502 = vunpack.c.l.b16 %v374
      %v503 = vunpack.c.l.b16 %v375
      %v504 = vpack.c.b16 %v489, %v488
      %v505 = vpack.c.b16 %v491, %v490
      %v506 = vpack.c.b16 %v493, %v492
      %v507 = vpack.c.b16 %v495, %v494
      %v508 = vpack.c.b16 %v497, %v496
      %v509 = vpack.c.b16 %v499, %v498
      %v510 = vpack.c.b16 %v501, %v500
      %v511 = vpack.c.b16 %v503, %v502
      %520 = vmatprep.subr.bf16.mxu0 0
      %521 = vmatpush1.bf16.msra.mxu0 %v511
      %522 = vmatprep.subr.bf16.mxu0 0
      %523 = vmatpush1.bf16.msra.mxu0 %v510
      %524 = vmatprep.subr.bf16.mxu0 0
      %525 = vmatpush1.bf16.msra.mxu0 %v509
      %526 = vmatprep.subr.bf16.mxu0 0
      %527 = vmatpush1.bf16.msra.mxu0 %v508
      %528 = vmatprep.subr.bf16.mxu0 0
      %529 = vmatpush1.bf16.msra.mxu0 %v507
      %530 = vmatprep.subr.bf16.mxu0 0
      %531 = vmatpush1.bf16.msra.mxu0 %v506
      %532 = vmatprep.subr.bf16.mxu0 0
      %533 = vmatpush1.bf16.msra.mxu0 %v505
      %534 = vmatprep.subr.bf16.mxu0 0
      %535 = vmatpush1.bf16.msra.mxu0 %v504
      %536 = vmatprep.subr.bf16.mxu0 0
      %537 = vmatpush2.bf16.msra.mxu0 0
      %538 = vmatprep.subr.bf16.mxu0 0
      %539 = vmatpush2.bf16.msra.mxu0 0
      %540 = vmatprep.subr.bf16.mxu0 0
      %541 = vmatpush2.bf16.msra.mxu0 0
      %542 = vmatprep.subr.bf16.mxu0 0
      %543 = vmatpush2.bf16.msra.mxu0 0
      %544 = vmatprep.subr.bf16.mxu0 0
      %545 = vmatpush2.bf16.msra.mxu0 0
      %546 = vmatprep.subr.bf16.mxu0 0
      %547 = vmatpush2.bf16.msra.mxu0 0
      %548 = vmatprep.subr.bf16.mxu0 0
      %549 = vmatpush2.bf16.msra.mxu0 0
      %550 = vmatprep.subr.bf16.mxu0 0
      %551 = vmatpush2.bf16.msra.mxu0 0
      %552 = vmatprep.mubr.bf16.mxu0 0
      %553 = vmatmul.mubr.bf16.gmra.mxu0 %v440
      %v554 = vpop.f32.mrf.mxu0
      %v555 = vadd.f32 0.0, %v554
      %v556 = vpop.f32.mrf.mxu0
      %v557 = vpop.f32.mrf.mxu0
      %v558 = vadd.f32 0.0, %v557
      %v559 = vpop.f32.mrf.mxu0
      %560 = vmatprep.mubr.bf16.mxu0 0
      %561 = vmatmul.mubr.bf16.gmra.mxu0 %v441
      %v562 = vpop.f32.mrf.mxu0
      %v563 = vadd.f32 0.0, %v562
      %v564 = vpop.f32.mrf.mxu0
      %v565 = vpop.f32.mrf.mxu0
      %v566 = vadd.f32 0.0, %v565
      %v567 = vpop.f32.mrf.mxu0
      %568 = vmatprep.mubr.bf16.mxu0 0
      %569 = vmatmul.mubr.bf16.gmra.mxu0 %v442
      %v570 = vpop.f32.mrf.mxu0
      %v571 = vadd.f32 0.0, %v570
      %v572 = vpop.f32.mrf.mxu0
      %v573 = vpop.f32.mrf.mxu0
      %v574 = vadd.f32 0.0, %v573
      %v575 = vpop.f32.mrf.mxu0
      %576 = vmatprep.mubr.bf16.mxu0 0
      %577 = vmatmul.mubr.bf16.gmra.mxu0 %v443
      %v578 = vpop.f32.mrf.mxu0
      %v579 = vadd.f32 0.0, %v578
      %v580 = vpop.f32.mrf.mxu0
      %v581 = vpop.f32.mrf.mxu0
      %v582 = vadd.f32 0.0, %v581
      %v583 = vpop.f32.mrf.mxu0
      %584 = vmatprep.mubr.bf16.mxu0 0
      %585 = vmatmul.mubr.bf16.gmra.mxu0 %v444
      %v586 = vpop.f32.mrf.mxu0
      %v587 = vadd.f32 0.0, %v586
      %v588 = vpop.f32.mrf.mxu0
      %v589 = vpop.f32.mrf.mxu0
      %v590 = vadd.f32 0.0, %v589
      %v591 = vpop.f32.mrf.mxu0
      %592 = vmatprep.mubr.bf16.mxu0 0
      %593 = vmatmul.mubr.bf16.gmra.mxu0 %v445
      %v594 = vpop.f32.mrf.mxu0
      %v595 = vadd.f32 0.0, %v594
      %v596 = vpop.f32.mrf.mxu0
      %v597 = vpop.f32.mrf.mxu0
      %v598 = vadd.f32 0.0, %v597
      %v599 = vpop.f32.mrf.mxu0
      %600 = vmatprep.mubr.bf16.mxu0 0
      %601 = vmatmul.mubr.bf16.gmra.mxu0 %v446
      %v602 = vpop.f32.mrf.mxu0
      %v603 = vadd.f32 0.0, %v602
      %v604 = vpop.f32.mrf.mxu0
      %v605 = vpop.f32.mrf.mxu0
      %v606 = vadd.f32 0.0, %v605
      %v607 = vpop.f32.mrf.mxu0
      %608 = vmatprep.mubr.bf16.mxu0 0
      %609 = vmatmul.mubr.bf16.gmra.mxu0 %v447
      %v610 = vpop.f32.mrf.mxu0
      %v611 = vadd.f32 0.0, %v610
      %v612 = vpop.f32.mrf.mxu0
      %v613 = vpop.f32.mrf.mxu0
      %v614 = vadd.f32 0.0, %v613
      %v615 = vpop.f32.mrf.mxu0
      %616 = vmatprep.mubr.bf16.mxu0 0
      %617 = vmatmul.mubr.bf16.gmra.mxu0 %v448
      %v618 = vpop.f32.mrf.mxu0
      %v619 = vadd.f32 0.0, %v618
      %v620 = vpop.f32.mrf.mxu0
      %v621 = vpop.f32.mrf.mxu0
      %v622 = vadd.f32 0.0, %v621
      %v623 = vpop.f32.mrf.mxu0
      %624 = vmatprep.mubr.bf16.mxu0 0
      %625 = vmatmul.mubr.bf16.gmra.mxu0 %v449
      %v626 = vpop.f32.mrf.mxu0
      %v627 = vadd.f32 0.0, %v626
      %v628 = vpop.f32.mrf.mxu0
      %v629 = vpop.f32.mrf.mxu0
      %v630 = vadd.f32 0.0, %v629
      %v631 = vpop.f32.mrf.mxu0
      %632 = vmatprep.mubr.bf16.mxu0 0
      %633 = vmatmul.mubr.bf16.gmra.mxu0 %v450
      %v634 = vpop.f32.mrf.mxu0
      %v635 = vadd.f32 0.0, %v634
      %v636 = vpop.f32.mrf.mxu0
      %v637 = vpop.f32.mrf.mxu0
      %v638 = vadd.f32 0.0, %v637
      %v639 = vpop.f32.mrf.mxu0
      %640 = vmatprep.mubr.bf16.mxu0 0
      %641 = vmatmul.mubr.bf16.gmra.mxu0 %v451
      %v642 = vpop.f32.mrf.mxu0
      %v643 = vadd.f32 0.0, %v642
      %v644 = vpop.f32.mrf.mxu0
      %v645 = vpop.f32.mrf.mxu0
      %v646 = vadd.f32 0.0, %v645
      %v647 = vpop.f32.mrf.mxu0
      %648 = vmatprep.mubr.bf16.mxu0 0
      %649 = vmatmul.mubr.bf16.gmra.mxu0 %v452
      %v650 = vpop.f32.mrf.mxu0
      %v651 = vadd.f32 0.0, %v650
      %v652 = vpop.f32.mrf.mxu0
      %v653 = vpop.f32.mrf.mxu0
      %v654 = vadd.f32 0.0, %v653
      %v655 = vpop.f32.mrf.mxu0
      %656 = vmatprep.mubr.bf16.mxu0 0
      %657 = vmatmul.mubr.bf16.gmra.mxu0 %v453
      %v658 = vpop.f32.mrf.mxu0
      %v659 = vadd.f32 0.0, %v658
      %v660 = vpop.f32.mrf.mxu0
      %v661 = vpop.f32.mrf.mxu0
      %v662 = vadd.f32 0.0, %v661
      %v663 = vpop.f32.mrf.mxu0
      %664 = vmatprep.mubr.bf16.mxu0 0
      %665 = vmatmul.mubr.bf16.gmra.mxu0 %v454
      %v666 = vpop.f32.mrf.mxu0
      %v667 = vadd.f32 0.0, %v666
      %v668 = vpop.f32.mrf.mxu0
      %v669 = vpop.f32.mrf.mxu0
      %v670 = vadd.f32 0.0, %v669
      %v671 = vpop.f32.mrf.mxu0
      %672 = vmatprep.mubr.bf16.mxu0 0
      %673 = vmatmul.mubr.bf16.gmra.mxu0 %v455
      %v674 = vpop.f32.mrf.mxu0
      %v675 = vadd.f32 0.0, %v674
      %v676 = vpop.f32.mrf.mxu0
      %v677 = vpop.f32.mrf.mxu0
      %v678 = vadd.f32 0.0, %v677
      %v679 = vpop.f32.mrf.mxu0
      %680 = vdwg.mxu0
      %v681 = vadd.f32 %v296, %v555
      %v682 = vadd.f32 %v297, %v558
      %v683 = vadd.f32 %v298, %v563
      %v684 = vadd.f32 %v299, %v566
      %v685 = vadd.f32 %v300, %v571
      %v686 = vadd.f32 %v301, %v574
      %v687 = vadd.f32 %v302, %v579
      %v688 = vadd.f32 %v303, %v582
      %v689 = vadd.f32 %v304, %v587
      %v690 = vadd.f32 %v305, %v590
      %v691 = vadd.f32 %v306, %v595
      %v692 = vadd.f32 %v307, %v598
      %v693 = vadd.f32 %v308, %v603
      %v694 = vadd.f32 %v309, %v606
      %v695 = vadd.f32 %v310, %v611
      %v696 = vadd.f32 %v311, %v614
      %v697 = vadd.f32 %v312, %v619
      %v698 = vadd.f32 %v313, %v622
      %v699 = vadd.f32 %v314, %v627
      %v700 = vadd.f32 %v315, %v630
      %v701 = vadd.f32 %v316, %v635
      %v702 = vadd.f32 %v317, %v638
      %v703 = vadd.f32 %v318, %v643
      %v704 = vadd.f32 %v319, %v646
      %v705 = vadd.f32 %v320, %v651
      %v706 = vadd.f32 %v321, %v654
      %v707 = vadd.f32 %v322, %v659
      %v708 = vadd.f32 %v323, %v662
      %v709 = vadd.f32 %v324, %v667
      %v710 = vadd.f32 %v325, %v670
      %v711 = vadd.f32 %v326, %v675
      %v712 = vadd.f32 %v327, %v678
      %713 = vst [vmem:[#allocation2] sm:$0xff] %v681
      %714 = vst [vmem:[#allocation2 + $0x8] sm:$0xff] %v682
      %715 = vst [vmem:[#allocation2 + $0x10] sm:$0xff] %v683
      %716 = vst [vmem:[#allocation2 + $0x18] sm:$0xff] %v684
      %717 = vst [vmem:[#allocation2 + $0x20] sm:$0xff] %v685
      %718 = vst [vmem:[#allocation2 + $0x28] sm:$0xff] %v686
      %719 = vst [vmem:[#allocation2 + $0x30] sm:$0xff] %v687
      %720 = vst [vmem:[#allocation2 + $0x38] sm:$0xff] %v688
      %721 = vst [vmem:[#allocation2 + $0x40] sm:$0xff] %v689
      %722 = vst [vmem:[#allocation2 + $0x48] sm:$0xff] %v690
      %723 = vst [vmem:[#allocation2 + $0x50] sm:$0xff] %v691
      %724 = vst [vmem:[#allocation2 + $0x58] sm:$0xff] %v692
      %725 = vst [vmem:[#allocation2 + $0x60] sm:$0xff] %v693
      %726 = vst [vmem:[#allocation2 + $0x68] sm:$0xff] %v694
      %727 = vst [vmem:[#allocation2 + $0x70] sm:$0xff] %v695
      %728 = vst [vmem:[#allocation2 + $0x78] sm:$0xff] %v696
      %729 = vst [vmem:[#allocation2 + $0x80] sm:$0xff] %v697
      %730 = vst [vmem:[#allocation2 + $0x88] sm:$0xff] %v698
      %731 = vst [vmem:[#allocation2 + $0x90] sm:$0xff] %v699
      %732 = vst [vmem:[#allocation2 + $0x98] sm:$0xff] %v700
      %733 = vst [vmem:[#allocation2 + $0xa0] sm:$0xff] %v701
      %734 = vst [vmem:[#allocation2 + $0xa8] sm:$0xff] %v702
      %735 = vst [vmem:[#allocation2 + $0xb0] sm:$0xff] %v703
      %736 = vst [vmem:[#allocation2 + $0xb8] sm:$0xff] %v704
      %737 = vst [vmem:[#allocation2 + $0xc0] sm:$0xff] %v705
      %738 = vst [vmem:[#allocation2 + $0xc8] sm:$0xff] %v706
      %739 = vst [vmem:[#allocation2 + $0xd0] sm:$0xff] %v707
      %740 = vst [vmem:[#allocation2 + $0xd8] sm:$0xff] %v708
      %741 = vst [vmem:[#allocation2 + $0xe0] sm:$0xff] %v709
      %742 = vst [vmem:[#allocation2 + $0xe8] sm:$0xff] %v710
      %743 = vst [vmem:[#allocation2 + $0xf0] sm:$0xff] %v711
      %744 = vst [vmem:[#allocation2 + $0xf8] sm:$0xff] %v712
      // Predicated region
      $region37: #{encoder_forward.10} parent=31 // pred_check
        %p745 = pneg %p260
      $region38: #{encoder_forward.10} parent=31 // pred_check_branch
        %747 = sbr.rel (%p745) target = $region40
      $region39: #{encoder_forward.10} parent=31 // pred_region
        %v748 = vld [vmem:[#allocation2] sm:$0xff]
        %v749 = vld [vmem:[#allocation2 + $0x8] sm:$0xff]
        %v750 = vld [vmem:[#allocation2 + $0x10] sm:$0xff]
        %v751 = vld [vmem:[#allocation2 + $0x18] sm:$0xff]
        %v752 = vld [vmem:[#allocation2 + $0x20] sm:$0xff]
        %v753 = vld [vmem:[#allocation2 + $0x28] sm:$0xff]
        %v754 = vld [vmem:[#allocation2 + $0x30] sm:$0xff]
        %v755 = vld [vmem:[#allocation2 + $0x38] sm:$0xff]
        %v756 = vld [vmem:[#allocation2 + $0x40] sm:$0xff]
        %v757 = vld [vmem:[#allocation2 + $0x48] sm:$0xff]
        %v758 = vld [vmem:[#allocation2 + $0x50] sm:$0xff]
        %v759 = vld [vmem:[#allocation2 + $0x58] sm:$0xff]
        %v760 = vld [vmem:[#allocation2 + $0x60] sm:$0xff]
        %v761 = vld [vmem:[#allocation2 + $0x68] sm:$0xff]
        %v762 = vld [vmem:[#allocation2 + $0x70] sm:$0xff]
        %v763 = vld [vmem:[#allocation2 + $0x78] sm:$0xff]
        %v764 = vld [vmem:[#allocation2 + $0x80] sm:$0xff]
        %v765 = vld [vmem:[#allocation2 + $0x88] sm:$0xff]
        %v766 = vld [vmem:[#allocation2 + $0x90] sm:$0xff]
        %v767 = vld [vmem:[#allocation2 + $0x98] sm:$0xff]
        %v768 = vld [vmem:[#allocation2 + $0xa0] sm:$0xff]
        %v769 = vld [vmem:[#allocation2 + $0xa8] sm:$0xff]
        %v770 = vld [vmem:[#allocation2 + $0xb0] sm:$0xff]
        %v771 = vld [vmem:[#allocation2 + $0xb8] sm:$0xff]
        %v772 = vld [vmem:[#allocation2 + $0xc0] sm:$0xff]
        %v773 = vld [vmem:[#allocation2 + $0xc8] sm:$0xff]
        %v774 = vld [vmem:[#allocation2 + $0xd0] sm:$0xff]
        %v775 = vld [vmem:[#allocation2 + $0xd8] sm:$0xff]
        %v776 = vld [vmem:[#allocation2 + $0xe0] sm:$0xff]
        %v777 = vld [vmem:[#allocation2 + $0xe8] sm:$0xff]
        %v778 = vld [vmem:[#allocation2 + $0xf0] sm:$0xff]
        %v779 = vld [vmem:[#allocation2 + $0xf8] sm:$0xff]
        %v780 = vld [vmem:[%s249] sm:$0x1]
        %v782 = vlaneseq
        %v783 = vshrl.u32 %v782, 7
        %v784 = vsub.s32 0, %v783
        %v785 = vrot.slane %v780, %v784
        %v787 = vadd.f32 %v748, %v785
        %v788 = vadd.f32 %v749, %v785
        %v789 = vadd.f32 %v750, %v785
        %v790 = vadd.f32 %v751, %v785
        %v791 = vadd.f32 %v752, %v785
        %v792 = vadd.f32 %v753, %v785
        %v793 = vadd.f32 %v754, %v785
        %v794 = vadd.f32 %v755, %v785
        %v795 = vadd.f32 %v756, %v785
        %v796 = vadd.f32 %v757, %v785
        %v797 = vadd.f32 %v758, %v785
        %v798 = vadd.f32 %v759, %v785
        %v799 = vadd.f32 %v760, %v785
        %v800 = vadd.f32 %v761, %v785
        %v801 = vadd.f32 %v762, %v785
        %v802 = vadd.f32 %v763, %v785
        %v803 = vadd.f32 %v764, %v785
        %v804 = vadd.f32 %v765, %v785
        %v805 = vadd.f32 %v766, %v785
        %v806 = vadd.f32 %v767, %v785
        %v807 = vadd.f32 %v768, %v785
        %v808 = vadd.f32 %v769, %v785
        %v809 = vadd.f32 %v770, %v785
        %v810 = vadd.f32 %v771, %v785
        %v811 = vadd.f32 %v772, %v785
        %v812 = vadd.f32 %v773, %v785
        %v813 = vadd.f32 %v774, %v785
        %v814 = vadd.f32 %v775, %v785
        %v815 = vadd.f32 %v776, %v785
        %v816 = vadd.f32 %v777, %v785
        %v817 = vadd.f32 %v778, %v785
        %v818 = vadd.f32 %v779, %v785
        %vm819 = vcmp.ge.f32.partialorder %v787, 0.0
        %vm820 = vcmp.ge.f32.partialorder %v788, 0.0
        %vm821 = vcmp.ge.f32.partialorder %v789, 0.0
        %vm822 = vcmp.ge.f32.partialorder %v790, 0.0
        %vm823 = vcmp.ge.f32.partialorder %v791, 0.0
        %vm824 = vcmp.ge.f32.partialorder %v792, 0.0
        %vm825 = vcmp.ge.f32.partialorder %v793, 0.0
        %vm826 = vcmp.ge.f32.partialorder %v794, 0.0
        %vm827 = vcmp.ge.f32.partialorder %v795, 0.0
        %vm828 = vcmp.ge.f32.partialorder %v796, 0.0
        %vm829 = vcmp.ge.f32.partialorder %v797, 0.0
        %vm830 = vcmp.ge.f32.partialorder %v798, 0.0
        %vm831 = vcmp.ge.f32.partialorder %v799, 0.0
        %vm832 = vcmp.ge.f32.partialorder %v800, 0.0
        %vm833 = vcmp.ge.f32.partialorder %v801, 0.0
        %vm834 = vcmp.ge.f32.partialorder %v802, 0.0
        %vm835 = vcmp.ge.f32.partialorder %v803, 0.0
        %vm836 = vcmp.ge.f32.partialorder %v804, 0.0
        %vm837 = vcmp.ge.f32.partialorder %v805, 0.0
        %vm838 = vcmp.ge.f32.partialorder %v806, 0.0
        %vm839 = vcmp.ge.f32.partialorder %v807, 0.0
        %vm840 = vcmp.ge.f32.partialorder %v808, 0.0
        %vm841 = vcmp.ge.f32.partialorder %v809, 0.0
        %vm842 = vcmp.ge.f32.partialorder %v810, 0.0
        %vm843 = vcmp.ge.f32.partialorder %v811, 0.0
        %vm844 = vcmp.ge.f32.partialorder %v812, 0.0
        %vm845 = vcmp.ge.f32.partialorder %v813, 0.0
        %vm846 = vcmp.ge.f32.partialorder %v814, 0.0
        %vm847 = vcmp.ge.f32.partialorder %v815, 0.0
        %vm848 = vcmp.ge.f32.partialorder %v816, 0.0
        %vm849 = vcmp.ge.f32.partialorder %v817, 0.0
        %vm850 = vcmp.ge.f32.partialorder %v818, 0.0
        %v851 = vmul.f32 %v787, 0.2
        %v852 = vmul.f32 %v788, 0.2
        %v853 = vmul.f32 %v789, 0.2
        %v854 = vmul.f32 %v790, 0.2
        %v855 = vmul.f32 %v791, 0.2
        %v856 = vmul.f32 %v792, 0.2
        %v857 = vmul.f32 %v793, 0.2
        %v858 = vmul.f32 %v794, 0.2
        %v859 = vmul.f32 %v795, 0.2
        %v860 = vmul.f32 %v796, 0.2
        %v861 = vmul.f32 %v797, 0.2
        %v862 = vmul.f32 %v798, 0.2
        %v863 = vmul.f32 %v799, 0.2
        %v864 = vmul.f32 %v800, 0.2
        %v865 = vmul.f32 %v801, 0.2
        %v866 = vmul.f32 %v802, 0.2
        %v867 = vmul.f32 %v803, 0.2
        %v868 = vmul.f32 %v804, 0.2
        %v869 = vmul.f32 %v805, 0.2
        %v870 = vmul.f32 %v806, 0.2
        %v871 = vmul.f32 %v807, 0.2
        %v872 = vmul.f32 %v808, 0.2
        %v873 = vmul.f32 %v809, 0.2
        %v874 = vmul.f32 %v810, 0.2
        %v875 = vmul.f32 %v811, 0.2
        %v876 = vmul.f32 %v812, 0.2
        %v877 = vmul.f32 %v813, 0.2
        %v878 = vmul.f32 %v814, 0.2
        %v879 = vmul.f32 %v815, 0.2
        %v880 = vmul.f32 %v816, 0.2
        %v881 = vmul.f32 %v817, 0.2
        %v882 = vmul.f32 %v818, 0.2
        %v883 = vsel %vm819, %v787, %v851
        %v884 = vsel %vm820, %v788, %v852
        %v885 = vsel %vm821, %v789, %v853
        %v886 = vsel %vm822, %v790, %v854
        %v887 = vsel %vm823, %v791, %v855
        %v888 = vsel %vm824, %v792, %v856
        %v889 = vsel %vm825, %v793, %v857
        %v890 = vsel %vm826, %v794, %v858
        %v891 = vsel %vm827, %v795, %v859
        %v892 = vsel %vm828, %v796, %v860
        %v893 = vsel %vm829, %v797, %v861
        %v894 = vsel %vm830, %v798, %v862
        %v895 = vsel %vm831, %v799, %v863
        %v896 = vsel %vm832, %v800, %v864
        %v897 = vsel %vm833, %v801, %v865
        %v898 = vsel %vm834, %v802, %v866
        %v899 = vsel %vm835, %v803, %v867
        %v900 = vsel %vm836, %v804, %v868
        %v901 = vsel %vm837, %v805, %v869
        %v902 = vsel %vm838, %v806, %v870
        %v903 = vsel %vm839, %v807, %v871
        %v904 = vsel %vm840, %v808, %v872
        %v905 = vsel %vm841, %v809, %v873
        %v906 = vsel %vm842, %v810, %v874
        %v907 = vsel %vm843, %v811, %v875
        %v908 = vsel %vm844, %v812, %v876
        %v909 = vsel %vm845, %v813, %v877
        %v910 = vsel %vm846, %v814, %v878
        %v911 = vsel %vm847, %v815, %v879
        %v912 = vsel %vm848, %v816, %v880
        %v913 = vsel %vm849, %v817, %v881
        %v914 = vsel %vm850, %v818, %v882
        %v915 = vpack.c.bf16 %v884, %v883
        %v916 = vpack.c.bf16 %v886, %v885
        %v917 = vpack.c.bf16 %v888, %v887
        %v918 = vpack.c.bf16 %v890, %v889
        %v919 = vpack.c.bf16 %v892, %v891
        %v920 = vpack.c.bf16 %v894, %v893
        %v921 = vpack.c.bf16 %v896, %v895
        %v922 = vpack.c.bf16 %v898, %v897
        %v923 = vpack.c.bf16 %v900, %v899
        %v924 = vpack.c.bf16 %v902, %v901
        %v925 = vpack.c.bf16 %v904, %v903
        %v926 = vpack.c.bf16 %v906, %v905
        %v927 = vpack.c.bf16 %v908, %v907
        %v928 = vpack.c.bf16 %v910, %v909
        %v929 = vpack.c.bf16 %v912, %v911
        %v930 = vpack.c.bf16 %v914, %v913
        %v947 = vunpack.c.l.b16 %v915
        %v948 = vunpack.c.h.b16 %v915
        %v949 = vunpack.c.l.b16 %v916
        %v950 = vunpack.c.h.b16 %v916
        %v951 = vunpack.c.l.b16 %v917
        %v952 = vunpack.c.h.b16 %v917
        %v953 = vunpack.c.l.b16 %v918
        %v954 = vunpack.c.h.b16 %v918
        %v955 = vunpack.c.l.b16 %v919
        %v956 = vunpack.c.h.b16 %v919
        %v957 = vunpack.c.l.b16 %v920
        %v958 = vunpack.c.h.b16 %v920
        %v959 = vunpack.c.l.b16 %v921
        %v960 = vunpack.c.h.b16 %v921
        %v961 = vunpack.c.l.b16 %v922
        %v962 = vunpack.c.h.b16 %v922
        %v963 = vunpack.c.l.b16 %v923
        %v964 = vunpack.c.h.b16 %v923
        %v965 = vunpack.c.l.b16 %v924
        %v966 = vunpack.c.h.b16 %v924
        %v967 = vunpack.c.l.b16 %v925
        %v968 = vunpack.c.h.b16 %v925
        %v969 = vunpack.c.l.b16 %v926
        %v970 = vunpack.c.h.b16 %v926
        %v971 = vunpack.c.l.b16 %v927
        %v972 = vunpack.c.h.b16 %v927
        %v973 = vunpack.c.l.b16 %v928
        %v974 = vunpack.c.h.b16 %v928
        %v975 = vunpack.c.l.b16 %v929
        %v976 = vunpack.c.h.b16 %v929
        %v977 = vunpack.c.l.b16 %v930
        %v978 = vunpack.c.h.b16 %v930
        %v979 = vpack.c.b16 %v947, %v947
        %v980 = vpack.c.b16 %v948, %v948
        %v981 = vpack.c.b16 %v949, %v949
        %v982 = vpack.c.b16 %v950, %v950
        %v983 = vpack.c.b16 %v951, %v951
        %v984 = vpack.c.b16 %v952, %v952
        %v985 = vpack.c.b16 %v953, %v953
        %v986 = vpack.c.b16 %v954, %v954
        %v987 = vpack.c.b16 %v955, %v955
        %v988 = vpack.c.b16 %v956, %v956
        %v989 = vpack.c.b16 %v957, %v957
        %v990 = vpack.c.b16 %v958, %v958
        %v991 = vpack.c.b16 %v959, %v959
        %v992 = vpack.c.b16 %v960, %v960
        %v993 = vpack.c.b16 %v961, %v961
        %v994 = vpack.c.b16 %v962, %v962
        %v995 = vpack.c.b16 %v963, %v963
        %v996 = vpack.c.b16 %v964, %v964
        %v997 = vpack.c.b16 %v965, %v965
        %v998 = vpack.c.b16 %v966, %v966
        %v999 = vpack.c.b16 %v967, %v967
        %v1000 = vpack.c.b16 %v968, %v968
        %v1001 = vpack.c.b16 %v969, %v969
        %v1002 = vpack.c.b16 %v970, %v970
        %v1003 = vpack.c.b16 %v971, %v971
        %v1004 = vpack.c.b16 %v972, %v972
        %v1005 = vpack.c.b16 %v973, %v973
        %v1006 = vpack.c.b16 %v974, %v974
        %v1007 = vpack.c.b16 %v975, %v975
        %v1008 = vpack.c.b16 %v976, %v976
        %v1009 = vpack.c.b16 %v977, %v977
        %v1010 = vpack.c.b16 %v978, %v978
        %1043 = vst [vmem:[%s257] sm:$0xf] %v979
        %1044 = vst [vmem:[%s257 + $0x4] sm:$0xf] %v980
        %1045 = vst [vmem:[%s257 + $0x8] sm:$0xf] %v981
        %1046 = vst [vmem:[%s257 + $0xc] sm:$0xf] %v982
        %1047 = vst [vmem:[%s257 + $0x10] sm:$0xf] %v983
        %1048 = vst [vmem:[%s257 + $0x14] sm:$0xf] %v984
        %1049 = vst [vmem:[%s257 + $0x18] sm:$0xf] %v985
        %1050 = vst [vmem:[%s257 + $0x1c] sm:$0xf] %v986
        %1051 = vst [vmem:[%s257 + $0x20] sm:$0xf] %v987
        %1052 = vst [vmem:[%s257 + $0x24] sm:$0xf] %v988
        %1053 = vst [vmem:[%s257 + $0x28] sm:$0xf] %v989
        %1054 = vst [vmem:[%s257 + $0x2c] sm:$0xf] %v990
        %1055 = vst [vmem:[%s257 + $0x30] sm:$0xf] %v991
        %1056 = vst [vmem:[%s257 + $0x34] sm:$0xf] %v992
        %1057 = vst [vmem:[%s257 + $0x38] sm:$0xf] %v993
        %1058 = vst [vmem:[%s257 + $0x3c] sm:$0xf] %v994
        %1059 = vst [vmem:[%s257 + $0x40] sm:$0xf] %v995
        %1060 = vst [vmem:[%s257 + $0x44] sm:$0xf] %v996
        %1061 = vst [vmem:[%s257 + $0x48] sm:$0xf] %v997
        %1062 = vst [vmem:[%s257 + $0x4c] sm:$0xf] %v998
        %1063 = vst [vmem:[%s257 + $0x50] sm:$0xf] %v999
        %1064 = vst [vmem:[%s257 + $0x54] sm:$0xf] %v1000
        %1065 = vst [vmem:[%s257 + $0x58] sm:$0xf] %v1001
        %1066 = vst [vmem:[%s257 + $0x5c] sm:$0xf] %v1002
        %1067 = vst [vmem:[%s257 + $0x60] sm:$0xf] %v1003
        %1068 = vst [vmem:[%s257 + $0x64] sm:$0xf] %v1004
        %1069 = vst [vmem:[%s257 + $0x68] sm:$0xf] %v1005
        %1070 = vst [vmem:[%s257 + $0x6c] sm:$0xf] %v1006
        %1071 = vst [vmem:[%s257 + $0x70] sm:$0xf] %v1007
        %1072 = vst [vmem:[%s257 + $0x74] sm:$0xf] %v1008
        %1073 = vst [vmem:[%s257 + $0x78] sm:$0xf] %v1009
        %1074 = vst [vmem:[%s257 + $0x7c] sm:$0xf] %v1010
      $region40: #{encoder_forward.10} parent=31 // pred_fallthru
        _
      %s1075 = smul.u32 32, %s19
      %p1076 = scmp.lt.s32.totalorder %s1075, 63
      %s1077 = scalar_select %p1076, %s1075, 63
      %p1078 = scmp.lt.s32.totalorder %s20, 0
      %s1079 = scalar_select %p1078, %s20, 0
      %s1080 = sadd.s32 %s1079, %s1077
      %s1081 = smul.addr %s1080, 4
      %s1082 = scalar_lea.vmem %s3, %s1081
      // Predicated region
      $region41: #{encoder_forward.10} parent=31 // pred_check
        %p1083 = pneg %p135
      $region42: #{encoder_forward.10} parent=31 // pred_check_branch
        %1085 = sbr.rel (%p1083) target = $region44
      $region43: #{encoder_forward.10} parent=31 // pred_region
        %s1086 = smul.u32 32, %s19
      $region44: #{encoder_forward.10} parent=31 // pred_fallthru
        _
    $region32: #{encoder_forward.10} parent=5 // pred_fallthru
      _
    %p1087 = scmp.le.s32.totalorder 2, %s9
    // Predicated region
    $region45: #{encoder_forward.10} parent=5 // pred_check
      %p1088 = pneg %p1087
    $region46: #{encoder_forward.10} parent=5 // pred_check_branch
      %1090 = sbr.rel (%p1088) target = $region48
    $region47: #{encoder_forward.10} parent=5 // pred_region
      %s1091 = ssub.s32 %s9, 2
      // Predicated region
      $region49: #{encoder_forward.10} parent=47 // pred_check
        %p1092 = pneg %p141
      $region50: #{encoder_forward.10} parent=47 // pred_check_branch
        %1094 = sbr.rel (%p1092) target = $region52
      $region51: #{encoder_forward.10} parent=47 // pred_region
        %s1095 = smul.u32 32, %s22
        %p1096 = scmp.lt.s32.totalorder %s1095, 63
        %s1097 = scalar_select %p1096, %s1095, 63
        %p1098 = scmp.lt.s32.totalorder %s23, 0
        %s1099 = scalar_select %p1098, %s23, 0
        %s1100 = sadd.s32 %s1099, %s1097
        %s1101 = smul.addr %s1100, 4
        %s1102 = scalar_lea.vmem %s3, %s1101
      $region52: #{encoder_forward.10} parent=47 // pred_fallthru
        _
    $region48: #{encoder_forward.10} parent=5 // pred_fallthru
      _
  $region6: #{encoder_forward.10} parent=0 // loop_footer
    %s13 = sadd.s32 1, %s9
  $region7: #{encoder_forward.10} parent=0 // loop_footer_branch
    %8 = sbr.rel target = $region3
  $region8: #{encoder_forward.10} parent=0 // loop_exit
    _

// kernel: encoder_forward.11
$region0: #{encoder_forward.11}
  #allocation0 [shape = 'u32[]', space=smem, size = 0x4, offset = 0x4, fixed_abs, tag = 'smem constant byte address 0x4 - core index']
  #allocation1 [shape = 'u32[144,128]{1,0:T(1,128)}', space=vmem, size = 0x12000, scoped, tag = 'internal scratch']
  #allocation2 [shape = 'f32[256,128]{1,0:T(8,128)}', space=vmem, size = 0x20000, scoped, tag = 'scratch operand']
  %s0 = inlined_call_operand.vmem [shape: bf16[512,128], index: 0, kind: input, shape index: {}]
  %s1 = inlined_call_operand.vmem [shape: bf16[128,128], index: 1, kind: input, shape index: {}]
  %s2 = inlined_call_operand.vmem [shape: f32[1,128], index: 2, kind: input, shape index: {}]
  %s3 = inlined_call_operand.vmem [shape: bf16[512,128], index: 3, kind: input, shape index: {}]
  %s4 = inlined_call_operand.vmem [shape: bf16[512,128], index: 4, kind: output, shape index: {}]
  %s5 = sld [smem:[#allocation0]]
  $region57: #{encoder_forward.11} parent=0
    _
  %s7 = ssub.s32 1, %s5
  %s8 = scalar_select 0, %s7, %s5
  loop: start=0, step=1, limit=4
  $region2: #{encoder_forward.11} parent=0 // loop_pre_header
    _
  $region3: #{encoder_forward.11} parent=0 // loop_header
    %s10 = sphi 0, %s14
    %p11 = scmp.ge.s32.totalorder %s10, 4
    %s17 = sphi 0, %s36
    %s18 = sphi 0, %s32
    %s19 = sphi 0, %s28
    %s20 = sphi 0, %s17
    %s21 = sphi 0, %s18
    %s22 = sphi 0, %s19
    %s23 = sphi 0, %s20
    %s24 = sphi 0, %s21
    %s25 = sphi 0, %s22
    %s41 = sphi 0, %s43
    %s44 = sphi 0, %s41
    %s45 = sphi 0, %s44
    %s61 = sphi 0, %s45
    %s69 = sphi 0, %s71
    %s72 = sphi 0, %s69
    %s73 = sphi 0, %s72
    %s89 = sphi 0, %s73
    %s95 = sphi 0, %s97
    %s98 = sphi 0, %s95
    %s99 = sphi 0, %s98
    %s115 = sphi 0, %s99
    %s123 = sphi 0, %s125
    %s126 = sphi 0, %s123
    %s127 = sphi 0, %s126
    %s143 = sphi 0, %s127
    %s151 = sphi 0, %s153
    %s154 = sphi 0, %s151
    %s155 = sphi 0, %s154
    %s171 = sphi 0, %s155
  $region4: #{encoder_forward.11} parent=0 // loop_header_branch
    %13 = sbr.rel (%p11) target = $region8
  $region5: #{encoder_forward.11} parent=0 // loop_body
    %s15 = ssub.s32 %s10, 1
    %s16 = ssub.s32 %s10, 2
    %s26 = sadd.s32 1, %s19
    %p27 = scmp.ge.s32.totalorder %s26, 1
    %s28 = scalar_select %p27, 0, %s26
    %s29 = sadd.s32 1, %s18
    %s30 = scalar_select %p27, %s29, %s18
    %p31 = scmp.ge.s32.totalorder %s30, 1
    %s32 = scalar_select %p31, 0, %s30
    %s33 = sadd.s32 1, %s17
    %s34 = scalar_select %p31, %s33, %s17
    %p35 = scmp.ge.s32.totalorder %s34, 2
    %s36 = scalar_select %p35, 0, %s34
    %s37 = ssub.s32 %s17, %s36
    %s38 = ssub.s32 %s19, %s28
    %s39 = sor.u32 %s37, %s38
    %p40 = scmp.eq.s32.totalorder %s39, 0
    %s42 = sadd.s32 %s41, 1
    %s43 = scalar_select %p40, %s41, %s42
    %p46 = pneg %p40
    %p47 = scmp.eq.s32.totalorder %s10, 1
    %p48 = por %p46, %p47
    %p49 = scmp.ne.s32.totalorder %s41, %s44
    %p50 = scmp.eq.s32.totalorder %s10, 0
    %p51 = por %p49, %p50
    %p52 = scmp.ne.s32.totalorder %s41, %s44
    %p53 = scmp.eq.s32.totalorder %s15, 1
    %p54 = por %p52, %p53
    %p55 = scmp.ne.s32.totalorder %s44, %s45
    %p56 = scmp.eq.s32.totalorder %s15, 0
    %p57 = por %p55, %p56
    %p58 = scmp.ne.s32.totalorder %s44, %s45
    %p59 = scmp.eq.s32.totalorder %s16, 1
    %p60 = por %p58, %p59
    %p62 = scmp.ne.s32.totalorder %s45, %s61
    %p63 = scmp.eq.s32.totalorder %s16, 0
    %p64 = por %p62, %p63
    %s65 = ssub.s32 %s19, %s28
    %s66 = ssub.s32 %s18, %s32
    %s67 = sor.u32 %s65, %s66
    %p68 = scmp.eq.s32.totalorder %s67, 0
    %s70 = sadd.s32 %s69, 1
    %s71 = scalar_select %p68, %s69, %s70
    %p74 = pneg %p68
    %p75 = scmp.eq.s32.totalorder %s10, 1
    %p76 = por %p74, %p75
    %p77 = scmp.ne.s32.totalorder %s69, %s72
    %p78 = scmp.eq.s32.totalorder %s10, 0
    %p79 = por %p77, %p78
    %p80 = scmp.ne.s32.totalorder %s69, %s72
    %p81 = scmp.eq.s32.totalorder %s15, 1
    %p82 = por %p80, %p81
    %p83 = scmp.ne.s32.totalorder %s72, %s73
    %p84 = scmp.eq.s32.totalorder %s15, 0
    %p85 = por %p83, %p84
    %p86 = scmp.ne.s32.totalorder %s72, %s73
    %p87 = scmp.eq.s32.totalorder %s16, 1
    %p88 = por %p86, %p87
    %p90 = scmp.ne.s32.totalorder %s73, %s89
    %p91 = scmp.eq.s32.totalorder %s16, 0
    %p92 = por %p90, %p91
    %s93 = ssub.s32 %s18, %s32
    %p94 = scmp.eq.s32.totalorder %s93, 0
    %s96 = sadd.s32 %s95, 1
    %s97 = scalar_select %p94, %s95, %s96
    %p100 = pneg %p94
    %p101 = scmp.eq.s32.totalorder %s10, 1
    %p102 = por %p100, %p101
    %p103 = scmp.ne.s32.totalorder %s95, %s98
    %p104 = scmp.eq.s32.totalorder %s10, 0
    %p105 = por %p103, %p104
    %p106 = scmp.ne.s32.totalorder %s95, %s98
    %p107 = scmp.eq.s32.totalorder %s15, 1
    %p108 = por %p106, %p107
    %p109 = scmp.ne.s32.totalorder %s98, %s99
    %p110 = scmp.eq.s32.totalorder %s15, 0
    %p111 = por %p109, %p110
    %p112 = scmp.ne.s32.totalorder %s98, %s99
    %p113 = scmp.eq.s32.totalorder %s16, 1
    %p114 = por %p112, %p113
    %p116 = scmp.ne.s32.totalorder %s99, %s115
    %p117 = scmp.eq.s32.totalorder %s16, 0
    %p118 = por %p116, %p117
    %s119 = ssub.s32 %s17, %s36
    %s120 = ssub.s32 %s18, %s32
    %s121 = sor.u32 %s119, %s120
    %p122 = scmp.eq.s32.totalorder %s121, 0
    %s124 = sadd.s32 %s123, 1
    %s125 = scalar_select %p122, %s123, %s124
    %p128 = pneg %p122
    %p129 = scmp.eq.s32.totalorder %s10, 1
    %p130 = por %p128, %p129
    %p131 = scmp.ne.s32.totalorder %s123, %s126
    %p132 = scmp.eq.s32.totalorder %s10, 0
    %p133 = por %p131, %p132
    %p134 = scmp.ne.s32.totalorder %s123, %s126
    %p135 = scmp.eq.s32.totalorder %s15, 1
    %p136 = por %p134, %p135
    %p137 = scmp.ne.s32.totalorder %s126, %s127
    %p138 = scmp.eq.s32.totalorder %s15, 0
    %p139 = por %p137, %p138
    %p140 = scmp.ne.s32.totalorder %s126, %s127
    %p141 = scmp.eq.s32.totalorder %s16, 1
    %p142 = por %p140, %p141
    %p144 = scmp.ne.s32.totalorder %s127, %s143
    %p145 = scmp.eq.s32.totalorder %s16, 0
    %p146 = por %p144, %p145
    %s147 = ssub.s32 %s17, %s36
    %s148 = ssub.s32 %s18, %s32
    %s149 = sor.u32 %s147, %s148
    %p150 = scmp.eq.s32.totalorder %s149, 0
    %s152 = sadd.s32 %s151, 1
    %s153 = scalar_select %p150, %s151, %s152
    %p156 = pneg %p150
    %p157 = scmp.eq.s32.totalorder %s10, 1
    %p158 = por %p156, %p157
    %p159 = scmp.ne.s32.totalorder %s151, %s154
    %p160 = scmp.eq.s32.totalorder %s10, 0
    %p161 = por %p159, %p160
    %p162 = scmp.ne.s32.totalorder %s151, %s154
    %p163 = scmp.eq.s32.totalorder %s15, 1
    %p164 = por %p162, %p163
    %p165 = scmp.ne.s32.totalorder %s154, %s155
    %p166 = scmp.eq.s32.totalorder %s15, 0
    %p167 = por %p165, %p166
    %p168 = scmp.ne.s32.totalorder %s154, %s155
    %p169 = scmp.eq.s32.totalorder %s16, 1
    %p170 = por %p168, %p169
    %p172 = scmp.ne.s32.totalorder %s155, %s171
    %p173 = scmp.eq.s32.totalorder %s16, 0
    %p174 = por %p172, %p173
    %p175 = scmp.le.s32.totalorder 1, %s10
    %p176 = scmp.lt.s32.totalorder %s10, 3
    %p177 = pnand %p175, %p176
    %p178 = pneg %p177
    // Predicated region
    $region9: #{encoder_forward.11} parent=5 // pred_check
      _
    $region10: #{encoder_forward.11} parent=5 // pred_check_branch
      %180 = sbr.rel (%p177) target = $region12
    $region11: #{encoder_forward.11} parent=5 // pred_region
      %s181 = ssub.s32 %s10, 1
      // Predicated region
      $region13: #{encoder_forward.11} parent=11 // pred_check
        %p182 = pneg %p85
      $region14: #{encoder_forward.11} parent=11 // pred_check_branch
        %184 = sbr.rel (%p182) target = $region16
      $region15: #{encoder_forward.11} parent=11 // pred_region
        %s185 = smul.u32 16, %s22
        %p186 = scmp.lt.s32.totalorder %s185, 15
        %s187 = scalar_select %p186, %s185, 15
        %p188 = scmp.lt.s32.totalorder %s21, 0
        %s189 = scalar_select %p188, %s21, 0
        %s190 = sadd.s32 %s189, %s187
        %s191 = smul.addr %s190, 4
        %s192 = scalar_lea.vmem %s1, %s191
        %s193 = smul.u32 16, %s22
      $region16: #{encoder_forward.11} parent=11 // pred_fallthru
        _
      // Predicated region
      $region17: #{encoder_forward.11} parent=11 // pred_check
        %p194 = pneg %p111
      $region18: #{encoder_forward.11} parent=11 // pred_check_branch
        %196 = sbr.rel (%p194) target = $region20
      $region19: #{encoder_forward.11} parent=11 // pred_region
        %p197 = scmp.lt.s32.totalorder %s21, 0
        %s198 = scalar_select %p197, %s21, 0
        %s199 = scalar_lea.vmem %s2, %s198
      $region20: #{encoder_forward.11} parent=11 // pred_fallthru
        _
    $region12: #{encoder_forward.11} parent=5 // pred_fallthru
      _
    %p200 = scmp.lt.s32.totalorder %s10, 2
    // Predicated region
    $region21: #{encoder_forward.11} parent=5 // pred_check
      %p201 = pneg %p200
    $region22: #{encoder_forward.11} parent=5 // pred_check_branch
      %203 = sbr.rel (%p201) target = $region24
    $region23: #{encoder_forward.11} parent=5 // pred_region
      // Predicated region
      $region25: #{encoder_forward.11} parent=23 // pred_check
        %p204 = pneg %p51
      $region26: #{encoder_forward.11} parent=23 // pred_check_branch
        %206 = sbr.rel (%p204) target = $region28
      $region27: #{encoder_forward.11} parent=23 // pred_region
        %s207 = smul.u32 32, %s17
        %p208 = scmp.lt.s32.totalorder %s207, 63
        %s209 = scalar_select %p208, %s207, 63
        %p210 = scmp.lt.s32.totalorder %s19, 0
        %s211 = scalar_select %p210, %s19, 0
        %s212 = sadd.s32 %s211, %s209
        %s213 = smul.addr %s212, 4
        %s214 = scalar_lea.vmem %s0, %s213
        %s215 = smul.u32 32, %s17
      $region28: #{encoder_forward.11} parent=23 // pred_fallthru
        _
      // Predicated region
      $region29: #{encoder_forward.11} parent=23 // pred_check
        %p216 = pneg %p133
      $region30: #{encoder_forward.11} parent=23 // pred_check_branch
        %218 = sbr.rel (%p216) target = $region32
      $region31: #{encoder_forward.11} parent=23 // pred_region
        %s219 = smul.u32 32, %s17
        %p220 = scmp.lt.s32.totalorder %s219, 63
        %s221 = scalar_select %p220, %s219, 63
        %p222 = scmp.lt.s32.totalorder %s18, 0
        %s223 = scalar_select %p222, %s18, 0
        %s224 = sadd.s32 %s223, %s221
        %s225 = smul.addr %s224, 4
        %s226 = scalar_lea.vmem %s3, %s225
        %s227 = smul.u32 32, %s17
      $region32: #{encoder_forward.11} parent=23 // pred_fallthru
        _
    $region24: #{encoder_forward.11} parent=5 // pred_fallthru
      _
    %p228 = scmp.le.s32.totalorder 1, %s10
    %p229 = scmp.lt.s32.totalorder %s10, 3
    %p230 = pnand %p228, %p229
    %p231 = pneg %p230
    // Predicated region
    $region33: #{encoder_forward.11} parent=5 // pred_check
      _
    $region34: #{encoder_forward.11} parent=5 // pred_check_branch
      %233 = sbr.rel (%p230) target = $region36
    $region35: #{encoder_forward.11} parent=5 // pred_region
      %s234 = ssub.s32 %s10, 1
      %s235 = smul.u32 32, %s20
      %p236 = scmp.lt.s32.totalorder %s235, 63
      %s237 = scalar_select %p236, %s235, 63
      %p238 = scmp.lt.s32.totalorder %s22, 0
      %s239 = scalar_select %p238, %s22, 0
      %s240 = sadd.s32 %s239, %s237
      %s241 = smul.addr %s240, 4
      %s242 = scalar_lea.vmem %s0, %s241
      %p243 = pneg %p57
      %p244 = pneg %p54
      %s245 = smul.u32 16, %s22
      %p246 = scmp.lt.s32.totalorder %s245, 15
      %s247 = scalar_select %p246, %s245, 15
      %p248 = scmp.lt.s32.totalorder %s21, 0
      %s249 = scalar_select %p248, %s21, 0
      %s250 = sadd.s32 %s249, %s247
      %s251 = smul.addr %s250, 4
      %s252 = scalar_lea.vmem %s1, %s251
      %p253 = pneg %p85
      %p254 = pneg %p82
      %p255 = scmp.lt.s32.totalorder %s21, 0
      %s256 = scalar_select %p255, %s21, 0
      %s257 = scalar_lea.vmem %s2, %s256
      %p258 = pneg %p111
      %p259 = pneg %p108
      %s260 = smul.u32 32, %s20
      %p261 = scmp.lt.s32.totalorder %s260, 63
      %s262 = scalar_select %p261, %s260, 63
      %p263 = scmp.lt.s32.totalorder %s21, 0
      %s264 = scalar_select %p263, %s21, 0
      %s265 = sadd.s32 %s264, %s262
      %s266 = smul.addr %s265, 4
      %s267 = scalar_lea.vmem %s3, %s266
      %p268 = pneg %p139
      %p269 = pneg %p136
      %p270 = pneg %p167
      %p271 = pneg %p164
      %s272 = smul.u32 32, %s20
      %p273 = scmp.lt.s32.totalorder %s272, 63
      %s274 = scalar_select %p273, %s272, 63
      %p275 = scmp.lt.s32.totalorder %s21, 0
      %s276 = scalar_select %p275, %s21, 0
      %s277 = sadd.s32 %s276, %s274
      %s278 = smul.addr %s277, 4
      %s279 = scalar_lea.vmem %s4, %s278
      %s280 = smul.u32 32, %s20
      %p281 = scmp.lt.s32.totalorder %s280, 63
      %s282 = scalar_select %p281, %s280, 63
      %p283 = scmp.lt.s32.totalorder %s22, 0
      %s284 = scalar_select %p283, %s22, 0
      %s285 = sadd.s32 %s284, %s282
      %s286 = smul.addr %s285, 4
      %s287 = scalar_lea.vmem %s0, %s286
      %s288 = smul.u32 32, %s20
      %s289 = smul.u32 16, %s22
      %p290 = scmp.lt.s32.totalorder %s289, 15
      %s291 = scalar_select %p290, %s289, 15
      %p292 = scmp.lt.s32.totalorder %s21, 0
      %s293 = scalar_select %p292, %s21, 0
      %s294 = sadd.s32 %s293, %s291
      %s295 = smul.addr %s294, 4
      %s296 = scalar_lea.vmem %s1, %s295
      %s297 = smul.u32 16, %s22
      %p298 = scmp.lt.s32.totalorder %s21, 0
      %s299 = scalar_select %p298, %s21, 0
      %s300 = scalar_lea.vmem %s2, %s299
      %s301 = smul.u32 32, %s20
      %p302 = scmp.lt.s32.totalorder %s301, 63
      %s303 = scalar_select %p302, %s301, 63
      %p304 = scmp.lt.s32.totalorder %s21, 0
      %s305 = scalar_select %p304, %s21, 0
      %s306 = sadd.s32 %s305, %s303
      %s307 = smul.addr %s306, 4
      %s308 = scalar_lea.vmem %s3, %s307
      %s309 = smul.u32 32, %s20
      %s310 = smul.u32 32, %s20
      %p311 = scmp.lt.s32.totalorder %s310, 63
      %s312 = scalar_select %p311, %s310, 63
      %p313 = scmp.lt.s32.totalorder %s21, 0
      %s314 = scalar_select %p313, %s21, 0
      %s315 = sadd.s32 %s314, %s312
      %s316 = smul.addr %s315, 4
      %s317 = scalar_lea.vmem %s4, %s316
      %s318 = smul.u32 32, %s20
      %p320 = scmp.eq.s32.totalorder %s22, 0
      // Predicated region
      $region37: #{encoder_forward.11} parent=35 // pred_check
        %p321 = pneg %p320
      $region38: #{encoder_forward.11} parent=35 // pred_check_branch
        %323 = sbr.rel (%p321) target = $region40
      $region39: #{encoder_forward.11} parent=35 // pred_region
        %324 = vst [vmem:[#allocation2] sm:$0xff] 0.0
        %325 = vst [vmem:[#allocation2 + $0x8] sm:$0xff] 0.0
        %326 = vst [vmem:[#allocation2 + $0x10] sm:$0xff] 0.0
        %327 = vst [vmem:[#allocation2 + $0x18] sm:$0xff] 0.0
        %328 = vst [vmem:[#allocation2 + $0x20] sm:$0xff] 0.0
        %329 = vst [vmem:[#allocation2 + $0x28] sm:$0xff] 0.0
        %330 = vst [vmem:[#allocation2 + $0x30] sm:$0xff] 0.0
        %331 = vst [vmem:[#allocation2 + $0x38] sm:$0xff] 0.0
        %332 = vst [vmem:[#allocation2 + $0x40] sm:$0xff] 0.0
        %333 = vst [vmem:[#allocation2 + $0x48] sm:$0xff] 0.0
        %334 = vst [vmem:[#allocation2 + $0x50] sm:$0xff] 0.0
        %335 = vst [vmem:[#allocation2 + $0x58] sm:$0xff] 0.0
        %336 = vst [vmem:[#allocation2 + $0x60] sm:$0xff] 0.0
        %337 = vst [vmem:[#allocation2 + $0x68] sm:$0xff] 0.0
        %338 = vst [vmem:[#allocation2 + $0x70] sm:$0xff] 0.0
        %339 = vst [vmem:[#allocation2 + $0x78] sm:$0xff] 0.0
        %340 = vst [vmem:[#allocation2 + $0x80] sm:$0xff] 0.0
        %341 = vst [vmem:[#allocation2 + $0x88] sm:$0xff] 0.0
        %342 = vst [vmem:[#allocation2 + $0x90] sm:$0xff] 0.0
        %343 = vst [vmem:[#allocation2 + $0x98] sm:$0xff] 0.0
        %344 = vst [vmem:[#allocation2 + $0xa0] sm:$0xff] 0.0
        %345 = vst [vmem:[#allocation2 + $0xa8] sm:$0xff] 0.0
        %346 = vst [vmem:[#allocation2 + $0xb0] sm:$0xff] 0.0
        %347 = vst [vmem:[#allocation2 + $0xb8] sm:$0xff] 0.0
        %348 = vst [vmem:[#allocation2 + $0xc0] sm:$0xff] 0.0
        %349 = vst [vmem:[#allocation2 + $0xc8] sm:$0xff] 0.0
        %350 = vst [vmem:[#allocation2 + $0xd0] sm:$0xff] 0.0
        %351 = vst [vmem:[#allocation2 + $0xd8] sm:$0xff] 0.0
        %352 = vst [vmem:[#allocation2 + $0xe0] sm:$0xff] 0.0
        %353 = vst [vmem:[#allocation2 + $0xe8] sm:$0xff] 0.0
        %354 = vst [vmem:[#allocation2 + $0xf0] sm:$0xff] 0.0
        %355 = vst [vmem:[#allocation2 + $0xf8] sm:$0xff] 0.0
      $region40: #{encoder_forward.11} parent=35 // pred_fallthru
        _
      %v356 = vld [vmem:[#allocation2] sm:$0xff]
      %v357 = vld [vmem:[#allocation2 + $0x8] sm:$0xff]
      %v358 = vld [vmem:[#allocation2 + $0x10] sm:$0xff]
      %v359 = vld [vmem:[#allocation2 + $0x18] sm:$0xff]
      %v360 = vld [vmem:[#allocation2 + $0x20] sm:$0xff]
      %v361 = vld [vmem:[#allocation2 + $0x28] sm:$0xff]
      %v362 = vld [vmem:[#allocation2 + $0x30] sm:$0xff]
      %v363 = vld [vmem:[#allocation2 + $0x38] sm:$0xff]
      %v364 = vld [vmem:[#allocation2 + $0x40] sm:$0xff]
      %v365 = vld [vmem:[#allocation2 + $0x48] sm:$0xff]
      %v366 = vld [vmem:[#allocation2 + $0x50] sm:$0xff]
      %v367 = vld [vmem:[#allocation2 + $0x58] sm:$0xff]
      %v368 = vld [vmem:[#allocation2 + $0x60] sm:$0xff]
      %v369 = vld [vmem:[#allocation2 + $0x68] sm:$0xff]
      %v370 = vld [vmem:[#allocation2 + $0x70] sm:$0xff]
      %v371 = vld [vmem:[#allocation2 + $0x78] sm:$0xff]
      %v372 = vld [vmem:[#allocation2 + $0x80] sm:$0xff]
      %v373 = vld [vmem:[#allocation2 + $0x88] sm:$0xff]
      %v374 = vld [vmem:[#allocation2 + $0x90] sm:$0xff]
      %v375 = vld [vmem:[#allocation2 + $0x98] sm:$0xff]
      %v376 = vld [vmem:[#allocation2 + $0xa0] sm:$0xff]
      %v377 = vld [vmem:[#allocation2 + $0xa8] sm:$0xff]
      %v378 = vld [vmem:[#allocation2 + $0xb0] sm:$0xff]
      %v379 = vld [vmem:[#allocation2 + $0xb8] sm:$0xff]
      %v380 = vld [vmem:[#allocation2 + $0xc0] sm:$0xff]
      %v381 = vld [vmem:[#allocation2 + $0xc8] sm:$0xff]
      %v382 = vld [vmem:[#allocation2 + $0xd0] sm:$0xff]
      %v383 = vld [vmem:[#allocation2 + $0xd8] sm:$0xff]
      %v384 = vld [vmem:[#allocation2 + $0xe0] sm:$0xff]
      %v385 = vld [vmem:[#allocation2 + $0xe8] sm:$0xff]
      %v386 = vld [vmem:[#allocation2 + $0xf0] sm:$0xff]
      %v387 = vld [vmem:[#allocation2 + $0xf8] sm:$0xff]
      %v388 = vld [vmem:[%s287] sm:$0xf]
      %v389 = vld [vmem:[%s287 + $0x4] sm:$0xf]
      %v390 = vld [vmem:[%s287 + $0x8] sm:$0xf]
      %v391 = vld [vmem:[%s287 + $0xc] sm:$0xf]
      %v392 = vld [vmem:[%s287 + $0x10] sm:$0xf]
      %v393 = vld [vmem:[%s287 + $0x14] sm:$0xf]
      %v394 = vld [vmem:[%s287 + $0x18] sm:$0xf]
      %v395 = vld [vmem:[%s287 + $0x1c] sm:$0xf]
      %v396 = vld [vmem:[%s287 + $0x20] sm:$0xf]
      %v397 = vld [vmem:[%s287 + $0x24] sm:$0xf]
      %v398 = vld [vmem:[%s287 + $0x28] sm:$0xf]
      %v399 = vld [vmem:[%s287 + $0x2c] sm:$0xf]
      %v400 = vld [vmem:[%s287 + $0x30] sm:$0xf]
      %v401 = vld [vmem:[%s287 + $0x34] sm:$0xf]
      %v402 = vld [vmem:[%s287 + $0x38] sm:$0xf]
      %v403 = vld [vmem:[%s287 + $0x3c] sm:$0xf]
      %v404 = vld [vmem:[%s287 + $0x40] sm:$0xf]
      %v405 = vld [vmem:[%s287 + $0x44] sm:$0xf]
      %v406 = vld [vmem:[%s287 + $0x48] sm:$0xf]
      %v407 = vld [vmem:[%s287 + $0x4c] sm:$0xf]
      %v408 = vld [vmem:[%s287 + $0x50] sm:$0xf]
      %v409 = vld [vmem:[%s287 + $0x54] sm:$0xf]
      %v410 = vld [vmem:[%s287 + $0x58] sm:$0xf]
      %v411 = vld [vmem:[%s287 + $0x5c] sm:$0xf]
      %v412 = vld [vmem:[%s287 + $0x60] sm:$0xf]
      %v413 = vld [vmem:[%s287 + $0x64] sm:$0xf]
      %v414 = vld [vmem:[%s287 + $0x68] sm:$0xf]
      %v415 = vld [vmem:[%s287 + $0x6c] sm:$0xf]
      %v416 = vld [vmem:[%s287 + $0x70] sm:$0xf]
      %v417 = vld [vmem:[%s287 + $0x74] sm:$0xf]
      %v418 = vld [vmem:[%s287 + $0x78] sm:$0xf]
      %v419 = vld [vmem:[%s287 + $0x7c] sm:$0xf]
      %v420 = vld [vmem:[%s296] sm:$0xf]
      %v421 = vld [vmem:[%s296 + $0x4] sm:$0xf]
      %v422 = vld [vmem:[%s296 + $0x8] sm:$0xf]
      %v423 = vld [vmem:[%s296 + $0xc] sm:$0xf]
      %v424 = vld [vmem:[%s296 + $0x10] sm:$0xf]
      %v425 = vld [vmem:[%s296 + $0x14] sm:$0xf]
      %v426 = vld [vmem:[%s296 + $0x18] sm:$0xf]
      %v427 = vld [vmem:[%s296 + $0x1c] sm:$0xf]
      %v428 = vld [vmem:[%s296 + $0x20] sm:$0xf]
      %v429 = vld [vmem:[%s296 + $0x24] sm:$0xf]
      %v430 = vld [vmem:[%s296 + $0x28] sm:$0xf]
      %v431 = vld [vmem:[%s296 + $0x2c] sm:$0xf]
      %v432 = vld [vmem:[%s296 + $0x30] sm:$0xf]
      %v433 = vld [vmem:[%s296 + $0x34] sm:$0xf]
      %v434 = vld [vmem:[%s296 + $0x38] sm:$0xf]
      %v435 = vld [vmem:[%s296 + $0x3c] sm:$0xf]
      %v468 = vunpack.c.l.b16 %v388
      %v469 = vunpack.c.l.b16 %v389
      %v470 = vunpack.c.l.b16 %v390
      %v471 = vunpack.c.l.b16 %v391
      %v472 = vunpack.c.l.b16 %v392
      %v473 = vunpack.c.l.b16 %v393
      %v474 = vunpack.c.l.b16 %v394
      %v475 = vunpack.c.l.b16 %v395
      %v476 = vunpack.c.l.b16 %v396
      %v477 = vunpack.c.l.b16 %v397
      %v478 = vunpack.c.l.b16 %v398
      %v479 = vunpack.c.l.b16 %v399
      %v480 = vunpack.c.l.b16 %v400
      %v481 = vunpack.c.l.b16 %v401
      %v482 = vunpack.c.l.b16 %v402
      %v483 = vunpack.c.l.b16 %v403
      %v484 = vunpack.c.l.b16 %v404
      %v485 = vunpack.c.l.b16 %v405
      %v486 = vunpack.c.l.b16 %v406
      %v487 = vunpack.c.l.b16 %v407
      %v488 = vunpack.c.l.b16 %v408
      %v489 = vunpack.c.l.b16 %v409
      %v490 = vunpack.c.l.b16 %v410
      %v491 = vunpack.c.l.b16 %v411
      %v492 = vunpack.c.l.b16 %v412
      %v493 = vunpack.c.l.b16 %v413
      %v494 = vunpack.c.l.b16 %v414
      %v495 = vunpack.c.l.b16 %v415
      %v496 = vunpack.c.l.b16 %v416
      %v497 = vunpack.c.l.b16 %v417
      %v498 = vunpack.c.l.b16 %v418
      %v499 = vunpack.c.l.b16 %v419
      %v500 = vpack.c.b16 %v469, %v468
      %v501 = vpack.c.b16 %v471, %v470
      %v502 = vpack.c.b16 %v473, %v472
      %v503 = vpack.c.b16 %v475, %v474
      %v504 = vpack.c.b16 %v477, %v476
      %v505 = vpack.c.b16 %v479, %v478
      %v506 = vpack.c.b16 %v481, %v480
      %v507 = vpack.c.b16 %v483, %v482
      %v508 = vpack.c.b16 %v485, %v484
      %v509 = vpack.c.b16 %v487, %v486
      %v510 = vpack.c.b16 %v489, %v488
      %v511 = vpack.c.b16 %v491, %v490
      %v512 = vpack.c.b16 %v493, %v492
      %v513 = vpack.c.b16 %v495, %v494
      %v514 = vpack.c.b16 %v497, %v496
      %v515 = vpack.c.b16 %v499, %v498
      %v548 = vunpack.c.l.b16 %v420
      %v549 = vunpack.c.l.b16 %v421
      %v550 = vunpack.c.l.b16 %v422
      %v551 = vunpack.c.l.b16 %v423
      %v552 = vunpack.c.l.b16 %v424
      %v553 = vunpack.c.l.b16 %v425
      %v554 = vunpack.c.l.b16 %v426
      %v555 = vunpack.c.l.b16 %v427
      %v556 = vunpack.c.l.b16 %v428
      %v557 = vunpack.c.l.b16 %v429
      %v558 = vunpack.c.l.b16 %v430
      %v559 = vunpack.c.l.b16 %v431
      %v560 = vunpack.c.l.b16 %v432
      %v561 = vunpack.c.l.b16 %v433
      %v562 = vunpack.c.l.b16 %v434
      %v563 = vunpack.c.l.b16 %v435
      %v564 = vpack.c.b16 %v549, %v548
      %v565 = vpack.c.b16 %v551, %v550
      %v566 = vpack.c.b16 %v553, %v552
      %v567 = vpack.c.b16 %v555, %v554
      %v568 = vpack.c.b16 %v557, %v556
      %v569 = vpack.c.b16 %v559, %v558
      %v570 = vpack.c.b16 %v561, %v560
      %v571 = vpack.c.b16 %v563, %v562
      %580 = vmatprep.subr.bf16.mxu0 0
      %581 = vmatpush1.bf16.msra.mxu0 %v571
      %582 = vmatprep.subr.bf16.mxu0 0
      %583 = vmatpush1.bf16.msra.mxu0 %v570
      %584 = vmatprep.subr.bf16.mxu0 0
      %585 = vmatpush1.bf16.msra.mxu0 %v569
      %586 = vmatprep.subr.bf16.mxu0 0
      %587 = vmatpush1.bf16.msra.mxu0 %v568
      %588 = vmatprep.subr.bf16.mxu0 0
      %589 = vmatpush1.bf16.msra.mxu0 %v567
      %590 = vmatprep.subr.bf16.mxu0 0
      %591 = vmatpush1.bf16.msra.mxu0 %v566
      %592 = vmatprep.subr.bf16.mxu0 0
      %593 = vmatpush1.bf16.msra.mxu0 %v565
      %594 = vmatprep.subr.bf16.mxu0 0
      %595 = vmatpush1.bf16.msra.mxu0 %v564
      %596 = vmatprep.subr.bf16.mxu0 0
      %597 = vmatpush2.bf16.msra.mxu0 0
      %598 = vmatprep.subr.bf16.mxu0 0
      %599 = vmatpush2.bf16.msra.mxu0 0
      %600 = vmatprep.subr.bf16.mxu0 0
      %601 = vmatpush2.bf16.msra.mxu0 0
      %602 = vmatprep.subr.bf16.mxu0 0
      %603 = vmatpush2.bf16.msra.mxu0 0
      %604 = vmatprep.subr.bf16.mxu0 0
      %605 = vmatpush2.bf16.msra.mxu0 0
      %606 = vmatprep.subr.bf16.mxu0 0
      %607 = vmatpush2.bf16.msra.mxu0 0
      %608 = vmatprep.subr.bf16.mxu0 0
      %609 = vmatpush2.bf16.msra.mxu0 0
      %610 = vmatprep.subr.bf16.mxu0 0
      %611 = vmatpush2.bf16.msra.mxu0 0
      %612 = vmatprep.mubr.bf16.mxu0 0
      %613 = vmatmul.mubr.bf16.gmra.mxu0 %v500
      %v614 = vpop.f32.mrf.mxu0
      %v615 = vadd.f32 0.0, %v614
      %v616 = vpop.f32.mrf.mxu0
      %v617 = vpop.f32.mrf.mxu0
      %v618 = vadd.f32 0.0, %v617
      %v619 = vpop.f32.mrf.mxu0
      %620 = vmatprep.mubr.bf16.mxu0 0
      %621 = vmatmul.mubr.bf16.gmra.mxu0 %v501
      %v622 = vpop.f32.mrf.mxu0
      %v623 = vadd.f32 0.0, %v622
      %v624 = vpop.f32.mrf.mxu0
      %v625 = vpop.f32.mrf.mxu0
      %v626 = vadd.f32 0.0, %v625
      %v627 = vpop.f32.mrf.mxu0
      %628 = vmatprep.mubr.bf16.mxu0 0
      %629 = vmatmul.mubr.bf16.gmra.mxu0 %v502
      %v630 = vpop.f32.mrf.mxu0
      %v631 = vadd.f32 0.0, %v630
      %v632 = vpop.f32.mrf.mxu0
      %v633 = vpop.f32.mrf.mxu0
      %v634 = vadd.f32 0.0, %v633
      %v635 = vpop.f32.mrf.mxu0
      %636 = vmatprep.mubr.bf16.mxu0 0
      %637 = vmatmul.mubr.bf16.gmra.mxu0 %v503
      %v638 = vpop.f32.mrf.mxu0
      %v639 = vadd.f32 0.0, %v638
      %v640 = vpop.f32.mrf.mxu0
      %v641 = vpop.f32.mrf.mxu0
      %v642 = vadd.f32 0.0, %v641
      %v643 = vpop.f32.mrf.mxu0
      %644 = vmatprep.mubr.bf16.mxu0 0
      %645 = vmatmul.mubr.bf16.gmra.mxu0 %v504
      %v646 = vpop.f32.mrf.mxu0
      %v647 = vadd.f32 0.0, %v646
      %v648 = vpop.f32.mrf.mxu0
      %v649 = vpop.f32.mrf.mxu0
      %v650 = vadd.f32 0.0, %v649
      %v651 = vpop.f32.mrf.mxu0
      %652 = vmatprep.mubr.bf16.mxu0 0
      %653 = vmatmul.mubr.bf16.gmra.mxu0 %v505
      %v654 = vpop.f32.mrf.mxu0
      %v655 = vadd.f32 0.0, %v654
      %v656 = vpop.f32.mrf.mxu0
      %v657 = vpop.f32.mrf.mxu0
      %v658 = vadd.f32 0.0, %v657
      %v659 = vpop.f32.mrf.mxu0
      %660 = vmatprep.mubr.bf16.mxu0 0
      %661 = vmatmul.mubr.bf16.gmra.mxu0 %v506
      %v662 = vpop.f32.mrf.mxu0
      %v663 = vadd.f32 0.0, %v662
      %v664 = vpop.f32.mrf.mxu0
      %v665 = vpop.f32.mrf.mxu0
      %v666 = vadd.f32 0.0, %v665
      %v667 = vpop.f32.mrf.mxu0
      %668 = vmatprep.mubr.bf16.mxu0 0
      %669 = vmatmul.mubr.bf16.gmra.mxu0 %v507
      %v670 = vpop.f32.mrf.mxu0
      %v671 = vadd.f32 0.0, %v670
      %v672 = vpop.f32.mrf.mxu0
      %v673 = vpop.f32.mrf.mxu0
      %v674 = vadd.f32 0.0, %v673
      %v675 = vpop.f32.mrf.mxu0
      %676 = vmatprep.mubr.bf16.mxu0 0
      %677 = vmatmul.mubr.bf16.gmra.mxu0 %v508
      %v678 = vpop.f32.mrf.mxu0
      %v679 = vadd.f32 0.0, %v678
      %v680 = vpop.f32.mrf.mxu0
      %v681 = vpop.f32.mrf.mxu0
      %v682 = vadd.f32 0.0, %v681
      %v683 = vpop.f32.mrf.mxu0
      %684 = vmatprep.mubr.bf16.mxu0 0
      %685 = vmatmul.mubr.bf16.gmra.mxu0 %v509
      %v686 = vpop.f32.mrf.mxu0
      %v687 = vadd.f32 0.0, %v686
      %v688 = vpop.f32.mrf.mxu0
      %v689 = vpop.f32.mrf.mxu0
      %v690 = vadd.f32 0.0, %v689
      %v691 = vpop.f32.mrf.mxu0
      %692 = vmatprep.mubr.bf16.mxu0 0
      %693 = vmatmul.mubr.bf16.gmra.mxu0 %v510
      %v694 = vpop.f32.mrf.mxu0
      %v695 = vadd.f32 0.0, %v694
      %v696 = vpop.f32.mrf.mxu0
      %v697 = vpop.f32.mrf.mxu0
      %v698 = vadd.f32 0.0, %v697
      %v699 = vpop.f32.mrf.mxu0
      %700 = vmatprep.mubr.bf16.mxu0 0
      %701 = vmatmul.mubr.bf16.gmra.mxu0 %v511
      %v702 = vpop.f32.mrf.mxu0
      %v703 = vadd.f32 0.0, %v702
      %v704 = vpop.f32.mrf.mxu0
      %v705 = vpop.f32.mrf.mxu0
      %v706 = vadd.f32 0.0, %v705
      %v707 = vpop.f32.mrf.mxu0
      %708 = vmatprep.mubr.bf16.mxu0 0
      %709 = vmatmul.mubr.bf16.gmra.mxu0 %v512
      %v710 = vpop.f32.mrf.mxu0
      %v711 = vadd.f32 0.0, %v710
      %v712 = vpop.f32.mrf.mxu0
      %v713 = vpop.f32.mrf.mxu0
      %v714 = vadd.f32 0.0, %v713
      %v715 = vpop.f32.mrf.mxu0
      %716 = vmatprep.mubr.bf16.mxu0 0
      %717 = vmatmul.mubr.bf16.gmra.mxu0 %v513
      %v718 = vpop.f32.mrf.mxu0
      %v719 = vadd.f32 0.0, %v718
      %v720 = vpop.f32.mrf.mxu0
      %v721 = vpop.f32.mrf.mxu0
      %v722 = vadd.f32 0.0, %v721
      %v723 = vpop.f32.mrf.mxu0
      %724 = vmatprep.mubr.bf16.mxu0 0
      %725 = vmatmul.mubr.bf16.gmra.mxu0 %v514
      %v726 = vpop.f32.mrf.mxu0
      %v727 = vadd.f32 0.0, %v726
      %v728 = vpop.f32.mrf.mxu0
      %v729 = vpop.f32.mrf.mxu0
      %v730 = vadd.f32 0.0, %v729
      %v731 = vpop.f32.mrf.mxu0
      %732 = vmatprep.mubr.bf16.mxu0 0
      %733 = vmatmul.mubr.bf16.gmra.mxu0 %v515
      %v734 = vpop.f32.mrf.mxu0
      %v735 = vadd.f32 0.0, %v734
      %v736 = vpop.f32.mrf.mxu0
      %v737 = vpop.f32.mrf.mxu0
      %v738 = vadd.f32 0.0, %v737
      %v739 = vpop.f32.mrf.mxu0
      %740 = vdwg.mxu0
      %v741 = vadd.f32 %v356, %v615
      %v742 = vadd.f32 %v357, %v618
      %v743 = vadd.f32 %v358, %v623
      %v744 = vadd.f32 %v359, %v626
      %v745 = vadd.f32 %v360, %v631
      %v746 = vadd.f32 %v361, %v634
      %v747 = vadd.f32 %v362, %v639
      %v748 = vadd.f32 %v363, %v642
      %v749 = vadd.f32 %v364, %v647
      %v750 = vadd.f32 %v365, %v650
      %v751 = vadd.f32 %v366, %v655
      %v752 = vadd.f32 %v367, %v658
      %v753 = vadd.f32 %v368, %v663
      %v754 = vadd.f32 %v369, %v666
      %v755 = vadd.f32 %v370, %v671
      %v756 = vadd.f32 %v371, %v674
      %v757 = vadd.f32 %v372, %v679
      %v758 = vadd.f32 %v373, %v682
      %v759 = vadd.f32 %v374, %v687
      %v760 = vadd.f32 %v375, %v690
      %v761 = vadd.f32 %v376, %v695
      %v762 = vadd.f32 %v377, %v698
      %v763 = vadd.f32 %v378, %v703
      %v764 = vadd.f32 %v379, %v706
      %v765 = vadd.f32 %v380, %v711
      %v766 = vadd.f32 %v381, %v714
      %v767 = vadd.f32 %v382, %v719
      %v768 = vadd.f32 %v383, %v722
      %v769 = vadd.f32 %v384, %v727
      %v770 = vadd.f32 %v385, %v730
      %v771 = vadd.f32 %v386, %v735
      %v772 = vadd.f32 %v387, %v738
      %773 = vst [vmem:[#allocation2] sm:$0xff] %v741
      %774 = vst [vmem:[#allocation2 + $0x8] sm:$0xff] %v742
      %775 = vst [vmem:[#allocation2 + $0x10] sm:$0xff] %v743
      %776 = vst [vmem:[#allocation2 + $0x18] sm:$0xff] %v744
      %777 = vst [vmem:[#allocation2 + $0x20] sm:$0xff] %v745
      %778 = vst [vmem:[#allocation2 + $0x28] sm:$0xff] %v746
      %779 = vst [vmem:[#allocation2 + $0x30] sm:$0xff] %v747
      %780 = vst [vmem:[#allocation2 + $0x38] sm:$0xff] %v748
      %781 = vst [vmem:[#allocation2 + $0x40] sm:$0xff] %v749
      %782 = vst [vmem:[#allocation2 + $0x48] sm:$0xff] %v750
      %783 = vst [vmem:[#allocation2 + $0x50] sm:$0xff] %v751
      %784 = vst [vmem:[#allocation2 + $0x58] sm:$0xff] %v752
      %785 = vst [vmem:[#allocation2 + $0x60] sm:$0xff] %v753
      %786 = vst [vmem:[#allocation2 + $0x68] sm:$0xff] %v754
      %787 = vst [vmem:[#allocation2 + $0x70] sm:$0xff] %v755
      %788 = vst [vmem:[#allocation2 + $0x78] sm:$0xff] %v756
      %789 = vst [vmem:[#allocation2 + $0x80] sm:$0xff] %v757
      %790 = vst [vmem:[#allocation2 + $0x88] sm:$0xff] %v758
      %791 = vst [vmem:[#allocation2 + $0x90] sm:$0xff] %v759
      %792 = vst [vmem:[#allocation2 + $0x98] sm:$0xff] %v760
      %793 = vst [vmem:[#allocation2 + $0xa0] sm:$0xff] %v761
      %794 = vst [vmem:[#allocation2 + $0xa8] sm:$0xff] %v762
      %795 = vst [vmem:[#allocation2 + $0xb0] sm:$0xff] %v763
      %796 = vst [vmem:[#allocation2 + $0xb8] sm:$0xff] %v764
      %797 = vst [vmem:[#allocation2 + $0xc0] sm:$0xff] %v765
      %798 = vst [vmem:[#allocation2 + $0xc8] sm:$0xff] %v766
      %799 = vst [vmem:[#allocation2 + $0xd0] sm:$0xff] %v767
      %800 = vst [vmem:[#allocation2 + $0xd8] sm:$0xff] %v768
      %801 = vst [vmem:[#allocation2 + $0xe0] sm:$0xff] %v769
      %802 = vst [vmem:[#allocation2 + $0xe8] sm:$0xff] %v770
      %803 = vst [vmem:[#allocation2 + $0xf0] sm:$0xff] %v771
      %804 = vst [vmem:[#allocation2 + $0xf8] sm:$0xff] %v772
      // Predicated region
      $region41: #{encoder_forward.11} parent=35 // pred_check
        %p805 = pneg %p320
      $region42: #{encoder_forward.11} parent=35 // pred_check_branch
        %807 = sbr.rel (%p805) target = $region44
      $region43: #{encoder_forward.11} parent=35 // pred_region
        %v808 = vld [vmem:[#allocation2] sm:$0xff]
        %v809 = vld [vmem:[#allocation2 + $0x8] sm:$0xff]
        %v810 = vld [vmem:[#allocation2 + $0x10] sm:$0xff]
        %v811 = vld [vmem:[#allocation2 + $0x18] sm:$0xff]
        %v812 = vld [vmem:[#allocation2 + $0x20] sm:$0xff]
        %v813 = vld [vmem:[#allocation2 + $0x28] sm:$0xff]
        %v814 = vld [vmem:[#allocation2 + $0x30] sm:$0xff]
        %v815 = vld [vmem:[#allocation2 + $0x38] sm:$0xff]
        %v816 = vld [vmem:[#allocation2 + $0x40] sm:$0xff]
        %v817 = vld [vmem:[#allocation2 + $0x48] sm:$0xff]
        %v818 = vld [vmem:[#allocation2 + $0x50] sm:$0xff]
        %v819 = vld [vmem:[#allocation2 + $0x58] sm:$0xff]
        %v820 = vld [vmem:[#allocation2 + $0x60] sm:$0xff]
        %v821 = vld [vmem:[#allocation2 + $0x68] sm:$0xff]
        %v822 = vld [vmem:[#allocation2 + $0x70] sm:$0xff]
        %v823 = vld [vmem:[#allocation2 + $0x78] sm:$0xff]
        %v824 = vld [vmem:[#allocation2 + $0x80] sm:$0xff]
        %v825 = vld [vmem:[#allocation2 + $0x88] sm:$0xff]
        %v826 = vld [vmem:[#allocation2 + $0x90] sm:$0xff]
        %v827 = vld [vmem:[#allocation2 + $0x98] sm:$0xff]
        %v828 = vld [vmem:[#allocation2 + $0xa0] sm:$0xff]
        %v829 = vld [vmem:[#allocation2 + $0xa8] sm:$0xff]
        %v830 = vld [vmem:[#allocation2 + $0xb0] sm:$0xff]
        %v831 = vld [vmem:[#allocation2 + $0xb8] sm:$0xff]
        %v832 = vld [vmem:[#allocation2 + $0xc0] sm:$0xff]
        %v833 = vld [vmem:[#allocation2 + $0xc8] sm:$0xff]
        %v834 = vld [vmem:[#allocation2 + $0xd0] sm:$0xff]
        %v835 = vld [vmem:[#allocation2 + $0xd8] sm:$0xff]
        %v836 = vld [vmem:[#allocation2 + $0xe0] sm:$0xff]
        %v837 = vld [vmem:[#allocation2 + $0xe8] sm:$0xff]
        %v838 = vld [vmem:[#allocation2 + $0xf0] sm:$0xff]
        %v839 = vld [vmem:[#allocation2 + $0xf8] sm:$0xff]
        %v840 = vld [vmem:[%s300] sm:$0x1]
        %v842 = vlaneseq
        %v843 = vshrl.u32 %v842, 7
        %v844 = vsub.s32 0, %v843
        %v845 = vrot.slane %v840, %v844
        %v847 = vadd.f32 %v808, %v845
        %v848 = vadd.f32 %v809, %v845
        %v849 = vadd.f32 %v810, %v845
        %v850 = vadd.f32 %v811, %v845
        %v851 = vadd.f32 %v812, %v845
        %v852 = vadd.f32 %v813, %v845
        %v853 = vadd.f32 %v814, %v845
        %v854 = vadd.f32 %v815, %v845
        %v855 = vadd.f32 %v816, %v845
        %v856 = vadd.f32 %v817, %v845
        %v857 = vadd.f32 %v818, %v845
        %v858 = vadd.f32 %v819, %v845
        %v859 = vadd.f32 %v820, %v845
        %v860 = vadd.f32 %v821, %v845
        %v861 = vadd.f32 %v822, %v845
        %v862 = vadd.f32 %v823, %v845
        %v863 = vadd.f32 %v824, %v845
        %v864 = vadd.f32 %v825, %v845
        %v865 = vadd.f32 %v826, %v845
        %v866 = vadd.f32 %v827, %v845
        %v867 = vadd.f32 %v828, %v845
        %v868 = vadd.f32 %v829, %v845
        %v869 = vadd.f32 %v830, %v845
        %v870 = vadd.f32 %v831, %v845
        %v871 = vadd.f32 %v832, %v845
        %v872 = vadd.f32 %v833, %v845
        %v873 = vadd.f32 %v834, %v845
        %v874 = vadd.f32 %v835, %v845
        %v875 = vadd.f32 %v836, %v845
        %v876 = vadd.f32 %v837, %v845
        %v877 = vadd.f32 %v838, %v845
        %v878 = vadd.f32 %v839, %v845
        %v879 = vld [vmem:[%s308] sm:$0xf]
        %v880 = vld [vmem:[%s308 + $0x4] sm:$0xf]
        %v881 = vld [vmem:[%s308 + $0x8] sm:$0xf]
        %v882 = vld [vmem:[%s308 + $0xc] sm:$0xf]
        %v883 = vld [vmem:[%s308 + $0x10] sm:$0xf]
        %v884 = vld [vmem:[%s308 + $0x14] sm:$0xf]
        %v885 = vld [vmem:[%s308 + $0x18] sm:$0xf]
        %v886 = vld [vmem:[%s308 + $0x1c] sm:$0xf]
        %v887 = vld [vmem:[%s308 + $0x20] sm:$0xf]
        %v888 = vld [vmem:[%s308 + $0x24] sm:$0xf]
        %v889 = vld [vmem:[%s308 + $0x28] sm:$0xf]
        %v890 = vld [vmem:[%s308 + $0x2c] sm:$0xf]
        %v891 = vld [vmem:[%s308 + $0x30] sm:$0xf]
        %v892 = vld [vmem:[%s308 + $0x34] sm:$0xf]
        %v893 = vld [vmem:[%s308 + $0x38] sm:$0xf]
        %v894 = vld [vmem:[%s308 + $0x3c] sm:$0xf]
        %v895 = vld [vmem:[%s308 + $0x40] sm:$0xf]
        %v896 = vld [vmem:[%s308 + $0x44] sm:$0xf]
        %v897 = vld [vmem:[%s308 + $0x48] sm:$0xf]
        %v898 = vld [vmem:[%s308 + $0x4c] sm:$0xf]
        %v899 = vld [vmem:[%s308 + $0x50] sm:$0xf]
        %v900 = vld [vmem:[%s308 + $0x54] sm:$0xf]
        %v901 = vld [vmem:[%s308 + $0x58] sm:$0xf]
        %v902 = vld [vmem:[%s308 + $0x5c] sm:$0xf]
        %v903 = vld [vmem:[%s308 + $0x60] sm:$0xf]
        %v904 = vld [vmem:[%s308 + $0x64] sm:$0xf]
        %v905 = vld [vmem:[%s308 + $0x68] sm:$0xf]
        %v906 = vld [vmem:[%s308 + $0x6c] sm:$0xf]
        %v907 = vld [vmem:[%s308 + $0x70] sm:$0xf]
        %v908 = vld [vmem:[%s308 + $0x74] sm:$0xf]
        %v909 = vld [vmem:[%s308 + $0x78] sm:$0xf]
        %v910 = vld [vmem:[%s308 + $0x7c] sm:$0xf]
        %v911 = vunpack.c.l.bf16 %v879
        %v912 = vunpack.c.l.bf16 %v880
        %v913 = vunpack.c.l.bf16 %v881
        %v914 = vunpack.c.l.bf16 %v882
        %v915 = vunpack.c.l.bf16 %v883
        %v916 = vunpack.c.l.bf16 %v884
        %v917 = vunpack.c.l.bf16 %v885
        %v918 = vunpack.c.l.bf16 %v886
        %v919 = vunpack.c.l.bf16 %v887
        %v920 = vunpack.c.l.bf16 %v888
        %v921 = vunpack.c.l.bf16 %v889
        %v922 = vunpack.c.l.bf16 %v890
        %v923 = vunpack.c.l.bf16 %v891
        %v924 = vunpack.c.l.bf16 %v892
        %v925 = vunpack.c.l.bf16 %v893
        %v926 = vunpack.c.l.bf16 %v894
        %v927 = vunpack.c.l.bf16 %v895
        %v928 = vunpack.c.l.bf16 %v896
        %v929 = vunpack.c.l.bf16 %v897
        %v930 = vunpack.c.l.bf16 %v898
        %v931 = vunpack.c.l.bf16 %v899
        %v932 = vunpack.c.l.bf16 %v900
        %v933 = vunpack.c.l.bf16 %v901
        %v934 = vunpack.c.l.bf16 %v902
        %v935 = vunpack.c.l.bf16 %v903
        %v936 = vunpack.c.l.bf16 %v904
        %v937 = vunpack.c.l.bf16 %v905
        %v938 = vunpack.c.l.bf16 %v906
        %v939 = vunpack.c.l.bf16 %v907
        %v940 = vunpack.c.l.bf16 %v908
        %v941 = vunpack.c.l.bf16 %v909
        %v942 = vunpack.c.l.bf16 %v910
        %v943 = vadd.f32 %v847, %v911
        %v944 = vadd.f32 %v848, %v912
        %v945 = vadd.f32 %v849, %v913
        %v946 = vadd.f32 %v850, %v914
        %v947 = vadd.f32 %v851, %v915
        %v948 = vadd.f32 %v852, %v916
        %v949 = vadd.f32 %v853, %v917
        %v950 = vadd.f32 %v854, %v918
        %v951 = vadd.f32 %v855, %v919
        %v952 = vadd.f32 %v856, %v920
        %v953 = vadd.f32 %v857, %v921
        %v954 = vadd.f32 %v858, %v922
        %v955 = vadd.f32 %v859, %v923
        %v956 = vadd.f32 %v860, %v924
        %v957 = vadd.f32 %v861, %v925
        %v958 = vadd.f32 %v862, %v926
        %v959 = vadd.f32 %v863, %v927
        %v960 = vadd.f32 %v864, %v928
        %v961 = vadd.f32 %v865, %v929
        %v962 = vadd.f32 %v866, %v930
        %v963 = vadd.f32 %v867, %v931
        %v964 = vadd.f32 %v868, %v932
        %v965 = vadd.f32 %v869, %v933
        %v966 = vadd.f32 %v870, %v934
        %v967 = vadd.f32 %v871, %v935
        %v968 = vadd.f32 %v872, %v936
        %v969 = vadd.f32 %v873, %v937
        %v970 = vadd.f32 %v874, %v938
        %v971 = vadd.f32 %v875, %v939
        %v972 = vadd.f32 %v876, %v940
        %v973 = vadd.f32 %v877, %v941
        %v974 = vadd.f32 %v878, %v942
        %vm975 = vcmp.ge.f32.partialorder %v943, 0.0
        %vm976 = vcmp.ge.f32.partialorder %v944, 0.0
        %vm977 = vcmp.ge.f32.partialorder %v945, 0.0
        %vm978 = vcmp.ge.f32.partialorder %v946, 0.0
        %vm979 = vcmp.ge.f32.partialorder %v947, 0.0
        %vm980 = vcmp.ge.f32.partialorder %v948, 0.0
        %vm981 = vcmp.ge.f32.partialorder %v949, 0.0
        %vm982 = vcmp.ge.f32.partialorder %v950, 0.0
        %vm983 = vcmp.ge.f32.partialorder %v951, 0.0
        %vm984 = vcmp.ge.f32.partialorder %v952, 0.0
        %vm985 = vcmp.ge.f32.partialorder %v953, 0.0
        %vm986 = vcmp.ge.f32.partialorder %v954, 0.0
        %vm987 = vcmp.ge.f32.partialorder %v955, 0.0
        %vm988 = vcmp.ge.f32.partialorder %v956, 0.0
        %vm989 = vcmp.ge.f32.partialorder %v957, 0.0
        %vm990 = vcmp.ge.f32.partialorder %v958, 0.0
        %vm991 = vcmp.ge.f32.partialorder %v959, 0.0
        %vm992 = vcmp.ge.f32.partialorder %v960, 0.0
        %vm993 = vcmp.ge.f32.partialorder %v961, 0.0
        %vm994 = vcmp.ge.f32.partialorder %v962, 0.0
        %vm995 = vcmp.ge.f32.partialorder %v963, 0.0
        %vm996 = vcmp.ge.f32.partialorder %v964, 0.0
        %vm997 = vcmp.ge.f32.partialorder %v965, 0.0
        %vm998 = vcmp.ge.f32.partialorder %v966, 0.0
        %vm999 = vcmp.ge.f32.partialorder %v967, 0.0
        %vm1000 = vcmp.ge.f32.partialorder %v968, 0.0
        %vm1001 = vcmp.ge.f32.partialorder %v969, 0.0
        %vm1002 = vcmp.ge.f32.partialorder %v970, 0.0
        %vm1003 = vcmp.ge.f32.partialorder %v971, 0.0
        %vm1004 = vcmp.ge.f32.partialorder %v972, 0.0
        %vm1005 = vcmp.ge.f32.partialorder %v973, 0.0
        %vm1006 = vcmp.ge.f32.partialorder %v974, 0.0
        %v1007 = vmul.f32 %v943, 0.2
        %v1008 = vmul.f32 %v944, 0.2
        %v1009 = vmul.f32 %v945, 0.2
        %v1010 = vmul.f32 %v946, 0.2
        %v1011 = vmul.f32 %v947, 0.2
        %v1012 = vmul.f32 %v948, 0.2
        %v1013 = vmul.f32 %v949, 0.2
        %v1014 = vmul.f32 %v950, 0.2
        %v1015 = vmul.f32 %v951, 0.2
        %v1016 = vmul.f32 %v952, 0.2
        %v1017 = vmul.f32 %v953, 0.2
        %v1018 = vmul.f32 %v954, 0.2
        %v1019 = vmul.f32 %v955, 0.2
        %v1020 = vmul.f32 %v956, 0.2
        %v1021 = vmul.f32 %v957, 0.2
        %v1022 = vmul.f32 %v958, 0.2
        %v1023 = vmul.f32 %v959, 0.2
        %v1024 = vmul.f32 %v960, 0.2
        %v1025 = vmul.f32 %v961, 0.2
        %v1026 = vmul.f32 %v962, 0.2
        %v1027 = vmul.f32 %v963, 0.2
        %v1028 = vmul.f32 %v964, 0.2
        %v1029 = vmul.f32 %v965, 0.2
        %v1030 = vmul.f32 %v966, 0.2
        %v1031 = vmul.f32 %v967, 0.2
        %v1032 = vmul.f32 %v968, 0.2
        %v1033 = vmul.f32 %v969, 0.2
        %v1034 = vmul.f32 %v970, 0.2
        %v1035 = vmul.f32 %v971, 0.2
        %v1036 = vmul.f32 %v972, 0.2
        %v1037 = vmul.f32 %v973, 0.2
        %v1038 = vmul.f32 %v974, 0.2
        %v1039 = vsel %vm975, %v943, %v1007
        %v1040 = vsel %vm976, %v944, %v1008
        %v1041 = vsel %vm977, %v945, %v1009
        %v1042 = vsel %vm978, %v946, %v1010
        %v1043 = vsel %vm979, %v947, %v1011
        %v1044 = vsel %vm980, %v948, %v1012
        %v1045 = vsel %vm981, %v949, %v1013
        %v1046 = vsel %vm982, %v950, %v1014
        %v1047 = vsel %vm983, %v951, %v1015
        %v1048 = vsel %vm984, %v952, %v1016
        %v1049 = vsel %vm985, %v953, %v1017
        %v1050 = vsel %vm986, %v954, %v1018
        %v1051 = vsel %vm987, %v955, %v1019
        %v1052 = vsel %vm988, %v956, %v1020
        %v1053 = vsel %vm989, %v957, %v1021
        %v1054 = vsel %vm990, %v958, %v1022
        %v1055 = vsel %vm991, %v959, %v1023
        %v1056 = vsel %vm992, %v960, %v1024
        %v1057 = vsel %vm993, %v961, %v1025
        %v1058 = vsel %vm994, %v962, %v1026
        %v1059 = vsel %vm995, %v963, %v1027
        %v1060 = vsel %vm996, %v964, %v1028
        %v1061 = vsel %vm997, %v965, %v1029
        %v1062 = vsel %vm998, %v966, %v1030
        %v1063 = vsel %vm999, %v967, %v1031
        %v1064 = vsel %vm1000, %v968, %v1032
        %v1065 = vsel %vm1001, %v969, %v1033
        %v1066 = vsel %vm1002, %v970, %v1034
        %v1067 = vsel %vm1003, %v971, %v1035
        %v1068 = vsel %vm1004, %v972, %v1036
        %v1069 = vsel %vm1005, %v973, %v1037
        %v1070 = vsel %vm1006, %v974, %v1038
        %v1071 = vpack.c.bf16 %v1040, %v1039
        %v1072 = vpack.c.bf16 %v1042, %v1041
        %v1073 = vpack.c.bf16 %v1044, %v1043
        %v1074 = vpack.c.bf16 %v1046, %v1045
        %v1075 = vpack.c.bf16 %v1048, %v1047
        %v1076 = vpack.c.bf16 %v1050, %v1049
        %v1077 = vpack.c.bf16 %v1052, %v1051
        %v1078 = vpack.c.bf16 %v1054, %v1053
        %v1079 = vpack.c.bf16 %v1056, %v1055
        %v1080 = vpack.c.bf16 %v1058, %v1057
        %v1081 = vpack.c.bf16 %v1060, %v1059
        %v1082 = vpack.c.bf16 %v1062, %v1061
        %v1083 = vpack.c.bf16 %v1064, %v1063
        %v1084 = vpack.c.bf16 %v1066, %v1065
        %v1085 = vpack.c.bf16 %v1068, %v1067
        %v1086 = vpack.c.bf16 %v1070, %v1069
        %v1103 = vunpack.c.l.b16 %v1071
        %v1104 = vunpack.c.h.b16 %v1071
        %v1105 = vunpack.c.l.b16 %v1072
        %v1106 = vunpack.c.h.b16 %v1072
        %v1107 = vunpack.c.l.b16 %v1073
        %v1108 = vunpack.c.h.b16 %v1073
        %v1109 = vunpack.c.l.b16 %v1074
        %v1110 = vunpack.c.h.b16 %v1074
        %v1111 = vunpack.c.l.b16 %v1075
        %v1112 = vunpack.c.h.b16 %v1075
        %v1113 = vunpack.c.l.b16 %v1076
        %v1114 = vunpack.c.h.b16 %v1076
        %v1115 = vunpack.c.l.b16 %v1077
        %v1116 = vunpack.c.h.b16 %v1077
        %v1117 = vunpack.c.l.b16 %v1078
        %v1118 = vunpack.c.h.b16 %v1078
        %v1119 = vunpack.c.l.b16 %v1079
        %v1120 = vunpack.c.h.b16 %v1079
        %v1121 = vunpack.c.l.b16 %v1080
        %v1122 = vunpack.c.h.b16 %v1080
        %v1123 = vunpack.c.l.b16 %v1081
        %v1124 = vunpack.c.h.b16 %v1081
        %v1125 = vunpack.c.l.b16 %v1082
        %v1126 = vunpack.c.h.b16 %v1082
        %v1127 = vunpack.c.l.b16 %v1083
        %v1128 = vunpack.c.h.b16 %v1083
        %v1129 = vunpack.c.l.b16 %v1084
        %v1130 = vunpack.c.h.b16 %v1084
        %v1131 = vunpack.c.l.b16 %v1085
        %v1132 = vunpack.c.h.b16 %v1085
        %v1133 = vunpack.c.l.b16 %v1086
        %v1134 = vunpack.c.h.b16 %v1086
        %v1135 = vpack.c.b16 %v1103, %v1103
        %v1136 = vpack.c.b16 %v1104, %v1104
        %v1137 = vpack.c.b16 %v1105, %v1105
        %v1138 = vpack.c.b16 %v1106, %v1106
        %v1139 = vpack.c.b16 %v1107, %v1107
        %v1140 = vpack.c.b16 %v1108, %v1108
        %v1141 = vpack.c.b16 %v1109, %v1109
        %v1142 = vpack.c.b16 %v1110, %v1110
        %v1143 = vpack.c.b16 %v1111, %v1111
        %v1144 = vpack.c.b16 %v1112, %v1112
        %v1145 = vpack.c.b16 %v1113, %v1113
        %v1146 = vpack.c.b16 %v1114, %v1114
        %v1147 = vpack.c.b16 %v1115, %v1115
        %v1148 = vpack.c.b16 %v1116, %v1116
        %v1149 = vpack.c.b16 %v1117, %v1117
        %v1150 = vpack.c.b16 %v1118, %v1118
        %v1151 = vpack.c.b16 %v1119, %v1119
        %v1152 = vpack.c.b16 %v1120, %v1120
        %v1153 = vpack.c.b16 %v1121, %v1121
        %v1154 = vpack.c.b16 %v1122, %v1122
        %v1155 = vpack.c.b16 %v1123, %v1123
        %v1156 = vpack.c.b16 %v1124, %v1124
        %v1157 = vpack.c.b16 %v1125, %v1125
        %v1158 = vpack.c.b16 %v1126, %v1126
        %v1159 = vpack.c.b16 %v1127, %v1127
        %v1160 = vpack.c.b16 %v1128, %v1128
        %v1161 = vpack.c.b16 %v1129, %v1129
        %v1162 = vpack.c.b16 %v1130, %v1130
        %v1163 = vpack.c.b16 %v1131, %v1131
        %v1164 = vpack.c.b16 %v1132, %v1132
        %v1165 = vpack.c.b16 %v1133, %v1133
        %v1166 = vpack.c.b16 %v1134, %v1134
        %1199 = vst [vmem:[%s317] sm:$0xf] %v1135
        %1200 = vst [vmem:[%s317 + $0x4] sm:$0xf] %v1136
        %1201 = vst [vmem:[%s317 + $0x8] sm:$0xf] %v1137
        %1202 = vst [vmem:[%s317 + $0xc] sm:$0xf] %v1138
        %1203 = vst [vmem:[%s317 + $0x10] sm:$0xf] %v1139
        %1204 = vst [vmem:[%s317 + $0x14] sm:$0xf] %v1140
        %1205 = vst [vmem:[%s317 + $0x18] sm:$0xf] %v1141
        %1206 = vst [vmem:[%s317 + $0x1c] sm:$0xf] %v1142
        %1207 = vst [vmem:[%s317 + $0x20] sm:$0xf] %v1143
        %1208 = vst [vmem:[%s317 + $0x24] sm:$0xf] %v1144
        %1209 = vst [vmem:[%s317 + $0x28] sm:$0xf] %v1145
        %1210 = vst [vmem:[%s317 + $0x2c] sm:$0xf] %v1146
        %1211 = vst [vmem:[%s317 + $0x30] sm:$0xf] %v1147
        %1212 = vst [vmem:[%s317 + $0x34] sm:$0xf] %v1148
        %1213 = vst [vmem:[%s317 + $0x38] sm:$0xf] %v1149
        %1214 = vst [vmem:[%s317 + $0x3c] sm:$0xf] %v1150
        %1215 = vst [vmem:[%s317 + $0x40] sm:$0xf] %v1151
        %1216 = vst [vmem:[%s317 + $0x44] sm:$0xf] %v1152
        %1217 = vst [vmem:[%s317 + $0x48] sm:$0xf] %v1153
        %1218 = vst [vmem:[%s317 + $0x4c] sm:$0xf] %v1154
        %1219 = vst [vmem:[%s317 + $0x50] sm:$0xf] %v1155
        %1220 = vst [vmem:[%s317 + $0x54] sm:$0xf] %v1156
        %1221 = vst [vmem:[%s317 + $0x58] sm:$0xf] %v1157
        %1222 = vst [vmem:[%s317 + $0x5c] sm:$0xf] %v1158
        %1223 = vst [vmem:[%s317 + $0x60] sm:$0xf] %v1159
        %1224 = vst [vmem:[%s317 + $0x64] sm:$0xf] %v1160
        %1225 = vst [vmem:[%s317 + $0x68] sm:$0xf] %v1161
        %1226 = vst [vmem:[%s317 + $0x6c] sm:$0xf] %v1162
        %1227 = vst [vmem:[%s317 + $0x70] sm:$0xf] %v1163
        %1228 = vst [vmem:[%s317 + $0x74] sm:$0xf] %v1164
        %1229 = vst [vmem:[%s317 + $0x78] sm:$0xf] %v1165
        %1230 = vst [vmem:[%s317 + $0x7c] sm:$0xf] %v1166
      $region44: #{encoder_forward.11} parent=35 // pred_fallthru
        _
      %s1231 = smul.u32 32, %s20
      %p1232 = scmp.lt.s32.totalorder %s1231, 63
      %s1233 = scalar_select %p1232, %s1231, 63
      %p1234 = scmp.lt.s32.totalorder %s21, 0
      %s1235 = scalar_select %p1234, %s21, 0
      %s1236 = sadd.s32 %s1235, %s1233
      %s1237 = smul.addr %s1236, 4
      %s1238 = scalar_lea.vmem %s4, %s1237
      // Predicated region
      $region45: #{encoder_forward.11} parent=35 // pred_check
        %p1239 = pneg %p164
      $region46: #{encoder_forward.11} parent=35 // pred_check_branch
        %1241 = sbr.rel (%p1239) target = $region48
      $region47: #{encoder_forward.11} parent=35 // pred_region
        %s1242 = smul.u32 32, %s20
      $region48: #{encoder_forward.11} parent=35 // pred_fallthru
        _
    $region36: #{encoder_forward.11} parent=5 // pred_fallthru
      _
    %p1243 = scmp.le.s32.totalorder 2, %s10
    // Predicated region
    $region49: #{encoder_forward.11} parent=5 // pred_check
      %p1244 = pneg %p1243
    $region50: #{encoder_forward.11} parent=5 // pred_check_branch
      %1246 = sbr.rel (%p1244) target = $region52
    $region51: #{encoder_forward.11} parent=5 // pred_region
      %s1247 = ssub.s32 %s10, 2
      // Predicated region
      $region53: #{encoder_forward.11} parent=51 // pred_check
        %p1248 = pneg %p170
      $region54: #{encoder_forward.11} parent=51 // pred_check_branch
        %1250 = sbr.rel (%p1248) target = $region56
      $region55: #{encoder_forward.11} parent=51 // pred_region
        %s1251 = smul.u32 32, %s23
        %p1252 = scmp.lt.s32.totalorder %s1251, 63
        %s1253 = scalar_select %p1252, %s1251, 63
        %p1254 = scmp.lt.s32.totalorder %s24, 0
        %s1255 = scalar_select %p1254, %s24, 0
        %s1256 = sadd.s32 %s1255, %s1253
        %s1257 = smul.addr %s1256, 4
        %s1258 = scalar_lea.vmem %s4, %s1257
      $region56: #{encoder_forward.11} parent=51 // pred_fallthru
        _
    $region52: #{encoder_forward.11} parent=5 // pred_fallthru
      _
  $region6: #{encoder_forward.11} parent=0 // loop_footer
    %s14 = sadd.s32 1, %s10
  $region7: #{encoder_forward.11} parent=0 // loop_footer_branch
    %9 = sbr.rel target = $region3
  $region8: #{encoder_forward.11} parent=0 // loop_exit
    _

// kernel: encoder_forward.12
$region0: #{encoder_forward.12}
  #allocation0 [shape = 'u32[]', space=smem, size = 0x4, offset = 0x4, fixed_abs, tag = 'smem constant byte address 0x4 - core index']
  #allocation1 [shape = 'u32[144,128]{1,0:T(1,128)}', space=vmem, size = 0x12000, scoped, tag = 'internal scratch']
  #allocation2 [shape = 'f32[128,128]{1,0:T(8,128)}', space=vmem, size = 0x10000, scoped, tag = 'scratch operand']
  %s0 = inlined_call_operand.vmem [shape: bf16[128,128], index: 0, kind: input, shape index: {}]
  %s1 = inlined_call_operand.vmem [shape: bf16[128,128], index: 1, kind: input, shape index: {}]
  %s2 = inlined_call_operand.vmem [shape: f32[1,128], index: 2, kind: input, shape index: {}]
  %s3 = inlined_call_operand.vmem [shape: bf16[128,128], index: 3, kind: output, shape index: {}]
  %s4 = sld [smem:[#allocation0]]
  $region30: #{encoder_forward.12} parent=0
    _
  %s6 = ssub.s32 1, %s4
  %s7 = scalar_select 0, %s6, %s4
  // Predicated region
  $region2: #{encoder_forward.12} parent=0 // pred_check
    _
  $region3: #{encoder_forward.12} parent=0 // pred_check_branch
    %9 = sbr.rel (0) target = $region5
  $region4: #{encoder_forward.12} parent=0 // pred_region
    _
  $region5: #{encoder_forward.12} parent=0 // pred_fallthru
    _
  // Predicated region
  $region6: #{encoder_forward.12} parent=0 // pred_check
    _
  $region7: #{encoder_forward.12} parent=0 // pred_check_branch
    %11 = sbr.rel (0) target = $region9
  $region8: #{encoder_forward.12} parent=0 // pred_region
    _
  $region9: #{encoder_forward.12} parent=0 // pred_fallthru
    _
  // Predicated region
  $region10: #{encoder_forward.12} parent=0 // pred_check
    _
  $region11: #{encoder_forward.12} parent=0 // pred_check_branch
    %13 = sbr.rel (0) target = $region13
  $region12: #{encoder_forward.12} parent=0 // pred_region
    _
  $region13: #{encoder_forward.12} parent=0 // pred_fallthru
    _
  %p15 = scmp.eq.s32.totalorder 0, 0
  // Predicated region
  $region14: #{encoder_forward.12} parent=0 // pred_check
    %p16 = pneg %p15
  $region15: #{encoder_forward.12} parent=0 // pred_check_branch
    %18 = sbr.rel (%p16) target = $region17
  $region16: #{encoder_forward.12} parent=0 // pred_region
    %19 = vst [vmem:[#allocation2] sm:$0xff] 0.0
    %20 = vst [vmem:[#allocation2 + $0x8] sm:$0xff] 0.0
    %21 = vst [vmem:[#allocation2 + $0x10] sm:$0xff] 0.0
    %22 = vst [vmem:[#allocation2 + $0x18] sm:$0xff] 0.0
    %23 = vst [vmem:[#allocation2 + $0x20] sm:$0xff] 0.0
    %24 = vst [vmem:[#allocation2 + $0x28] sm:$0xff] 0.0
    %25 = vst [vmem:[#allocation2 + $0x30] sm:$0xff] 0.0
    %26 = vst [vmem:[#allocation2 + $0x38] sm:$0xff] 0.0
    %27 = vst [vmem:[#allocation2 + $0x40] sm:$0xff] 0.0
    %28 = vst [vmem:[#allocation2 + $0x48] sm:$0xff] 0.0
    %29 = vst [vmem:[#allocation2 + $0x50] sm:$0xff] 0.0
    %30 = vst [vmem:[#allocation2 + $0x58] sm:$0xff] 0.0
    %31 = vst [vmem:[#allocation2 + $0x60] sm:$0xff] 0.0
    %32 = vst [vmem:[#allocation2 + $0x68] sm:$0xff] 0.0
    %33 = vst [vmem:[#allocation2 + $0x70] sm:$0xff] 0.0
    %34 = vst [vmem:[#allocation2 + $0x78] sm:$0xff] 0.0
  $region17: #{encoder_forward.12} parent=0 // pred_fallthru
    _
  %v35 = vld [vmem:[#allocation2] sm:$0xff]
  %v36 = vld [vmem:[#allocation2 + $0x8] sm:$0xff]
  %v37 = vld [vmem:[#allocation2 + $0x10] sm:$0xff]
  %v38 = vld [vmem:[#allocation2 + $0x18] sm:$0xff]
  %v39 = vld [vmem:[#allocation2 + $0x20] sm:$0xff]
  %v40 = vld [vmem:[#allocation2 + $0x28] sm:$0xff]
  %v41 = vld [vmem:[#allocation2 + $0x30] sm:$0xff]
  %v42 = vld [vmem:[#allocation2 + $0x38] sm:$0xff]
  %v43 = vld [vmem:[#allocation2 + $0x40] sm:$0xff]
  %v44 = vld [vmem:[#allocation2 + $0x48] sm:$0xff]
  %v45 = vld [vmem:[#allocation2 + $0x50] sm:$0xff]
  %v46 = vld [vmem:[#allocation2 + $0x58] sm:$0xff]
  %v47 = vld [vmem:[#allocation2 + $0x60] sm:$0xff]
  %v48 = vld [vmem:[#allocation2 + $0x68] sm:$0xff]
  %v49 = vld [vmem:[#allocation2 + $0x70] sm:$0xff]
  %v50 = vld [vmem:[#allocation2 + $0x78] sm:$0xff]
  %v51 = vld [vmem:[%s0] sm:$0xf]
  %v52 = vld [vmem:[%s0 + $0x4] sm:$0xf]
  %v53 = vld [vmem:[%s0 + $0x8] sm:$0xf]
  %v54 = vld [vmem:[%s0 + $0xc] sm:$0xf]
  %v55 = vld [vmem:[%s0 + $0x10] sm:$0xf]
  %v56 = vld [vmem:[%s0 + $0x14] sm:$0xf]
  %v57 = vld [vmem:[%s0 + $0x18] sm:$0xf]
  %v58 = vld [vmem:[%s0 + $0x1c] sm:$0xf]
  %v59 = vld [vmem:[%s0 + $0x20] sm:$0xf]
  %v60 = vld [vmem:[%s0 + $0x24] sm:$0xf]
  %v61 = vld [vmem:[%s0 + $0x28] sm:$0xf]
  %v62 = vld [vmem:[%s0 + $0x2c] sm:$0xf]
  %v63 = vld [vmem:[%s0 + $0x30] sm:$0xf]
  %v64 = vld [vmem:[%s0 + $0x34] sm:$0xf]
  %v65 = vld [vmem:[%s0 + $0x38] sm:$0xf]
  %v66 = vld [vmem:[%s0 + $0x3c] sm:$0xf]
  %v67 = vld [vmem:[%s1] sm:$0xf]
  %v68 = vld [vmem:[%s1 + $0x4] sm:$0xf]
  %v69 = vld [vmem:[%s1 + $0x8] sm:$0xf]
  %v70 = vld [vmem:[%s1 + $0xc] sm:$0xf]
  %v71 = vld [vmem:[%s1 + $0x10] sm:$0xf]
  %v72 = vld [vmem:[%s1 + $0x14] sm:$0xf]
  %v73 = vld [vmem:[%s1 + $0x18] sm:$0xf]
  %v74 = vld [vmem:[%s1 + $0x1c] sm:$0xf]
  %v75 = vld [vmem:[%s1 + $0x20] sm:$0xf]
  %v76 = vld [vmem:[%s1 + $0x24] sm:$0xf]
  %v77 = vld [vmem:[%s1 + $0x28] sm:$0xf]
  %v78 = vld [vmem:[%s1 + $0x2c] sm:$0xf]
  %v79 = vld [vmem:[%s1 + $0x30] sm:$0xf]
  %v80 = vld [vmem:[%s1 + $0x34] sm:$0xf]
  %v81 = vld [vmem:[%s1 + $0x38] sm:$0xf]
  %v82 = vld [vmem:[%s1 + $0x3c] sm:$0xf]
  %v99 = vunpack.c.l.b16 %v51
  %v100 = vunpack.c.l.b16 %v52
  %v101 = vunpack.c.l.b16 %v53
  %v102 = vunpack.c.l.b16 %v54
  %v103 = vunpack.c.l.b16 %v55
  %v104 = vunpack.c.l.b16 %v56
  %v105 = vunpack.c.l.b16 %v57
  %v106 = vunpack.c.l.b16 %v58
  %v107 = vunpack.c.l.b16 %v59
  %v108 = vunpack.c.l.b16 %v60
  %v109 = vunpack.c.l.b16 %v61
  %v110 = vunpack.c.l.b16 %v62
  %v111 = vunpack.c.l.b16 %v63
  %v112 = vunpack.c.l.b16 %v64
  %v113 = vunpack.c.l.b16 %v65
  %v114 = vunpack.c.l.b16 %v66
  %v115 = vpack.c.b16 %v100, %v99
  %v116 = vpack.c.b16 %v102, %v101
  %v117 = vpack.c.b16 %v104, %v103
  %v118 = vpack.c.b16 %v106, %v105
  %v119 = vpack.c.b16 %v108, %v107
  %v120 = vpack.c.b16 %v110, %v109
  %v121 = vpack.c.b16 %v112, %v111
  %v122 = vpack.c.b16 %v114, %v113
  %v147 = vunpack.c.l.b16 %v67
  %v148 = vunpack.c.l.b16 %v68
  %v149 = vunpack.c.l.b16 %v69
  %v150 = vunpack.c.l.b16 %v70
  %v151 = vunpack.c.l.b16 %v71
  %v152 = vunpack.c.l.b16 %v72
  %v153 = vunpack.c.l.b16 %v73
  %v154 = vunpack.c.l.b16 %v74
  %v155 = vunpack.c.l.b16 %v75
  %v156 = vunpack.c.l.b16 %v76
  %v157 = vunpack.c.l.b16 %v77
  %v158 = vunpack.c.l.b16 %v78
  %v159 = vunpack.c.l.b16 %v79
  %v160 = vunpack.c.l.b16 %v80
  %v161 = vunpack.c.l.b16 %v81
  %v162 = vunpack.c.l.b16 %v82
  %v163 = vpack.c.b16 %v148, %v147
  %v164 = vpack.c.b16 %v150, %v149
  %v165 = vpack.c.b16 %v152, %v151
  %v166 = vpack.c.b16 %v154, %v153
  %v167 = vpack.c.b16 %v156, %v155
  %v168 = vpack.c.b16 %v158, %v157
  %v169 = vpack.c.b16 %v160, %v159
  %v170 = vpack.c.b16 %v162, %v161
  %179 = vmatprep.subr.bf16.mxu0 0
  %180 = vmatpush1.bf16.msra.mxu0 %v170
  %181 = vmatprep.subr.bf16.mxu0 0
  %182 = vmatpush1.bf16.msra.mxu0 %v169
  %183 = vmatprep.subr.bf16.mxu0 0
  %184 = vmatpush1.bf16.msra.mxu0 %v168
  %185 = vmatprep.subr.bf16.mxu0 0
  %186 = vmatpush1.bf16.msra.mxu0 %v167
  %187 = vmatprep.subr.bf16.mxu0 0
  %188 = vmatpush1.bf16.msra.mxu0 %v166
  %189 = vmatprep.subr.bf16.mxu0 0
  %190 = vmatpush1.bf16.msra.mxu0 %v165
  %191 = vmatprep.subr.bf16.mxu0 0
  %192 = vmatpush1.bf16.msra.mxu0 %v164
  %193 = vmatprep.subr.bf16.mxu0 0
  %194 = vmatpush1.bf16.msra.mxu0 %v163
  %195 = vmatprep.subr.bf16.mxu0 0
  %196 = vmatpush2.bf16.msra.mxu0 0
  %197 = vmatprep.subr.bf16.mxu0 0
  %198 = vmatpush2.bf16.msra.mxu0 0
  %199 = vmatprep.subr.bf16.mxu0 0
  %200 = vmatpush2.bf16.msra.mxu0 0
  %201 = vmatprep.subr.bf16.mxu0 0
  %202 = vmatpush2.bf16.msra.mxu0 0
  %203 = vmatprep.subr.bf16.mxu0 0
  %204 = vmatpush2.bf16.msra.mxu0 0
  %205 = vmatprep.subr.bf16.mxu0 0
  %206 = vmatpush2.bf16.msra.mxu0 0
  %207 = vmatprep.subr.bf16.mxu0 0
  %208 = vmatpush2.bf16.msra.mxu0 0
  %209 = vmatprep.subr.bf16.mxu0 0
  %210 = vmatpush2.bf16.msra.mxu0 0
  %211 = vmatprep.mubr.bf16.mxu0 0
  %212 = vmatmul.mubr.bf16.gmra.mxu0 %v115
  %v213 = vpop.f32.mrf.mxu0
  %v214 = vadd.f32 0.0, %v213
  %v215 = vpop.f32.mrf.mxu0
  %v216 = vpop.f32.mrf.mxu0
  %v217 = vadd.f32 0.0, %v216
  %v218 = vpop.f32.mrf.mxu0
  %219 = vmatprep.mubr.bf16.mxu0 0
  %220 = vmatmul.mubr.bf16.gmra.mxu0 %v116
  %v221 = vpop.f32.mrf.mxu0
  %v222 = vadd.f32 0.0, %v221
  %v223 = vpop.f32.mrf.mxu0
  %v224 = vpop.f32.mrf.mxu0
  %v225 = vadd.f32 0.0, %v224
  %v226 = vpop.f32.mrf.mxu0
  %227 = vmatprep.mubr.bf16.mxu0 0
  %228 = vmatmul.mubr.bf16.gmra.mxu0 %v117
  %v229 = vpop.f32.mrf.mxu0
  %v230 = vadd.f32 0.0, %v229
  %v231 = vpop.f32.mrf.mxu0
  %v232 = vpop.f32.mrf.mxu0
  %v233 = vadd.f32 0.0, %v232
  %v234 = vpop.f32.mrf.mxu0
  %235 = vmatprep.mubr.bf16.mxu0 0
  %236 = vmatmul.mubr.bf16.gmra.mxu0 %v118
  %v237 = vpop.f32.mrf.mxu0
  %v238 = vadd.f32 0.0, %v237
  %v239 = vpop.f32.mrf.mxu0
  %v240 = vpop.f32.mrf.mxu0
  %v241 = vadd.f32 0.0, %v240
  %v242 = vpop.f32.mrf.mxu0
  %243 = vmatprep.mubr.bf16.mxu0 0
  %244 = vmatmul.mubr.bf16.gmra.mxu0 %v119
  %v245 = vpop.f32.mrf.mxu0
  %v246 = vadd.f32 0.0, %v245
  %v247 = vpop.f32.mrf.mxu0
  %v248 = vpop.f32.mrf.mxu0
  %v249 = vadd.f32 0.0, %v248
  %v250 = vpop.f32.mrf.mxu0
  %251 = vmatprep.mubr.bf16.mxu0 0
  %252 = vmatmul.mubr.bf16.gmra.mxu0 %v120
  %v253 = vpop.f32.mrf.mxu0
  %v254 = vadd.f32 0.0, %v253
  %v255 = vpop.f32.mrf.mxu0
  %v256 = vpop.f32.mrf.mxu0
  %v257 = vadd.f32 0.0, %v256
  %v258 = vpop.f32.mrf.mxu0
  %259 = vmatprep.mubr.bf16.mxu0 0
  %260 = vmatmul.mubr.bf16.gmra.mxu0 %v121
  %v261 = vpop.f32.mrf.mxu0
  %v262 = vadd.f32 0.0, %v261
  %v263 = vpop.f32.mrf.mxu0
  %v264 = vpop.f32.mrf.mxu0
  %v265 = vadd.f32 0.0, %v264
  %v266 = vpop.f32.mrf.mxu0
  %267 = vmatprep.mubr.bf16.mxu0 0
  %268 = vmatmul.mubr.bf16.gmra.mxu0 %v122
  %v269 = vpop.f32.mrf.mxu0
  %v270 = vadd.f32 0.0, %v269
  %v271 = vpop.f32.mrf.mxu0
  %v272 = vpop.f32.mrf.mxu0
  %v273 = vadd.f32 0.0, %v272
  %v274 = vpop.f32.mrf.mxu0
  %275 = vdwg.mxu0
  %v276 = vadd.f32 %v35, %v214
  %v277 = vadd.f32 %v36, %v217
  %v278 = vadd.f32 %v37, %v222
  %v279 = vadd.f32 %v38, %v225
  %v280 = vadd.f32 %v39, %v230
  %v281 = vadd.f32 %v40, %v233
  %v282 = vadd.f32 %v41, %v238
  %v283 = vadd.f32 %v42, %v241
  %v284 = vadd.f32 %v43, %v246
  %v285 = vadd.f32 %v44, %v249
  %v286 = vadd.f32 %v45, %v254
  %v287 = vadd.f32 %v46, %v257
  %v288 = vadd.f32 %v47, %v262
  %v289 = vadd.f32 %v48, %v265
  %v290 = vadd.f32 %v49, %v270
  %v291 = vadd.f32 %v50, %v273
  %292 = vst [vmem:[#allocation2] sm:$0xff] %v276
  %293 = vst [vmem:[#allocation2 + $0x8] sm:$0xff] %v277
  %294 = vst [vmem:[#allocation2 + $0x10] sm:$0xff] %v278
  %295 = vst [vmem:[#allocation2 + $0x18] sm:$0xff] %v279
  %296 = vst [vmem:[#allocation2 + $0x20] sm:$0xff] %v280
  %297 = vst [vmem:[#allocation2 + $0x28] sm:$0xff] %v281
  %298 = vst [vmem:[#allocation2 + $0x30] sm:$0xff] %v282
  %299 = vst [vmem:[#allocation2 + $0x38] sm:$0xff] %v283
  %300 = vst [vmem:[#allocation2 + $0x40] sm:$0xff] %v284
  %301 = vst [vmem:[#allocation2 + $0x48] sm:$0xff] %v285
  %302 = vst [vmem:[#allocation2 + $0x50] sm:$0xff] %v286
  %303 = vst [vmem:[#allocation2 + $0x58] sm:$0xff] %v287
  %304 = vst [vmem:[#allocation2 + $0x60] sm:$0xff] %v288
  %305 = vst [vmem:[#allocation2 + $0x68] sm:$0xff] %v289
  %306 = vst [vmem:[#allocation2 + $0x70] sm:$0xff] %v290
  %307 = vst [vmem:[#allocation2 + $0x78] sm:$0xff] %v291
  // Predicated region
  $region18: #{encoder_forward.12} parent=0 // pred_check
    %p308 = pneg %p15
  $region19: #{encoder_forward.12} parent=0 // pred_check_branch
    %310 = sbr.rel (%p308) target = $region21
  $region20: #{encoder_forward.12} parent=0 // pred_region
    %v311 = vld [vmem:[#allocation2] sm:$0xff]
    %v312 = vld [vmem:[#allocation2 + $0x8] sm:$0xff]
    %v313 = vld [vmem:[#allocation2 + $0x10] sm:$0xff]
    %v314 = vld [vmem:[#allocation2 + $0x18] sm:$0xff]
    %v315 = vld [vmem:[#allocation2 + $0x20] sm:$0xff]
    %v316 = vld [vmem:[#allocation2 + $0x28] sm:$0xff]
    %v317 = vld [vmem:[#allocation2 + $0x30] sm:$0xff]
    %v318 = vld [vmem:[#allocation2 + $0x38] sm:$0xff]
    %v319 = vld [vmem:[#allocation2 + $0x40] sm:$0xff]
    %v320 = vld [vmem:[#allocation2 + $0x48] sm:$0xff]
    %v321 = vld [vmem:[#allocation2 + $0x50] sm:$0xff]
    %v322 = vld [vmem:[#allocation2 + $0x58] sm:$0xff]
    %v323 = vld [vmem:[#allocation2 + $0x60] sm:$0xff]
    %v324 = vld [vmem:[#allocation2 + $0x68] sm:$0xff]
    %v325 = vld [vmem:[#allocation2 + $0x70] sm:$0xff]
    %v326 = vld [vmem:[#allocation2 + $0x78] sm:$0xff]
    %v327 = vld [vmem:[%s2] sm:$0x1]
    %v329 = vlaneseq
    %v330 = vshrl.u32 %v329, 7
    %v331 = vsub.s32 0, %v330
    %v332 = vrot.slane %v327, %v331
    %v334 = vadd.f32 %v311, %v332
    %v335 = vadd.f32 %v312, %v332
    %v336 = vadd.f32 %v313, %v332
    %v337 = vadd.f32 %v314, %v332
    %v338 = vadd.f32 %v315, %v332
    %v339 = vadd.f32 %v316, %v332
    %v340 = vadd.f32 %v317, %v332
    %v341 = vadd.f32 %v318, %v332
    %v342 = vadd.f32 %v319, %v332
    %v343 = vadd.f32 %v320, %v332
    %v344 = vadd.f32 %v321, %v332
    %v345 = vadd.f32 %v322, %v332
    %v346 = vadd.f32 %v323, %v332
    %v347 = vadd.f32 %v324, %v332
    %v348 = vadd.f32 %v325, %v332
    %v349 = vadd.f32 %v326, %v332
    %vm350 = vcmp.ge.f32.partialorder %v334, 0.0
    %vm351 = vcmp.ge.f32.partialorder %v335, 0.0
    %vm352 = vcmp.ge.f32.partialorder %v336, 0.0
    %vm353 = vcmp.ge.f32.partialorder %v337, 0.0
    %vm354 = vcmp.ge.f32.partialorder %v338, 0.0
    %vm355 = vcmp.ge.f32.partialorder %v339, 0.0
    %vm356 = vcmp.ge.f32.partialorder %v340, 0.0
    %vm357 = vcmp.ge.f32.partialorder %v341, 0.0
    %vm358 = vcmp.ge.f32.partialorder %v342, 0.0
    %vm359 = vcmp.ge.f32.partialorder %v343, 0.0
    %vm360 = vcmp.ge.f32.partialorder %v344, 0.0
    %vm361 = vcmp.ge.f32.partialorder %v345, 0.0
    %vm362 = vcmp.ge.f32.partialorder %v346, 0.0
    %vm363 = vcmp.ge.f32.partialorder %v347, 0.0
    %vm364 = vcmp.ge.f32.partialorder %v348, 0.0
    %vm365 = vcmp.ge.f32.partialorder %v349, 0.0
    %v366 = vmul.f32 %v334, 0.1
    %v367 = vmul.f32 %v335, 0.1
    %v368 = vmul.f32 %v336, 0.1
    %v369 = vmul.f32 %v337, 0.1
    %v370 = vmul.f32 %v338, 0.1
    %v371 = vmul.f32 %v339, 0.1
    %v372 = vmul.f32 %v340, 0.1
    %v373 = vmul.f32 %v341, 0.1
    %v374 = vmul.f32 %v342, 0.1
    %v375 = vmul.f32 %v343, 0.1
    %v376 = vmul.f32 %v344, 0.1
    %v377 = vmul.f32 %v345, 0.1
    %v378 = vmul.f32 %v346, 0.1
    %v379 = vmul.f32 %v347, 0.1
    %v380 = vmul.f32 %v348, 0.1
    %v381 = vmul.f32 %v349, 0.1
    %v382 = vsel %vm350, %v334, %v366
    %v383 = vsel %vm351, %v335, %v367
    %v384 = vsel %vm352, %v336, %v368
    %v385 = vsel %vm353, %v337, %v369
    %v386 = vsel %vm354, %v338, %v370
    %v387 = vsel %vm355, %v339, %v371
    %v388 = vsel %vm356, %v340, %v372
    %v389 = vsel %vm357, %v341, %v373
    %v390 = vsel %vm358, %v342, %v374
    %v391 = vsel %vm359, %v343, %v375
    %v392 = vsel %vm360, %v344, %v376
    %v393 = vsel %vm361, %v345, %v377
    %v394 = vsel %vm362, %v346, %v378
    %v395 = vsel %vm363, %v347, %v379
    %v396 = vsel %vm364, %v348, %v380
    %v397 = vsel %vm365, %v349, %v381
    %v398 = vpack.c.bf16 %v383, %v382
    %v399 = vpack.c.bf16 %v385, %v384
    %v400 = vpack.c.bf16 %v387, %v386
    %v401 = vpack.c.bf16 %v389, %v388
    %v402 = vpack.c.bf16 %v391, %v390
    %v403 = vpack.c.bf16 %v393, %v392
    %v404 = vpack.c.bf16 %v395, %v394
    %v405 = vpack.c.bf16 %v397, %v396
    %v414 = vunpack.c.l.b16 %v398
    %v415 = vunpack.c.h.b16 %v398
    %v416 = vunpack.c.l.b16 %v399
    %v417 = vunpack.c.h.b16 %v399
    %v418 = vunpack.c.l.b16 %v400
    %v419 = vunpack.c.h.b16 %v400
    %v420 = vunpack.c.l.b16 %v401
    %v421 = vunpack.c.h.b16 %v401
    %v422 = vunpack.c.l.b16 %v402
    %v423 = vunpack.c.h.b16 %v402
    %v424 = vunpack.c.l.b16 %v403
    %v425 = vunpack.c.h.b16 %v403
    %v426 = vunpack.c.l.b16 %v404
    %v427 = vunpack.c.h.b16 %v404
    %v428 = vunpack.c.l.b16 %v405
    %v429 = vunpack.c.h.b16 %v405
    %v430 = vpack.c.b16 %v414, %v414
    %v431 = vpack.c.b16 %v415, %v415
    %v432 = vpack.c.b16 %v416, %v416
    %v433 = vpack.c.b16 %v417, %v417
    %v434 = vpack.c.b16 %v418, %v418
    %v435 = vpack.c.b16 %v419, %v419
    %v436 = vpack.c.b16 %v420, %v420
    %v437 = vpack.c.b16 %v421, %v421
    %v438 = vpack.c.b16 %v422, %v422
    %v439 = vpack.c.b16 %v423, %v423
    %v440 = vpack.c.b16 %v424, %v424
    %v441 = vpack.c.b16 %v425, %v425
    %v442 = vpack.c.b16 %v426, %v426
    %v443 = vpack.c.b16 %v427, %v427
    %v444 = vpack.c.b16 %v428, %v428
    %v445 = vpack.c.b16 %v429, %v429
    %462 = vst [vmem:[%s3] sm:$0xf] %v430
    %463 = vst [vmem:[%s3 + $0x4] sm:$0xf] %v431
    %464 = vst [vmem:[%s3 + $0x8] sm:$0xf] %v432
    %465 = vst [vmem:[%s3 + $0xc] sm:$0xf] %v433
    %466 = vst [vmem:[%s3 + $0x10] sm:$0xf] %v434
    %467 = vst [vmem:[%s3 + $0x14] sm:$0xf] %v435
    %468 = vst [vmem:[%s3 + $0x18] sm:$0xf] %v436
    %469 = vst [vmem:[%s3 + $0x1c] sm:$0xf] %v437
    %470 = vst [vmem:[%s3 + $0x20] sm:$0xf] %v438
    %471 = vst [vmem:[%s3 + $0x24] sm:$0xf] %v439
    %472 = vst [vmem:[%s3 + $0x28] sm:$0xf] %v440
    %473 = vst [vmem:[%s3 + $0x2c] sm:$0xf] %v441
    %474 = vst [vmem:[%s3 + $0x30] sm:$0xf] %v442
    %475 = vst [vmem:[%s3 + $0x34] sm:$0xf] %v443
    %476 = vst [vmem:[%s3 + $0x38] sm:$0xf] %v444
    %477 = vst [vmem:[%s3 + $0x3c] sm:$0xf] %v445
  $region21: #{encoder_forward.12} parent=0 // pred_fallthru
    _
  // Predicated region
  $region22: #{encoder_forward.12} parent=0 // pred_check
    _
  $region23: #{encoder_forward.12} parent=0 // pred_check_branch
    %479 = sbr.rel (0) target = $region25
  $region24: #{encoder_forward.12} parent=0 // pred_region
    _
  $region25: #{encoder_forward.12} parent=0 // pred_fallthru
    _
  // Predicated region
  $region26: #{encoder_forward.12} parent=0 // pred_check
    _
  $region27: #{encoder_forward.12} parent=0 // pred_check_branch
    %481 = sbr.rel (0) target = $region29
  $region28: #{encoder_forward.12} parent=0 // pred_region
    _
  $region29: #{encoder_forward.12} parent=0 // pred_fallthru
    _

// kernel: encoder_forward.13
$region0: #{encoder_forward.13}
  #allocation0 [shape = 'u32[]', space=smem, size = 0x4, offset = 0x4, fixed_abs, tag = 'smem constant byte address 0x4 - core index']
  #allocation1 [shape = 'u32[144,128]{1,0:T(1,128)}', space=vmem, size = 0x12000, scoped, tag = 'internal scratch']
  #allocation2 [shape = 'f32[32,128]{1,0:T(8,128)}', space=vmem, size = 0x4000, scoped, tag = 'scratch operand']
  %s0 = inlined_call_operand.vmem [shape: bf16[32,256], index: 0, kind: input, shape index: {}]
  %s1 = inlined_call_operand.vmem [shape: bf16[256,128], index: 1, kind: input, shape index: {}]
  %s2 = inlined_call_operand.vmem [shape: f32[1,128], index: 2, kind: input, shape index: {}]
  %s3 = inlined_call_operand.vmem [shape: bf16[32,128], index: 3, kind: output, shape index: {}]
  %s4 = sld [smem:[#allocation0]]
  $region30: #{encoder_forward.13} parent=0
    _
  %s6 = ssub.s32 1, %s4
  %s7 = scalar_select 0, %s6, %s4
  // Predicated region
  $region2: #{encoder_forward.13} parent=0 // pred_check
    _
  $region3: #{encoder_forward.13} parent=0 // pred_check_branch
    %9 = sbr.rel (0) target = $region5
  $region4: #{encoder_forward.13} parent=0 // pred_region
    _
  $region5: #{encoder_forward.13} parent=0 // pred_fallthru
    _
  // Predicated region
  $region6: #{encoder_forward.13} parent=0 // pred_check
    _
  $region7: #{encoder_forward.13} parent=0 // pred_check_branch
    %11 = sbr.rel (0) target = $region9
  $region8: #{encoder_forward.13} parent=0 // pred_region
    _
  $region9: #{encoder_forward.13} parent=0 // pred_fallthru
    _
  // Predicated region
  $region10: #{encoder_forward.13} parent=0 // pred_check
    _
  $region11: #{encoder_forward.13} parent=0 // pred_check_branch
    %13 = sbr.rel (0) target = $region13
  $region12: #{encoder_forward.13} parent=0 // pred_region
    _
  $region13: #{encoder_forward.13} parent=0 // pred_fallthru
    _
  %p15 = scmp.eq.s32.totalorder 0, 0
  // Predicated region
  $region14: #{encoder_forward.13} parent=0 // pred_check
    %p16 = pneg %p15
  $region15: #{encoder_forward.13} parent=0 // pred_check_branch
    %18 = sbr.rel (%p16) target = $region17
  $region16: #{encoder_forward.13} parent=0 // pred_region
    %19 = vst [vmem:[#allocation2] sm:$0xff] 0.0
    %20 = vst [vmem:[#allocation2 + $0x8] sm:$0xff] 0.0
    %21 = vst [vmem:[#allocation2 + $0x10] sm:$0xff] 0.0
    %22 = vst [vmem:[#allocation2 + $0x18] sm:$0xff] 0.0
  $region17: #{encoder_forward.13} parent=0 // pred_fallthru
    _
  %v23 = vld [vmem:[#allocation2] sm:$0xff]
  %v24 = vld [vmem:[#allocation2 + $0x8] sm:$0xff]
  %v25 = vld [vmem:[#allocation2 + $0x10] sm:$0xff]
  %v26 = vld [vmem:[#allocation2 + $0x18] sm:$0xff]
  %v27 = vld [vmem:[%s0] sm:$0xff]
  %v28 = vld [vmem:[%s0 + $0x8] sm:$0xff]
  %v29 = vld [vmem:[%s0 + $0x10] sm:$0xff]
  %v30 = vld [vmem:[%s0 + $0x18] sm:$0xff]
  %v31 = vld [vmem:[%s1] sm:$0xf]
  %v32 = vld [vmem:[%s1 + $0x4] sm:$0xf]
  %v33 = vld [vmem:[%s1 + $0x8] sm:$0xf]
  %v34 = vld [vmem:[%s1 + $0xc] sm:$0xf]
  %v35 = vld [vmem:[%s1 + $0x10] sm:$0xf]
  %v36 = vld [vmem:[%s1 + $0x14] sm:$0xf]
  %v37 = vld [vmem:[%s1 + $0x18] sm:$0xf]
  %v38 = vld [vmem:[%s1 + $0x1c] sm:$0xf]
  %v39 = vld [vmem:[%s1 + $0x20] sm:$0xf]
  %v40 = vld [vmem:[%s1 + $0x24] sm:$0xf]
  %v41 = vld [vmem:[%s1 + $0x28] sm:$0xf]
  %v42 = vld [vmem:[%s1 + $0x2c] sm:$0xf]
  %v43 = vld [vmem:[%s1 + $0x30] sm:$0xf]
  %v44 = vld [vmem:[%s1 + $0x34] sm:$0xf]
  %v45 = vld [vmem:[%s1 + $0x38] sm:$0xf]
  %v46 = vld [vmem:[%s1 + $0x3c] sm:$0xf]
  %v47 = vld [vmem:[%s1 + $0x40] sm:$0xf]
  %v48 = vld [vmem:[%s1 + $0x44] sm:$0xf]
  %v49 = vld [vmem:[%s1 + $0x48] sm:$0xf]
  %v50 = vld [vmem:[%s1 + $0x4c] sm:$0xf]
  %v51 = vld [vmem:[%s1 + $0x50] sm:$0xf]
  %v52 = vld [vmem:[%s1 + $0x54] sm:$0xf]
  %v53 = vld [vmem:[%s1 + $0x58] sm:$0xf]
  %v54 = vld [vmem:[%s1 + $0x5c] sm:$0xf]
  %v55 = vld [vmem:[%s1 + $0x60] sm:$0xf]
  %v56 = vld [vmem:[%s1 + $0x64] sm:$0xf]
  %v57 = vld [vmem:[%s1 + $0x68] sm:$0xf]
  %v58 = vld [vmem:[%s1 + $0x6c] sm:$0xf]
  %v59 = vld [vmem:[%s1 + $0x70] sm:$0xf]
  %v60 = vld [vmem:[%s1 + $0x74] sm:$0xf]
  %v61 = vld [vmem:[%s1 + $0x78] sm:$0xf]
  %v62 = vld [vmem:[%s1 + $0x7c] sm:$0xf]
  %v67 = vunpack.c.l.b16 %v27
  %v68 = vunpack.c.h.b16 %v27
  %v69 = vunpack.c.l.b16 %v28
  %v70 = vunpack.c.h.b16 %v28
  %v71 = vunpack.c.l.b16 %v29
  %v72 = vunpack.c.h.b16 %v29
  %v73 = vunpack.c.l.b16 %v30
  %v74 = vunpack.c.h.b16 %v30
  %v75 = vpack.c.b16 %v69, %v67
  %v76 = vpack.c.b16 %v70, %v68
  %v77 = vpack.c.b16 %v73, %v71
  %v78 = vpack.c.b16 %v74, %v72
  %v115 = vunpack.c.l.b16 %v31
  %v116 = vunpack.c.l.b16 %v32
  %v117 = vunpack.c.l.b16 %v33
  %v118 = vunpack.c.l.b16 %v34
  %v119 = vunpack.c.l.b16 %v35
  %v120 = vunpack.c.l.b16 %v36
  %v121 = vunpack.c.l.b16 %v37
  %v122 = vunpack.c.l.b16 %v38
  %v123 = vunpack.c.l.b16 %v39
  %v124 = vunpack.c.l.b16 %v40
  %v125 = vunpack.c.l.b16 %v41
  %v126 = vunpack.c.l.b16 %v42
  %v127 = vunpack.c.l.b16 %v43
  %v128 = vunpack.c.l.b16 %v44
  %v129 = vunpack.c.l.b16 %v45
  %v130 = vunpack.c.l.b16 %v46
  %v131 = vunpack.c.l.b16 %v47
  %v132 = vunpack.c.l.b16 %v48
  %v133 = vunpack.c.l.b16 %v49
  %v134 = vunpack.c.l.b16 %v50
  %v135 = vunpack.c.l.b16 %v51
  %v136 = vunpack.c.l.b16 %v52
  %v137 = vunpack.c.l.b16 %v53
  %v138 = vunpack.c.l.b16 %v54
  %v139 = vunpack.c.l.b16 %v55
  %v140 = vunpack.c.l.b16 %v56
  %v141 = vunpack.c.l.b16 %v57
  %v142 = vunpack.c.l.b16 %v58
  %v143 = vunpack.c.l.b16 %v59
  %v144 = vunpack.c.l.b16 %v60
  %v145 = vunpack.c.l.b16 %v61
  %v146 = vunpack.c.l.b16 %v62
  %v147 = vpack.c.b16 %v116, %v115
  %v148 = vpack.c.b16 %v118, %v117
  %v149 = vpack.c.b16 %v120, %v119
  %v150 = vpack.c.b16 %v122, %v121
  %v151 = vpack.c.b16 %v124, %v123
  %v152 = vpack.c.b16 %v126, %v125
  %v153 = vpack.c.b16 %v128, %v127
  %v154 = vpack.c.b16 %v130, %v129
  %v155 = vpack.c.b16 %v132, %v131
  %v156 = vpack.c.b16 %v134, %v133
  %v157 = vpack.c.b16 %v136, %v135
  %v158 = vpack.c.b16 %v138, %v137
  %v159 = vpack.c.b16 %v140, %v139
  %v160 = vpack.c.b16 %v142, %v141
  %v161 = vpack.c.b16 %v144, %v143
  %v162 = vpack.c.b16 %v146, %v145
  %179 = vmatprep.subr.bf16.mxu0 0
  %180 = vmatpush1.bf16.msra.mxu0 %v154
  %181 = vmatprep.subr.bf16.mxu0 0
  %182 = vmatpush1.bf16.msra.mxu0 %v153
  %183 = vmatprep.subr.bf16.mxu0 0
  %184 = vmatpush1.bf16.msra.mxu0 %v152
  %185 = vmatprep.subr.bf16.mxu0 0
  %186 = vmatpush1.bf16.msra.mxu0 %v151
  %187 = vmatprep.subr.bf16.mxu0 0
  %188 = vmatpush1.bf16.msra.mxu0 %v150
  %189 = vmatprep.subr.bf16.mxu0 0
  %190 = vmatpush1.bf16.msra.mxu0 %v149
  %191 = vmatprep.subr.bf16.mxu0 0
  %192 = vmatpush1.bf16.msra.mxu0 %v148
  %193 = vmatprep.subr.bf16.mxu0 0
  %194 = vmatpush1.bf16.msra.mxu0 %v147
  %195 = vmatprep.subr.bf16.mxu0 0
  %196 = vmatpush2.bf16.msra.mxu0 %v162
  %197 = vmatprep.subr.bf16.mxu0 0
  %198 = vmatpush2.bf16.msra.mxu0 %v161
  %199 = vmatprep.subr.bf16.mxu0 0
  %200 = vmatpush2.bf16.msra.mxu0 %v160
  %201 = vmatprep.subr.bf16.mxu0 0
  %202 = vmatpush2.bf16.msra.mxu0 %v159
  %203 = vmatprep.subr.bf16.mxu0 0
  %204 = vmatpush2.bf16.msra.mxu0 %v158
  %205 = vmatprep.subr.bf16.mxu0 0
  %206 = vmatpush2.bf16.msra.mxu0 %v157
  %207 = vmatprep.subr.bf16.mxu0 0
  %208 = vmatpush2.bf16.msra.mxu0 %v156
  %209 = vmatprep.subr.bf16.mxu0 0
  %210 = vmatpush2.bf16.msra.mxu0 %v155
  %211 = vmatprep.mubr.bf16.mxu0 %v76
  %212 = vmatmul.mubr.bf16.gmra.mxu0 %v75
  %v213 = vpop.f32.mrf.mxu0
  %v214 = vadd.f32 0.0, %v213
  %v215 = vpop.f32.mrf.mxu0
  %v216 = vpop.f32.mrf.mxu0
  %v217 = vadd.f32 0.0, %v216
  %v218 = vpop.f32.mrf.mxu0
  %219 = vmatprep.mubr.bf16.mxu0 %v78
  %220 = vmatmul.mubr.bf16.gmra.mxu0 %v77
  %v221 = vpop.f32.mrf.mxu0
  %v222 = vadd.f32 0.0, %v221
  %v223 = vpop.f32.mrf.mxu0
  %v224 = vpop.f32.mrf.mxu0
  %v225 = vadd.f32 0.0, %v224
  %v226 = vpop.f32.mrf.mxu0
  %227 = vdwg.mxu0
  %v228 = vadd.f32 %v23, %v214
  %v229 = vadd.f32 %v24, %v217
  %v230 = vadd.f32 %v25, %v222
  %v231 = vadd.f32 %v26, %v225
  %232 = vst [vmem:[#allocation2] sm:$0xff] %v228
  %233 = vst [vmem:[#allocation2 + $0x8] sm:$0xff] %v229
  %234 = vst [vmem:[#allocation2 + $0x10] sm:$0xff] %v230
  %235 = vst [vmem:[#allocation2 + $0x18] sm:$0xff] %v231
  // Predicated region
  $region18: #{encoder_forward.13} parent=0 // pred_check
    %p236 = pneg %p15
  $region19: #{encoder_forward.13} parent=0 // pred_check_branch
    %238 = sbr.rel (%p236) target = $region21
  $region20: #{encoder_forward.13} parent=0 // pred_region
    %v239 = vld [vmem:[#allocation2] sm:$0xff]
    %v240 = vld [vmem:[#allocation2 + $0x8] sm:$0xff]
    %v241 = vld [vmem:[#allocation2 + $0x10] sm:$0xff]
    %v242 = vld [vmem:[#allocation2 + $0x18] sm:$0xff]
    %v243 = vld [vmem:[%s2] sm:$0x1]
    %v245 = vlaneseq
    %v246 = vshrl.u32 %v245, 7
    %v247 = vsub.s32 0, %v246
    %v248 = vrot.slane %v243, %v247
    %v250 = vadd.f32 %v239, %v248
    %v251 = vadd.f32 %v240, %v248
    %v252 = vadd.f32 %v241, %v248
    %v253 = vadd.f32 %v242, %v248
    %vm254 = vcmp.ge.f32.partialorder %v250, 0.0
    %vm255 = vcmp.ge.f32.partialorder %v251, 0.0
    %vm256 = vcmp.ge.f32.partialorder %v252, 0.0
    %vm257 = vcmp.ge.f32.partialorder %v253, 0.0
    %v258 = vmul.f32 %v250, 0.1
    %v259 = vmul.f32 %v251, 0.1
    %v260 = vmul.f32 %v252, 0.1
    %v261 = vmul.f32 %v253, 0.1
    %v262 = vsel %vm254, %v250, %v258
    %v263 = vsel %vm255, %v251, %v259
    %v264 = vsel %vm256, %v252, %v260
    %v265 = vsel %vm257, %v253, %v261
    %v266 = vpack.c.bf16 %v263, %v262
    %v267 = vpack.c.bf16 %v265, %v264
    %v270 = vunpack.c.l.b16 %v266
    %v271 = vunpack.c.h.b16 %v266
    %v272 = vunpack.c.l.b16 %v267
    %v273 = vunpack.c.h.b16 %v267
    %v274 = vpack.c.b16 %v270, %v270
    %v275 = vpack.c.b16 %v271, %v271
    %v276 = vpack.c.b16 %v272, %v272
    %v277 = vpack.c.b16 %v273, %v273
    %282 = vst [vmem:[%s3] sm:$0xf] %v274
    %283 = vst [vmem:[%s3 + $0x4] sm:$0xf] %v275
    %284 = vst [vmem:[%s3 + $0x8] sm:$0xf] %v276
    %285 = vst [vmem:[%s3 + $0xc] sm:$0xf] %v277
  $region21: #{encoder_forward.13} parent=0 // pred_fallthru
    _
  // Predicated region
  $region22: #{encoder_forward.13} parent=0 // pred_check
    _
  $region23: #{encoder_forward.13} parent=0 // pred_check_branch
    %287 = sbr.rel (0) target = $region25
  $region24: #{encoder_forward.13} parent=0 // pred_region
    _
  $region25: #{encoder_forward.13} parent=0 // pred_fallthru
    _
  // Predicated region
  $region26: #{encoder_forward.13} parent=0 // pred_check
    _
  $region27: #{encoder_forward.13} parent=0 // pred_check_branch
    %289 = sbr.rel (0) target = $region29
  $region28: #{encoder_forward.13} parent=0 // pred_region
    _
  $region29: #{encoder_forward.13} parent=0 // pred_fallthru
    _

// kernel: encoder_forward.15
$region0: #{encoder_forward.15}
  #allocation0 [shape = 'u32[]', space=smem, size = 0x4, offset = 0x4, fixed_abs, tag = 'smem constant byte address 0x4 - core index']
  #allocation1 [shape = 'u32[144,128]{1,0:T(1,128)}', space=vmem, size = 0x12000, scoped, tag = 'internal scratch']
  #allocation2 [shape = 'f32[8,128]{1,0:T(8,128)}', space=vmem, size = 0x1000, scoped, tag = 'scratch operand']
  %s0 = inlined_call_operand.vmem [shape: bf16[8,896], index: 0, kind: input, shape index: {}]
  %s1 = inlined_call_operand.vmem [shape: bf16[896,128], index: 1, kind: input, shape index: {}]
  %s2 = inlined_call_operand.vmem [shape: f32[1,128], index: 2, kind: input, shape index: {}]
  %s3 = inlined_call_operand.vmem [shape: bf16[8,128], index: 3, kind: output, shape index: {}]
  %s4 = sld [smem:[#allocation0]]
  $region53: #{encoder_forward.15} parent=0
    _
  %s6 = ssub.s32 1, %s4
  %s7 = scalar_select 0, %s6, %s4
  loop: start=0, step=1, limit=9
  $region2: #{encoder_forward.15} parent=0 // loop_pre_header
    _
  $region3: #{encoder_forward.15} parent=0 // loop_header
    %s9 = sphi 0, %s13
    %p10 = scmp.ge.s32.totalorder %s9, 9
    %s16 = sphi 0, %s35
    %s17 = sphi 0, %s31
    %s18 = sphi 0, %s27
    %s19 = sphi 0, %s16
    %s20 = sphi 0, %s17
    %s21 = sphi 0, %s18
    %s22 = sphi 0, %s19
    %s23 = sphi 0, %s20
    %s24 = sphi 0, %s21
    %s40 = sphi 0, %s42
    %s43 = sphi 0, %s40
    %s44 = sphi 0, %s43
    %s60 = sphi 0, %s44
    %s68 = sphi 0, %s70
    %s71 = sphi 0, %s68
    %s72 = sphi 0, %s71
    %s88 = sphi 0, %s72
    %s94 = sphi 0, %s96
    %s97 = sphi 0, %s94
    %s98 = sphi 0, %s97
    %s114 = sphi 0, %s98
    %s122 = sphi 0, %s124
    %s125 = sphi 0, %s122
    %s126 = sphi 0, %s125
    %s142 = sphi 0, %s126
  $region4: #{encoder_forward.15} parent=0 // loop_header_branch
    %12 = sbr.rel (%p10) target = $region8
  $region5: #{encoder_forward.15} parent=0 // loop_body
    %s14 = ssub.s32 %s9, 1
    %s15 = ssub.s32 %s9, 2
    %s25 = sadd.s32 1, %s18
    %p26 = scmp.ge.s32.totalorder %s25, 7
    %s27 = scalar_select %p26, 0, %s25
    %s28 = sadd.s32 1, %s17
    %s29 = scalar_select %p26, %s28, %s17
    %p30 = scmp.ge.s32.totalorder %s29, 1
    %s31 = scalar_select %p30, 0, %s29
    %s32 = sadd.s32 1, %s16
    %s33 = scalar_select %p30, %s32, %s16
    %p34 = scmp.ge.s32.totalorder %s33, 1
    %s35 = scalar_select %p34, 0, %s33
    %s36 = ssub.s32 %s16, %s35
    %s37 = ssub.s32 %s18, %s27
    %s38 = sor.u32 %s36, %s37
    %p39 = scmp.eq.s32.totalorder %s38, 0
    %s41 = sadd.s32 %s40, 1
    %s42 = scalar_select %p39, %s40, %s41
    %p45 = pneg %p39
    %p46 = scmp.eq.s32.totalorder %s9, 6
    %p47 = por %p45, %p46
    %p48 = scmp.ne.s32.totalorder %s40, %s43
    %p49 = scmp.eq.s32.totalorder %s9, 0
    %p50 = por %p48, %p49
    %p51 = scmp.ne.s32.totalorder %s40, %s43
    %p52 = scmp.eq.s32.totalorder %s14, 6
    %p53 = por %p51, %p52
    %p54 = scmp.ne.s32.totalorder %s43, %s44
    %p55 = scmp.eq.s32.totalorder %s14, 0
    %p56 = por %p54, %p55
    %p57 = scmp.ne.s32.totalorder %s43, %s44
    %p58 = scmp.eq.s32.totalorder %s15, 6
    %p59 = por %p57, %p58
    %p61 = scmp.ne.s32.totalorder %s44, %s60
    %p62 = scmp.eq.s32.totalorder %s15, 0
    %p63 = por %p61, %p62
    %s64 = ssub.s32 %s18, %s27
    %s65 = ssub.s32 %s17, %s31
    %s66 = sor.u32 %s64, %s65
    %p67 = scmp.eq.s32.totalorder %s66, 0
    %s69 = sadd.s32 %s68, 1
    %s70 = scalar_select %p67, %s68, %s69
    %p73 = pneg %p67
    %p74 = scmp.eq.s32.totalorder %s9, 6
    %p75 = por %p73, %p74
    %p76 = scmp.ne.s32.totalorder %s68, %s71
    %p77 = scmp.eq.s32.totalorder %s9, 0
    %p78 = por %p76, %p77
    %p79 = scmp.ne.s32.totalorder %s68, %s71
    %p80 = scmp.eq.s32.totalorder %s14, 6
    %p81 = por %p79, %p80
    %p82 = scmp.ne.s32.totalorder %s71, %s72
    %p83 = scmp.eq.s32.totalorder %s14, 0
    %p84 = por %p82, %p83
    %p85 = scmp.ne.s32.totalorder %s71, %s72
    %p86 = scmp.eq.s32.totalorder %s15, 6
    %p87 = por %p85, %p86
    %p89 = scmp.ne.s32.totalorder %s72, %s88
    %p90 = scmp.eq.s32.totalorder %s15, 0
    %p91 = por %p89, %p90
    %s92 = ssub.s32 %s17, %s31
    %p93 = scmp.eq.s32.totalorder %s92, 0
    %s95 = sadd.s32 %s94, 1
    %s96 = scalar_select %p93, %s94, %s95
    %p99 = pneg %p93
    %p100 = scmp.eq.s32.totalorder %s9, 6
    %p101 = por %p99, %p100
    %p102 = scmp.ne.s32.totalorder %s94, %s97
    %p103 = scmp.eq.s32.totalorder %s9, 0
    %p104 = por %p102, %p103
    %p105 = scmp.ne.s32.totalorder %s94, %s97
    %p106 = scmp.eq.s32.totalorder %s14, 6
    %p107 = por %p105, %p106
    %p108 = scmp.ne.s32.totalorder %s97, %s98
    %p109 = scmp.eq.s32.totalorder %s14, 0
    %p110 = por %p108, %p109
    %p111 = scmp.ne.s32.totalorder %s97, %s98
    %p112 = scmp.eq.s32.totalorder %s15, 6
    %p113 = por %p111, %p112
    %p115 = scmp.ne.s32.totalorder %s98, %s114
    %p116 = scmp.eq.s32.totalorder %s15, 0
    %p117 = por %p115, %p116
    %s118 = ssub.s32 %s16, %s35
    %s119 = ssub.s32 %s17, %s31
    %s120 = sor.u32 %s118, %s119
    %p121 = scmp.eq.s32.totalorder %s120, 0
    %s123 = sadd.s32 %s122, 1
    %s124 = scalar_select %p121, %s122, %s123
    %p127 = pneg %p121
    %p128 = scmp.eq.s32.totalorder %s9, 6
    %p129 = por %p127, %p128
    %p130 = scmp.ne.s32.totalorder %s122, %s125
    %p131 = scmp.eq.s32.totalorder %s9, 0
    %p132 = por %p130, %p131
    %p133 = scmp.ne.s32.totalorder %s122, %s125
    %p134 = scmp.eq.s32.totalorder %s14, 6
    %p135 = por %p133, %p134
    %p136 = scmp.ne.s32.totalorder %s125, %s126
    %p137 = scmp.eq.s32.totalorder %s14, 0
    %p138 = por %p136, %p137
    %p139 = scmp.ne.s32.totalorder %s125, %s126
    %p140 = scmp.eq.s32.totalorder %s15, 6
    %p141 = por %p139, %p140
    %p143 = scmp.ne.s32.totalorder %s126, %s142
    %p144 = scmp.eq.s32.totalorder %s15, 0
    %p145 = por %p143, %p144
    %p146 = scmp.le.s32.totalorder 1, %s9
    %p147 = scmp.lt.s32.totalorder %s9, 8
    %p148 = pnand %p146, %p147
    %p149 = pneg %p148
    // Predicated region
    $region9: #{encoder_forward.15} parent=5 // pred_check
      _
    $region10: #{encoder_forward.15} parent=5 // pred_check_branch
      %151 = sbr.rel (%p148) target = $region12
    $region11: #{encoder_forward.15} parent=5 // pred_region
      %s152 = ssub.s32 %s9, 1
      // Predicated region
      $region13: #{encoder_forward.15} parent=11 // pred_check
        %p153 = pneg %p110
      $region14: #{encoder_forward.15} parent=11 // pred_check_branch
        %155 = sbr.rel (%p153) target = $region16
      $region15: #{encoder_forward.15} parent=11 // pred_region
        %p156 = scmp.lt.s32.totalorder %s20, 0
        %s157 = scalar_select %p156, %s20, 0
        %s158 = scalar_lea.vmem %s2, %s157
      $region16: #{encoder_forward.15} parent=11 // pred_fallthru
        _
    $region12: #{encoder_forward.15} parent=5 // pred_fallthru
      _
    %p159 = scmp.lt.s32.totalorder %s9, 7
    // Predicated region
    $region17: #{encoder_forward.15} parent=5 // pred_check
      %p160 = pneg %p159
    $region18: #{encoder_forward.15} parent=5 // pred_check_branch
      %162 = sbr.rel (%p160) target = $region20
    $region19: #{encoder_forward.15} parent=5 // pred_region
      // Predicated region
      $region21: #{encoder_forward.15} parent=19 // pred_check
        %p163 = pneg %p50
      $region22: #{encoder_forward.15} parent=19 // pred_check_branch
        %165 = sbr.rel (%p163) target = $region24
      $region23: #{encoder_forward.15} parent=19 // pred_region
        %p166 = scmp.lt.s32.totalorder %s16, 0
        %s167 = scalar_select %p166, %s16, 0
        %p168 = scmp.lt.s32.totalorder %s18, 6
        %s169 = scalar_select %p168, %s18, 6
        %s170 = smul.addr %s167, 7
        %s171 = sadd.s32 %s169, %s170
        %s172 = smul.addr %s171, 4
        %s173 = scalar_lea.vmem %s0, %s172
      $region24: #{encoder_forward.15} parent=19 // pred_fallthru
        _
      // Predicated region
      $region25: #{encoder_forward.15} parent=19 // pred_check
        %p174 = pneg %p78
      $region26: #{encoder_forward.15} parent=19 // pred_check_branch
        %176 = sbr.rel (%p174) target = $region28
      $region27: #{encoder_forward.15} parent=19 // pred_region
        %s177 = smul.u32 16, %s18
        %p178 = scmp.lt.s32.totalorder %s177, 111
        %s179 = scalar_select %p178, %s177, 111
        %p180 = scmp.lt.s32.totalorder %s17, 0
        %s181 = scalar_select %p180, %s17, 0
        %s182 = sadd.s32 %s181, %s179
        %s183 = smul.addr %s182, 4
        %s184 = scalar_lea.vmem %s1, %s183
        %s185 = smul.u32 16, %s18
      $region28: #{encoder_forward.15} parent=19 // pred_fallthru
        _
    $region20: #{encoder_forward.15} parent=5 // pred_fallthru
      _
    %p186 = scmp.le.s32.totalorder 1, %s9
    %p187 = scmp.lt.s32.totalorder %s9, 8
    %p188 = pnand %p186, %p187
    %p189 = pneg %p188
    // Predicated region
    $region29: #{encoder_forward.15} parent=5 // pred_check
      _
    $region30: #{encoder_forward.15} parent=5 // pred_check_branch
      %191 = sbr.rel (%p188) target = $region32
    $region31: #{encoder_forward.15} parent=5 // pred_region
      %s192 = ssub.s32 %s9, 1
      %p193 = scmp.lt.s32.totalorder %s19, 0
      %s194 = scalar_select %p193, %s19, 0
      %p195 = scmp.lt.s32.totalorder %s21, 6
      %s196 = scalar_select %p195, %s21, 6
      %s197 = smul.addr %s194, 7
      %s198 = sadd.s32 %s196, %s197
      %s199 = smul.addr %s198, 4
      %s200 = scalar_lea.vmem %s0, %s199
      %p201 = pneg %p56
      %p202 = pneg %p53
      %s203 = smul.u32 16, %s21
      %p204 = scmp.lt.s32.totalorder %s203, 111
      %s205 = scalar_select %p204, %s203, 111
      %p206 = scmp.lt.s32.totalorder %s20, 0
      %s207 = scalar_select %p206, %s20, 0
      %s208 = sadd.s32 %s207, %s205
      %s209 = smul.addr %s208, 4
      %s210 = scalar_lea.vmem %s1, %s209
      %p211 = pneg %p84
      %p212 = pneg %p81
      %p213 = scmp.lt.s32.totalorder %s20, 0
      %s214 = scalar_select %p213, %s20, 0
      %s215 = scalar_lea.vmem %s2, %s214
      %p216 = pneg %p110
      %p217 = pneg %p107
      %p218 = pneg %p138
      %p219 = pneg %p135
      %p220 = scmp.lt.s32.totalorder %s19, 0
      %s221 = scalar_select %p220, %s19, 0
      %p222 = scmp.lt.s32.totalorder %s20, 0
      %s223 = scalar_select %p222, %s20, 0
      %s224 = sadd.s32 %s223, %s221
      %s225 = smul.addr %s224, 4
      %s226 = scalar_lea.vmem %s3, %s225
      %p227 = scmp.lt.s32.totalorder %s19, 0
      %s228 = scalar_select %p227, %s19, 0
      %p229 = scmp.lt.s32.totalorder %s21, 6
      %s230 = scalar_select %p229, %s21, 6
      %s231 = smul.addr %s228, 7
      %s232 = sadd.s32 %s230, %s231
      %s233 = smul.addr %s232, 4
      %s234 = scalar_lea.vmem %s0, %s233
      %s235 = smul.u32 16, %s21
      %p236 = scmp.lt.s32.totalorder %s235, 111
      %s237 = scalar_select %p236, %s235, 111
      %p238 = scmp.lt.s32.totalorder %s20, 0
      %s239 = scalar_select %p238, %s20, 0
      %s240 = sadd.s32 %s239, %s237
      %s241 = smul.addr %s240, 4
      %s242 = scalar_lea.vmem %s1, %s241
      %s243 = smul.u32 16, %s21
      %p244 = scmp.lt.s32.totalorder %s20, 0
      %s245 = scalar_select %p244, %s20, 0
      %s246 = scalar_lea.vmem %s2, %s245
      %p247 = scmp.lt.s32.totalorder %s19, 0
      %s248 = scalar_select %p247, %s19, 0
      %p249 = scmp.lt.s32.totalorder %s20, 0
      %s250 = scalar_select %p249, %s20, 0
      %s251 = sadd.s32 %s250, %s248
      %s252 = smul.addr %s251, 4
      %s253 = scalar_lea.vmem %s3, %s252
      %p255 = scmp.eq.s32.totalorder %s21, 0
      // Predicated region
      $region33: #{encoder_forward.15} parent=31 // pred_check
        %p256 = pneg %p255
      $region34: #{encoder_forward.15} parent=31 // pred_check_branch
        %258 = sbr.rel (%p256) target = $region36
      $region35: #{encoder_forward.15} parent=31 // pred_region
        %259 = vst [vmem:[#allocation2] sm:$0xff] 0.0
      $region36: #{encoder_forward.15} parent=31 // pred_fallthru
        _
      %v260 = vld [vmem:[#allocation2] sm:$0xff]
      %v261 = vld [vmem:[%s234] sm:$0xf]
      %v262 = vld [vmem:[%s242] sm:$0xf]
      %v263 = vld [vmem:[%s242 + $0x4] sm:$0xf]
      %v264 = vld [vmem:[%s242 + $0x8] sm:$0xf]
      %v265 = vld [vmem:[%s242 + $0xc] sm:$0xf]
      %v266 = vld [vmem:[%s242 + $0x10] sm:$0xf]
      %v267 = vld [vmem:[%s242 + $0x14] sm:$0xf]
      %v268 = vld [vmem:[%s242 + $0x18] sm:$0xf]
      %v269 = vld [vmem:[%s242 + $0x1c] sm:$0xf]
      %v270 = vld [vmem:[%s242 + $0x20] sm:$0xf]
      %v271 = vld [vmem:[%s242 + $0x24] sm:$0xf]
      %v272 = vld [vmem:[%s242 + $0x28] sm:$0xf]
      %v273 = vld [vmem:[%s242 + $0x2c] sm:$0xf]
      %v274 = vld [vmem:[%s242 + $0x30] sm:$0xf]
      %v275 = vld [vmem:[%s242 + $0x34] sm:$0xf]
      %v276 = vld [vmem:[%s242 + $0x38] sm:$0xf]
      %v277 = vld [vmem:[%s242 + $0x3c] sm:$0xf]
      %v294 = vunpack.c.l.b16 %v262
      %v295 = vunpack.c.l.b16 %v263
      %v296 = vunpack.c.l.b16 %v264
      %v297 = vunpack.c.l.b16 %v265
      %v298 = vunpack.c.l.b16 %v266
      %v299 = vunpack.c.l.b16 %v267
      %v300 = vunpack.c.l.b16 %v268
      %v301 = vunpack.c.l.b16 %v269
      %v302 = vunpack.c.l.b16 %v270
      %v303 = vunpack.c.l.b16 %v271
      %v304 = vunpack.c.l.b16 %v272
      %v305 = vunpack.c.l.b16 %v273
      %v306 = vunpack.c.l.b16 %v274
      %v307 = vunpack.c.l.b16 %v275
      %v308 = vunpack.c.l.b16 %v276
      %v309 = vunpack.c.l.b16 %v277
      %v310 = vpack.c.b16 %v295, %v294
      %v311 = vpack.c.b16 %v297, %v296
      %v312 = vpack.c.b16 %v299, %v298
      %v313 = vpack.c.b16 %v301, %v300
      %v314 = vpack.c.b16 %v303, %v302
      %v315 = vpack.c.b16 %v305, %v304
      %v316 = vpack.c.b16 %v307, %v306
      %v317 = vpack.c.b16 %v309, %v308
      %326 = vmatprep.subr.bf16.mxu0 0
      %327 = vmatpush1.bf16.msra.mxu0 %v317
      %328 = vmatprep.subr.bf16.mxu0 0
      %329 = vmatpush1.bf16.msra.mxu0 %v316
      %330 = vmatprep.subr.bf16.mxu0 0
      %331 = vmatpush1.bf16.msra.mxu0 %v315
      %332 = vmatprep.subr.bf16.mxu0 0
      %333 = vmatpush1.bf16.msra.mxu0 %v314
      %334 = vmatprep.subr.bf16.mxu0 0
      %335 = vmatpush1.bf16.msra.mxu0 %v313
      %336 = vmatprep.subr.bf16.mxu0 0
      %337 = vmatpush1.bf16.msra.mxu0 %v312
      %338 = vmatprep.subr.bf16.mxu0 0
      %339 = vmatpush1.bf16.msra.mxu0 %v311
      %340 = vmatprep.subr.bf16.mxu0 0
      %341 = vmatpush1.bf16.msra.mxu0 %v310
      %342 = vmatprep.subr.bf16.mxu0 0
      %343 = vmatpush2.bf16.msra.mxu0 0
      %344 = vmatprep.subr.bf16.mxu0 0
      %345 = vmatpush2.bf16.msra.mxu0 0
      %346 = vmatprep.subr.bf16.mxu0 0
      %347 = vmatpush2.bf16.msra.mxu0 0
      %348 = vmatprep.subr.bf16.mxu0 0
      %349 = vmatpush2.bf16.msra.mxu0 0
      %350 = vmatprep.subr.bf16.mxu0 0
      %351 = vmatpush2.bf16.msra.mxu0 0
      %352 = vmatprep.subr.bf16.mxu0 0
      %353 = vmatpush2.bf16.msra.mxu0 0
      %354 = vmatprep.subr.bf16.mxu0 0
      %355 = vmatpush2.bf16.msra.mxu0 0
      %356 = vmatprep.subr.bf16.mxu0 0
      %357 = vmatpush2.bf16.msra.mxu0 0
      %358 = vmatprep.mubr.bf16.mxu0 0
      %359 = vmatmul.mubr.bf16.gmra.mxu0 %v261
      %v360 = vpop.f32.mrf.mxu0
      %v361 = vadd.f32 0.0, %v360
      %v362 = vpop.f32.mrf.mxu0
      %v363 = vpop.f32.mrf.mxu0
      %v364 = vpop.f32.mrf.mxu0
      %365 = vdwg.mxu0
      %v366 = vadd.f32 %v260, %v361
      %367 = vst [vmem:[#allocation2] sm:$0xff] %v366
      %p368 = scmp.eq.s32.totalorder %s21, 6
      // Predicated region
      $region37: #{encoder_forward.15} parent=31 // pred_check
        %p369 = pneg %p368
      $region38: #{encoder_forward.15} parent=31 // pred_check_branch
        %371 = sbr.rel (%p369) target = $region40
      $region39: #{encoder_forward.15} parent=31 // pred_region
        %v372 = vld [vmem:[#allocation2] sm:$0xff]
        %v373 = vld [vmem:[%s246] sm:$0x1]
        %v375 = vlaneseq
        %v376 = vshrl.u32 %v375, 7
        %v377 = vsub.s32 0, %v376
        %v378 = vrot.slane %v373, %v377
        %v380 = vadd.f32 %v372, %v378
        %vm381 = vcmp.ge.f32.partialorder %v380, 0.0
        %v382 = vmul.f32 %v380, 0.1
        %v383 = vsel %vm381, %v380, %v382
        %v384 = vpack.c.bf16 %v383, %v383
        %385 = vst [vmem:[%s253] sm:$0xf] %v384
      $region40: #{encoder_forward.15} parent=31 // pred_fallthru
        _
      %p386 = scmp.lt.s32.totalorder %s19, 0
      %s387 = scalar_select %p386, %s19, 0
      %p388 = scmp.lt.s32.totalorder %s20, 0
      %s389 = scalar_select %p388, %s20, 0
      %s390 = sadd.s32 %s389, %s387
      %s391 = smul.addr %s390, 4
      %s392 = scalar_lea.vmem %s3, %s391
      // Predicated region
      $region41: #{encoder_forward.15} parent=31 // pred_check
        %p393 = pneg %p135
      $region42: #{encoder_forward.15} parent=31 // pred_check_branch
        %395 = sbr.rel (%p393) target = $region44
      $region43: #{encoder_forward.15} parent=31 // pred_region
        _
      $region44: #{encoder_forward.15} parent=31 // pred_fallthru
        _
      // Predicated region
      $region45: #{encoder_forward.15} parent=31 // pred_check
        %p396 = pneg %p135
      $region46: #{encoder_forward.15} parent=31 // pred_check_branch
        %398 = sbr.rel (%p396) target = $region48
      $region47: #{encoder_forward.15} parent=31 // pred_region
        %p399 = scmp.lt.s32.totalorder %s19, 0
        %s400 = scalar_select %p399, %s19, 0
        %p401 = scmp.lt.s32.totalorder %s20, 0
        %s402 = scalar_select %p401, %s20, 0
        %s403 = sadd.s32 %s402, %s400
        %s404 = smul.addr %s403, 4
        %s405 = scalar_lea.vmem %s3, %s404
      $region48: #{encoder_forward.15} parent=31 // pred_fallthru
        _
    $region32: #{encoder_forward.15} parent=5 // pred_fallthru
      _
    %p406 = scmp.le.s32.totalorder 2, %s9
    // Predicated region
    $region49: #{encoder_forward.15} parent=5 // pred_check
      %p407 = pneg %p406
    $region50: #{encoder_forward.15} parent=5 // pred_check_branch
      %409 = sbr.rel (%p407) target = $region52
    $region51: #{encoder_forward.15} parent=5 // pred_region
      %s410 = ssub.s32 %s9, 2
    $region52: #{encoder_forward.15} parent=5 // pred_fallthru
      _
  $region6: #{encoder_forward.15} parent=0 // loop_footer
    %s13 = sadd.s32 1, %s9
  $region7: #{encoder_forward.15} parent=0 // loop_footer_branch
    %8 = sbr.rel target = $region3
  $region8: #{encoder_forward.15} parent=0 // loop_exit
    _

// kernel: encoder_forward.14
$region0: #{encoder_forward.14}
  #allocation0 [shape = 'u32[]', space=smem, size = 0x4, offset = 0x4, fixed_abs, tag = 'smem constant byte address 0x4 - core index']
  #allocation1 [shape = 'u32[144,128]{1,0:T(1,128)}', space=vmem, size = 0x12000, scoped, tag = 'internal scratch']
  #allocation2 [shape = 'f32[8,128]{1,0:T(8,128)}', space=vmem, size = 0x1000, scoped, tag = 'scratch operand']
  %s0 = inlined_call_operand.vmem [shape: bf16[8,512], index: 0, kind: input, shape index: {}]
  %s1 = inlined_call_operand.vmem [shape: bf16[512,128], index: 1, kind: input, shape index: {}]
  %s2 = inlined_call_operand.vmem [shape: f32[1,128], index: 2, kind: input, shape index: {}]
  %s3 = inlined_call_operand.vmem [shape: bf16[8,128], index: 3, kind: output, shape index: {}]
  %s4 = sld [smem:[#allocation0]]
  $region30: #{encoder_forward.14} parent=0
    _
  %s6 = ssub.s32 1, %s4
  %s7 = scalar_select 0, %s6, %s4
  // Predicated region
  $region2: #{encoder_forward.14} parent=0 // pred_check
    _
  $region3: #{encoder_forward.14} parent=0 // pred_check_branch
    %9 = sbr.rel (0) target = $region5
  $region4: #{encoder_forward.14} parent=0 // pred_region
    _
  $region5: #{encoder_forward.14} parent=0 // pred_fallthru
    _
  // Predicated region
  $region6: #{encoder_forward.14} parent=0 // pred_check
    _
  $region7: #{encoder_forward.14} parent=0 // pred_check_branch
    %11 = sbr.rel (0) target = $region9
  $region8: #{encoder_forward.14} parent=0 // pred_region
    _
  $region9: #{encoder_forward.14} parent=0 // pred_fallthru
    _
  // Predicated region
  $region10: #{encoder_forward.14} parent=0 // pred_check
    _
  $region11: #{encoder_forward.14} parent=0 // pred_check_branch
    %13 = sbr.rel (0) target = $region13
  $region12: #{encoder_forward.14} parent=0 // pred_region
    _
  $region13: #{encoder_forward.14} parent=0 // pred_fallthru
    _
  %p15 = scmp.eq.s32.totalorder 0, 0
  // Predicated region
  $region14: #{encoder_forward.14} parent=0 // pred_check
    %p16 = pneg %p15
  $region15: #{encoder_forward.14} parent=0 // pred_check_branch
    %18 = sbr.rel (%p16) target = $region17
  $region16: #{encoder_forward.14} parent=0 // pred_region
    %19 = vst [vmem:[#allocation2] sm:$0xff] 0.0
  $region17: #{encoder_forward.14} parent=0 // pred_fallthru
    _
  %v20 = vld [vmem:[#allocation2] sm:$0xff]
  %v21 = vld [vmem:[%s0] sm:$0xff]
  %v22 = vld [vmem:[%s0 + $0x8] sm:$0xff]
  %v23 = vld [vmem:[%s1] sm:$0xf]
  %v24 = vld [vmem:[%s1 + $0x4] sm:$0xf]
  %v25 = vld [vmem:[%s1 + $0x8] sm:$0xf]
  %v26 = vld [vmem:[%s1 + $0xc] sm:$0xf]
  %v27 = vld [vmem:[%s1 + $0x10] sm:$0xf]
  %v28 = vld [vmem:[%s1 + $0x14] sm:$0xf]
  %v29 = vld [vmem:[%s1 + $0x18] sm:$0xf]
  %v30 = vld [vmem:[%s1 + $0x1c] sm:$0xf]
  %v31 = vld [vmem:[%s1 + $0x20] sm:$0xf]
  %v32 = vld [vmem:[%s1 + $0x24] sm:$0xf]
  %v33 = vld [vmem:[%s1 + $0x28] sm:$0xf]
  %v34 = vld [vmem:[%s1 + $0x2c] sm:$0xf]
  %v35 = vld [vmem:[%s1 + $0x30] sm:$0xf]
  %v36 = vld [vmem:[%s1 + $0x34] sm:$0xf]
  %v37 = vld [vmem:[%s1 + $0x38] sm:$0xf]
  %v38 = vld [vmem:[%s1 + $0x3c] sm:$0xf]
  %v39 = vld [vmem:[%s1 + $0x40] sm:$0xf]
  %v40 = vld [vmem:[%s1 + $0x44] sm:$0xf]
  %v41 = vld [vmem:[%s1 + $0x48] sm:$0xf]
  %v42 = vld [vmem:[%s1 + $0x4c] sm:$0xf]
  %v43 = vld [vmem:[%s1 + $0x50] sm:$0xf]
  %v44 = vld [vmem:[%s1 + $0x54] sm:$0xf]
  %v45 = vld [vmem:[%s1 + $0x58] sm:$0xf]
  %v46 = vld [vmem:[%s1 + $0x5c] sm:$0xf]
  %v47 = vld [vmem:[%s1 + $0x60] sm:$0xf]
  %v48 = vld [vmem:[%s1 + $0x64] sm:$0xf]
  %v49 = vld [vmem:[%s1 + $0x68] sm:$0xf]
  %v50 = vld [vmem:[%s1 + $0x6c] sm:$0xf]
  %v51 = vld [vmem:[%s1 + $0x70] sm:$0xf]
  %v52 = vld [vmem:[%s1 + $0x74] sm:$0xf]
  %v53 = vld [vmem:[%s1 + $0x78] sm:$0xf]
  %v54 = vld [vmem:[%s1 + $0x7c] sm:$0xf]
  %v55 = vld [vmem:[%s1 + $0x80] sm:$0xf]
  %v56 = vld [vmem:[%s1 + $0x84] sm:$0xf]
  %v57 = vld [vmem:[%s1 + $0x88] sm:$0xf]
  %v58 = vld [vmem:[%s1 + $0x8c] sm:$0xf]
  %v59 = vld [vmem:[%s1 + $0x90] sm:$0xf]
  %v60 = vld [vmem:[%s1 + $0x94] sm:$0xf]
  %v61 = vld [vmem:[%s1 + $0x98] sm:$0xf]
  %v62 = vld [vmem:[%s1 + $0x9c] sm:$0xf]
  %v63 = vld [vmem:[%s1 + $0xa0] sm:$0xf]
  %v64 = vld [vmem:[%s1 + $0xa4] sm:$0xf]
  %v65 = vld [vmem:[%s1 + $0xa8] sm:$0xf]
  %v66 = vld [vmem:[%s1 + $0xac] sm:$0xf]
  %v67 = vld [vmem:[%s1 + $0xb0] sm:$0xf]
  %v68 = vld [vmem:[%s1 + $0xb4] sm:$0xf]
  %v69 = vld [vmem:[%s1 + $0xb8] sm:$0xf]
  %v70 = vld [vmem:[%s1 + $0xbc] sm:$0xf]
  %v71 = vld [vmem:[%s1 + $0xc0] sm:$0xf]
  %v72 = vld [vmem:[%s1 + $0xc4] sm:$0xf]
  %v73 = vld [vmem:[%s1 + $0xc8] sm:$0xf]
  %v74 = vld [vmem:[%s1 + $0xcc] sm:$0xf]
  %v75 = vld [vmem:[%s1 + $0xd0] sm:$0xf]
  %v76 = vld [vmem:[%s1 + $0xd4] sm:$0xf]
  %v77 = vld [vmem:[%s1 + $0xd8] sm:$0xf]
  %v78 = vld [vmem:[%s1 + $0xdc] sm:$0xf]
  %v79 = vld [vmem:[%s1 + $0xe0] sm:$0xf]
  %v80 = vld [vmem:[%s1 + $0xe4] sm:$0xf]
  %v81 = vld [vmem:[%s1 + $0xe8] sm:$0xf]
  %v82 = vld [vmem:[%s1 + $0xec] sm:$0xf]
  %v83 = vld [vmem:[%s1 + $0xf0] sm:$0xf]
  %v84 = vld [vmem:[%s1 + $0xf4] sm:$0xf]
  %v85 = vld [vmem:[%s1 + $0xf8] sm:$0xf]
  %v86 = vld [vmem:[%s1 + $0xfc] sm:$0xf]
  %v89 = vunpack.c.l.b16 %v21
  %v90 = vunpack.c.h.b16 %v21
  %v91 = vunpack.c.l.b16 %v22
  %v92 = vunpack.c.h.b16 %v22
  %v93 = vpack.c.b16 %v89, %v89
  %v94 = vpack.c.b16 %v90, %v90
  %v95 = vpack.c.b16 %v91, %v91
  %v96 = vpack.c.b16 %v92, %v92
  %v165 = vunpack.c.l.b16 %v23
  %v166 = vunpack.c.l.b16 %v24
  %v167 = vunpack.c.l.b16 %v25
  %v168 = vunpack.c.l.b16 %v26
  %v169 = vunpack.c.l.b16 %v27
  %v170 = vunpack.c.l.b16 %v28
  %v171 = vunpack.c.l.b16 %v29
  %v172 = vunpack.c.l.b16 %v30
  %v173 = vunpack.c.l.b16 %v31
  %v174 = vunpack.c.l.b16 %v32
  %v175 = vunpack.c.l.b16 %v33
  %v176 = vunpack.c.l.b16 %v34
  %v177 = vunpack.c.l.b16 %v35
  %v178 = vunpack.c.l.b16 %v36
  %v179 = vunpack.c.l.b16 %v37
  %v180 = vunpack.c.l.b16 %v38
  %v181 = vunpack.c.l.b16 %v39
  %v182 = vunpack.c.l.b16 %v40
  %v183 = vunpack.c.l.b16 %v41
  %v184 = vunpack.c.l.b16 %v42
  %v185 = vunpack.c.l.b16 %v43
  %v186 = vunpack.c.l.b16 %v44
  %v187 = vunpack.c.l.b16 %v45
  %v188 = vunpack.c.l.b16 %v46
  %v189 = vunpack.c.l.b16 %v47
  %v190 = vunpack.c.l.b16 %v48
  %v191 = vunpack.c.l.b16 %v49
  %v192 = vunpack.c.l.b16 %v50
  %v193 = vunpack.c.l.b16 %v51
  %v194 = vunpack.c.l.b16 %v52
  %v195 = vunpack.c.l.b16 %v53
  %v196 = vunpack.c.l.b16 %v54
  %v197 = vunpack.c.l.b16 %v55
  %v198 = vunpack.c.l.b16 %v56
  %v199 = vunpack.c.l.b16 %v57
  %v200 = vunpack.c.l.b16 %v58
  %v201 = vunpack.c.l.b16 %v59
  %v202 = vunpack.c.l.b16 %v60
  %v203 = vunpack.c.l.b16 %v61
  %v204 = vunpack.c.l.b16 %v62
  %v205 = vunpack.c.l.b16 %v63
  %v206 = vunpack.c.l.b16 %v64
  %v207 = vunpack.c.l.b16 %v65
  %v208 = vunpack.c.l.b16 %v66
  %v209 = vunpack.c.l.b16 %v67
  %v210 = vunpack.c.l.b16 %v68
  %v211 = vunpack.c.l.b16 %v69
  %v212 = vunpack.c.l.b16 %v70
  %v213 = vunpack.c.l.b16 %v71
  %v214 = vunpack.c.l.b16 %v72
  %v215 = vunpack.c.l.b16 %v73
  %v216 = vunpack.c.l.b16 %v74
  %v217 = vunpack.c.l.b16 %v75
  %v218 = vunpack.c.l.b16 %v76
  %v219 = vunpack.c.l.b16 %v77
  %v220 = vunpack.c.l.b16 %v78
  %v221 = vunpack.c.l.b16 %v79
  %v222 = vunpack.c.l.b16 %v80
  %v223 = vunpack.c.l.b16 %v81
  %v224 = vunpack.c.l.b16 %v82
  %v225 = vunpack.c.l.b16 %v83
  %v226 = vunpack.c.l.b16 %v84
  %v227 = vunpack.c.l.b16 %v85
  %v228 = vunpack.c.l.b16 %v86
  %v229 = vpack.c.b16 %v166, %v165
  %v230 = vpack.c.b16 %v168, %v167
  %v231 = vpack.c.b16 %v170, %v169
  %v232 = vpack.c.b16 %v172, %v171
  %v233 = vpack.c.b16 %v174, %v173
  %v234 = vpack.c.b16 %v176, %v175
  %v235 = vpack.c.b16 %v178, %v177
  %v236 = vpack.c.b16 %v180, %v179
  %v237 = vpack.c.b16 %v182, %v181
  %v238 = vpack.c.b16 %v184, %v183
  %v239 = vpack.c.b16 %v186, %v185
  %v240 = vpack.c.b16 %v188, %v187
  %v241 = vpack.c.b16 %v190, %v189
  %v242 = vpack.c.b16 %v192, %v191
  %v243 = vpack.c.b16 %v194, %v193
  %v244 = vpack.c.b16 %v196, %v195
  %v245 = vpack.c.b16 %v198, %v197
  %v246 = vpack.c.b16 %v200, %v199
  %v247 = vpack.c.b16 %v202, %v201
  %v248 = vpack.c.b16 %v204, %v203
  %v249 = vpack.c.b16 %v206, %v205
  %v250 = vpack.c.b16 %v208, %v207
  %v251 = vpack.c.b16 %v210, %v209
  %v252 = vpack.c.b16 %v212, %v211
  %v253 = vpack.c.b16 %v214, %v213
  %v254 = vpack.c.b16 %v216, %v215
  %v255 = vpack.c.b16 %v218, %v217
  %v256 = vpack.c.b16 %v220, %v219
  %v257 = vpack.c.b16 %v222, %v221
  %v258 = vpack.c.b16 %v224, %v223
  %v259 = vpack.c.b16 %v226, %v225
  %v260 = vpack.c.b16 %v228, %v227
  %293 = vmatprep.subr.bf16.mxu0 0
  %294 = vmatpush1.bf16.msra.mxu0 %v236
  %295 = vmatprep.subr.bf16.mxu0 0
  %296 = vmatpush1.bf16.msra.mxu0 %v235
  %297 = vmatprep.subr.bf16.mxu0 0
  %298 = vmatpush1.bf16.msra.mxu0 %v234
  %299 = vmatprep.subr.bf16.mxu0 0
  %300 = vmatpush1.bf16.msra.mxu0 %v233
  %301 = vmatprep.subr.bf16.mxu0 0
  %302 = vmatpush1.bf16.msra.mxu0 %v232
  %303 = vmatprep.subr.bf16.mxu0 0
  %304 = vmatpush1.bf16.msra.mxu0 %v231
  %305 = vmatprep.subr.bf16.mxu0 0
  %306 = vmatpush1.bf16.msra.mxu0 %v230
  %307 = vmatprep.subr.bf16.mxu0 0
  %308 = vmatpush1.bf16.msra.mxu0 %v229
  %309 = vmatprep.subr.bf16.mxu0 0
  %310 = vmatpush2.bf16.msra.mxu0 %v244
  %311 = vmatprep.subr.bf16.mxu0 0
  %312 = vmatpush2.bf16.msra.mxu0 %v243
  %313 = vmatprep.subr.bf16.mxu0 0
  %314 = vmatpush2.bf16.msra.mxu0 %v242
  %315 = vmatprep.subr.bf16.mxu0 0
  %316 = vmatpush2.bf16.msra.mxu0 %v241
  %317 = vmatprep.subr.bf16.mxu0 0
  %318 = vmatpush2.bf16.msra.mxu0 %v240
  %319 = vmatprep.subr.bf16.mxu0 0
  %320 = vmatpush2.bf16.msra.mxu0 %v239
  %321 = vmatprep.subr.bf16.mxu0 0
  %322 = vmatpush2.bf16.msra.mxu0 %v238
  %323 = vmatprep.subr.bf16.mxu0 0
  %324 = vmatpush2.bf16.msra.mxu0 %v237
  %325 = vmatprep.mubr.bf16.mxu0 %v94
  %326 = vmatmul.mubr.bf16.gmra.mxu0 %v93
  %v327 = vpop.f32.mrf.mxu0
  %v328 = vadd.f32 0.0, %v327
  %v329 = vpop.f32.mrf.mxu0
  %v330 = vpop.f32.mrf.mxu0
  %v331 = vpop.f32.mrf.mxu0
  %332 = vdwg.mxu0
  %333 = vmatprep.subr.bf16.mxu0 0
  %334 = vmatpush1.bf16.msra.mxu0 %v252
  %335 = vmatprep.subr.bf16.mxu0 0
  %336 = vmatpush1.bf16.msra.mxu0 %v251
  %337 = vmatprep.subr.bf16.mxu0 0
  %338 = vmatpush1.bf16.msra.mxu0 %v250
  %339 = vmatprep.subr.bf16.mxu0 0
  %340 = vmatpush1.bf16.msra.mxu0 %v249
  %341 = vmatprep.subr.bf16.mxu0 0
  %342 = vmatpush1.bf16.msra.mxu0 %v248
  %343 = vmatprep.subr.bf16.mxu0 0
  %344 = vmatpush1.bf16.msra.mxu0 %v247
  %345 = vmatprep.subr.bf16.mxu0 0
  %346 = vmatpush1.bf16.msra.mxu0 %v246
  %347 = vmatprep.subr.bf16.mxu0 0
  %348 = vmatpush1.bf16.msra.mxu0 %v245
  %349 = vmatprep.subr.bf16.mxu0 0
  %350 = vmatpush2.bf16.msra.mxu0 %v260
  %351 = vmatprep.subr.bf16.mxu0 0
  %352 = vmatpush2.bf16.msra.mxu0 %v259
  %353 = vmatprep.subr.bf16.mxu0 0
  %354 = vmatpush2.bf16.msra.mxu0 %v258
  %355 = vmatprep.subr.bf16.mxu0 0
  %356 = vmatpush2.bf16.msra.mxu0 %v257
  %357 = vmatprep.subr.bf16.mxu0 0
  %358 = vmatpush2.bf16.msra.mxu0 %v256
  %359 = vmatprep.subr.bf16.mxu0 0
  %360 = vmatpush2.bf16.msra.mxu0 %v255
  %361 = vmatprep.subr.bf16.mxu0 0
  %362 = vmatpush2.bf16.msra.mxu0 %v254
  %363 = vmatprep.subr.bf16.mxu0 0
  %364 = vmatpush2.bf16.msra.mxu0 %v253
  %365 = vmatprep.mubr.bf16.mxu0 %v96
  %366 = vmatmul.mubr.bf16.gmra.mxu0 %v95
  %v367 = vpop.f32.mrf.mxu0
  %v368 = vadd.f32 %v328, %v367
  %v369 = vpop.f32.mrf.mxu0
  %v370 = vpop.f32.mrf.mxu0
  %v371 = vpop.f32.mrf.mxu0
  %372 = vdwg.mxu0
  %v373 = vadd.f32 %v20, %v368
  %374 = vst [vmem:[#allocation2] sm:$0xff] %v373
  // Predicated region
  $region18: #{encoder_forward.14} parent=0 // pred_check
    %p375 = pneg %p15
  $region19: #{encoder_forward.14} parent=0 // pred_check_branch
    %377 = sbr.rel (%p375) target = $region21
  $region20: #{encoder_forward.14} parent=0 // pred_region
    %v378 = vld [vmem:[#allocation2] sm:$0xff]
    %v379 = vld [vmem:[%s2] sm:$0x1]
    %v381 = vlaneseq
    %v382 = vshrl.u32 %v381, 7
    %v383 = vsub.s32 0, %v382
    %v384 = vrot.slane %v379, %v383
    %v386 = vadd.f32 %v378, %v384
    %vm387 = vcmp.ge.f32.partialorder %v386, 0.0
    %v388 = vmul.f32 %v386, 0.1
    %v389 = vsel %vm387, %v386, %v388
    %v390 = vpack.c.bf16 %v389, %v389
    %391 = vst [vmem:[%s3] sm:$0xf] %v390
  $region21: #{encoder_forward.14} parent=0 // pred_fallthru
    _
  // Predicated region
  $region22: #{encoder_forward.14} parent=0 // pred_check
    _
  $region23: #{encoder_forward.14} parent=0 // pred_check_branch
    %393 = sbr.rel (0) target = $region25
  $region24: #{encoder_forward.14} parent=0 // pred_region
    _
  $region25: #{encoder_forward.14} parent=0 // pred_fallthru
    _
  // Predicated region
  $region26: #{encoder_forward.14} parent=0 // pred_check
    _
  $region27: #{encoder_forward.14} parent=0 // pred_check_branch
    %395 = sbr.rel (0) target = $region29
  $region28: #{encoder_forward.14} parent=0 // pred_region
    _
  $region29: #{encoder_forward.14} parent=0 // pred_fallthru
    _

// kernel: encoder_forward.16
$region0: #{encoder_forward.16}
  #allocation0 [shape = 'u32[]', space=smem, size = 0x4, offset = 0x4, fixed_abs, tag = 'smem constant byte address 0x4 - core index']
  #allocation1 [shape = 'u32[144,128]{1,0:T(1,128)}', space=vmem, size = 0x12000, scoped, tag = 'internal scratch']
  #allocation2 [shape = 'f32[8,128]{1,0:T(8,128)}', space=vmem, size = 0x1000, scoped, tag = 'scratch operand']
  %s0 = inlined_call_operand.vmem [shape: bf16[8,384], index: 0, kind: input, shape index: {}]
  %s1 = inlined_call_operand.vmem [shape: bf16[384,128], index: 1, kind: input, shape index: {}]
  %s2 = inlined_call_operand.vmem [shape: f32[1,128], index: 2, kind: input, shape index: {}]
  %s3 = inlined_call_operand.vmem [shape: bf16[8,128], index: 3, kind: output, shape index: {}]
  %s4 = sld [smem:[#allocation0]]
  $region53: #{encoder_forward.16} parent=0
    _
  %s6 = ssub.s32 1, %s4
  %s7 = scalar_select 0, %s6, %s4
  loop: start=0, step=1, limit=5
  $region2: #{encoder_forward.16} parent=0 // loop_pre_header
    _
  $region3: #{encoder_forward.16} parent=0 // loop_header
    %s9 = sphi 0, %s13
    %p10 = scmp.ge.s32.totalorder %s9, 5
    %s16 = sphi 0, %s35
    %s17 = sphi 0, %s31
    %s18 = sphi 0, %s27
    %s19 = sphi 0, %s16
    %s20 = sphi 0, %s17
    %s21 = sphi 0, %s18
    %s22 = sphi 0, %s19
    %s23 = sphi 0, %s20
    %s24 = sphi 0, %s21
    %s40 = sphi 0, %s42
    %s43 = sphi 0, %s40
    %s44 = sphi 0, %s43
    %s60 = sphi 0, %s44
    %s68 = sphi 0, %s70
    %s71 = sphi 0, %s68
    %s72 = sphi 0, %s71
    %s88 = sphi 0, %s72
    %s94 = sphi 0, %s96
    %s97 = sphi 0, %s94
    %s98 = sphi 0, %s97
    %s114 = sphi 0, %s98
    %s122 = sphi 0, %s124
    %s125 = sphi 0, %s122
    %s126 = sphi 0, %s125
    %s142 = sphi 0, %s126
  $region4: #{encoder_forward.16} parent=0 // loop_header_branch
    %12 = sbr.rel (%p10) target = $region8
  $region5: #{encoder_forward.16} parent=0 // loop_body
    %s14 = ssub.s32 %s9, 1
    %s15 = ssub.s32 %s9, 2
    %s25 = sadd.s32 1, %s18
    %p26 = scmp.ge.s32.totalorder %s25, 3
    %s27 = scalar_select %p26, 0, %s25
    %s28 = sadd.s32 1, %s17
    %s29 = scalar_select %p26, %s28, %s17
    %p30 = scmp.ge.s32.totalorder %s29, 1
    %s31 = scalar_select %p30, 0, %s29
    %s32 = sadd.s32 1, %s16
    %s33 = scalar_select %p30, %s32, %s16
    %p34 = scmp.ge.s32.totalorder %s33, 1
    %s35 = scalar_select %p34, 0, %s33
    %s36 = ssub.s32 %s16, %s35
    %s37 = ssub.s32 %s18, %s27
    %s38 = sor.u32 %s36, %s37
    %p39 = scmp.eq.s32.totalorder %s38, 0
    %s41 = sadd.s32 %s40, 1
    %s42 = scalar_select %p39, %s40, %s41
    %p45 = pneg %p39
    %p46 = scmp.eq.s32.totalorder %s9, 2
    %p47 = por %p45, %p46
    %p48 = scmp.ne.s32.totalorder %s40, %s43
    %p49 = scmp.eq.s32.totalorder %s9, 0
    %p50 = por %p48, %p49
    %p51 = scmp.ne.s32.totalorder %s40, %s43
    %p52 = scmp.eq.s32.totalorder %s14, 2
    %p53 = por %p51, %p52
    %p54 = scmp.ne.s32.totalorder %s43, %s44
    %p55 = scmp.eq.s32.totalorder %s14, 0
    %p56 = por %p54, %p55
    %p57 = scmp.ne.s32.totalorder %s43, %s44
    %p58 = scmp.eq.s32.totalorder %s15, 2
    %p59 = por %p57, %p58
    %p61 = scmp.ne.s32.totalorder %s44, %s60
    %p62 = scmp.eq.s32.totalorder %s15, 0
    %p63 = por %p61, %p62
    %s64 = ssub.s32 %s18, %s27
    %s65 = ssub.s32 %s17, %s31
    %s66 = sor.u32 %s64, %s65
    %p67 = scmp.eq.s32.totalorder %s66, 0
    %s69 = sadd.s32 %s68, 1
    %s70 = scalar_select %p67, %s68, %s69
    %p73 = pneg %p67
    %p74 = scmp.eq.s32.totalorder %s9, 2
    %p75 = por %p73, %p74
    %p76 = scmp.ne.s32.totalorder %s68, %s71
    %p77 = scmp.eq.s32.totalorder %s9, 0
    %p78 = por %p76, %p77
    %p79 = scmp.ne.s32.totalorder %s68, %s71
    %p80 = scmp.eq.s32.totalorder %s14, 2
    %p81 = por %p79, %p80
    %p82 = scmp.ne.s32.totalorder %s71, %s72
    %p83 = scmp.eq.s32.totalorder %s14, 0
    %p84 = por %p82, %p83
    %p85 = scmp.ne.s32.totalorder %s71, %s72
    %p86 = scmp.eq.s32.totalorder %s15, 2
    %p87 = por %p85, %p86
    %p89 = scmp.ne.s32.totalorder %s72, %s88
    %p90 = scmp.eq.s32.totalorder %s15, 0
    %p91 = por %p89, %p90
    %s92 = ssub.s32 %s17, %s31
    %p93 = scmp.eq.s32.totalorder %s92, 0
    %s95 = sadd.s32 %s94, 1
    %s96 = scalar_select %p93, %s94, %s95
    %p99 = pneg %p93
    %p100 = scmp.eq.s32.totalorder %s9, 2
    %p101 = por %p99, %p100
    %p102 = scmp.ne.s32.totalorder %s94, %s97
    %p103 = scmp.eq.s32.totalorder %s9, 0
    %p104 = por %p102, %p103
    %p105 = scmp.ne.s32.totalorder %s94, %s97
    %p106 = scmp.eq.s32.totalorder %s14, 2
    %p107 = por %p105, %p106
    %p108 = scmp.ne.s32.totalorder %s97, %s98
    %p109 = scmp.eq.s32.totalorder %s14, 0
    %p110 = por %p108, %p109
    %p111 = scmp.ne.s32.totalorder %s97, %s98
    %p112 = scmp.eq.s32.totalorder %s15, 2
    %p113 = por %p111, %p112
    %p115 = scmp.ne.s32.totalorder %s98, %s114
    %p116 = scmp.eq.s32.totalorder %s15, 0
    %p117 = por %p115, %p116
    %s118 = ssub.s32 %s16, %s35
    %s119 = ssub.s32 %s17, %s31
    %s120 = sor.u32 %s118, %s119
    %p121 = scmp.eq.s32.totalorder %s120, 0
    %s123 = sadd.s32 %s122, 1
    %s124 = scalar_select %p121, %s122, %s123
    %p127 = pneg %p121
    %p128 = scmp.eq.s32.totalorder %s9, 2
    %p129 = por %p127, %p128
    %p130 = scmp.ne.s32.totalorder %s122, %s125
    %p131 = scmp.eq.s32.totalorder %s9, 0
    %p132 = por %p130, %p131
    %p133 = scmp.ne.s32.totalorder %s122, %s125
    %p134 = scmp.eq.s32.totalorder %s14, 2
    %p135 = por %p133, %p134
    %p136 = scmp.ne.s32.totalorder %s125, %s126
    %p137 = scmp.eq.s32.totalorder %s14, 0
    %p138 = por %p136, %p137
    %p139 = scmp.ne.s32.totalorder %s125, %s126
    %p140 = scmp.eq.s32.totalorder %s15, 2
    %p141 = por %p139, %p140
    %p143 = scmp.ne.s32.totalorder %s126, %s142
    %p144 = scmp.eq.s32.totalorder %s15, 0
    %p145 = por %p143, %p144
    %p146 = scmp.le.s32.totalorder 1, %s9
    %p147 = scmp.lt.s32.totalorder %s9, 4
    %p148 = pnand %p146, %p147
    %p149 = pneg %p148
    // Predicated region
    $region9: #{encoder_forward.16} parent=5 // pred_check
      _
    $region10: #{encoder_forward.16} parent=5 // pred_check_branch
      %151 = sbr.rel (%p148) target = $region12
    $region11: #{encoder_forward.16} parent=5 // pred_region
      %s152 = ssub.s32 %s9, 1
      // Predicated region
      $region13: #{encoder_forward.16} parent=11 // pred_check
        %p153 = pneg %p110
      $region14: #{encoder_forward.16} parent=11 // pred_check_branch
        %155 = sbr.rel (%p153) target = $region16
      $region15: #{encoder_forward.16} parent=11 // pred_region
        %p156 = scmp.lt.s32.totalorder %s20, 0
        %s157 = scalar_select %p156, %s20, 0
        %s158 = scalar_lea.vmem %s2, %s157
      $region16: #{encoder_forward.16} parent=11 // pred_fallthru
        _
    $region12: #{encoder_forward.16} parent=5 // pred_fallthru
      _
    %p159 = scmp.lt.s32.totalorder %s9, 3
    // Predicated region
    $region17: #{encoder_forward.16} parent=5 // pred_check
      %p160 = pneg %p159
    $region18: #{encoder_forward.16} parent=5 // pred_check_branch
      %162 = sbr.rel (%p160) target = $region20
    $region19: #{encoder_forward.16} parent=5 // pred_region
      // Predicated region
      $region21: #{encoder_forward.16} parent=19 // pred_check
        %p163 = pneg %p50
      $region22: #{encoder_forward.16} parent=19 // pred_check_branch
        %165 = sbr.rel (%p163) target = $region24
      $region23: #{encoder_forward.16} parent=19 // pred_region
        %p166 = scmp.lt.s32.totalorder %s16, 0
        %s167 = scalar_select %p166, %s16, 0
        %p168 = scmp.lt.s32.totalorder %s18, 2
        %s169 = scalar_select %p168, %s18, 2
        %s170 = smul.addr %s167, 3
        %s171 = sadd.s32 %s169, %s170
        %s172 = smul.addr %s171, 4
        %s173 = scalar_lea.vmem %s0, %s172
      $region24: #{encoder_forward.16} parent=19 // pred_fallthru
        _
      // Predicated region
      $region25: #{encoder_forward.16} parent=19 // pred_check
        %p174 = pneg %p78
      $region26: #{encoder_forward.16} parent=19 // pred_check_branch
        %176 = sbr.rel (%p174) target = $region28
      $region27: #{encoder_forward.16} parent=19 // pred_region
        %s177 = smul.u32 16, %s18
        %p178 = scmp.lt.s32.totalorder %s177, 47
        %s179 = scalar_select %p178, %s177, 47
        %p180 = scmp.lt.s32.totalorder %s17, 0
        %s181 = scalar_select %p180, %s17, 0
        %s182 = sadd.s32 %s181, %s179
        %s183 = smul.addr %s182, 4
        %s184 = scalar_lea.vmem %s1, %s183
        %s185 = smul.u32 16, %s18
      $region28: #{encoder_forward.16} parent=19 // pred_fallthru
        _
    $region20: #{encoder_forward.16} parent=5 // pred_fallthru
      _
    %p186 = scmp.le.s32.totalorder 1, %s9
    %p187 = scmp.lt.s32.totalorder %s9, 4
    %p188 = pnand %p186, %p187
    %p189 = pneg %p188
    // Predicated region
    $region29: #{encoder_forward.16} parent=5 // pred_check
      _
    $region30: #{encoder_forward.16} parent=5 // pred_check_branch
      %191 = sbr.rel (%p188) target = $region32
    $region31: #{encoder_forward.16} parent=5 // pred_region
      %s192 = ssub.s32 %s9, 1
      %p193 = scmp.lt.s32.totalorder %s19, 0
      %s194 = scalar_select %p193, %s19, 0
      %p195 = scmp.lt.s32.totalorder %s21, 2
      %s196 = scalar_select %p195, %s21, 2
      %s197 = smul.addr %s194, 3
      %s198 = sadd.s32 %s196, %s197
      %s199 = smul.addr %s198, 4
      %s200 = scalar_lea.vmem %s0, %s199
      %p201 = pneg %p56
      %p202 = pneg %p53
      %s203 = smul.u32 16, %s21
      %p204 = scmp.lt.s32.totalorder %s203, 47
      %s205 = scalar_select %p204, %s203, 47
      %p206 = scmp.lt.s32.totalorder %s20, 0
      %s207 = scalar_select %p206, %s20, 0
      %s208 = sadd.s32 %s207, %s205
      %s209 = smul.addr %s208, 4
      %s210 = scalar_lea.vmem %s1, %s209
      %p211 = pneg %p84
      %p212 = pneg %p81
      %p213 = scmp.lt.s32.totalorder %s20, 0
      %s214 = scalar_select %p213, %s20, 0
      %s215 = scalar_lea.vmem %s2, %s214
      %p216 = pneg %p110
      %p217 = pneg %p107
      %p218 = pneg %p138
      %p219 = pneg %p135
      %p220 = scmp.lt.s32.totalorder %s19, 0
      %s221 = scalar_select %p220, %s19, 0
      %p222 = scmp.lt.s32.totalorder %s20, 0
      %s223 = scalar_select %p222, %s20, 0
      %s224 = sadd.s32 %s223, %s221
      %s225 = smul.addr %s224, 4
      %s226 = scalar_lea.vmem %s3, %s225
      %p227 = scmp.lt.s32.totalorder %s19, 0
      %s228 = scalar_select %p227, %s19, 0
      %p229 = scmp.lt.s32.totalorder %s21, 2
      %s230 = scalar_select %p229, %s21, 2
      %s231 = smul.addr %s228, 3
      %s232 = sadd.s32 %s230, %s231
      %s233 = smul.addr %s232, 4
      %s234 = scalar_lea.vmem %s0, %s233
      %s235 = smul.u32 16, %s21
      %p236 = scmp.lt.s32.totalorder %s235, 47
      %s237 = scalar_select %p236, %s235, 47
      %p238 = scmp.lt.s32.totalorder %s20, 0
      %s239 = scalar_select %p238, %s20, 0
      %s240 = sadd.s32 %s239, %s237
      %s241 = smul.addr %s240, 4
      %s242 = scalar_lea.vmem %s1, %s241
      %s243 = smul.u32 16, %s21
      %p244 = scmp.lt.s32.totalorder %s20, 0
      %s245 = scalar_select %p244, %s20, 0
      %s246 = scalar_lea.vmem %s2, %s245
      %p247 = scmp.lt.s32.totalorder %s19, 0
      %s248 = scalar_select %p247, %s19, 0
      %p249 = scmp.lt.s32.totalorder %s20, 0
      %s250 = scalar_select %p249, %s20, 0
      %s251 = sadd.s32 %s250, %s248
      %s252 = smul.addr %s251, 4
      %s253 = scalar_lea.vmem %s3, %s252
      %p255 = scmp.eq.s32.totalorder %s21, 0
      // Predicated region
      $region33: #{encoder_forward.16} parent=31 // pred_check
        %p256 = pneg %p255
      $region34: #{encoder_forward.16} parent=31 // pred_check_branch
        %258 = sbr.rel (%p256) target = $region36
      $region35: #{encoder_forward.16} parent=31 // pred_region
        %259 = vst [vmem:[#allocation2] sm:$0xff] 0.0
      $region36: #{encoder_forward.16} parent=31 // pred_fallthru
        _
      %v260 = vld [vmem:[#allocation2] sm:$0xff]
      %v261 = vld [vmem:[%s234] sm:$0xf]
      %v262 = vld [vmem:[%s242] sm:$0xf]
      %v263 = vld [vmem:[%s242 + $0x4] sm:$0xf]
      %v264 = vld [vmem:[%s242 + $0x8] sm:$0xf]
      %v265 = vld [vmem:[%s242 + $0xc] sm:$0xf]
      %v266 = vld [vmem:[%s242 + $0x10] sm:$0xf]
      %v267 = vld [vmem:[%s242 + $0x14] sm:$0xf]
      %v268 = vld [vmem:[%s242 + $0x18] sm:$0xf]
      %v269 = vld [vmem:[%s242 + $0x1c] sm:$0xf]
      %v270 = vld [vmem:[%s242 + $0x20] sm:$0xf]
      %v271 = vld [vmem:[%s242 + $0x24] sm:$0xf]
      %v272 = vld [vmem:[%s242 + $0x28] sm:$0xf]
      %v273 = vld [vmem:[%s242 + $0x2c] sm:$0xf]
      %v274 = vld [vmem:[%s242 + $0x30] sm:$0xf]
      %v275 = vld [vmem:[%s242 + $0x34] sm:$0xf]
      %v276 = vld [vmem:[%s242 + $0x38] sm:$0xf]
      %v277 = vld [vmem:[%s242 + $0x3c] sm:$0xf]
      %v294 = vunpack.c.l.b16 %v262
      %v295 = vunpack.c.l.b16 %v263
      %v296 = vunpack.c.l.b16 %v264
      %v297 = vunpack.c.l.b16 %v265
      %v298 = vunpack.c.l.b16 %v266
      %v299 = vunpack.c.l.b16 %v267
      %v300 = vunpack.c.l.b16 %v268
      %v301 = vunpack.c.l.b16 %v269
      %v302 = vunpack.c.l.b16 %v270
      %v303 = vunpack.c.l.b16 %v271
      %v304 = vunpack.c.l.b16 %v272
      %v305 = vunpack.c.l.b16 %v273
      %v306 = vunpack.c.l.b16 %v274
      %v307 = vunpack.c.l.b16 %v275
      %v308 = vunpack.c.l.b16 %v276
      %v309 = vunpack.c.l.b16 %v277
      %v310 = vpack.c.b16 %v295, %v294
      %v311 = vpack.c.b16 %v297, %v296
      %v312 = vpack.c.b16 %v299, %v298
      %v313 = vpack.c.b16 %v301, %v300
      %v314 = vpack.c.b16 %v303, %v302
      %v315 = vpack.c.b16 %v305, %v304
      %v316 = vpack.c.b16 %v307, %v306
      %v317 = vpack.c.b16 %v309, %v308
      %326 = vmatprep.subr.bf16.mxu0 0
      %327 = vmatpush1.bf16.msra.mxu0 %v317
      %328 = vmatprep.subr.bf16.mxu0 0
      %329 = vmatpush1.bf16.msra.mxu0 %v316
      %330 = vmatprep.subr.bf16.mxu0 0
      %331 = vmatpush1.bf16.msra.mxu0 %v315
      %332 = vmatprep.subr.bf16.mxu0 0
      %333 = vmatpush1.bf16.msra.mxu0 %v314
      %334 = vmatprep.subr.bf16.mxu0 0
      %335 = vmatpush1.bf16.msra.mxu0 %v313
      %336 = vmatprep.subr.bf16.mxu0 0
      %337 = vmatpush1.bf16.msra.mxu0 %v312
      %338 = vmatprep.subr.bf16.mxu0 0
      %339 = vmatpush1.bf16.msra.mxu0 %v311
      %340 = vmatprep.subr.bf16.mxu0 0
      %341 = vmatpush1.bf16.msra.mxu0 %v310
      %342 = vmatprep.subr.bf16.mxu0 0
      %343 = vmatpush2.bf16.msra.mxu0 0
      %344 = vmatprep.subr.bf16.mxu0 0
      %345 = vmatpush2.bf16.msra.mxu0 0
      %346 = vmatprep.subr.bf16.mxu0 0
      %347 = vmatpush2.bf16.msra.mxu0 0
      %348 = vmatprep.subr.bf16.mxu0 0
      %349 = vmatpush2.bf16.msra.mxu0 0
      %350 = vmatprep.subr.bf16.mxu0 0
      %351 = vmatpush2.bf16.msra.mxu0 0
      %352 = vmatprep.subr.bf16.mxu0 0
      %353 = vmatpush2.bf16.msra.mxu0 0
      %354 = vmatprep.subr.bf16.mxu0 0
      %355 = vmatpush2.bf16.msra.mxu0 0
      %356 = vmatprep.subr.bf16.mxu0 0
      %357 = vmatpush2.bf16.msra.mxu0 0
      %358 = vmatprep.mubr.bf16.mxu0 0
      %359 = vmatmul.mubr.bf16.gmra.mxu0 %v261
      %v360 = vpop.f32.mrf.mxu0
      %v361 = vadd.f32 0.0, %v360
      %v362 = vpop.f32.mrf.mxu0
      %v363 = vpop.f32.mrf.mxu0
      %v364 = vpop.f32.mrf.mxu0
      %365 = vdwg.mxu0
      %v366 = vadd.f32 %v260, %v361
      %367 = vst [vmem:[#allocation2] sm:$0xff] %v366
      %p368 = scmp.eq.s32.totalorder %s21, 2
      // Predicated region
      $region37: #{encoder_forward.16} parent=31 // pred_check
        %p369 = pneg %p368
      $region38: #{encoder_forward.16} parent=31 // pred_check_branch
        %371 = sbr.rel (%p369) target = $region40
      $region39: #{encoder_forward.16} parent=31 // pred_region
        %v372 = vld [vmem:[#allocation2] sm:$0xff]
        %v373 = vld [vmem:[%s246] sm:$0x1]
        %v375 = vlaneseq
        %v376 = vshrl.u32 %v375, 7
        %v377 = vsub.s32 0, %v376
        %v378 = vrot.slane %v373, %v377
        %v380 = vadd.f32 %v372, %v378
        %vm381 = vcmp.ge.f32.partialorder %v380, 0.0
        %v382 = vmul.f32 %v380, 0.2
        %v383 = vsel %vm381, %v380, %v382
        %v384 = vpack.c.bf16 %v383, %v383
        %385 = vst [vmem:[%s253] sm:$0xf] %v384
      $region40: #{encoder_forward.16} parent=31 // pred_fallthru
        _
      %p386 = scmp.lt.s32.totalorder %s19, 0
      %s387 = scalar_select %p386, %s19, 0
      %p388 = scmp.lt.s32.totalorder %s20, 0
      %s389 = scalar_select %p388, %s20, 0
      %s390 = sadd.s32 %s389, %s387
      %s391 = smul.addr %s390, 4
      %s392 = scalar_lea.vmem %s3, %s391
      // Predicated region
      $region41: #{encoder_forward.16} parent=31 // pred_check
        %p393 = pneg %p135
      $region42: #{encoder_forward.16} parent=31 // pred_check_branch
        %395 = sbr.rel (%p393) target = $region44
      $region43: #{encoder_forward.16} parent=31 // pred_region
        _
      $region44: #{encoder_forward.16} parent=31 // pred_fallthru
        _
      // Predicated region
      $region45: #{encoder_forward.16} parent=31 // pred_check
        %p396 = pneg %p135
      $region46: #{encoder_forward.16} parent=31 // pred_check_branch
        %398 = sbr.rel (%p396) target = $region48
      $region47: #{encoder_forward.16} parent=31 // pred_region
        %p399 = scmp.lt.s32.totalorder %s19, 0
        %s400 = scalar_select %p399, %s19, 0
        %p401 = scmp.lt.s32.totalorder %s20, 0
        %s402 = scalar_select %p401, %s20, 0
        %s403 = sadd.s32 %s402, %s400
        %s404 = smul.addr %s403, 4
        %s405 = scalar_lea.vmem %s3, %s404
      $region48: #{encoder_forward.16} parent=31 // pred_fallthru
        _
    $region32: #{encoder_forward.16} parent=5 // pred_fallthru
      _
    %p406 = scmp.le.s32.totalorder 2, %s9
    // Predicated region
    $region49: #{encoder_forward.16} parent=5 // pred_check
      %p407 = pneg %p406
    $region50: #{encoder_forward.16} parent=5 // pred_check_branch
      %409 = sbr.rel (%p407) target = $region52
    $region51: #{encoder_forward.16} parent=5 // pred_region
      %s410 = ssub.s32 %s9, 2
    $region52: #{encoder_forward.16} parent=5 // pred_fallthru
      _
  $region6: #{encoder_forward.16} parent=0 // loop_footer
    %s13 = sadd.s32 1, %s9
  $region7: #{encoder_forward.16} parent=0 // loop_footer_branch
    %8 = sbr.rel target = $region3
  $region8: #{encoder_forward.16} parent=0 // loop_exit
    _

// kernel: encoder_forward.17
$region0: #{encoder_forward.17}
  #allocation0 [shape = 'u32[]', space=smem, size = 0x4, offset = 0x4, fixed_abs, tag = 'smem constant byte address 0x4 - core index']
  #allocation1 [shape = 'u32[144,128]{1,0:T(1,128)}', space=vmem, size = 0x12000, scoped, tag = 'internal scratch']
  #allocation2 [shape = 'f32[8,128]{1,0:T(8,128)}', space=vmem, size = 0x1000, scoped, tag = 'scratch operand']
  %s0 = inlined_call_operand.vmem [shape: bf16[8,384], index: 0, kind: input, shape index: {}]
  %s1 = inlined_call_operand.vmem [shape: bf16[384,128], index: 1, kind: input, shape index: {}]
  %s2 = inlined_call_operand.vmem [shape: f32[1,128], index: 2, kind: input, shape index: {}]
  %s3 = inlined_call_operand.vmem [shape: bf16[8,128], index: 3, kind: input, shape index: {}]
  %s4 = inlined_call_operand.vmem [shape: f32[8,128], index: 4, kind: output, shape index: {}]
  %s5 = sld [smem:[#allocation0]]
  $region57: #{encoder_forward.17} parent=0
    _
  %s7 = ssub.s32 1, %s5
  %s8 = scalar_select 0, %s7, %s5
  loop: start=0, step=1, limit=5
  $region2: #{encoder_forward.17} parent=0 // loop_pre_header
    _
  $region3: #{encoder_forward.17} parent=0 // loop_header
    %s10 = sphi 0, %s14
    %p11 = scmp.ge.s32.totalorder %s10, 5
    %s17 = sphi 0, %s36
    %s18 = sphi 0, %s32
    %s19 = sphi 0, %s28
    %s20 = sphi 0, %s17
    %s21 = sphi 0, %s18
    %s22 = sphi 0, %s19
    %s23 = sphi 0, %s20
    %s24 = sphi 0, %s21
    %s25 = sphi 0, %s22
    %s41 = sphi 0, %s43
    %s44 = sphi 0, %s41
    %s45 = sphi 0, %s44
    %s61 = sphi 0, %s45
    %s69 = sphi 0, %s71
    %s72 = sphi 0, %s69
    %s73 = sphi 0, %s72
    %s89 = sphi 0, %s73
    %s95 = sphi 0, %s97
    %s98 = sphi 0, %s95
    %s99 = sphi 0, %s98
    %s115 = sphi 0, %s99
    %s123 = sphi 0, %s125
    %s126 = sphi 0, %s123
    %s127 = sphi 0, %s126
    %s143 = sphi 0, %s127
    %s151 = sphi 0, %s153
    %s154 = sphi 0, %s151
    %s155 = sphi 0, %s154
    %s171 = sphi 0, %s155
  $region4: #{encoder_forward.17} parent=0 // loop_header_branch
    %13 = sbr.rel (%p11) target = $region8
  $region5: #{encoder_forward.17} parent=0 // loop_body
    %s15 = ssub.s32 %s10, 1
    %s16 = ssub.s32 %s10, 2
    %s26 = sadd.s32 1, %s19
    %p27 = scmp.ge.s32.totalorder %s26, 3
    %s28 = scalar_select %p27, 0, %s26
    %s29 = sadd.s32 1, %s18
    %s30 = scalar_select %p27, %s29, %s18
    %p31 = scmp.ge.s32.totalorder %s30, 1
    %s32 = scalar_select %p31, 0, %s30
    %s33 = sadd.s32 1, %s17
    %s34 = scalar_select %p31, %s33, %s17
    %p35 = scmp.ge.s32.totalorder %s34, 1
    %s36 = scalar_select %p35, 0, %s34
    %s37 = ssub.s32 %s17, %s36
    %s38 = ssub.s32 %s19, %s28
    %s39 = sor.u32 %s37, %s38
    %p40 = scmp.eq.s32.totalorder %s39, 0
    %s42 = sadd.s32 %s41, 1
    %s43 = scalar_select %p40, %s41, %s42
    %p46 = pneg %p40
    %p47 = scmp.eq.s32.totalorder %s10, 2
    %p48 = por %p46, %p47
    %p49 = scmp.ne.s32.totalorder %s41, %s44
    %p50 = scmp.eq.s32.totalorder %s10, 0
    %p51 = por %p49, %p50
    %p52 = scmp.ne.s32.totalorder %s41, %s44
    %p53 = scmp.eq.s32.totalorder %s15, 2
    %p54 = por %p52, %p53
    %p55 = scmp.ne.s32.totalorder %s44, %s45
    %p56 = scmp.eq.s32.totalorder %s15, 0
    %p57 = por %p55, %p56
    %p58 = scmp.ne.s32.totalorder %s44, %s45
    %p59 = scmp.eq.s32.totalorder %s16, 2
    %p60 = por %p58, %p59
    %p62 = scmp.ne.s32.totalorder %s45, %s61
    %p63 = scmp.eq.s32.totalorder %s16, 0
    %p64 = por %p62, %p63
    %s65 = ssub.s32 %s19, %s28
    %s66 = ssub.s32 %s18, %s32
    %s67 = sor.u32 %s65, %s66
    %p68 = scmp.eq.s32.totalorder %s67, 0
    %s70 = sadd.s32 %s69, 1
    %s71 = scalar_select %p68, %s69, %s70
    %p74 = pneg %p68
    %p75 = scmp.eq.s32.totalorder %s10, 2
    %p76 = por %p74, %p75
    %p77 = scmp.ne.s32.totalorder %s69, %s72
    %p78 = scmp.eq.s32.totalorder %s10, 0
    %p79 = por %p77, %p78
    %p80 = scmp.ne.s32.totalorder %s69, %s72
    %p81 = scmp.eq.s32.totalorder %s15, 2
    %p82 = por %p80, %p81
    %p83 = scmp.ne.s32.totalorder %s72, %s73
    %p84 = scmp.eq.s32.totalorder %s15, 0
    %p85 = por %p83, %p84
    %p86 = scmp.ne.s32.totalorder %s72, %s73
    %p87 = scmp.eq.s32.totalorder %s16, 2
    %p88 = por %p86, %p87
    %p90 = scmp.ne.s32.totalorder %s73, %s89
    %p91 = scmp.eq.s32.totalorder %s16, 0
    %p92 = por %p90, %p91
    %s93 = ssub.s32 %s18, %s32
    %p94 = scmp.eq.s32.totalorder %s93, 0
    %s96 = sadd.s32 %s95, 1
    %s97 = scalar_select %p94, %s95, %s96
    %p100 = pneg %p94
    %p101 = scmp.eq.s32.totalorder %s10, 2
    %p102 = por %p100, %p101
    %p103 = scmp.ne.s32.totalorder %s95, %s98
    %p104 = scmp.eq.s32.totalorder %s10, 0
    %p105 = por %p103, %p104
    %p106 = scmp.ne.s32.totalorder %s95, %s98
    %p107 = scmp.eq.s32.totalorder %s15, 2
    %p108 = por %p106, %p107
    %p109 = scmp.ne.s32.totalorder %s98, %s99
    %p110 = scmp.eq.s32.totalorder %s15, 0
    %p111 = por %p109, %p110
    %p112 = scmp.ne.s32.totalorder %s98, %s99
    %p113 = scmp.eq.s32.totalorder %s16, 2
    %p114 = por %p112, %p113
    %p116 = scmp.ne.s32.totalorder %s99, %s115
    %p117 = scmp.eq.s32.totalorder %s16, 0
    %p118 = por %p116, %p117
    %s119 = ssub.s32 %s17, %s36
    %s120 = ssub.s32 %s18, %s32
    %s121 = sor.u32 %s119, %s120
    %p122 = scmp.eq.s32.totalorder %s121, 0
    %s124 = sadd.s32 %s123, 1
    %s125 = scalar_select %p122, %s123, %s124
    %p128 = pneg %p122
    %p129 = scmp.eq.s32.totalorder %s10, 2
    %p130 = por %p128, %p129
    %p131 = scmp.ne.s32.totalorder %s123, %s126
    %p132 = scmp.eq.s32.totalorder %s10, 0
    %p133 = por %p131, %p132
    %p134 = scmp.ne.s32.totalorder %s123, %s126
    %p135 = scmp.eq.s32.totalorder %s15, 2
    %p136 = por %p134, %p135
    %p137 = scmp.ne.s32.totalorder %s126, %s127
    %p138 = scmp.eq.s32.totalorder %s15, 0
    %p139 = por %p137, %p138
    %p140 = scmp.ne.s32.totalorder %s126, %s127
    %p141 = scmp.eq.s32.totalorder %s16, 2
    %p142 = por %p140, %p141
    %p144 = scmp.ne.s32.totalorder %s127, %s143
    %p145 = scmp.eq.s32.totalorder %s16, 0
    %p146 = por %p144, %p145
    %s147 = ssub.s32 %s17, %s36
    %s148 = ssub.s32 %s18, %s32
    %s149 = sor.u32 %s147, %s148
    %p150 = scmp.eq.s32.totalorder %s149, 0
    %s152 = sadd.s32 %s151, 1
    %s153 = scalar_select %p150, %s151, %s152
    %p156 = pneg %p150
    %p157 = scmp.eq.s32.totalorder %s10, 2
    %p158 = por %p156, %p157
    %p159 = scmp.ne.s32.totalorder %s151, %s154
    %p160 = scmp.eq.s32.totalorder %s10, 0
    %p161 = por %p159, %p160
    %p162 = scmp.ne.s32.totalorder %s151, %s154
    %p163 = scmp.eq.s32.totalorder %s15, 2
    %p164 = por %p162, %p163
    %p165 = scmp.ne.s32.totalorder %s154, %s155
    %p166 = scmp.eq.s32.totalorder %s15, 0
    %p167 = por %p165, %p166
    %p168 = scmp.ne.s32.totalorder %s154, %s155
    %p169 = scmp.eq.s32.totalorder %s16, 2
    %p170 = por %p168, %p169
    %p172 = scmp.ne.s32.totalorder %s155, %s171
    %p173 = scmp.eq.s32.totalorder %s16, 0
    %p174 = por %p172, %p173
    %p175 = scmp.le.s32.totalorder 1, %s10
    %p176 = scmp.lt.s32.totalorder %s10, 4
    %p177 = pnand %p175, %p176
    %p178 = pneg %p177
    // Predicated region
    $region9: #{encoder_forward.17} parent=5 // pred_check
      _
    $region10: #{encoder_forward.17} parent=5 // pred_check_branch
      %180 = sbr.rel (%p177) target = $region12
    $region11: #{encoder_forward.17} parent=5 // pred_region
      %s181 = ssub.s32 %s10, 1
      // Predicated region
      $region13: #{encoder_forward.17} parent=11 // pred_check
        %p182 = pneg %p111
      $region14: #{encoder_forward.17} parent=11 // pred_check_branch
        %184 = sbr.rel (%p182) target = $region16
      $region15: #{encoder_forward.17} parent=11 // pred_region
        %p185 = scmp.lt.s32.totalorder %s21, 0
        %s186 = scalar_select %p185, %s21, 0
        %s187 = scalar_lea.vmem %s2, %s186
      $region16: #{encoder_forward.17} parent=11 // pred_fallthru
        _
      // Predicated region
      $region17: #{encoder_forward.17} parent=11 // pred_check
        %p188 = pneg %p139
      $region18: #{encoder_forward.17} parent=11 // pred_check_branch
        %190 = sbr.rel (%p188) target = $region20
      $region19: #{encoder_forward.17} parent=11 // pred_region
        %p191 = scmp.lt.s32.totalorder %s20, 0
        %s192 = scalar_select %p191, %s20, 0
        %p193 = scmp.lt.s32.totalorder %s21, 0
        %s194 = scalar_select %p193, %s21, 0
        %s195 = sadd.s32 %s194, %s192
        %s196 = smul.addr %s195, 4
        %s197 = scalar_lea.vmem %s3, %s196
      $region20: #{encoder_forward.17} parent=11 // pred_fallthru
        _
    $region12: #{encoder_forward.17} parent=5 // pred_fallthru
      _
    %p198 = scmp.lt.s32.totalorder %s10, 3
    // Predicated region
    $region21: #{encoder_forward.17} parent=5 // pred_check
      %p199 = pneg %p198
    $region22: #{encoder_forward.17} parent=5 // pred_check_branch
      %201 = sbr.rel (%p199) target = $region24
    $region23: #{encoder_forward.17} parent=5 // pred_region
      // Predicated region
      $region25: #{encoder_forward.17} parent=23 // pred_check
        %p202 = pneg %p51
      $region26: #{encoder_forward.17} parent=23 // pred_check_branch
        %204 = sbr.rel (%p202) target = $region28
      $region27: #{encoder_forward.17} parent=23 // pred_region
        %p205 = scmp.lt.s32.totalorder %s17, 0
        %s206 = scalar_select %p205, %s17, 0
        %p207 = scmp.lt.s32.totalorder %s19, 2
        %s208 = scalar_select %p207, %s19, 2
        %s209 = smul.addr %s206, 3
        %s210 = sadd.s32 %s208, %s209
        %s211 = smul.addr %s210, 4
        %s212 = scalar_lea.vmem %s0, %s211
      $region28: #{encoder_forward.17} parent=23 // pred_fallthru
        _
      // Predicated region
      $region29: #{encoder_forward.17} parent=23 // pred_check
        %p213 = pneg %p79
      $region30: #{encoder_forward.17} parent=23 // pred_check_branch
        %215 = sbr.rel (%p213) target = $region32
      $region31: #{encoder_forward.17} parent=23 // pred_region
        %s216 = smul.u32 16, %s19
        %p217 = scmp.lt.s32.totalorder %s216, 47
        %s218 = scalar_select %p217, %s216, 47
        %p219 = scmp.lt.s32.totalorder %s18, 0
        %s220 = scalar_select %p219, %s18, 0
        %s221 = sadd.s32 %s220, %s218
        %s222 = smul.addr %s221, 4
        %s223 = scalar_lea.vmem %s1, %s222
        %s224 = smul.u32 16, %s19
      $region32: #{encoder_forward.17} parent=23 // pred_fallthru
        _
    $region24: #{encoder_forward.17} parent=5 // pred_fallthru
      _
    %p225 = scmp.le.s32.totalorder 1, %s10
    %p226 = scmp.lt.s32.totalorder %s10, 4
    %p227 = pnand %p225, %p226
    %p228 = pneg %p227
    // Predicated region
    $region33: #{encoder_forward.17} parent=5 // pred_check
      _
    $region34: #{encoder_forward.17} parent=5 // pred_check_branch
      %230 = sbr.rel (%p227) target = $region36
    $region35: #{encoder_forward.17} parent=5 // pred_region
      %s231 = ssub.s32 %s10, 1
      %p232 = scmp.lt.s32.totalorder %s20, 0
      %s233 = scalar_select %p232, %s20, 0
      %p234 = scmp.lt.s32.totalorder %s22, 2
      %s235 = scalar_select %p234, %s22, 2
      %s236 = smul.addr %s233, 3
      %s237 = sadd.s32 %s235, %s236
      %s238 = smul.addr %s237, 4
      %s239 = scalar_lea.vmem %s0, %s238
      %p240 = pneg %p57
      %p241 = pneg %p54
      %s242 = smul.u32 16, %s22
      %p243 = scmp.lt.s32.totalorder %s242, 47
      %s244 = scalar_select %p243, %s242, 47
      %p245 = scmp.lt.s32.totalorder %s21, 0
      %s246 = scalar_select %p245, %s21, 0
      %s247 = sadd.s32 %s246, %s244
      %s248 = smul.addr %s247, 4
      %s249 = scalar_lea.vmem %s1, %s248
      %p250 = pneg %p85
      %p251 = pneg %p82
      %p252 = scmp.lt.s32.totalorder %s21, 0
      %s253 = scalar_select %p252, %s21, 0
      %s254 = scalar_lea.vmem %s2, %s253
      %p255 = pneg %p111
      %p256 = pneg %p108
      %p257 = scmp.lt.s32.totalorder %s20, 0
      %s258 = scalar_select %p257, %s20, 0
      %p259 = scmp.lt.s32.totalorder %s21, 0
      %s260 = scalar_select %p259, %s21, 0
      %s261 = sadd.s32 %s260, %s258
      %s262 = smul.addr %s261, 4
      %s263 = scalar_lea.vmem %s3, %s262
      %p264 = pneg %p139
      %p265 = pneg %p136
      %p266 = pneg %p167
      %p267 = pneg %p164
      %p268 = scmp.lt.s32.totalorder %s20, 0
      %s269 = scalar_select %p268, %s20, 0
      %p270 = scmp.lt.s32.totalorder %s21, 0
      %s271 = scalar_select %p270, %s21, 0
      %s272 = sadd.s32 %s271, %s269
      %s273 = smul.addr %s272, 8
      %s274 = scalar_lea.vmem %s4, %s273
      %p275 = scmp.lt.s32.totalorder %s20, 0
      %s276 = scalar_select %p275, %s20, 0
      %p277 = scmp.lt.s32.totalorder %s22, 2
      %s278 = scalar_select %p277, %s22, 2
      %s279 = smul.addr %s276, 3
      %s280 = sadd.s32 %s278, %s279
      %s281 = smul.addr %s280, 4
      %s282 = scalar_lea.vmem %s0, %s281
      %s283 = smul.u32 16, %s22
      %p284 = scmp.lt.s32.totalorder %s283, 47
      %s285 = scalar_select %p284, %s283, 47
      %p286 = scmp.lt.s32.totalorder %s21, 0
      %s287 = scalar_select %p286, %s21, 0
      %s288 = sadd.s32 %s287, %s285
      %s289 = smul.addr %s288, 4
      %s290 = scalar_lea.vmem %s1, %s289
      %s291 = smul.u32 16, %s22
      %p292 = scmp.lt.s32.totalorder %s21, 0
      %s293 = scalar_select %p292, %s21, 0
      %s294 = scalar_lea.vmem %s2, %s293
      %p295 = scmp.lt.s32.totalorder %s20, 0
      %s296 = scalar_select %p295, %s20, 0
      %p297 = scmp.lt.s32.totalorder %s21, 0
      %s298 = scalar_select %p297, %s21, 0
      %s299 = sadd.s32 %s298, %s296
      %s300 = smul.addr %s299, 4
      %s301 = scalar_lea.vmem %s3, %s300
      %p302 = scmp.lt.s32.totalorder %s20, 0
      %s303 = scalar_select %p302, %s20, 0
      %p304 = scmp.lt.s32.totalorder %s21, 0
      %s305 = scalar_select %p304, %s21, 0
      %s306 = sadd.s32 %s305, %s303
      %s307 = smul.addr %s306, 8
      %s308 = scalar_lea.vmem %s4, %s307
      %p310 = scmp.eq.s32.totalorder %s22, 0
      // Predicated region
      $region37: #{encoder_forward.17} parent=35 // pred_check
        %p311 = pneg %p310
      $region38: #{encoder_forward.17} parent=35 // pred_check_branch
        %313 = sbr.rel (%p311) target = $region40
      $region39: #{encoder_forward.17} parent=35 // pred_region
        %314 = vst [vmem:[#allocation2] sm:$0xff] 0.0
      $region40: #{encoder_forward.17} parent=35 // pred_fallthru
        _
      %v315 = vld [vmem:[#allocation2] sm:$0xff]
      %v316 = vld [vmem:[%s282] sm:$0xf]
      %v317 = vld [vmem:[%s290] sm:$0xf]
      %v318 = vld [vmem:[%s290 + $0x4] sm:$0xf]
      %v319 = vld [vmem:[%s290 + $0x8] sm:$0xf]
      %v320 = vld [vmem:[%s290 + $0xc] sm:$0xf]
      %v321 = vld [vmem:[%s290 + $0x10] sm:$0xf]
      %v322 = vld [vmem:[%s290 + $0x14] sm:$0xf]
      %v323 = vld [vmem:[%s290 + $0x18] sm:$0xf]
      %v324 = vld [vmem:[%s290 + $0x1c] sm:$0xf]
      %v325 = vld [vmem:[%s290 + $0x20] sm:$0xf]
      %v326 = vld [vmem:[%s290 + $0x24] sm:$0xf]
      %v327 = vld [vmem:[%s290 + $0x28] sm:$0xf]
      %v328 = vld [vmem:[%s290 + $0x2c] sm:$0xf]
      %v329 = vld [vmem:[%s290 + $0x30] sm:$0xf]
      %v330 = vld [vmem:[%s290 + $0x34] sm:$0xf]
      %v331 = vld [vmem:[%s290 + $0x38] sm:$0xf]
      %v332 = vld [vmem:[%s290 + $0x3c] sm:$0xf]
      %v349 = vunpack.c.l.b16 %v317
      %v350 = vunpack.c.l.b16 %v318
      %v351 = vunpack.c.l.b16 %v319
      %v352 = vunpack.c.l.b16 %v320
      %v353 = vunpack.c.l.b16 %v321
      %v354 = vunpack.c.l.b16 %v322
      %v355 = vunpack.c.l.b16 %v323
      %v356 = vunpack.c.l.b16 %v324
      %v357 = vunpack.c.l.b16 %v325
      %v358 = vunpack.c.l.b16 %v326
      %v359 = vunpack.c.l.b16 %v327
      %v360 = vunpack.c.l.b16 %v328
      %v361 = vunpack.c.l.b16 %v329
      %v362 = vunpack.c.l.b16 %v330
      %v363 = vunpack.c.l.b16 %v331
      %v364 = vunpack.c.l.b16 %v332
      %v365 = vpack.c.b16 %v350, %v349
      %v366 = vpack.c.b16 %v352, %v351
      %v367 = vpack.c.b16 %v354, %v353
      %v368 = vpack.c.b16 %v356, %v355
      %v369 = vpack.c.b16 %v358, %v357
      %v370 = vpack.c.b16 %v360, %v359
      %v371 = vpack.c.b16 %v362, %v361
      %v372 = vpack.c.b16 %v364, %v363
      %381 = vmatprep.subr.bf16.mxu0 0
      %382 = vmatpush1.bf16.msra.mxu0 %v372
      %383 = vmatprep.subr.bf16.mxu0 0
      %384 = vmatpush1.bf16.msra.mxu0 %v371
      %385 = vmatprep.subr.bf16.mxu0 0
      %386 = vmatpush1.bf16.msra.mxu0 %v370
      %387 = vmatprep.subr.bf16.mxu0 0
      %388 = vmatpush1.bf16.msra.mxu0 %v369
      %389 = vmatprep.subr.bf16.mxu0 0
      %390 = vmatpush1.bf16.msra.mxu0 %v368
      %391 = vmatprep.subr.bf16.mxu0 0
      %392 = vmatpush1.bf16.msra.mxu0 %v367
      %393 = vmatprep.subr.bf16.mxu0 0
      %394 = vmatpush1.bf16.msra.mxu0 %v366
      %395 = vmatprep.subr.bf16.mxu0 0
      %396 = vmatpush1.bf16.msra.mxu0 %v365
      %397 = vmatprep.subr.bf16.mxu0 0
      %398 = vmatpush2.bf16.msra.mxu0 0
      %399 = vmatprep.subr.bf16.mxu0 0
      %400 = vmatpush2.bf16.msra.mxu0 0
      %401 = vmatprep.subr.bf16.mxu0 0
      %402 = vmatpush2.bf16.msra.mxu0 0
      %403 = vmatprep.subr.bf16.mxu0 0
      %404 = vmatpush2.bf16.msra.mxu0 0
      %405 = vmatprep.subr.bf16.mxu0 0
      %406 = vmatpush2.bf16.msra.mxu0 0
      %407 = vmatprep.subr.bf16.mxu0 0
      %408 = vmatpush2.bf16.msra.mxu0 0
      %409 = vmatprep.subr.bf16.mxu0 0
      %410 = vmatpush2.bf16.msra.mxu0 0
      %411 = vmatprep.subr.bf16.mxu0 0
      %412 = vmatpush2.bf16.msra.mxu0 0
      %413 = vmatprep.mubr.bf16.mxu0 0
      %414 = vmatmul.mubr.bf16.gmra.mxu0 %v316
      %v415 = vpop.f32.mrf.mxu0
      %v416 = vadd.f32 0.0, %v415
      %v417 = vpop.f32.mrf.mxu0
      %v418 = vpop.f32.mrf.mxu0
      %v419 = vpop.f32.mrf.mxu0
      %420 = vdwg.mxu0
      %v421 = vadd.f32 %v315, %v416
      %422 = vst [vmem:[#allocation2] sm:$0xff] %v421
      %p423 = scmp.eq.s32.totalorder %s22, 2
      // Predicated region
      $region41: #{encoder_forward.17} parent=35 // pred_check
        %p424 = pneg %p423
      $region42: #{encoder_forward.17} parent=35 // pred_check_branch
        %426 = sbr.rel (%p424) target = $region44
      $region43: #{encoder_forward.17} parent=35 // pred_region
        %v427 = vld [vmem:[#allocation2] sm:$0xff]
        %v428 = vld [vmem:[%s294] sm:$0x1]
        %v430 = vlaneseq
        %v431 = vshrl.u32 %v430, 7
        %v432 = vsub.s32 0, %v431
        %v433 = vrot.slane %v428, %v432
        %v435 = vadd.f32 %v427, %v433
        %v436 = vld [vmem:[%s301] sm:$0xf]
        %v437 = vunpack.c.l.bf16 %v436
        %v438 = vadd.f32 %v435, %v437
        %vm439 = vcmp.ge.f32.partialorder %v438, 0.0
        %v440 = vmul.f32 %v438, 0.2
        %v441 = vsel %vm439, %v438, %v440
        %v442 = vmul.f32 %v441, %v441
        %443 = vadd.xlane.f32.xlu0 %v442
        %v444 = vpop.xlane.xlu0 %443
        %v445 = vmul.f32 %v444, 0.03125
        %v446 = vadd.f32 %v445, 1e-06
        %v447 = vrsqrt.pop %v446
        %v448 = vmul.f32 %v441, %v447
        %449 = vst [vmem:[%s308] sm:$0xff] %v448
      $region44: #{encoder_forward.17} parent=35 // pred_fallthru
        _
      %p450 = scmp.lt.s32.totalorder %s20, 0
      %s451 = scalar_select %p450, %s20, 0
      %p452 = scmp.lt.s32.totalorder %s21, 0
      %s453 = scalar_select %p452, %s21, 0
      %s454 = sadd.s32 %s453, %s451
      %s455 = smul.addr %s454, 8
      %s456 = scalar_lea.vmem %s4, %s455
      // Predicated region
      $region45: #{encoder_forward.17} parent=35 // pred_check
        %p457 = pneg %p164
      $region46: #{encoder_forward.17} parent=35 // pred_check_branch
        %459 = sbr.rel (%p457) target = $region48
      $region47: #{encoder_forward.17} parent=35 // pred_region
        _
      $region48: #{encoder_forward.17} parent=35 // pred_fallthru
        _
      // Predicated region
      $region49: #{encoder_forward.17} parent=35 // pred_check
        %p460 = pneg %p164
      $region50: #{encoder_forward.17} parent=35 // pred_check_branch
        %462 = sbr.rel (%p460) target = $region52
      $region51: #{encoder_forward.17} parent=35 // pred_region
        %p463 = scmp.lt.s32.totalorder %s20, 0
        %s464 = scalar_select %p463, %s20, 0
        %p465 = scmp.lt.s32.totalorder %s21, 0
        %s466 = scalar_select %p465, %s21, 0
        %s467 = sadd.s32 %s466, %s464
        %s468 = smul.addr %s467, 8
        %s469 = scalar_lea.vmem %s4, %s468
      $region52: #{encoder_forward.17} parent=35 // pred_fallthru
        _
    $region36: #{encoder_forward.17} parent=5 // pred_fallthru
      _
    %p470 = scmp.le.s32.totalorder 2, %s10
    // Predicated region
    $region53: #{encoder_forward.17} parent=5 // pred_check
      %p471 = pneg %p470
    $region54: #{encoder_forward.17} parent=5 // pred_check_branch
      %473 = sbr.rel (%p471) target = $region56
    $region55: #{encoder_forward.17} parent=5 // pred_region
      %s474 = ssub.s32 %s10, 2
    $region56: #{encoder_forward.17} parent=5 // pred_fallthru
      _
  $region6: #{encoder_forward.17} parent=0 // loop_footer
    %s14 = sadd.s32 1, %s10
  $region7: #{encoder_forward.17} parent=0 // loop_footer_branch
    %9 = sbr.rel target = $region3
  $region8: #{encoder_forward.17} parent=0 // loop_exit
    _

</llo_original>
